<compile_context>
chip_gen: v7x
topology: tpu7x:2x2x1
jax: 0.10.0
libtpu: 0.0.40
codegen_flags: <defaults>
</compile_context>

<pallas_src>
import functools

import numpy as np
import jax
import jax.numpy as jnp
from jax import lax
from jax.experimental import pallas as pl
from jax.experimental.pallas import tpu as pltpu


# Operand dtype fed to the MXU.  bf16 would roughly double MXU throughput and
# halve operand bytes, but f32 is kept so the strict 1e-2 check against the f32
# reference holds with a wide margin (K<=216, so MXU time is negligible anyway).
MXU_DTYPE = jnp.float32


def _round_up(x, m):
    return (x + m - 1) // m * m


def _pick_tm(rows, cap=512):
    """Largest row tile (<= cap, multiple of 8) that still leaves >= 2 row
    blocks, so the 'parallel' grid axis can shard across a megacore's two TCs."""
    if rows >= 16:
        return max(8, min(cap, _round_up((rows + 1) // 2, 8)))
    return _round_up(max(rows, 1), 8)


def _grid_split(nblocks):
    """Split row blocks into (parallel, arbitrary) factors for megacore."""
    n_par = 2 if (nblocks % 2 == 0 and nblocks >= 2) else 1
    return n_par, nblocks // n_par


def _bn_scale_shift(mean, var, gamma, beta, eps=1e-5):
    scale = gamma / jnp.sqrt(var + eps)
    return scale, beta - mean * scale


def _finalize_stats(s, sq, count):
    tot = jnp.sum(s[:, 0, :], axis=0)
    totsq = jnp.sum(sq[:, 0, :], axis=0)
    mean = tot / count
    # E[x^2]-E[x]^2 in f32 is fine at these magnitudes.
    var = jnp.maximum(totsq / count - mean * mean, 0.0)
    return mean, var


# ---- fused conv1 + downsample (both 1x1x1, same strided input) + BN stats ----
def _dual_gemm_stats_kernel(a_ref, w1_ref, b1_ref, wd_ref, bd_ref, rm_ref,
                            y1_ref, yd_ref, s1_ref, q1_ref, sd_ref, qd_ref):
    @pl.when(pl.program_id(1) == 0)
    def _():
        s1_ref[...] = jnp.zeros_like(s1_ref)
        q1_ref[...] = jnp.zeros_like(q1_ref)
        sd_ref[...] = jnp.zeros_like(sd_ref)
        qd_ref[...] = jnp.zeros_like(qd_ref)

    a = a_ref[...].astype(MXU_DTYPE)
    rm = rm_ref[...]                                  # exclude padded rows from stats

    f1 = y1_ref.shape[1]
    y1 = jnp.dot(a, w1_ref[...].astype(MXU_DTYPE),
                 preferred_element_type=jnp.float32) + b1_ref[...]
    y1_ref[...] = y1
    y1m = y1 * rm
    s1_ref[...] += jnp.sum(y1m, axis=0).reshape(1, 1, f1)
    q1_ref[...] += jnp.sum(y1m * y1m, axis=0).reshape(1, 1, f1)

    fd = yd_ref.shape[1]
    yd = jnp.dot(a, wd_ref[...].astype(MXU_DTYPE),
                 preferred_element_type=jnp.float32) + bd_ref[...]
    yd_ref[...] = yd
    ydm = yd * rm
    sd_ref[...] += jnp.sum(ydm, axis=0).reshape(1, 1, fd)
    qd_ref[...] += jnp.sum(ydm * ydm, axis=0).reshape(1, 1, fd)


def dual_conv_gemm_bn(a, w1, b1, wd, bd, *, tm=None):
    """y1 = a @ w1 + b1,  yd = a @ wd + bd  (single pass over `a`), with both
    outputs' BatchNorm batch mean / biased variance computed in the epilogue."""
    rows, K = a.shape
    F1, Fd = w1.shape[1], wd.shape[1]
    valid_rows = rows
    tm = _pick_tm(rows) if tm is None else tm
    rows_p = _round_up(rows, tm)
    if rows_p != rows:
        a = jnp.pad(a, ((0, rows_p - rows), (0, 0)))
    n_par, n_arb = _grid_split(rows_p // tm)

    rowmask = jnp.asarray(
        (np.arange(rows_p) < valid_rows).astype(np.float32).reshape(rows_p, 1))

    row_map = lambda c, i: (c * n_arb + i, 0)
    rep_map = lambda c, i: (0, 0)
    stat_map = lambda c, i: (c, 0, 0)

    y1, yd, s1, q1, sd, qd = pl.pallas_call(
        _dual_gemm_stats_kernel,
        out_shape=(jax.ShapeDtypeStruct((rows_p, F1), jnp.float32),
                   jax.ShapeDtypeStruct((rows_p, Fd), jnp.float32),
                   jax.ShapeDtypeStruct((n_par, 1, F1), jnp.float32),
                   jax.ShapeDtypeStruct((n_par, 1, F1), jnp.float32),
                   jax.ShapeDtypeStruct((n_par, 1, Fd), jnp.float32),
                   jax.ShapeDtypeStruct((n_par, 1, Fd), jnp.float32)),
        grid_spec=pltpu.PrefetchScalarGridSpec(
            num_scalar_prefetch=0,
            grid=(n_par, n_arb),
            in_specs=[pl.BlockSpec((tm, K), row_map),     # K, F kept at real extent
                      pl.BlockSpec((K, F1), rep_map),
                      pl.BlockSpec((1, F1), rep_map),
                      pl.BlockSpec((K, Fd), rep_map),
                      pl.BlockSpec((1, Fd), rep_map),
                      pl.BlockSpec((tm, 1), row_map)],
            out_specs=(pl.BlockSpec((tm, F1), row_map),
                       pl.BlockSpec((tm, Fd), row_map),
                       pl.BlockSpec((1, 1, F1), stat_map),
                       pl.BlockSpec((1, 1, F1), stat_map),
                       pl.BlockSpec((1, 1, Fd), stat_map),
                       pl.BlockSpec((1, 1, Fd), stat_map))),
        compiler_params=pltpu.CompilerParams(
            dimension_semantics=("parallel", "arbitrary")),
    )(a, w1, b1.reshape(1, F1), wd, bd.reshape(1, Fd), rowmask)

    m1, v1 = _finalize_stats(s1, q1, valid_rows)
    md, vd = _finalize_stats(sd, qd, valid_rows)
    return y1, m1, v1, yd, md, vd


# --- conv3 (1x1x1) GEMM with fused input BN affine + ReLU and fused BN stats ---
def _gemm_act_stats_kernel(a_ref, w_ref, b_ref, sc_ref, sh_ref, rm_ref,
                           y_ref, sum_ref, sq_ref):
    @pl.when(pl.program_id(1) == 0)
    def _():
        sum_ref[...] = jnp.zeros_like(sum_ref)
        sq_ref[...] = jnp.zeros_like(sq_ref)

    a = jnp.maximum(a_ref[...] * sc_ref[...] + sh_ref[...], 0.0)   # fused BN+ReLU
    y = jnp.dot(a.astype(MXU_DTYPE), w_ref[...].astype(MXU_DTYPE),
                preferred_element_type=jnp.float32) + b_ref[...]
    y_ref[...] = y

    f = y_ref.shape[1]
    ym = y * rm_ref[...]
    sum_ref[...] += jnp.sum(ym, axis=0).reshape(1, 1, f)
    sq_ref[...] += jnp.sum(ym * ym, axis=0).reshape(1, 1, f)


def conv_gemm_act_bn(a, w, b, in_scale, in_shift, *, valid_rows=None, tm=None):
    """y = relu(a*scale + shift) @ w + b, plus BN batch stats of y over the
    first `valid_rows` rows, all in one kernel."""
    rows, K = a.shape
    F = w.shape[1]
    valid_rows = rows if valid_rows is None else valid_rows
    tm = _pick_tm(rows) if tm is None else tm
    rows_p = _round_up(rows, tm)
    if rows_p != rows:
        a = jnp.pad(a, ((0, rows_p - rows), (0, 0)))
    n_par, n_arb = _grid_split(rows_p // tm)

    rowmask = jnp.asarray(
        (np.arange(rows_p) < valid_rows).astype(np.float32).reshape(rows_p, 1))

    row_map = lambda c, i: (c * n_arb + i, 0)
    rep_map = lambda c, i: (0, 0)
    stat_map = lambda c, i: (c, 0, 0)

    y, s, sq = pl.pallas_call(
        _gemm_act_stats_kernel,
        out_shape=(jax.ShapeDtypeStruct((rows_p, F), jnp.float32),
                   jax.ShapeDtypeStruct((n_par, 1, F), jnp.float32),
                   jax.ShapeDtypeStruct((n_par, 1, F), jnp.float32)),
        grid_spec=pltpu.PrefetchScalarGridSpec(
            num_scalar_prefetch=0,
            grid=(n_par, n_arb),
            in_specs=[pl.BlockSpec((tm, K), row_map),
                      pl.BlockSpec((K, F), rep_map),
                      pl.BlockSpec((1, F), rep_map),
                      pl.BlockSpec((1, K), rep_map),
                      pl.BlockSpec((1, K), rep_map),
                      pl.BlockSpec((tm, 1), row_map)],
            out_specs=(pl.BlockSpec((tm, F), row_map),
                       pl.BlockSpec((1, 1, F), stat_map),
                       pl.BlockSpec((1, 1, F), stat_map))),
        compiler_params=pltpu.CompilerParams(
            dimension_semantics=("parallel", "arbitrary")),
    )(a, w, b.reshape(1, F), in_scale.reshape(1, K), in_shift.reshape(1, K),
      rowmask)

    mean, var = _finalize_stats(s, sq, valid_rows)
    return y, mean, var


# -------- 3x3x3 conv (pad=1) with fused input BN+ReLU and fused BN stats -----
def _conv3x3x3_bn_kernel(x_ref, w_ref, b_ref, sc_ref, sh_ref, tmask_ref, rm_ref,
                         y_ref, sum_ref, sq_ref,
                         *, cin, halo, tap_offsets, block_rows):
    @pl.when(pl.program_id(1) == 0)
    def _():
        sum_ref[...] = jnp.zeros_like(sum_ref)
        sq_ref[...] = jnp.zeros_like(sq_ref)

    row0 = (pl.program_id(0) * pl.num_programs(1) + pl.program_id(1)) * block_rows
    sc = sc_ref[...]
    sh = sh_ref[...]
    tmask = tmask_ref[...]                          # (block_rows, 27)
    F = y_ref.shape[1]

    acc = jnp.zeros((block_rows, F), jnp.float32)
    for t, off in enumerate(tap_offsets):           # 27 static taps, unrolled
        # shifted in-VMEM slice of the resident conv1 output (no HBM im2col)
        a = x_ref[pl.ds(row0 + halo + off, block_rows), :]
        a = jnp.maximum(a * sc + sh, 0.0)           # fused BN1 affine + ReLU
        a = a * tmask[:, t:t + 1]                   # conv zero padding / row validity
        acc = acc + jnp.dot(a.astype(MXU_DTYPE),
                            w_ref[t * cin:(t + 1) * cin, :].astype(MXU_DTYPE),
                            preferred_element_type=jnp.float32)
    y = acc + b_ref[...]
    y_ref[...] = y

    ym = y * rm_ref[...]
    sum_ref[...] += jnp.sum(ym, axis=0).reshape(1, 1, F)
    sq_ref[...] += jnp.sum(ym * ym, axis=0).reshape(1, 1, F)


def conv3x3x3_bn(x2d, dims, wmat, bias, in_scale, in_shift, *, tm=None):
    """3x3x3 'same' conv over row-flattened activations (rows = n*d*h*w, cols=cin),
    with the previous BN affine+ReLU fused onto the input and the output's BN
    batch statistics fused into the epilogue.  The whole activation stays
    resident in VMEM; each tap is a shifted VMEM slice.
    # TODO(synk): for activations too large to keep resident in VMEM, switch the
    # x BlockSpec to row blocks with an explicit halo DMA."""
    n, d, h, w_sp = dims
    M = n * d * h * w_sp
    cin = x2d.shape[1]
    F = wmat.shape[1]
    x2d = x2d[:M]

    tm = _pick_tm(M) if tm is None else tm
    Mp = _round_up(M, tm)
    n_par, n_arb = _grid_split(Mp // tm)

    Td, Th = h * w_sp, w_sp
    halo = Td + Th + 1
    tap_offsets = tuple((kd - 1) * Td + (kh - 1) * Th + (kw - 1)
                        for kd in range(3) for kh in range(3) for kw in range(3))

    # halo rows keep every shifted slice in range; invalid taps are masked below
    xpad = jnp.pad(x2d, ((halo, halo + (Mp - M)), (0, 0)))
    Rtot = Mp + 2 * halo

    # static per-(row, tap) validity mask (trace-time numpy -> baked constant)
    ridx = np.arange(Mp)
    dd = (ridx % (d * h * w_sp)) // Td
    hh = (ridx % Td) // Th
    ww = ridx % Th
    cols = []
    for kd in range(3):
        for kh in range(3):
            for kw in range(3):
                cols.append((dd + kd - 1 >= 0) & (dd + kd - 1 < d) &
                            (hh + kh - 1 >= 0) & (hh + kh - 1 < h) &
                            (ww + kw - 1 >= 0) & (ww + kw - 1 < w_sp))
    tapmask = jnp.asarray(np.stack(cols, axis=1).astype(np.float32))    # (Mp, 27)
    rowmask = jnp.asarray((ridx < M).astype(np.float32).reshape(Mp, 1))

    row_map = lambda c, i: (c * n_arb + i, 0)
    rep_map = lambda c, i: (0, 0)
    stat_map = lambda c, i: (c, 0, 0)

    y, s, sq = pl.pallas_call(
        functools.partial(_conv3x3x3_bn_kernel, cin=cin, halo=halo,
                          tap_offsets=tap_offsets, block_rows=tm),
        out_shape=(jax.ShapeDtypeStruct((Mp, F), jnp.float32),
                   jax.ShapeDtypeStruct((n_par, 1, F), jnp.float32),
                   jax.ShapeDtypeStruct((n_par, 1, F), jnp.float32)),
        grid_spec=pltpu.PrefetchScalarGridSpec(
            num_scalar_prefetch=0,
            grid=(n_par, n_arb),
            in_specs=[pl.BlockSpec((Rtot, cin), rep_map),    # VMEM-resident input
                      pl.BlockSpec((27 * cin, F), rep_map),
                      pl.BlockSpec((1, F), rep_map),
                      pl.BlockSpec((1, cin), rep_map),
                      pl.BlockSpec((1, cin), rep_map),
                      pl.BlockSpec((tm, 27), row_map),
                      pl.BlockSpec((tm, 1), row_map)],
            out_specs=(pl.BlockSpec((tm, F), row_map),
                       pl.BlockSpec((1, 1, F), stat_map),
                       pl.BlockSpec((1, 1, F), stat_map))),
        compiler_params=pltpu.CompilerParams(
            dimension_semantics=("parallel", "arbitrary")),
    )(xpad, wmat, bias.reshape(1, F), in_scale.reshape(1, cin),
      in_shift.reshape(1, cin), tapmask, rowmask)

    mean, var = _finalize_stats(s, sq, M)
    return y, mean, var


# ------------- final fused dual BN-affine + residual add + ReLU --------------
def _bn_add_relu_kernel(a_ref, sa_ref, ta_ref, b_ref, sb_ref, tb_ref, o_ref):
    y = (a_ref[...] * sa_ref[...] + ta_ref[...] +
         b_ref[...] * sb_ref[...] + tb_ref[...])
    o_ref[...] = jnp.maximum(y, 0.0)


def bn_add_relu(a, sa, ta, b, sb, tb):
    M, F = a.shape
    Mp = _round_up(M, 8)
    if Mp != M:
        a = jnp.pad(a, ((0, Mp - M), (0, 0)))
        b = jnp.pad(b, ((0, Mp - M), (0, 0)))
    # lane-dense repack: (Mp, F) -> (Mp/8, 8F)  (free row-major reshape)
    R, L = Mp // 8, 8 * F
    a8, b8 = a.reshape(R, L), b.reshape(R, L)
    sa8, ta8 = jnp.tile(sa, 8).reshape(1, L), jnp.tile(ta, 8).reshape(1, L)
    sb8, tb8 = jnp.tile(sb, 8).reshape(1, L), jnp.tile(tb, 8).reshape(1, L)

    if R % 8 == 0:
        tr = 8
        while tr * 2 <= 256 and R % (tr * 2) == 0 and R // (tr * 2) >= 2:
            tr *= 2
    else:
        tr = R
    nb = R // tr
    row_map = lambda i: (i, 0)
    rep_map = lambda i: (0, 0)

    out = pl.pallas_call(
        _bn_add_relu_kernel,
        out_shape=jax.ShapeDtypeStruct((R, L), jnp.float32),
        grid_spec=pltpu.PrefetchScalarGridSpec(
            num_scalar_prefetch=0, grid=(nb,),
            in_specs=[pl.BlockSpec((tr, L), row_map),
                      pl.BlockSpec((1, L), rep_map),
                      pl.BlockSpec((1, L), rep_map),
                      pl.BlockSpec((tr, L), row_map),
                      pl.BlockSpec((1, L), rep_map),
                      pl.BlockSpec((1, L), rep_map)],
            out_specs=pl.BlockSpec((tr, L), row_map)),
        compiler_params=pltpu.CompilerParams(
            dimension_semantics=("parallel",)),
    )(a8, sa8, ta8, b8, sb8, tb8)
    return out.reshape(Mp, F)[:M]


# -------------------------- ConvBlock forward --------------------------------
def conv_block_forward(x_ncdhw, p, stride=2):
    x = jnp.transpose(x_ncdhw, (0, 2, 3, 4, 1))            # NCDHW -> NDHWC
    xs = x[:, ::stride, ::stride, ::stride, :]
    n, d, h, w_sp, c = xs.shape
    M = n * d * h * w_sp
    p1 = xs.reshape(M, c)

    f0 = p["w1"].shape[-1]
    f1 = p["w2"].shape[-1]
    f2 = p["w3"].shape[-1]

    # conv1 (1x1x1, stride) + downsample conv (1x1x1, stride), fused single pass
    # over the strided input, with both BN batch stats fused in the epilogue
    y1, m1, v1, ydn, md, vd = dual_conv_gemm_bn(
        p1, p["w1"].reshape(c, f0), p["b1"], p["wd"].reshape(c, f2), p["bd"])
    s1, t1 = _bn_scale_shift(m1, v1, p["g1"], p["be1"])
    sd, td = _bn_scale_shift(md, vd, p["gd"], p["bed"])

    # conv2 (3x3x3, pad=1): BN1 affine + ReLU fused on the input, BN2 stats fused
    y2, m2, v2 = conv3x3x3_bn(y1, (n, d, h, w_sp), p["w2"].reshape(27 * f0, f1),
                              p["b2"], s1, t1)
    s2, t2 = _bn_scale_shift(m2, v2, p["g2"], p["be2"])

    # conv3 (1x1x1): BN2 affine + ReLU fused on the input, BN3 stats fused
    y3, m3, v3 = conv_gemm_act_bn(y2, p["w3"].reshape(f1, f2), p["b3"],
                                  s2, t2, valid_rows=M)
    s3, t3 = _bn_scale_shift(m3, v3, p["g3"], p["be3"])

    # out = ReLU(BN3(net) + BNd(downsample)), fused dual-affine + add + ReLU
    out2d = bn_add_relu(y3[:M], s3, t3, ydn[:M], sd, td)
    out = out2d.reshape(n, d, h, w_sp, f2)
    return jnp.transpose(out, (0, 4, 1, 2, 3))             # NDHWC -> NCDHW


# -------------------- pure-JAX reference (for verification) ------------------
def _ref_conv3d(x, w_dhwio, b, stride=1, pad=0):
    y = lax.conv_general_dilated(
        x, w_dhwio, window_strides=(stride,) * 3, padding=[(pad, pad)] * 3,
        dimension_numbers=("NDHWC", "DHWIO", "NDHWC"))
    return y + b


def _ref_bn(x, gamma, beta, eps=1e-5):
    mean = jnp.mean(x, axis=(0, 1, 2, 3))
    var = jnp.mean((x - mean) ** 2, axis=(0, 1, 2, 3))
    return (x - mean) / jnp.sqrt(var + eps) * gamma + beta


def ref_forward(x_ncdhw, p, stride=2):
    x = jnp.transpose(x_ncdhw, (0, 2, 3, 4, 1))
    y = _ref_conv3d(x, p["w1"], p["b1"], stride=stride)
    y = jax.nn.relu(_ref_bn(y, p["g1"], p["be1"]))
    y = _ref_conv3d(y, p["w2"], p["b2"], pad=1)
    y = jax.nn.relu(_ref_bn(y, p["g2"], p["be2"]))
    y = _ref_conv3d(y, p["w3"], p["b3"])
    y = _ref_bn(y, p["g3"], p["be3"])
    xd = _ref_conv3d(x, p["wd"], p["bd"], stride=stride)
    xd = _ref_bn(xd, p["gd"], p["bed"])
    out = jax.nn.relu(xd + y)
    return jnp.transpose(out, (0, 4, 1, 2, 3))


if __name__ == "__main__":
    N, C, D, H, W = 2, 4, 8, 8, 8
    filters = (8, 8, 16)
    stride = 2

    keys = jax.random.split(jax.random.PRNGKey(0), 9)
    f0, f1, f2 = filters
    # weights stored DHWIO (kd, kh, kw, in, out); BN gamma=1, beta=0 (PyTorch init)
    params = {
        "w1": jax.random.normal(keys[0], (1, 1, 1, C, f0), jnp.float32) * 0.2,
        "b1": jax.random.normal(keys[1], (f0,), jnp.float32) * 0.1,
        "g1": jnp.ones((f0,), jnp.float32), "be1": jnp.zeros((f0,), jnp.float32),
        "w2": jax.random.normal(keys[2], (3, 3, 3, f0, f1), jnp.float32) * 0.1,
        "b2": jax.random.normal(keys[3], (f1,), jnp.float32) * 0.1,
        "g2": jnp.ones((f1,), jnp.float32), "be2": jnp.zeros((f1,), jnp.float32),
        "w3": jax.random.normal(keys[4], (1, 1, 1, f1, f2), jnp.float32) * 0.2,
        "b3": jax.random.normal(keys[5], (f2,), jnp.float32) * 0.1,
        "g3": jnp.ones((f2,), jnp.float32), "be3": jnp.zeros((f2,), jnp.float32),
        "wd": jax.random.normal(keys[6], (1, 1, 1, C, f2), jnp.float32) * 0.2,
        "bd": jax.random.normal(keys[7], (f2,), jnp.float32) * 0.1,
        "gd": jnp.ones((f2,), jnp.float32), "bed": jnp.zeros((f2,), jnp.float32),
    }
    x = jax.random.normal(keys[8], (N, C, D, H, W), jnp.float32)

    fwd = jax.jit(functools.partial(conv_block_forward, stride=stride))
    out = jax.block_until_ready(fwd(x, params))
    ref = jax.block_until_ready(ref_forward(x, params, stride=stride))

    assert out.shape == (N, f2, D // stride, H // stride, W // stride), out.shape
    err = float(jnp.max(jnp.abs(out - ref)))
    assert err < 1e-2, f"max abs err {err}"
    print("KERNEL_OK")
</pallas_src>

<mosaic_0001>
module attributes {stable_mosaic.version = 11 : i64} {
  func.func @_dual_gemm_stats_kernel(%arg0: i32, %arg1: i32, %arg2: memref<64x4xf32, #tpu.memory_space<vmem>>, %arg3: memref<4x8xf32, #tpu.memory_space<vmem>>, %arg4: memref<1x8xf32, #tpu.memory_space<vmem>>, %arg5: memref<4x16xf32, #tpu.memory_space<vmem>>, %arg6: memref<1x16xf32, #tpu.memory_space<vmem>>, %arg7: memref<64x1xf32, #tpu.memory_space<vmem>>, %arg8: memref<64x8xf32, #tpu.memory_space<vmem>>, %arg9: memref<64x16xf32, #tpu.memory_space<vmem>>, %arg10: memref<1x1x8xf32, #tpu.memory_space<vmem>>, %arg11: memref<1x1x8xf32, #tpu.memory_space<vmem>>, %arg12: memref<1x1x16xf32, #tpu.memory_space<vmem>>, %arg13: memref<1x1x16xf32, #tpu.memory_space<vmem>>) attributes {dimension_semantics = [#tpu.dimension_semantics<parallel>, #tpu.dimension_semantics<arbitrary>], iteration_bounds = array<i64: 2, 1>, scalar_prefetch = 0 : i64, scratch_operands = 0 : i64, tpu.core_type = #tpu.core_type<tc>, window_params = [{transform_indices = @transform_0, window_bounds = array<i64: 64, 4>}, {pipeline_mode = #tpu.pipeline_mode<synchronous>, transform_indices = @transform_1, window_bounds = array<i64: 4, 8>}, {pipeline_mode = #tpu.pipeline_mode<synchronous>, transform_indices = @transform_2, window_bounds = array<i64: 1, 8>}, {pipeline_mode = #tpu.pipeline_mode<synchronous>, transform_indices = @transform_3, window_bounds = array<i64: 4, 16>}, {pipeline_mode = #tpu.pipeline_mode<synchronous>, transform_indices = @transform_4, window_bounds = array<i64: 1, 16>}, {transform_indices = @transform_5, window_bounds = array<i64: 64, 1>}, {transform_indices = @transform_6, window_bounds = array<i64: 64, 8>}, {transform_indices = @transform_7, window_bounds = array<i64: 64, 16>}, {transform_indices = @transform_8, window_bounds = array<i64: 1, 1, 8>}, {transform_indices = @transform_9, window_bounds = array<i64: 1, 1, 8>}, {transform_indices = @transform_10, window_bounds = array<i64: 1, 1, 16>}, {transform_indices = @transform_11, window_bounds = array<i64: 1, 1, 16>}]} {
    %c0_i32 = arith.constant 0 : i32
    %0 = arith.cmpi eq, %arg1, %c0_i32 : i32
    %1 = arith.extui %0 : i1 to i32
    %c0_i32_0 = arith.constant 0 : i32
    %2 = arith.cmpi ne, %1, %c0_i32_0 : i32
    scf.if %2 {
      %cst_45 = arith.constant 0.000000e+00 : f32
      %43 = vector.broadcast %cst_45 : f32 to vector<1x1x8xf32>
      %c0_46 = arith.constant 0 : index
      %c0_47 = arith.constant 0 : index
      %c0_48 = arith.constant 0 : index
      %44 = vector.load %arg10[%c0_46, %c0_47, %c0_48] : memref<1x1x8xf32, #tpu.memory_space<vmem>>, vector<1x1x8xf32>
      tpu.vector_store %arg10[%c0_46, %c0_47, %c0_48], %43 {strides = array<i32>} : memref<1x1x8xf32, #tpu.memory_space<vmem>>, vector<1x1x8xf32>,
      %cst_49 = arith.constant 0.000000e+00 : f32
      %45 = vector.broadcast %cst_49 : f32 to vector<1x1x8xf32>
      %c0_50 = arith.constant 0 : index
      %c0_51 = arith.constant 0 : index
      %c0_52 = arith.constant 0 : index
      %46 = vector.load %arg11[%c0_50, %c0_51, %c0_52] : memref<1x1x8xf32, #tpu.memory_space<vmem>>, vector<1x1x8xf32>
      tpu.vector_store %arg11[%c0_50, %c0_51, %c0_52], %45 {strides = array<i32>} : memref<1x1x8xf32, #tpu.memory_space<vmem>>, vector<1x1x8xf32>,
      %cst_53 = arith.constant 0.000000e+00 : f32
      %47 = vector.broadcast %cst_53 : f32 to vector<1x1x16xf32>
      %c0_54 = arith.constant 0 : index
      %c0_55 = arith.constant 0 : index
      %c0_56 = arith.constant 0 : index
      %48 = vector.load %arg12[%c0_54, %c0_55, %c0_56] : memref<1x1x16xf32, #tpu.memory_space<vmem>>, vector<1x1x16xf32>
      tpu.vector_store %arg12[%c0_54, %c0_55, %c0_56], %47 {strides = array<i32>} : memref<1x1x16xf32, #tpu.memory_space<vmem>>, vector<1x1x16xf32>,
      %cst_57 = arith.constant 0.000000e+00 : f32
      %49 = vector.broadcast %cst_57 : f32 to vector<1x1x16xf32>
      %c0_58 = arith.constant 0 : index
      %c0_59 = arith.constant 0 : index
      %c0_60 = arith.constant 0 : index
      %50 = vector.load %arg13[%c0_58, %c0_59, %c0_60] : memref<1x1x16xf32, #tpu.memory_space<vmem>>, vector<1x1x16xf32>
      tpu.vector_store %arg13[%c0_58, %c0_59, %c0_60], %49 {strides = array<i32>} : memref<1x1x16xf32, #tpu.memory_space<vmem>>, vector<1x1x16xf32>,
    } else {
    }
    %c0 = arith.constant 0 : index
    %c0_1 = arith.constant 0 : index
    %3 = vector.load %arg2[%c0, %c0_1] : memref<64x4xf32, #tpu.memory_space<vmem>>, vector<64x4xf32>
    %c0_2 = arith.constant 0 : index
    %c0_3 = arith.constant 0 : index
    %4 = vector.load %arg7[%c0_2, %c0_3] : memref<64x1xf32, #tpu.memory_space<vmem>>, vector<64x1xf32>
    %c0_4 = arith.constant 0 : index
    %c0_5 = arith.constant 0 : index
    %5 = vector.load %arg3[%c0_4, %c0_5] : memref<4x8xf32, #tpu.memory_space<vmem>>, vector<4x8xf32>
    %cst = arith.constant dense<0.000000e+00> : vector<64x8xf32>
    %6 = tpu.matmul %3, %5, %cst {dimension_numbers = #tpu.dot_dimension_numbers<[1], [0], [0], [1], [0, 0, 1, 1], [], []>} : vector<64x4xf32>, vector<4x8xf32>, vector<64x8xf32> -> vector<64x8xf32>
    %c0_6 = arith.constant 0 : index
    %c0_7 = arith.constant 0 : index
    %7 = vector.load %arg4[%c0_6, %c0_7] : memref<1x8xf32, #tpu.memory_space<vmem>>, vector<1x8xf32>
    %8 = vector.broadcast %7 : vector<1x8xf32> to vector<64x8xf32>
    %9 = arith.addf %6, %8 : vector<64x8xf32>
    %c0_8 = arith.constant 0 : index
    %c0_9 = arith.constant 0 : index
    %10 = vector.load %arg8[%c0_8, %c0_9] : memref<64x8xf32, #tpu.memory_space<vmem>>, vector<64x8xf32>
    tpu.vector_store %arg8[%c0_8, %c0_9], %9 {strides = array<i32>} : memref<64x8xf32, #tpu.memory_space<vmem>>, vector<64x8xf32>,
    %11 = vector.broadcast %4 : vector<64x1xf32> to vector<64x8xf32>
    %12 = arith.mulf %9, %11 : vector<64x8xf32>
    %c0_10 = arith.constant 0 : index
    %c0_11 = arith.constant 0 : index
    %c0_12 = arith.constant 0 : index
    %13 = vector.load %arg10[%c0_10, %c0_11, %c0_12] : memref<1x1x8xf32, #tpu.memory_space<vmem>>, vector<1x1x8xf32>
    %cst_13 = arith.constant dense<0.000000e+00> : vector<8xf32>
    %14 = vector.multi_reduction <add>, %12, %cst_13 [0] : vector<64x8xf32> to vector<8xf32>
    %15 = vector.shape_cast %14 : vector<8xf32> to vector<1x1x8xf32>
    %16 = arith.addf %13, %15 : vector<1x1x8xf32>
    %c0_14 = arith.constant 0 : index
    %c0_15 = arith.constant 0 : index
    %c0_16 = arith.constant 0 : index
    %17 = vector.load %arg10[%c0_14, %c0_15, %c0_16] : memref<1x1x8xf32, #tpu.memory_space<vmem>>, vector<1x1x8xf32>
    tpu.vector_store %arg10[%c0_14, %c0_15, %c0_16], %16 {strides = array<i32>} : memref<1x1x8xf32, #tpu.memory_space<vmem>>, vector<1x1x8xf32>,
    %c0_17 = arith.constant 0 : index
    %c0_18 = arith.constant 0 : index
    %c0_19 = arith.constant 0 : index
    %18 = vector.load %arg11[%c0_17, %c0_18, %c0_19] : memref<1x1x8xf32, #tpu.memory_space<vmem>>, vector<1x1x8xf32>
    %19 = arith.mulf %12, %12 : vector<64x8xf32>
    %cst_20 = arith.constant dense<0.000000e+00> : vector<8xf32>
    %20 = vector.multi_reduction <add>, %19, %cst_20 [0] : vector<64x8xf32> to vector<8xf32>
    %21 = vector.shape_cast %20 : vector<8xf32> to vector<1x1x8xf32>
    %22 = arith.addf %18, %21 : vector<1x1x8xf32>
    %c0_21 = arith.constant 0 : index
    %c0_22 = arith.constant 0 : index
    %c0_23 = arith.constant 0 : index
    %23 = vector.load %arg11[%c0_21, %c0_22, %c0_23] : memref<1x1x8xf32, #tpu.memory_space<vmem>>, vector<1x1x8xf32>
    tpu.vector_store %arg11[%c0_21, %c0_22, %c0_23], %22 {strides = array<i32>} : memref<1x1x8xf32, #tpu.memory_space<vmem>>, vector<1x1x8xf32>,
    %c0_24 = arith.constant 0 : index
    %c0_25 = arith.constant 0 : index
    %24 = vector.load %arg5[%c0_24, %c0_25] : memref<4x16xf32, #tpu.memory_space<vmem>>, vector<4x16xf32>
    %cst_26 = arith.constant dense<0.000000e+00> : vector<64x16xf32>
    %25 = tpu.matmul %3, %24, %cst_26 {dimension_numbers = #tpu.dot_dimension_numbers<[1], [0], [0], [1], [0, 0, 1, 1], [], []>} : vector<64x4xf32>, vector<4x16xf32>, vector<64x16xf32> -> vector<64x16xf32>
    %c0_27 = arith.constant 0 : index
    %c0_28 = arith.constant 0 : index
    %26 = vector.load %arg6[%c0_27, %c0_28] : memref<1x16xf32, #tpu.memory_space<vmem>>, vector<1x16xf32>
    %27 = vector.broadcast %26 : vector<1x16xf32> to vector<64x16xf32>
    %28 = arith.addf %25, %27 : vector<64x16xf32>
    %c0_29 = arith.constant 0 : index
    %c0_30 = arith.constant 0 : index
    %29 = vector.load %arg9[%c0_29, %c0_30] : memref<64x16xf32, #tpu.memory_space<vmem>>, vector<64x16xf32>
    tpu.vector_store %arg9[%c0_29, %c0_30], %28 {strides = array<i32>} : memref<64x16xf32, #tpu.memory_space<vmem>>, vector<64x16xf32>,
    %30 = vector.broadcast %4 : vector<64x1xf32> to vector<64x16xf32>
    %31 = arith.mulf %28, %30 : vector<64x16xf32>
    %c0_31 = arith.constant 0 : index
    %c0_32 = arith.constant 0 : index
    %c0_33 = arith.constant 0 : index
    %32 = vector.load %arg12[%c0_31, %c0_32, %c0_33] : memref<1x1x16xf32, #tpu.memory_space<vmem>>, vector<1x1x16xf32>
    %cst_34 = arith.constant dense<0.000000e+00> : vector<16xf32>
    %33 = vector.multi_reduction <add>, %31, %cst_34 [0] : vector<64x16xf32> to vector<16xf32>
    %34 = vector.shape_cast %33 : vector<16xf32> to vector<1x1x16xf32>
    %35 = arith.addf %32, %34 : vector<1x1x16xf32>
    %c0_35 = arith.constant 0 : index
    %c0_36 = arith.constant 0 : index
    %c0_37 = arith.constant 0 : index
    %36 = vector.load %arg12[%c0_35, %c0_36, %c0_37] : memref<1x1x16xf32, #tpu.memory_space<vmem>>, vector<1x1x16xf32>
    tpu.vector_store %arg12[%c0_35, %c0_36, %c0_37], %35 {strides = array<i32>} : memref<1x1x16xf32, #tpu.memory_space<vmem>>, vector<1x1x16xf32>,
    %c0_38 = arith.constant 0 : index
    %c0_39 = arith.constant 0 : index
    %c0_40 = arith.constant 0 : index
    %37 = vector.load %arg13[%c0_38, %c0_39, %c0_40] : memref<1x1x16xf32, #tpu.memory_space<vmem>>, vector<1x1x16xf32>
    %38 = arith.mulf %31, %31 : vector<64x16xf32>
    %cst_41 = arith.constant dense<0.000000e+00> : vector<16xf32>
    %39 = vector.multi_reduction <add>, %38, %cst_41 [0] : vector<64x16xf32> to vector<16xf32>
    %40 = vector.shape_cast %39 : vector<16xf32> to vector<1x1x16xf32>
    %41 = arith.addf %37, %40 : vector<1x1x16xf32>
    %c0_42 = arith.constant 0 : index
    %c0_43 = arith.constant 0 : index
    %c0_44 = arith.constant 0 : index
    %42 = vector.load %arg13[%c0_42, %c0_43, %c0_44] : memref<1x1x16xf32, #tpu.memory_space<vmem>>, vector<1x1x16xf32>
    tpu.vector_store %arg13[%c0_42, %c0_43, %c0_44], %41 {strides = array<i32>} : memref<1x1x16xf32, #tpu.memory_space<vmem>>, vector<1x1x16xf32>,
    return
  }
  func.func @transform_0(%arg0: i32, %arg1: i32) -> (i32, i32) {
    %c1_i32 = arith.constant 1 : i32
    %0 = arith.muli %arg0, %c1_i32 : i32
    %1 = arith.addi %0, %arg1 : i32
    %c0_i32 = arith.constant 0 : i32
    %c0_i32_0 = arith.constant 0 : i32
    return %1, %c0_i32 : i32, i32
  }
  func.func @transform_1(%arg0: i32, %arg1: i32) -> (i32, i32) {
    %c0_i32 = arith.constant 0 : i32
    %c0_i32_0 = arith.constant 0 : i32
    %c0_i32_1 = arith.constant 0 : i32
    return %c0_i32, %c0_i32_0 : i32, i32
  }
  func.func @transform_2(%arg0: i32, %arg1: i32) -> (i32, i32) {
    %c0_i32 = arith.constant 0 : i32
    %c0_i32_0 = arith.constant 0 : i32
    %c0_i32_1 = arith.constant 0 : i32
    return %c0_i32, %c0_i32_0 : i32, i32
  }
  func.func @transform_3(%arg0: i32, %arg1: i32) -> (i32, i32) {
    %c0_i32 = arith.constant 0 : i32
    %c0_i32_0 = arith.constant 0 : i32
    %c0_i32_1 = arith.constant 0 : i32
    return %c0_i32, %c0_i32_0 : i32, i32
  }
  func.func @transform_4(%arg0: i32, %arg1: i32) -> (i32, i32) {
    %c0_i32 = arith.constant 0 : i32
    %c0_i32_0 = arith.constant 0 : i32
    %c0_i32_1 = arith.constant 0 : i32
    return %c0_i32, %c0_i32_0 : i32, i32
  }
  func.func @transform_5(%arg0: i32, %arg1: i32) -> (i32, i32) {
    %c1_i32 = arith.constant 1 : i32
    %0 = arith.muli %arg0, %c1_i32 : i32
    %1 = arith.addi %0, %arg1 : i32
    %c0_i32 = arith.constant 0 : i32
    %c0_i32_0 = arith.constant 0 : i32
    return %1, %c0_i32 : i32, i32
  }
  func.func @transform_6(%arg0: i32, %arg1: i32) -> (i32, i32) {
    %c1_i32 = arith.constant 1 : i32
    %0 = arith.muli %arg0, %c1_i32 : i32
    %1 = arith.addi %0, %arg1 : i32
    %c0_i32 = arith.constant 0 : i32
    %c0_i32_0 = arith.constant 0 : i32
    return %1, %c0_i32 : i32, i32
  }
  func.func @transform_7(%arg0: i32, %arg1: i32) -> (i32, i32) {
    %c1_i32 = arith.constant 1 : i32
    %0 = arith.muli %arg0, %c1_i32 : i32
    %1 = arith.addi %0, %arg1 : i32
    %c0_i32 = arith.constant 0 : i32
    %c0_i32_0 = arith.constant 0 : i32
    return %1, %c0_i32 : i32, i32
  }
  func.func @transform_8(%arg0: i32, %arg1: i32) -> (i32, i32, i32) {
    %c0_i32 = arith.constant 0 : i32
    %c0_i32_0 = arith.constant 0 : i32
    %c0_i32_1 = arith.constant 0 : i32
    return %arg0, %c0_i32, %c0_i32_0 : i32, i32, i32
  }
  func.func @transform_9(%arg0: i32, %arg1: i32) -> (i32, i32, i32) {
    %c0_i32 = arith.constant 0 : i32
    %c0_i32_0 = arith.constant 0 : i32
    %c0_i32_1 = arith.constant 0 : i32
    return %arg0, %c0_i32, %c0_i32_0 : i32, i32, i32
  }
  func.func @transform_10(%arg0: i32, %arg1: i32) -> (i32, i32, i32) {
    %c0_i32 = arith.constant 0 : i32
    %c0_i32_0 = arith.constant 0 : i32
    %c0_i32_1 = arith.constant 0 : i32
    return %arg0, %c0_i32, %c0_i32_0 : i32, i32, i32
  }
  func.func @transform_11(%arg0: i32, %arg1: i32) -> (i32, i32, i32) {
    %c0_i32 = arith.constant 0 : i32
    %c0_i32_0 = arith.constant 0 : i32
    %c0_i32_1 = arith.constant 0 : i32
    return %arg0, %c0_i32, %c0_i32_0 : i32, i32, i32
  }
}

module attributes {stable_mosaic.version = 11 : i64} {
  func.func @_gemm_act_stats_kernel(%arg0: i32, %arg1: i32, %arg2: memref<64x8xf32, #tpu.memory_space<vmem>>, %arg3: memref<8x16xf32, #tpu.memory_space<vmem>>, %arg4: memref<1x16xf32, #tpu.memory_space<vmem>>, %arg5: memref<1x8xf32, #tpu.memory_space<vmem>>, %arg6: memref<1x8xf32, #tpu.memory_space<vmem>>, %arg7: memref<64x1xf32, #tpu.memory_space<vmem>>, %arg8: memref<64x16xf32, #tpu.memory_space<vmem>>, %arg9: memref<1x1x16xf32, #tpu.memory_space<vmem>>, %arg10: memref<1x1x16xf32, #tpu.memory_space<vmem>>) attributes {dimension_semantics = [#tpu.dimension_semantics<parallel>, #tpu.dimension_semantics<arbitrary>], iteration_bounds = array<i64: 2, 1>, scalar_prefetch = 0 : i64, scratch_operands = 0 : i64, tpu.core_type = #tpu.core_type<tc>, window_params = [{transform_indices = @transform_0, window_bounds = array<i64: 64, 8>}, {pipeline_mode = #tpu.pipeline_mode<synchronous>, transform_indices = @transform_1, window_bounds = array<i64: 8, 16>}, {pipeline_mode = #tpu.pipeline_mode<synchronous>, transform_indices = @transform_2, window_bounds = array<i64: 1, 16>}, {pipeline_mode = #tpu.pipeline_mode<synchronous>, transform_indices = @transform_3, window_bounds = array<i64: 1, 8>}, {pipeline_mode = #tpu.pipeline_mode<synchronous>, transform_indices = @transform_4, window_bounds = array<i64: 1, 8>}, {transform_indices = @transform_5, window_bounds = array<i64: 64, 1>}, {transform_indices = @transform_6, window_bounds = array<i64: 64, 16>}, {transform_indices = @transform_7, window_bounds = array<i64: 1, 1, 16>}, {transform_indices = @transform_8, window_bounds = array<i64: 1, 1, 16>}]} {
    %c0_i32 = arith.constant 0 : i32
    %0 = arith.cmpi eq, %arg1, %c0_i32 : i32
    %1 = arith.extui %0 : i1 to i32
    %c0_i32_0 = arith.constant 0 : i32
    %2 = arith.cmpi ne, %1, %c0_i32_0 : i32
    scf.if %2 {
      %cst_29 = arith.constant 0.000000e+00 : f32
      %32 = vector.broadcast %cst_29 : f32 to vector<1x1x16xf32>
      %c0_30 = arith.constant 0 : index
      %c0_31 = arith.constant 0 : index
      %c0_32 = arith.constant 0 : index
      %33 = vector.load %arg9[%c0_30, %c0_31, %c0_32] : memref<1x1x16xf32, #tpu.memory_space<vmem>>, vector<1x1x16xf32>
      tpu.vector_store %arg9[%c0_30, %c0_31, %c0_32], %32 {strides = array<i32>} : memref<1x1x16xf32, #tpu.memory_space<vmem>>, vector<1x1x16xf32>,
      %cst_33 = arith.constant 0.000000e+00 : f32
      %34 = vector.broadcast %cst_33 : f32 to vector<1x1x16xf32>
      %c0_34 = arith.constant 0 : index
      %c0_35 = arith.constant 0 : index
      %c0_36 = arith.constant 0 : index
      %35 = vector.load %arg10[%c0_34, %c0_35, %c0_36] : memref<1x1x16xf32, #tpu.memory_space<vmem>>, vector<1x1x16xf32>
      tpu.vector_store %arg10[%c0_34, %c0_35, %c0_36], %34 {strides = array<i32>} : memref<1x1x16xf32, #tpu.memory_space<vmem>>, vector<1x1x16xf32>,
    } else {
    }
    %c0 = arith.constant 0 : index
    %c0_1 = arith.constant 0 : index
    %3 = vector.load %arg2[%c0, %c0_1] : memref<64x8xf32, #tpu.memory_space<vmem>>, vector<64x8xf32>
    %c0_2 = arith.constant 0 : index
    %c0_3 = arith.constant 0 : index
    %4 = vector.load %arg5[%c0_2, %c0_3] : memref<1x8xf32, #tpu.memory_space<vmem>>, vector<1x8xf32>
    %5 = vector.broadcast %4 : vector<1x8xf32> to vector<64x8xf32>
    %6 = arith.mulf %3, %5 : vector<64x8xf32>
    %c0_4 = arith.constant 0 : index
    %c0_5 = arith.constant 0 : index
    %7 = vector.load %arg6[%c0_4, %c0_5] : memref<1x8xf32, #tpu.memory_space<vmem>>, vector<1x8xf32>
    %8 = vector.broadcast %7 : vector<1x8xf32> to vector<64x8xf32>
    %9 = arith.addf %6, %8 : vector<64x8xf32>
    %cst = arith.constant 0.000000e+00 : f32
    %10 = vector.broadcast %cst : f32 to vector<64x8xf32>
    %11 = arith.maximumf %9, %10 : vector<64x8xf32>
    %c0_6 = arith.constant 0 : index
    %c0_7 = arith.constant 0 : index
    %12 = vector.load %arg3[%c0_6, %c0_7] : memref<8x16xf32, #tpu.memory_space<vmem>>, vector<8x16xf32>
    %cst_8 = arith.constant dense<0.000000e+00> : vector<64x16xf32>
    %13 = tpu.matmul %11, %12, %cst_8 {dimension_numbers = #tpu.dot_dimension_numbers<[1], [0], [0], [1], [0, 0, 1, 1], [], []>} : vector<64x8xf32>, vector<8x16xf32>, vector<64x16xf32> -> vector<64x16xf32>
    %c0_9 = arith.constant 0 : index
    %c0_10 = arith.constant 0 : index
    %14 = vector.load %arg4[%c0_9, %c0_10] : memref<1x16xf32, #tpu.memory_space<vmem>>, vector<1x16xf32>
    %15 = vector.broadcast %14 : vector<1x16xf32> to vector<64x16xf32>
    %16 = arith.addf %13, %15 : vector<64x16xf32>
    %c0_11 = arith.constant 0 : index
    %c0_12 = arith.constant 0 : index
    %17 = vector.load %arg8[%c0_11, %c0_12] : memref<64x16xf32, #tpu.memory_space<vmem>>, vector<64x16xf32>
    tpu.vector_store %arg8[%c0_11, %c0_12], %16 {strides = array<i32>} : memref<64x16xf32, #tpu.memory_space<vmem>>, vector<64x16xf32>,
    %c0_13 = arith.constant 0 : index
    %c0_14 = arith.constant 0 : index
    %18 = vector.load %arg7[%c0_13, %c0_14] : memref<64x1xf32, #tpu.memory_space<vmem>>, vector<64x1xf32>
    %19 = vector.broadcast %18 : vector<64x1xf32> to vector<64x16xf32>
    %20 = arith.mulf %16, %19 : vector<64x16xf32>
    %c0_15 = arith.constant 0 : index
    %c0_16 = arith.constant 0 : index
    %c0_17 = arith.constant 0 : index
    %21 = vector.load %arg9[%c0_15, %c0_16, %c0_17] : memref<1x1x16xf32, #tpu.memory_space<vmem>>, vector<1x1x16xf32>
    %cst_18 = arith.constant dense<0.000000e+00> : vector<16xf32>
    %22 = vector.multi_reduction <add>, %20, %cst_18 [0] : vector<64x16xf32> to vector<16xf32>
    %23 = vector.shape_cast %22 : vector<16xf32> to vector<1x1x16xf32>
    %24 = arith.addf %21, %23 : vector<1x1x16xf32>
    %c0_19 = arith.constant 0 : index
    %c0_20 = arith.constant 0 : index
    %c0_21 = arith.constant 0 : index
    %25 = vector.load %arg9[%c0_19, %c0_20, %c0_21] : memref<1x1x16xf32, #tpu.memory_space<vmem>>, vector<1x1x16xf32>
    tpu.vector_store %arg9[%c0_19, %c0_20, %c0_21], %24 {strides = array<i32>} : memref<1x1x16xf32, #tpu.memory_space<vmem>>, vector<1x1x16xf32>,
    %c0_22 = arith.constant 0 : index
    %c0_23 = arith.constant 0 : index
    %c0_24 = arith.constant 0 : index
    %26 = vector.load %arg10[%c0_22, %c0_23, %c0_24] : memref<1x1x16xf32, #tpu.memory_space<vmem>>, vector<1x1x16xf32>
    %27 = arith.mulf %20, %20 : vector<64x16xf32>
    %cst_25 = arith.constant dense<0.000000e+00> : vector<16xf32>
    %28 = vector.multi_reduction <add>, %27, %cst_25 [0] : vector<64x16xf32> to vector<16xf32>
    %29 = vector.shape_cast %28 : vector<16xf32> to vector<1x1x16xf32>
    %30 = arith.addf %26, %29 : vector<1x1x16xf32>
    %c0_26 = arith.constant 0 : index
    %c0_27 = arith.constant 0 : index
    %c0_28 = arith.constant 0 : index
    %31 = vector.load %arg10[%c0_26, %c0_27, %c0_28] : memref<1x1x16xf32, #tpu.memory_space<vmem>>, vector<1x1x16xf32>
    tpu.vector_store %arg10[%c0_26, %c0_27, %c0_28], %30 {strides = array<i32>} : memref<1x1x16xf32, #tpu.memory_space<vmem>>, vector<1x1x16xf32>,
    return
  }
  func.func @transform_0(%arg0: i32, %arg1: i32) -> (i32, i32) {
    %c1_i32 = arith.constant 1 : i32
    %0 = arith.muli %arg0, %c1_i32 : i32
    %1 = arith.addi %0, %arg1 : i32
    %c0_i32 = arith.constant 0 : i32
    %c0_i32_0 = arith.constant 0 : i32
    return %1, %c0_i32 : i32, i32
  }
  func.func @transform_1(%arg0: i32, %arg1: i32) -> (i32, i32) {
    %c0_i32 = arith.constant 0 : i32
    %c0_i32_0 = arith.constant 0 : i32
    %c0_i32_1 = arith.constant 0 : i32
    return %c0_i32, %c0_i32_0 : i32, i32
  }
  func.func @transform_2(%arg0: i32, %arg1: i32) -> (i32, i32) {
    %c0_i32 = arith.constant 0 : i32
    %c0_i32_0 = arith.constant 0 : i32
    %c0_i32_1 = arith.constant 0 : i32
    return %c0_i32, %c0_i32_0 : i32, i32
  }
  func.func @transform_3(%arg0: i32, %arg1: i32) -> (i32, i32) {
    %c0_i32 = arith.constant 0 : i32
    %c0_i32_0 = arith.constant 0 : i32
    %c0_i32_1 = arith.constant 0 : i32
    return %c0_i32, %c0_i32_0 : i32, i32
  }
  func.func @transform_4(%arg0: i32, %arg1: i32) -> (i32, i32) {
    %c0_i32 = arith.constant 0 : i32
    %c0_i32_0 = arith.constant 0 : i32
    %c0_i32_1 = arith.constant 0 : i32
    return %c0_i32, %c0_i32_0 : i32, i32
  }
  func.func @transform_5(%arg0: i32, %arg1: i32) -> (i32, i32) {
    %c1_i32 = arith.constant 1 : i32
    %0 = arith.muli %arg0, %c1_i32 : i32
    %1 = arith.addi %0, %arg1 : i32
    %c0_i32 = arith.constant 0 : i32
    %c0_i32_0 = arith.constant 0 : i32
    return %1, %c0_i32 : i32, i32
  }
  func.func @transform_6(%arg0: i32, %arg1: i32) -> (i32, i32) {
    %c1_i32 = arith.constant 1 : i32
    %0 = arith.muli %arg0, %c1_i32 : i32
    %1 = arith.addi %0, %arg1 : i32
    %c0_i32 = arith.constant 0 : i32
    %c0_i32_0 = arith.constant 0 : i32
    return %1, %c0_i32 : i32, i32
  }
  func.func @transform_7(%arg0: i32, %arg1: i32) -> (i32, i32, i32) {
    %c0_i32 = arith.constant 0 : i32
    %c0_i32_0 = arith.constant 0 : i32
    %c0_i32_1 = arith.constant 0 : i32
    return %arg0, %c0_i32, %c0_i32_0 : i32, i32, i32
  }
  func.func @transform_8(%arg0: i32, %arg1: i32) -> (i32, i32, i32) {
    %c0_i32 = arith.constant 0 : i32
    %c0_i32_0 = arith.constant 0 : i32
    %c0_i32_1 = arith.constant 0 : i32
    return %arg0, %c0_i32, %c0_i32_0 : i32, i32, i32
  }
}

module attributes {stable_mosaic.version = 11 : i64} {
  func.func @_bn_add_relu_kernel(%arg0: i32, %arg1: memref<8x128xf32, #tpu.memory_space<vmem>>, %arg2: memref<1x128xf32, #tpu.memory_space<vmem>>, %arg3: memref<1x128xf32, #tpu.memory_space<vmem>>, %arg4: memref<8x128xf32, #tpu.memory_space<vmem>>, %arg5: memref<1x128xf32, #tpu.memory_space<vmem>>, %arg6: memref<1x128xf32, #tpu.memory_space<vmem>>, %arg7: memref<8x128xf32, #tpu.memory_space<vmem>>) attributes {dimension_semantics = [#tpu.dimension_semantics<parallel>], iteration_bounds = array<i64: 2>, scalar_prefetch = 0 : i64, scratch_operands = 0 : i64, tpu.core_type = #tpu.core_type<tc>, window_params = [{transform_indices = @transform_0, window_bounds = array<i64: 8, 128>}, {pipeline_mode = #tpu.pipeline_mode<synchronous>, transform_indices = @transform_1, window_bounds = array<i64: 1, 128>}, {pipeline_mode = #tpu.pipeline_mode<synchronous>, transform_indices = @transform_2, window_bounds = array<i64: 1, 128>}, {transform_indices = @transform_3, window_bounds = array<i64: 8, 128>}, {pipeline_mode = #tpu.pipeline_mode<synchronous>, transform_indices = @transform_4, window_bounds = array<i64: 1, 128>}, {pipeline_mode = #tpu.pipeline_mode<synchronous>, transform_indices = @transform_5, window_bounds = array<i64: 1, 128>}, {transform_indices = @transform_6, window_bounds = array<i64: 8, 128>}]} {
    %c0 = arith.constant 0 : index
    %c0_0 = arith.constant 0 : index
    %0 = vector.load %arg1[%c0, %c0_0] : memref<8x128xf32, #tpu.memory_space<vmem>>, vector<8x128xf32>
    %c0_1 = arith.constant 0 : index
    %c0_2 = arith.constant 0 : index
    %1 = vector.load %arg2[%c0_1, %c0_2] : memref<1x128xf32, #tpu.memory_space<vmem>>, vector<1x128xf32>
    %2 = vector.broadcast %1 : vector<1x128xf32> to vector<8x128xf32>
    %3 = arith.mulf %0, %2 : vector<8x128xf32>
    %c0_3 = arith.constant 0 : index
    %c0_4 = arith.constant 0 : index
    %4 = vector.load %arg3[%c0_3, %c0_4] : memref<1x128xf32, #tpu.memory_space<vmem>>, vector<1x128xf32>
    %5 = vector.broadcast %4 : vector<1x128xf32> to vector<8x128xf32>
    %6 = arith.addf %3, %5 : vector<8x128xf32>
    %c0_5 = arith.constant 0 : index
    %c0_6 = arith.constant 0 : index
    %7 = vector.load %arg4[%c0_5, %c0_6] : memref<8x128xf32, #tpu.memory_space<vmem>>, vector<8x128xf32>
    %c0_7 = arith.constant 0 : index
    %c0_8 = arith.constant 0 : index
    %8 = vector.load %arg5[%c0_7, %c0_8] : memref<1x128xf32, #tpu.memory_space<vmem>>, vector<1x128xf32>
    %9 = vector.broadcast %8 : vector<1x128xf32> to vector<8x128xf32>
    %10 = arith.mulf %7, %9 : vector<8x128xf32>
    %11 = arith.addf %6, %10 : vector<8x128xf32>
    %c0_9 = arith.constant 0 : index
    %c0_10 = arith.constant 0 : index
    %12 = vector.load %arg6[%c0_9, %c0_10] : memref<1x128xf32, #tpu.memory_space<vmem>>, vector<1x128xf32>
    %13 = vector.broadcast %12 : vector<1x128xf32> to vector<8x128xf32>
    %14 = arith.addf %11, %13 : vector<8x128xf32>
    %cst = arith.constant 0.000000e+00 : f32
    %15 = vector.broadcast %cst : f32 to vector<8x128xf32>
    %16 = arith.maximumf %14, %15 : vector<8x128xf32>
    %c0_11 = arith.constant 0 : index
    %c0_12 = arith.constant 0 : index
    %17 = vector.load %arg7[%c0_11, %c0_12] : memref<8x128xf32, #tpu.memory_space<vmem>>, vector<8x128xf32>
    tpu.vector_store %arg7[%c0_11, %c0_12], %16 {strides = array<i32>} : memref<8x128xf32, #tpu.memory_space<vmem>>, vector<8x128xf32>,
    return
  }
  func.func @transform_0(%arg0: i32) -> (i32, i32) {
    %c0_i32 = arith.constant 0 : i32
    %c0_i32_0 = arith.constant 0 : i32
    return %arg0, %c0_i32 : i32, i32
  }
  func.func @transform_1(%arg0: i32) -> (i32, i32) {
    %c0_i32 = arith.constant 0 : i32
    %c0_i32_0 = arith.constant 0 : i32
    %c0_i32_1 = arith.constant 0 : i32
    return %c0_i32, %c0_i32_0 : i32, i32
  }
  func.func @transform_2(%arg0: i32) -> (i32, i32) {
    %c0_i32 = arith.constant 0 : i32
    %c0_i32_0 = arith.constant 0 : i32
    %c0_i32_1 = arith.constant 0 : i32
    return %c0_i32, %c0_i32_0 : i32, i32
  }
  func.func @transform_3(%arg0: i32) -> (i32, i32) {
    %c0_i32 = arith.constant 0 : i32
    %c0_i32_0 = arith.constant 0 : i32
    return %arg0, %c0_i32 : i32, i32
  }
  func.func @transform_4(%arg0: i32) -> (i32, i32) {
    %c0_i32 = arith.constant 0 : i32
    %c0_i32_0 = arith.constant 0 : i32
    %c0_i32_1 = arith.constant 0 : i32
    return %c0_i32, %c0_i32_0 : i32, i32
  }
  func.func @transform_5(%arg0: i32) -> (i32, i32) {
    %c0_i32 = arith.constant 0 : i32
    %c0_i32_0 = arith.constant 0 : i32
    %c0_i32_1 = arith.constant 0 : i32
    return %c0_i32, %c0_i32_0 : i32, i32
  }
  func.func @transform_6(%arg0: i32) -> (i32, i32) {
    %c0_i32 = arith.constant 0 : i32
    %c0_i32_0 = arith.constant 0 : i32
    return %arg0, %c0_i32 : i32, i32
  }
}

module attributes {stable_mosaic.version = 11 : i64} {
  func.func @_conv3x3x3_bn_kernel(%arg0: i32, %arg1: i32, %arg2: memref<170x8xf32, #tpu.memory_space<vmem>>, %arg3: memref<216x8xf32, #tpu.memory_space<vmem>>, %arg4: memref<1x8xf32, #tpu.memory_space<vmem>>, %arg5: memref<1x8xf32, #tpu.memory_space<vmem>>, %arg6: memref<1x8xf32, #tpu.memory_space<vmem>>, %arg7: memref<64x27xf32, #tpu.memory_space<vmem>>, %arg8: memref<64x1xf32, #tpu.memory_space<vmem>>, %arg9: memref<64x8xf32, #tpu.memory_space<vmem>>, %arg10: memref<1x1x8xf32, #tpu.memory_space<vmem>>, %arg11: memref<1x1x8xf32, #tpu.memory_space<vmem>>) attributes {dimension_semantics = [#tpu.dimension_semantics<parallel>, #tpu.dimension_semantics<arbitrary>], iteration_bounds = array<i64: 2, 1>, scalar_prefetch = 0 : i64, scratch_operands = 0 : i64, tpu.core_type = #tpu.core_type<tc>, window_params = [{pipeline_mode = #tpu.pipeline_mode<synchronous>, transform_indices = @transform_0, window_bounds = array<i64: 170, 8>}, {pipeline_mode = #tpu.pipeline_mode<synchronous>, transform_indices = @transform_1, window_bounds = array<i64: 216, 8>}, {pipeline_mode = #tpu.pipeline_mode<synchronous>, transform_indices = @transform_2, window_bounds = array<i64: 1, 8>}, {pipeline_mode = #tpu.pipeline_mode<synchronous>, transform_indices = @transform_3, window_bounds = array<i64: 1, 8>}, {pipeline_mode = #tpu.pipeline_mode<synchronous>, transform_indices = @transform_4, window_bounds = array<i64: 1, 8>}, {transform_indices = @transform_5, window_bounds = array<i64: 64, 27>}, {transform_indices = @transform_6, window_bounds = array<i64: 64, 1>}, {transform_indices = @transform_7, window_bounds = array<i64: 64, 8>}, {transform_indices = @transform_8, window_bounds = array<i64: 1, 1, 8>}, {transform_indices = @transform_9, window_bounds = array<i64: 1, 1, 8>}]} {
    %c0_i32 = arith.constant 0 : i32
    %0 = arith.cmpi eq, %arg1, %c0_i32 : i32
    %1 = arith.extui %0 : i1 to i32
    %c0_i32_0 = arith.constant 0 : i32
    %2 = arith.cmpi ne, %1, %c0_i32_0 : i32
    scf.if %2 {
      %cst_164 = arith.constant 0.000000e+00 : f32
      %460 = vector.broadcast %cst_164 : f32 to vector<1x1x8xf32>
      %c0_165 = arith.constant 0 : index
      %c0_166 = arith.constant 0 : index
      %c0_167 = arith.constant 0 : index
      %461 = vector.load %arg10[%c0_165, %c0_166, %c0_167] : memref<1x1x8xf32, #tpu.memory_space<vmem>>, vector<1x1x8xf32>
      tpu.vector_store %arg10[%c0_165, %c0_166, %c0_167], %460 {strides = array<i32>} : memref<1x1x8xf32, #tpu.memory_space<vmem>>, vector<1x1x8xf32>,
      %cst_168 = arith.constant 0.000000e+00 : f32
      %462 = vector.broadcast %cst_168 : f32 to vector<1x1x8xf32>
      %c0_169 = arith.constant 0 : index
      %c0_170 = arith.constant 0 : index
      %c0_171 = arith.constant 0 : index
      %463 = vector.load %arg11[%c0_169, %c0_170, %c0_171] : memref<1x1x8xf32, #tpu.memory_space<vmem>>, vector<1x1x8xf32>
      tpu.vector_store %arg11[%c0_169, %c0_170, %c0_171], %462 {strides = array<i32>} : memref<1x1x8xf32, #tpu.memory_space<vmem>>, vector<1x1x8xf32>,
    } else {
    }
    %c1_i32 = arith.constant 1 : i32
    %3 = arith.muli %arg0, %c1_i32 : i32
    %4 = arith.addi %3, %arg1 : i32
    %c64_i32 = arith.constant 64 : i32
    %5 = arith.muli %4, %c64_i32 : i32
    %c0 = arith.constant 0 : index
    %c0_1 = arith.constant 0 : index
    %6 = vector.load %arg5[%c0, %c0_1] : memref<1x8xf32, #tpu.memory_space<vmem>>, vector<1x8xf32>
    %c0_2 = arith.constant 0 : index
    %c0_3 = arith.constant 0 : index
    %7 = vector.load %arg6[%c0_2, %c0_3] : memref<1x8xf32, #tpu.memory_space<vmem>>, vector<1x8xf32>
    %c0_4 = arith.constant 0 : index
    %c0_5 = arith.constant 0 : index
    %8 = vector.load %arg7[%c0_4, %c0_5] : memref<64x27xf32, #tpu.memory_space<vmem>>, vector<64x27xf32>
    %cst = arith.constant 0.000000e+00 : f32
    %9 = vector.broadcast %cst : f32 to vector<64x8xf32>
    %c21_i32 = arith.constant 21 : i32
    %10 = arith.addi %5, %c21_i32 : i32
    %c-21_i32 = arith.constant -21 : i32
    %11 = arith.addi %10, %c-21_i32 : i32
    %12 = arith.index_cast %11 : i32 to index
    %c0_6 = arith.constant 0 : index
    %13 = vector.load %arg2[%12, %c0_6] : memref<170x8xf32, #tpu.memory_space<vmem>>, vector<64x8xf32>
    %14 = vector.broadcast %6 : vector<1x8xf32> to vector<64x8xf32>
    %15 = arith.mulf %13, %14 : vector<64x8xf32>
    %16 = vector.broadcast %7 : vector<1x8xf32> to vector<64x8xf32>
    %17 = arith.addf %15, %16 : vector<64x8xf32>
    %cst_7 = arith.constant 0.000000e+00 : f32
    %18 = vector.broadcast %cst_7 : f32 to vector<64x8xf32>
    %19 = arith.maximumf %17, %18 : vector<64x8xf32>
    %20 = vector.extract_strided_slice %8 {offsets = [0, 0], sizes = [64, 1], strides = [1, 1]} : vector<64x27xf32> to vector<64x1xf32>
    %21 = vector.broadcast %20 : vector<64x1xf32> to vector<64x8xf32>
    %22 = arith.mulf %19, %21 : vector<64x8xf32>
    %c0_8 = arith.constant 0 : index
    %c0_9 = arith.constant 0 : index
    %23 = vector.load %arg3[%c0_8, %c0_9] : memref<216x8xf32, #tpu.memory_space<vmem>>, vector<8x8xf32>
    %cst_10 = arith.constant dense<0.000000e+00> : vector<64x8xf32>
    %24 = tpu.matmul %22, %23, %cst_10 {dimension_numbers = #tpu.dot_dimension_numbers<[1], [0], [0], [1], [0, 0, 1, 1], [], []>} : vector<64x8xf32>, vector<8x8xf32>, vector<64x8xf32> -> vector<64x8xf32>
    %25 = arith.addf %9, %24 : vector<64x8xf32>
    %c21_i32_11 = arith.constant 21 : i32
    %26 = arith.addi %5, %c21_i32_11 : i32
    %c-20_i32 = arith.constant -20 : i32
    %27 = arith.addi %26, %c-20_i32 : i32
    %28 = arith.index_cast %27 : i32 to index
    %c0_12 = arith.constant 0 : index
    %29 = vector.load %arg2[%28, %c0_12] : memref<170x8xf32, #tpu.memory_space<vmem>>, vector<64x8xf32>
    %30 = vector.broadcast %6 : vector<1x8xf32> to vector<64x8xf32>
    %31 = arith.mulf %29, %30 : vector<64x8xf32>
    %32 = vector.broadcast %7 : vector<1x8xf32> to vector<64x8xf32>
    %33 = arith.addf %31, %32 : vector<64x8xf32>
    %cst_13 = arith.constant 0.000000e+00 : f32
    %34 = vector.broadcast %cst_13 : f32 to vector<64x8xf32>
    %35 = arith.maximumf %33, %34 : vector<64x8xf32>
    %36 = vector.extract_strided_slice %8 {offsets = [0, 1], sizes = [64, 1], strides = [1, 1]} : vector<64x27xf32> to vector<64x1xf32>
    %37 = vector.broadcast %36 : vector<64x1xf32> to vector<64x8xf32>
    %38 = arith.mulf %35, %37 : vector<64x8xf32>
    %c8 = arith.constant 8 : index
    %c0_14 = arith.constant 0 : index
    %39 = vector.load %arg3[%c8, %c0_14] : memref<216x8xf32, #tpu.memory_space<vmem>>, vector<8x8xf32>
    %cst_15 = arith.constant dense<0.000000e+00> : vector<64x8xf32>
    %40 = tpu.matmul %38, %39, %cst_15 {dimension_numbers = #tpu.dot_dimension_numbers<[1], [0], [0], [1], [0, 0, 1, 1], [], []>} : vector<64x8xf32>, vector<8x8xf32>, vector<64x8xf32> -> vector<64x8xf32>
    %41 = arith.addf %25, %40 : vector<64x8xf32>
    %c21_i32_16 = arith.constant 21 : i32
    %42 = arith.addi %5, %c21_i32_16 : i32
    %c-19_i32 = arith.constant -19 : i32
    %43 = arith.addi %42, %c-19_i32 : i32
    %44 = arith.index_cast %43 : i32 to index
    %c0_17 = arith.constant 0 : index
    %45 = vector.load %arg2[%44, %c0_17] : memref<170x8xf32, #tpu.memory_space<vmem>>, vector<64x8xf32>
    %46 = vector.broadcast %6 : vector<1x8xf32> to vector<64x8xf32>
    %47 = arith.mulf %45, %46 : vector<64x8xf32>
    %48 = vector.broadcast %7 : vector<1x8xf32> to vector<64x8xf32>
    %49 = arith.addf %47, %48 : vector<64x8xf32>
    %cst_18 = arith.constant 0.000000e+00 : f32
    %50 = vector.broadcast %cst_18 : f32 to vector<64x8xf32>
    %51 = arith.maximumf %49, %50 : vector<64x8xf32>
    %52 = vector.extract_strided_slice %8 {offsets = [0, 2], sizes = [64, 1], strides = [1, 1]} : vector<64x27xf32> to vector<64x1xf32>
    %53 = vector.broadcast %52 : vector<64x1xf32> to vector<64x8xf32>
    %54 = arith.mulf %51, %53 : vector<64x8xf32>
    %c16 = arith.constant 16 : index
    %c0_19 = arith.constant 0 : index
    %55 = vector.load %arg3[%c16, %c0_19] : memref<216x8xf32, #tpu.memory_space<vmem>>, vector<8x8xf32>
    %cst_20 = arith.constant dense<0.000000e+00> : vector<64x8xf32>
    %56 = tpu.matmul %54, %55, %cst_20 {dimension_numbers = #tpu.dot_dimension_numbers<[1], [0], [0], [1], [0, 0, 1, 1], [], []>} : vector<64x8xf32>, vector<8x8xf32>, vector<64x8xf32> -> vector<64x8xf32>
    %57 = arith.addf %41, %56 : vector<64x8xf32>
    %c21_i32_21 = arith.constant 21 : i32
    %58 = arith.addi %5, %c21_i32_21 : i32
    %c-17_i32 = arith.constant -17 : i32
    %59 = arith.addi %58, %c-17_i32 : i32
    %60 = arith.index_cast %59 : i32 to index
    %c0_22 = arith.constant 0 : index
    %61 = vector.load %arg2[%60, %c0_22] : memref<170x8xf32, #tpu.memory_space<vmem>>, vector<64x8xf32>
    %62 = vector.broadcast %6 : vector<1x8xf32> to vector<64x8xf32>
    %63 = arith.mulf %61, %62 : vector<64x8xf32>
    %64 = vector.broadcast %7 : vector<1x8xf32> to vector<64x8xf32>
    %65 = arith.addf %63, %64 : vector<64x8xf32>
    %cst_23 = arith.constant 0.000000e+00 : f32
    %66 = vector.broadcast %cst_23 : f32 to vector<64x8xf32>
    %67 = arith.maximumf %65, %66 : vector<64x8xf32>
    %68 = vector.extract_strided_slice %8 {offsets = [0, 3], sizes = [64, 1], strides = [1, 1]} : vector<64x27xf32> to vector<64x1xf32>
    %69 = vector.broadcast %68 : vector<64x1xf32> to vector<64x8xf32>
    %70 = arith.mulf %67, %69 : vector<64x8xf32>
    %c24 = arith.constant 24 : index
    %c0_24 = arith.constant 0 : index
    %71 = vector.load %arg3[%c24, %c0_24] : memref<216x8xf32, #tpu.memory_space<vmem>>, vector<8x8xf32>
    %cst_25 = arith.constant dense<0.000000e+00> : vector<64x8xf32>
    %72 = tpu.matmul %70, %71, %cst_25 {dimension_numbers = #tpu.dot_dimension_numbers<[1], [0], [0], [1], [0, 0, 1, 1], [], []>} : vector<64x8xf32>, vector<8x8xf32>, vector<64x8xf32> -> vector<64x8xf32>
    %73 = arith.addf %57, %72 : vector<64x8xf32>
    %c21_i32_26 = arith.constant 21 : i32
    %74 = arith.addi %5, %c21_i32_26 : i32
    %c-16_i32 = arith.constant -16 : i32
    %75 = arith.addi %74, %c-16_i32 : i32
    %76 = arith.index_cast %75 : i32 to index
    %c0_27 = arith.constant 0 : index
    %77 = vector.load %arg2[%76, %c0_27] : memref<170x8xf32, #tpu.memory_space<vmem>>, vector<64x8xf32>
    %78 = vector.broadcast %6 : vector<1x8xf32> to vector<64x8xf32>
    %79 = arith.mulf %77, %78 : vector<64x8xf32>
    %80 = vector.broadcast %7 : vector<1x8xf32> to vector<64x8xf32>
    %81 = arith.addf %79, %80 : vector<64x8xf32>
    %cst_28 = arith.constant 0.000000e+00 : f32
    %82 = vector.broadcast %cst_28 : f32 to vector<64x8xf32>
    %83 = arith.maximumf %81, %82 : vector<64x8xf32>
    %84 = vector.extract_strided_slice %8 {offsets = [0, 4], sizes = [64, 1], strides = [1, 1]} : vector<64x27xf32> to vector<64x1xf32>
    %85 = vector.broadcast %84 : vector<64x1xf32> to vector<64x8xf32>
    %86 = arith.mulf %83, %85 : vector<64x8xf32>
    %c32 = arith.constant 32 : index
    %c0_29 = arith.constant 0 : index
    %87 = vector.load %arg3[%c32, %c0_29] : memref<216x8xf32, #tpu.memory_space<vmem>>, vector<8x8xf32>
    %cst_30 = arith.constant dense<0.000000e+00> : vector<64x8xf32>
    %88 = tpu.matmul %86, %87, %cst_30 {dimension_numbers = #tpu.dot_dimension_numbers<[1], [0], [0], [1], [0, 0, 1, 1], [], []>} : vector<64x8xf32>, vector<8x8xf32>, vector<64x8xf32> -> vector<64x8xf32>
    %89 = arith.addf %73, %88 : vector<64x8xf32>
    %c21_i32_31 = arith.constant 21 : i32
    %90 = arith.addi %5, %c21_i32_31 : i32
    %c-15_i32 = arith.constant -15 : i32
    %91 = arith.addi %90, %c-15_i32 : i32
    %92 = arith.index_cast %91 : i32 to index
    %c0_32 = arith.constant 0 : index
    %93 = vector.load %arg2[%92, %c0_32] : memref<170x8xf32, #tpu.memory_space<vmem>>, vector<64x8xf32>
    %94 = vector.broadcast %6 : vector<1x8xf32> to vector<64x8xf32>
    %95 = arith.mulf %93, %94 : vector<64x8xf32>
    %96 = vector.broadcast %7 : vector<1x8xf32> to vector<64x8xf32>
    %97 = arith.addf %95, %96 : vector<64x8xf32>
    %cst_33 = arith.constant 0.000000e+00 : f32
    %98 = vector.broadcast %cst_33 : f32 to vector<64x8xf32>
    %99 = arith.maximumf %97, %98 : vector<64x8xf32>
    %100 = vector.extract_strided_slice %8 {offsets = [0, 5], sizes = [64, 1], strides = [1, 1]} : vector<64x27xf32> to vector<64x1xf32>
    %101 = vector.broadcast %100 : vector<64x1xf32> to vector<64x8xf32>
    %102 = arith.mulf %99, %101 : vector<64x8xf32>
    %c40 = arith.constant 40 : index
    %c0_34 = arith.constant 0 : index
    %103 = vector.load %arg3[%c40, %c0_34] : memref<216x8xf32, #tpu.memory_space<vmem>>, vector<8x8xf32>
    %cst_35 = arith.constant dense<0.000000e+00> : vector<64x8xf32>
    %104 = tpu.matmul %102, %103, %cst_35 {dimension_numbers = #tpu.dot_dimension_numbers<[1], [0], [0], [1], [0, 0, 1, 1], [], []>} : vector<64x8xf32>, vector<8x8xf32>, vector<64x8xf32> -> vector<64x8xf32>
    %105 = arith.addf %89, %104 : vector<64x8xf32>
    %c21_i32_36 = arith.constant 21 : i32
    %106 = arith.addi %5, %c21_i32_36 : i32
    %c-13_i32 = arith.constant -13 : i32
    %107 = arith.addi %106, %c-13_i32 : i32
    %108 = arith.index_cast %107 : i32 to index
    %c0_37 = arith.constant 0 : index
    %109 = vector.load %arg2[%108, %c0_37] : memref<170x8xf32, #tpu.memory_space<vmem>>, vector<64x8xf32>
    %110 = vector.broadcast %6 : vector<1x8xf32> to vector<64x8xf32>
    %111 = arith.mulf %109, %110 : vector<64x8xf32>
    %112 = vector.broadcast %7 : vector<1x8xf32> to vector<64x8xf32>
    %113 = arith.addf %111, %112 : vector<64x8xf32>
    %cst_38 = arith.constant 0.000000e+00 : f32
    %114 = vector.broadcast %cst_38 : f32 to vector<64x8xf32>
    %115 = arith.maximumf %113, %114 : vector<64x8xf32>
    %116 = vector.extract_strided_slice %8 {offsets = [0, 6], sizes = [64, 1], strides = [1, 1]} : vector<64x27xf32> to vector<64x1xf32>
    %117 = vector.broadcast %116 : vector<64x1xf32> to vector<64x8xf32>
    %118 = arith.mulf %115, %117 : vector<64x8xf32>
    %c48 = arith.constant 48 : index
    %c0_39 = arith.constant 0 : index
    %119 = vector.load %arg3[%c48, %c0_39] : memref<216x8xf32, #tpu.memory_space<vmem>>, vector<8x8xf32>
    %cst_40 = arith.constant dense<0.000000e+00> : vector<64x8xf32>
    %120 = tpu.matmul %118, %119, %cst_40 {dimension_numbers = #tpu.dot_dimension_numbers<[1], [0], [0], [1], [0, 0, 1, 1], [], []>} : vector<64x8xf32>, vector<8x8xf32>, vector<64x8xf32> -> vector<64x8xf32>
    %121 = arith.addf %105, %120 : vector<64x8xf32>
    %c21_i32_41 = arith.constant 21 : i32
    %122 = arith.addi %5, %c21_i32_41 : i32
    %c-12_i32 = arith.constant -12 : i32
    %123 = arith.addi %122, %c-12_i32 : i32
    %124 = arith.index_cast %123 : i32 to index
    %c0_42 = arith.constant 0 : index
    %125 = vector.load %arg2[%124, %c0_42] : memref<170x8xf32, #tpu.memory_space<vmem>>, vector<64x8xf32>
    %126 = vector.broadcast %6 : vector<1x8xf32> to vector<64x8xf32>
    %127 = arith.mulf %125, %126 : vector<64x8xf32>
    %128 = vector.broadcast %7 : vector<1x8xf32> to vector<64x8xf32>
    %129 = arith.addf %127, %128 : vector<64x8xf32>
    %cst_43 = arith.constant 0.000000e+00 : f32
    %130 = vector.broadcast %cst_43 : f32 to vector<64x8xf32>
    %131 = arith.maximumf %129, %130 : vector<64x8xf32>
    %132 = vector.extract_strided_slice %8 {offsets = [0, 7], sizes = [64, 1], strides = [1, 1]} : vector<64x27xf32> to vector<64x1xf32>
    %133 = vector.broadcast %132 : vector<64x1xf32> to vector<64x8xf32>
    %134 = arith.mulf %131, %133 : vector<64x8xf32>
    %c56 = arith.constant 56 : index
    %c0_44 = arith.constant 0 : index
    %135 = vector.load %arg3[%c56, %c0_44] : memref<216x8xf32, #tpu.memory_space<vmem>>, vector<8x8xf32>
    %cst_45 = arith.constant dense<0.000000e+00> : vector<64x8xf32>
    %136 = tpu.matmul %134, %135, %cst_45 {dimension_numbers = #tpu.dot_dimension_numbers<[1], [0], [0], [1], [0, 0, 1, 1], [], []>} : vector<64x8xf32>, vector<8x8xf32>, vector<64x8xf32> -> vector<64x8xf32>
    %137 = arith.addf %121, %136 : vector<64x8xf32>
    %c21_i32_46 = arith.constant 21 : i32
    %138 = arith.addi %5, %c21_i32_46 : i32
    %c-11_i32 = arith.constant -11 : i32
    %139 = arith.addi %138, %c-11_i32 : i32
    %140 = arith.index_cast %139 : i32 to index
    %c0_47 = arith.constant 0 : index
    %141 = vector.load %arg2[%140, %c0_47] : memref<170x8xf32, #tpu.memory_space<vmem>>, vector<64x8xf32>
    %142 = vector.broadcast %6 : vector<1x8xf32> to vector<64x8xf32>
    %143 = arith.mulf %141, %142 : vector<64x8xf32>
    %144 = vector.broadcast %7 : vector<1x8xf32> to vector<64x8xf32>
    %145 = arith.addf %143, %144 : vector<64x8xf32>
    %cst_48 = arith.constant 0.000000e+00 : f32
    %146 = vector.broadcast %cst_48 : f32 to vector<64x8xf32>
    %147 = arith.maximumf %145, %146 : vector<64x8xf32>
    %148 = vector.extract_strided_slice %8 {offsets = [0, 8], sizes = [64, 1], strides = [1, 1]} : vector<64x27xf32> to vector<64x1xf32>
    %149 = vector.broadcast %148 : vector<64x1xf32> to vector<64x8xf32>
    %150 = arith.mulf %147, %149 : vector<64x8xf32>
    %c64 = arith.constant 64 : index
    %c0_49 = arith.constant 0 : index
    %151 = vector.load %arg3[%c64, %c0_49] : memref<216x8xf32, #tpu.memory_space<vmem>>, vector<8x8xf32>
    %cst_50 = arith.constant dense<0.000000e+00> : vector<64x8xf32>
    %152 = tpu.matmul %150, %151, %cst_50 {dimension_numbers = #tpu.dot_dimension_numbers<[1], [0], [0], [1], [0, 0, 1, 1], [], []>} : vector<64x8xf32>, vector<8x8xf32>, vector<64x8xf32> -> vector<64x8xf32>
    %153 = arith.addf %137, %152 : vector<64x8xf32>
    %c21_i32_51 = arith.constant 21 : i32
    %154 = arith.addi %5, %c21_i32_51 : i32
    %c-5_i32 = arith.constant -5 : i32
    %155 = arith.addi %154, %c-5_i32 : i32
    %156 = arith.index_cast %155 : i32 to index
    %c0_52 = arith.constant 0 : index
    %157 = vector.load %arg2[%156, %c0_52] : memref<170x8xf32, #tpu.memory_space<vmem>>, vector<64x8xf32>
    %158 = vector.broadcast %6 : vector<1x8xf32> to vector<64x8xf32>
    %159 = arith.mulf %157, %158 : vector<64x8xf32>
    %160 = vector.broadcast %7 : vector<1x8xf32> to vector<64x8xf32>
    %161 = arith.addf %159, %160 : vector<64x8xf32>
    %cst_53 = arith.constant 0.000000e+00 : f32
    %162 = vector.broadcast %cst_53 : f32 to vector<64x8xf32>
    %163 = arith.maximumf %161, %162 : vector<64x8xf32>
    %164 = vector.extract_strided_slice %8 {offsets = [0, 9], sizes = [64, 1], strides = [1, 1]} : vector<64x27xf32> to vector<64x1xf32>
    %165 = vector.broadcast %164 : vector<64x1xf32> to vector<64x8xf32>
    %166 = arith.mulf %163, %165 : vector<64x8xf32>
    %c72 = arith.constant 72 : index
    %c0_54 = arith.constant 0 : index
    %167 = vector.load %arg3[%c72, %c0_54] : memref<216x8xf32, #tpu.memory_space<vmem>>, vector<8x8xf32>
    %cst_55 = arith.constant dense<0.000000e+00> : vector<64x8xf32>
    %168 = tpu.matmul %166, %167, %cst_55 {dimension_numbers = #tpu.dot_dimension_numbers<[1], [0], [0], [1], [0, 0, 1, 1], [], []>} : vector<64x8xf32>, vector<8x8xf32>, vector<64x8xf32> -> vector<64x8xf32>
    %169 = arith.addf %153, %168 : vector<64x8xf32>
    %c21_i32_56 = arith.constant 21 : i32
    %170 = arith.addi %5, %c21_i32_56 : i32
    %c-4_i32 = arith.constant -4 : i32
    %171 = arith.addi %170, %c-4_i32 : i32
    %172 = arith.index_cast %171 : i32 to index
    %c0_57 = arith.constant 0 : index
    %173 = vector.load %arg2[%172, %c0_57] : memref<170x8xf32, #tpu.memory_space<vmem>>, vector<64x8xf32>
    %174 = vector.broadcast %6 : vector<1x8xf32> to vector<64x8xf32>
    %175 = arith.mulf %173, %174 : vector<64x8xf32>
    %176 = vector.broadcast %7 : vector<1x8xf32> to vector<64x8xf32>
    %177 = arith.addf %175, %176 : vector<64x8xf32>
    %cst_58 = arith.constant 0.000000e+00 : f32
    %178 = vector.broadcast %cst_58 : f32 to vector<64x8xf32>
    %179 = arith.maximumf %177, %178 : vector<64x8xf32>
    %180 = vector.extract_strided_slice %8 {offsets = [0, 10], sizes = [64, 1], strides = [1, 1]} : vector<64x27xf32> to vector<64x1xf32>
    %181 = vector.broadcast %180 : vector<64x1xf32> to vector<64x8xf32>
    %182 = arith.mulf %179, %181 : vector<64x8xf32>
    %c80 = arith.constant 80 : index
    %c0_59 = arith.constant 0 : index
    %183 = vector.load %arg3[%c80, %c0_59] : memref<216x8xf32, #tpu.memory_space<vmem>>, vector<8x8xf32>
    %cst_60 = arith.constant dense<0.000000e+00> : vector<64x8xf32>
    %184 = tpu.matmul %182, %183, %cst_60 {dimension_numbers = #tpu.dot_dimension_numbers<[1], [0], [0], [1], [0, 0, 1, 1], [], []>} : vector<64x8xf32>, vector<8x8xf32>, vector<64x8xf32> -> vector<64x8xf32>
    %185 = arith.addf %169, %184 : vector<64x8xf32>
    %c21_i32_61 = arith.constant 21 : i32
    %186 = arith.addi %5, %c21_i32_61 : i32
    %c-3_i32 = arith.constant -3 : i32
    %187 = arith.addi %186, %c-3_i32 : i32
    %188 = arith.index_cast %187 : i32 to index
    %c0_62 = arith.constant 0 : index
    %189 = vector.load %arg2[%188, %c0_62] : memref<170x8xf32, #tpu.memory_space<vmem>>, vector<64x8xf32>
    %190 = vector.broadcast %6 : vector<1x8xf32> to vector<64x8xf32>
    %191 = arith.mulf %189, %190 : vector<64x8xf32>
    %192 = vector.broadcast %7 : vector<1x8xf32> to vector<64x8xf32>
    %193 = arith.addf %191, %192 : vector<64x8xf32>
    %cst_63 = arith.constant 0.000000e+00 : f32
    %194 = vector.broadcast %cst_63 : f32 to vector<64x8xf32>
    %195 = arith.maximumf %193, %194 : vector<64x8xf32>
    %196 = vector.extract_strided_slice %8 {offsets = [0, 11], sizes = [64, 1], strides = [1, 1]} : vector<64x27xf32> to vector<64x1xf32>
    %197 = vector.broadcast %196 : vector<64x1xf32> to vector<64x8xf32>
    %198 = arith.mulf %195, %197 : vector<64x8xf32>
    %c88 = arith.constant 88 : index
    %c0_64 = arith.constant 0 : index
    %199 = vector.load %arg3[%c88, %c0_64] : memref<216x8xf32, #tpu.memory_space<vmem>>, vector<8x8xf32>
    %cst_65 = arith.constant dense<0.000000e+00> : vector<64x8xf32>
    %200 = tpu.matmul %198, %199, %cst_65 {dimension_numbers = #tpu.dot_dimension_numbers<[1], [0], [0], [1], [0, 0, 1, 1], [], []>} : vector<64x8xf32>, vector<8x8xf32>, vector<64x8xf32> -> vector<64x8xf32>
    %201 = arith.addf %185, %200 : vector<64x8xf32>
    %c21_i32_66 = arith.constant 21 : i32
    %202 = arith.addi %5, %c21_i32_66 : i32
    %c-1_i32 = arith.constant -1 : i32
    %203 = arith.addi %202, %c-1_i32 : i32
    %204 = arith.index_cast %203 : i32 to index
    %c0_67 = arith.constant 0 : index
    %205 = vector.load %arg2[%204, %c0_67] : memref<170x8xf32, #tpu.memory_space<vmem>>, vector<64x8xf32>
    %206 = vector.broadcast %6 : vector<1x8xf32> to vector<64x8xf32>
    %207 = arith.mulf %205, %206 : vector<64x8xf32>
    %208 = vector.broadcast %7 : vector<1x8xf32> to vector<64x8xf32>
    %209 = arith.addf %207, %208 : vector<64x8xf32>
    %cst_68 = arith.constant 0.000000e+00 : f32
    %210 = vector.broadcast %cst_68 : f32 to vector<64x8xf32>
    %211 = arith.maximumf %209, %210 : vector<64x8xf32>
    %212 = vector.extract_strided_slice %8 {offsets = [0, 12], sizes = [64, 1], strides = [1, 1]} : vector<64x27xf32> to vector<64x1xf32>
    %213 = vector.broadcast %212 : vector<64x1xf32> to vector<64x8xf32>
    %214 = arith.mulf %211, %213 : vector<64x8xf32>
    %c96 = arith.constant 96 : index
    %c0_69 = arith.constant 0 : index
    %215 = vector.load %arg3[%c96, %c0_69] : memref<216x8xf32, #tpu.memory_space<vmem>>, vector<8x8xf32>
    %cst_70 = arith.constant dense<0.000000e+00> : vector<64x8xf32>
    %216 = tpu.matmul %214, %215, %cst_70 {dimension_numbers = #tpu.dot_dimension_numbers<[1], [0], [0], [1], [0, 0, 1, 1], [], []>} : vector<64x8xf32>, vector<8x8xf32>, vector<64x8xf32> -> vector<64x8xf32>
    %217 = arith.addf %201, %216 : vector<64x8xf32>
    %c21_i32_71 = arith.constant 21 : i32
    %218 = arith.addi %5, %c21_i32_71 : i32
    %c0_i32_72 = arith.constant 0 : i32
    %219 = arith.addi %218, %c0_i32_72 : i32
    %220 = arith.index_cast %219 : i32 to index
    %c0_73 = arith.constant 0 : index
    %221 = vector.load %arg2[%220, %c0_73] : memref<170x8xf32, #tpu.memory_space<vmem>>, vector<64x8xf32>
    %222 = vector.broadcast %6 : vector<1x8xf32> to vector<64x8xf32>
    %223 = arith.mulf %221, %222 : vector<64x8xf32>
    %224 = vector.broadcast %7 : vector<1x8xf32> to vector<64x8xf32>
    %225 = arith.addf %223, %224 : vector<64x8xf32>
    %cst_74 = arith.constant 0.000000e+00 : f32
    %226 = vector.broadcast %cst_74 : f32 to vector<64x8xf32>
    %227 = arith.maximumf %225, %226 : vector<64x8xf32>
    %228 = vector.extract_strided_slice %8 {offsets = [0, 13], sizes = [64, 1], strides = [1, 1]} : vector<64x27xf32> to vector<64x1xf32>
    %229 = vector.broadcast %228 : vector<64x1xf32> to vector<64x8xf32>
    %230 = arith.mulf %227, %229 : vector<64x8xf32>
    %c104 = arith.constant 104 : index
    %c0_75 = arith.constant 0 : index
    %231 = vector.load %arg3[%c104, %c0_75] : memref<216x8xf32, #tpu.memory_space<vmem>>, vector<8x8xf32>
    %cst_76 = arith.constant dense<0.000000e+00> : vector<64x8xf32>
    %232 = tpu.matmul %230, %231, %cst_76 {dimension_numbers = #tpu.dot_dimension_numbers<[1], [0], [0], [1], [0, 0, 1, 1], [], []>} : vector<64x8xf32>, vector<8x8xf32>, vector<64x8xf32> -> vector<64x8xf32>
    %233 = arith.addf %217, %232 : vector<64x8xf32>
    %c21_i32_77 = arith.constant 21 : i32
    %234 = arith.addi %5, %c21_i32_77 : i32
    %c1_i32_78 = arith.constant 1 : i32
    %235 = arith.addi %234, %c1_i32_78 : i32
    %236 = arith.index_cast %235 : i32 to index
    %c0_79 = arith.constant 0 : index
    %237 = vector.load %arg2[%236, %c0_79] : memref<170x8xf32, #tpu.memory_space<vmem>>, vector<64x8xf32>
    %238 = vector.broadcast %6 : vector<1x8xf32> to vector<64x8xf32>
    %239 = arith.mulf %237, %238 : vector<64x8xf32>
    %240 = vector.broadcast %7 : vector<1x8xf32> to vector<64x8xf32>
    %241 = arith.addf %239, %240 : vector<64x8xf32>
    %cst_80 = arith.constant 0.000000e+00 : f32
    %242 = vector.broadcast %cst_80 : f32 to vector<64x8xf32>
    %243 = arith.maximumf %241, %242 : vector<64x8xf32>
    %244 = vector.extract_strided_slice %8 {offsets = [0, 14], sizes = [64, 1], strides = [1, 1]} : vector<64x27xf32> to vector<64x1xf32>
    %245 = vector.broadcast %244 : vector<64x1xf32> to vector<64x8xf32>
    %246 = arith.mulf %243, %245 : vector<64x8xf32>
    %c112 = arith.constant 112 : index
    %c0_81 = arith.constant 0 : index
    %247 = vector.load %arg3[%c112, %c0_81] : memref<216x8xf32, #tpu.memory_space<vmem>>, vector<8x8xf32>
    %cst_82 = arith.constant dense<0.000000e+00> : vector<64x8xf32>
    %248 = tpu.matmul %246, %247, %cst_82 {dimension_numbers = #tpu.dot_dimension_numbers<[1], [0], [0], [1], [0, 0, 1, 1], [], []>} : vector<64x8xf32>, vector<8x8xf32>, vector<64x8xf32> -> vector<64x8xf32>
    %249 = arith.addf %233, %248 : vector<64x8xf32>
    %c21_i32_83 = arith.constant 21 : i32
    %250 = arith.addi %5, %c21_i32_83 : i32
    %c3_i32 = arith.constant 3 : i32
    %251 = arith.addi %250, %c3_i32 : i32
    %252 = arith.index_cast %251 : i32 to index
    %c0_84 = arith.constant 0 : index
    %253 = vector.load %arg2[%252, %c0_84] : memref<170x8xf32, #tpu.memory_space<vmem>>, vector<64x8xf32>
    %254 = vector.broadcast %6 : vector<1x8xf32> to vector<64x8xf32>
    %255 = arith.mulf %253, %254 : vector<64x8xf32>
    %256 = vector.broadcast %7 : vector<1x8xf32> to vector<64x8xf32>
    %257 = arith.addf %255, %256 : vector<64x8xf32>
    %cst_85 = arith.constant 0.000000e+00 : f32
    %258 = vector.broadcast %cst_85 : f32 to vector<64x8xf32>
    %259 = arith.maximumf %257, %258 : vector<64x8xf32>
    %260 = vector.extract_strided_slice %8 {offsets = [0, 15], sizes = [64, 1], strides = [1, 1]} : vector<64x27xf32> to vector<64x1xf32>
    %261 = vector.broadcast %260 : vector<64x1xf32> to vector<64x8xf32>
    %262 = arith.mulf %259, %261 : vector<64x8xf32>
    %c120 = arith.constant 120 : index
    %c0_86 = arith.constant 0 : index
    %263 = vector.load %arg3[%c120, %c0_86] : memref<216x8xf32, #tpu.memory_space<vmem>>, vector<8x8xf32>
    %cst_87 = arith.constant dense<0.000000e+00> : vector<64x8xf32>
    %264 = tpu.matmul %262, %263, %cst_87 {dimension_numbers = #tpu.dot_dimension_numbers<[1], [0], [0], [1], [0, 0, 1, 1], [], []>} : vector<64x8xf32>, vector<8x8xf32>, vector<64x8xf32> -> vector<64x8xf32>
    %265 = arith.addf %249, %264 : vector<64x8xf32>
    %c21_i32_88 = arith.constant 21 : i32
    %266 = arith.addi %5, %c21_i32_88 : i32
    %c4_i32 = arith.constant 4 : i32
    %267 = arith.addi %266, %c4_i32 : i32
    %268 = arith.index_cast %267 : i32 to index
    %c0_89 = arith.constant 0 : index
    %269 = vector.load %arg2[%268, %c0_89] : memref<170x8xf32, #tpu.memory_space<vmem>>, vector<64x8xf32>
    %270 = vector.broadcast %6 : vector<1x8xf32> to vector<64x8xf32>
    %271 = arith.mulf %269, %270 : vector<64x8xf32>
    %272 = vector.broadcast %7 : vector<1x8xf32> to vector<64x8xf32>
    %273 = arith.addf %271, %272 : vector<64x8xf32>
    %cst_90 = arith.constant 0.000000e+00 : f32
    %274 = vector.broadcast %cst_90 : f32 to vector<64x8xf32>
    %275 = arith.maximumf %273, %274 : vector<64x8xf32>
    %276 = vector.extract_strided_slice %8 {offsets = [0, 16], sizes = [64, 1], strides = [1, 1]} : vector<64x27xf32> to vector<64x1xf32>
    %277 = vector.broadcast %276 : vector<64x1xf32> to vector<64x8xf32>
    %278 = arith.mulf %275, %277 : vector<64x8xf32>
    %c128 = arith.constant 128 : index
    %c0_91 = arith.constant 0 : index
    %279 = vector.load %arg3[%c128, %c0_91] : memref<216x8xf32, #tpu.memory_space<vmem>>, vector<8x8xf32>
    %cst_92 = arith.constant dense<0.000000e+00> : vector<64x8xf32>
    %280 = tpu.matmul %278, %279, %cst_92 {dimension_numbers = #tpu.dot_dimension_numbers<[1], [0], [0], [1], [0, 0, 1, 1], [], []>} : vector<64x8xf32>, vector<8x8xf32>, vector<64x8xf32> -> vector<64x8xf32>
    %281 = arith.addf %265, %280 : vector<64x8xf32>
    %c21_i32_93 = arith.constant 21 : i32
    %282 = arith.addi %5, %c21_i32_93 : i32
    %c5_i32 = arith.constant 5 : i32
    %283 = arith.addi %282, %c5_i32 : i32
    %284 = arith.index_cast %283 : i32 to index
    %c0_94 = arith.constant 0 : index
    %285 = vector.load %arg2[%284, %c0_94] : memref<170x8xf32, #tpu.memory_space<vmem>>, vector<64x8xf32>
    %286 = vector.broadcast %6 : vector<1x8xf32> to vector<64x8xf32>
    %287 = arith.mulf %285, %286 : vector<64x8xf32>
    %288 = vector.broadcast %7 : vector<1x8xf32> to vector<64x8xf32>
    %289 = arith.addf %287, %288 : vector<64x8xf32>
    %cst_95 = arith.constant 0.000000e+00 : f32
    %290 = vector.broadcast %cst_95 : f32 to vector<64x8xf32>
    %291 = arith.maximumf %289, %290 : vector<64x8xf32>
    %292 = vector.extract_strided_slice %8 {offsets = [0, 17], sizes = [64, 1], strides = [1, 1]} : vector<64x27xf32> to vector<64x1xf32>
    %293 = vector.broadcast %292 : vector<64x1xf32> to vector<64x8xf32>
    %294 = arith.mulf %291, %293 : vector<64x8xf32>
    %c136 = arith.constant 136 : index
    %c0_96 = arith.constant 0 : index
    %295 = vector.load %arg3[%c136, %c0_96] : memref<216x8xf32, #tpu.memory_space<vmem>>, vector<8x8xf32>
    %cst_97 = arith.constant dense<0.000000e+00> : vector<64x8xf32>
    %296 = tpu.matmul %294, %295, %cst_97 {dimension_numbers = #tpu.dot_dimension_numbers<[1], [0], [0], [1], [0, 0, 1, 1], [], []>} : vector<64x8xf32>, vector<8x8xf32>, vector<64x8xf32> -> vector<64x8xf32>
    %297 = arith.addf %281, %296 : vector<64x8xf32>
    %c21_i32_98 = arith.constant 21 : i32
    %298 = arith.addi %5, %c21_i32_98 : i32
    %c11_i32 = arith.constant 11 : i32
    %299 = arith.addi %298, %c11_i32 : i32
    %300 = arith.index_cast %299 : i32 to index
    %c0_99 = arith.constant 0 : index
    %301 = vector.load %arg2[%300, %c0_99] : memref<170x8xf32, #tpu.memory_space<vmem>>, vector<64x8xf32>
    %302 = vector.broadcast %6 : vector<1x8xf32> to vector<64x8xf32>
    %303 = arith.mulf %301, %302 : vector<64x8xf32>
    %304 = vector.broadcast %7 : vector<1x8xf32> to vector<64x8xf32>
    %305 = arith.addf %303, %304 : vector<64x8xf32>
    %cst_100 = arith.constant 0.000000e+00 : f32
    %306 = vector.broadcast %cst_100 : f32 to vector<64x8xf32>
    %307 = arith.maximumf %305, %306 : vector<64x8xf32>
    %308 = vector.extract_strided_slice %8 {offsets = [0, 18], sizes = [64, 1], strides = [1, 1]} : vector<64x27xf32> to vector<64x1xf32>
    %309 = vector.broadcast %308 : vector<64x1xf32> to vector<64x8xf32>
    %310 = arith.mulf %307, %309 : vector<64x8xf32>
    %c144 = arith.constant 144 : index
    %c0_101 = arith.constant 0 : index
    %311 = vector.load %arg3[%c144, %c0_101] : memref<216x8xf32, #tpu.memory_space<vmem>>, vector<8x8xf32>
    %cst_102 = arith.constant dense<0.000000e+00> : vector<64x8xf32>
    %312 = tpu.matmul %310, %311, %cst_102 {dimension_numbers = #tpu.dot_dimension_numbers<[1], [0], [0], [1], [0, 0, 1, 1], [], []>} : vector<64x8xf32>, vector<8x8xf32>, vector<64x8xf32> -> vector<64x8xf32>
    %313 = arith.addf %297, %312 : vector<64x8xf32>
    %c21_i32_103 = arith.constant 21 : i32
    %314 = arith.addi %5, %c21_i32_103 : i32
    %c12_i32 = arith.constant 12 : i32
    %315 = arith.addi %314, %c12_i32 : i32
    %316 = arith.index_cast %315 : i32 to index
    %c0_104 = arith.constant 0 : index
    %317 = vector.load %arg2[%316, %c0_104] : memref<170x8xf32, #tpu.memory_space<vmem>>, vector<64x8xf32>
    %318 = vector.broadcast %6 : vector<1x8xf32> to vector<64x8xf32>
    %319 = arith.mulf %317, %318 : vector<64x8xf32>
    %320 = vector.broadcast %7 : vector<1x8xf32> to vector<64x8xf32>
    %321 = arith.addf %319, %320 : vector<64x8xf32>
    %cst_105 = arith.constant 0.000000e+00 : f32
    %322 = vector.broadcast %cst_105 : f32 to vector<64x8xf32>
    %323 = arith.maximumf %321, %322 : vector<64x8xf32>
    %324 = vector.extract_strided_slice %8 {offsets = [0, 19], sizes = [64, 1], strides = [1, 1]} : vector<64x27xf32> to vector<64x1xf32>
    %325 = vector.broadcast %324 : vector<64x1xf32> to vector<64x8xf32>
    %326 = arith.mulf %323, %325 : vector<64x8xf32>
    %c152 = arith.constant 152 : index
    %c0_106 = arith.constant 0 : index
    %327 = vector.load %arg3[%c152, %c0_106] : memref<216x8xf32, #tpu.memory_space<vmem>>, vector<8x8xf32>
    %cst_107 = arith.constant dense<0.000000e+00> : vector<64x8xf32>
    %328 = tpu.matmul %326, %327, %cst_107 {dimension_numbers = #tpu.dot_dimension_numbers<[1], [0], [0], [1], [0, 0, 1, 1], [], []>} : vector<64x8xf32>, vector<8x8xf32>, vector<64x8xf32> -> vector<64x8xf32>
    %329 = arith.addf %313, %328 : vector<64x8xf32>
    %c21_i32_108 = arith.constant 21 : i32
    %330 = arith.addi %5, %c21_i32_108 : i32
    %c13_i32 = arith.constant 13 : i32
    %331 = arith.addi %330, %c13_i32 : i32
    %332 = arith.index_cast %331 : i32 to index
    %c0_109 = arith.constant 0 : index
    %333 = vector.load %arg2[%332, %c0_109] : memref<170x8xf32, #tpu.memory_space<vmem>>, vector<64x8xf32>
    %334 = vector.broadcast %6 : vector<1x8xf32> to vector<64x8xf32>
    %335 = arith.mulf %333, %334 : vector<64x8xf32>
    %336 = vector.broadcast %7 : vector<1x8xf32> to vector<64x8xf32>
    %337 = arith.addf %335, %336 : vector<64x8xf32>
    %cst_110 = arith.constant 0.000000e+00 : f32
    %338 = vector.broadcast %cst_110 : f32 to vector<64x8xf32>
    %339 = arith.maximumf %337, %338 : vector<64x8xf32>
    %340 = vector.extract_strided_slice %8 {offsets = [0, 20], sizes = [64, 1], strides = [1, 1]} : vector<64x27xf32> to vector<64x1xf32>
    %341 = vector.broadcast %340 : vector<64x1xf32> to vector<64x8xf32>
    %342 = arith.mulf %339, %341 : vector<64x8xf32>
    %c160 = arith.constant 160 : index
    %c0_111 = arith.constant 0 : index
    %343 = vector.load %arg3[%c160, %c0_111] : memref<216x8xf32, #tpu.memory_space<vmem>>, vector<8x8xf32>
    %cst_112 = arith.constant dense<0.000000e+00> : vector<64x8xf32>
    %344 = tpu.matmul %342, %343, %cst_112 {dimension_numbers = #tpu.dot_dimension_numbers<[1], [0], [0], [1], [0, 0, 1, 1], [], []>} : vector<64x8xf32>, vector<8x8xf32>, vector<64x8xf32> -> vector<64x8xf32>
    %345 = arith.addf %329, %344 : vector<64x8xf32>
    %c21_i32_113 = arith.constant 21 : i32
    %346 = arith.addi %5, %c21_i32_113 : i32
    %c15_i32 = arith.constant 15 : i32
    %347 = arith.addi %346, %c15_i32 : i32
    %348 = arith.index_cast %347 : i32 to index
    %c0_114 = arith.constant 0 : index
    %349 = vector.load %arg2[%348, %c0_114] : memref<170x8xf32, #tpu.memory_space<vmem>>, vector<64x8xf32>
    %350 = vector.broadcast %6 : vector<1x8xf32> to vector<64x8xf32>
    %351 = arith.mulf %349, %350 : vector<64x8xf32>
    %352 = vector.broadcast %7 : vector<1x8xf32> to vector<64x8xf32>
    %353 = arith.addf %351, %352 : vector<64x8xf32>
    %cst_115 = arith.constant 0.000000e+00 : f32
    %354 = vector.broadcast %cst_115 : f32 to vector<64x8xf32>
    %355 = arith.maximumf %353, %354 : vector<64x8xf32>
    %356 = vector.extract_strided_slice %8 {offsets = [0, 21], sizes = [64, 1], strides = [1, 1]} : vector<64x27xf32> to vector<64x1xf32>
    %357 = vector.broadcast %356 : vector<64x1xf32> to vector<64x8xf32>
    %358 = arith.mulf %355, %357 : vector<64x8xf32>
    %c168 = arith.constant 168 : index
    %c0_116 = arith.constant 0 : index
    %359 = vector.load %arg3[%c168, %c0_116] : memref<216x8xf32, #tpu.memory_space<vmem>>, vector<8x8xf32>
    %cst_117 = arith.constant dense<0.000000e+00> : vector<64x8xf32>
    %360 = tpu.matmul %358, %359, %cst_117 {dimension_numbers = #tpu.dot_dimension_numbers<[1], [0], [0], [1], [0, 0, 1, 1], [], []>} : vector<64x8xf32>, vector<8x8xf32>, vector<64x8xf32> -> vector<64x8xf32>
    %361 = arith.addf %345, %360 : vector<64x8xf32>
    %c21_i32_118 = arith.constant 21 : i32
    %362 = arith.addi %5, %c21_i32_118 : i32
    %c16_i32 = arith.constant 16 : i32
    %363 = arith.addi %362, %c16_i32 : i32
    %364 = arith.index_cast %363 : i32 to index
    %c0_119 = arith.constant 0 : index
    %365 = vector.load %arg2[%364, %c0_119] : memref<170x8xf32, #tpu.memory_space<vmem>>, vector<64x8xf32>
    %366 = vector.broadcast %6 : vector<1x8xf32> to vector<64x8xf32>
    %367 = arith.mulf %365, %366 : vector<64x8xf32>
    %368 = vector.broadcast %7 : vector<1x8xf32> to vector<64x8xf32>
    %369 = arith.addf %367, %368 : vector<64x8xf32>
    %cst_120 = arith.constant 0.000000e+00 : f32
    %370 = vector.broadcast %cst_120 : f32 to vector<64x8xf32>
    %371 = arith.maximumf %369, %370 : vector<64x8xf32>
    %372 = vector.extract_strided_slice %8 {offsets = [0, 22], sizes = [64, 1], strides = [1, 1]} : vector<64x27xf32> to vector<64x1xf32>
    %373 = vector.broadcast %372 : vector<64x1xf32> to vector<64x8xf32>
    %374 = arith.mulf %371, %373 : vector<64x8xf32>
    %c176 = arith.constant 176 : index
    %c0_121 = arith.constant 0 : index
    %375 = vector.load %arg3[%c176, %c0_121] : memref<216x8xf32, #tpu.memory_space<vmem>>, vector<8x8xf32>
    %cst_122 = arith.constant dense<0.000000e+00> : vector<64x8xf32>
    %376 = tpu.matmul %374, %375, %cst_122 {dimension_numbers = #tpu.dot_dimension_numbers<[1], [0], [0], [1], [0, 0, 1, 1], [], []>} : vector<64x8xf32>, vector<8x8xf32>, vector<64x8xf32> -> vector<64x8xf32>
    %377 = arith.addf %361, %376 : vector<64x8xf32>
    %c21_i32_123 = arith.constant 21 : i32
    %378 = arith.addi %5, %c21_i32_123 : i32
    %c17_i32 = arith.constant 17 : i32
    %379 = arith.addi %378, %c17_i32 : i32
    %380 = arith.index_cast %379 : i32 to index
    %c0_124 = arith.constant 0 : index
    %381 = vector.load %arg2[%380, %c0_124] : memref<170x8xf32, #tpu.memory_space<vmem>>, vector<64x8xf32>
    %382 = vector.broadcast %6 : vector<1x8xf32> to vector<64x8xf32>
    %383 = arith.mulf %381, %382 : vector<64x8xf32>
    %384 = vector.broadcast %7 : vector<1x8xf32> to vector<64x8xf32>
    %385 = arith.addf %383, %384 : vector<64x8xf32>
    %cst_125 = arith.constant 0.000000e+00 : f32
    %386 = vector.broadcast %cst_125 : f32 to vector<64x8xf32>
    %387 = arith.maximumf %385, %386 : vector<64x8xf32>
    %388 = vector.extract_strided_slice %8 {offsets = [0, 23], sizes = [64, 1], strides = [1, 1]} : vector<64x27xf32> to vector<64x1xf32>
    %389 = vector.broadcast %388 : vector<64x1xf32> to vector<64x8xf32>
    %390 = arith.mulf %387, %389 : vector<64x8xf32>
    %c184 = arith.constant 184 : index
    %c0_126 = arith.constant 0 : index
    %391 = vector.load %arg3[%c184, %c0_126] : memref<216x8xf32, #tpu.memory_space<vmem>>, vector<8x8xf32>
    %cst_127 = arith.constant dense<0.000000e+00> : vector<64x8xf32>
    %392 = tpu.matmul %390, %391, %cst_127 {dimension_numbers = #tpu.dot_dimension_numbers<[1], [0], [0], [1], [0, 0, 1, 1], [], []>} : vector<64x8xf32>, vector<8x8xf32>, vector<64x8xf32> -> vector<64x8xf32>
    %393 = arith.addf %377, %392 : vector<64x8xf32>
    %c21_i32_128 = arith.constant 21 : i32
    %394 = arith.addi %5, %c21_i32_128 : i32
    %c19_i32 = arith.constant 19 : i32
    %395 = arith.addi %394, %c19_i32 : i32
    %396 = arith.index_cast %395 : i32 to index
    %c0_129 = arith.constant 0 : index
    %397 = vector.load %arg2[%396, %c0_129] : memref<170x8xf32, #tpu.memory_space<vmem>>, vector<64x8xf32>
    %398 = vector.broadcast %6 : vector<1x8xf32> to vector<64x8xf32>
    %399 = arith.mulf %397, %398 : vector<64x8xf32>
    %400 = vector.broadcast %7 : vector<1x8xf32> to vector<64x8xf32>
    %401 = arith.addf %399, %400 : vector<64x8xf32>
    %cst_130 = arith.constant 0.000000e+00 : f32
    %402 = vector.broadcast %cst_130 : f32 to vector<64x8xf32>
    %403 = arith.maximumf %401, %402 : vector<64x8xf32>
    %404 = vector.extract_strided_slice %8 {offsets = [0, 24], sizes = [64, 1], strides = [1, 1]} : vector<64x27xf32> to vector<64x1xf32>
    %405 = vector.broadcast %404 : vector<64x1xf32> to vector<64x8xf32>
    %406 = arith.mulf %403, %405 : vector<64x8xf32>
    %c192 = arith.constant 192 : index
    %c0_131 = arith.constant 0 : index
    %407 = vector.load %arg3[%c192, %c0_131] : memref<216x8xf32, #tpu.memory_space<vmem>>, vector<8x8xf32>
    %cst_132 = arith.constant dense<0.000000e+00> : vector<64x8xf32>
    %408 = tpu.matmul %406, %407, %cst_132 {dimension_numbers = #tpu.dot_dimension_numbers<[1], [0], [0], [1], [0, 0, 1, 1], [], []>} : vector<64x8xf32>, vector<8x8xf32>, vector<64x8xf32> -> vector<64x8xf32>
    %409 = arith.addf %393, %408 : vector<64x8xf32>
    %c21_i32_133 = arith.constant 21 : i32
    %410 = arith.addi %5, %c21_i32_133 : i32
    %c20_i32 = arith.constant 20 : i32
    %411 = arith.addi %410, %c20_i32 : i32
    %412 = arith.index_cast %411 : i32 to index
    %c0_134 = arith.constant 0 : index
    %413 = vector.load %arg2[%412, %c0_134] : memref<170x8xf32, #tpu.memory_space<vmem>>, vector<64x8xf32>
    %414 = vector.broadcast %6 : vector<1x8xf32> to vector<64x8xf32>
    %415 = arith.mulf %413, %414 : vector<64x8xf32>
    %416 = vector.broadcast %7 : vector<1x8xf32> to vector<64x8xf32>
    %417 = arith.addf %415, %416 : vector<64x8xf32>
    %cst_135 = arith.constant 0.000000e+00 : f32
    %418 = vector.broadcast %cst_135 : f32 to vector<64x8xf32>
    %419 = arith.maximumf %417, %418 : vector<64x8xf32>
    %420 = vector.extract_strided_slice %8 {offsets = [0, 25], sizes = [64, 1], strides = [1, 1]} : vector<64x27xf32> to vector<64x1xf32>
    %421 = vector.broadcast %420 : vector<64x1xf32> to vector<64x8xf32>
    %422 = arith.mulf %419, %421 : vector<64x8xf32>
    %c200 = arith.constant 200 : index
    %c0_136 = arith.constant 0 : index
    %423 = vector.load %arg3[%c200, %c0_136] : memref<216x8xf32, #tpu.memory_space<vmem>>, vector<8x8xf32>
    %cst_137 = arith.constant dense<0.000000e+00> : vector<64x8xf32>
    %424 = tpu.matmul %422, %423, %cst_137 {dimension_numbers = #tpu.dot_dimension_numbers<[1], [0], [0], [1], [0, 0, 1, 1], [], []>} : vector<64x8xf32>, vector<8x8xf32>, vector<64x8xf32> -> vector<64x8xf32>
    %425 = arith.addf %409, %424 : vector<64x8xf32>
    %c21_i32_138 = arith.constant 21 : i32
    %426 = arith.addi %5, %c21_i32_138 : i32
    %c21_i32_139 = arith.constant 21 : i32
    %427 = arith.addi %426, %c21_i32_139 : i32
    %428 = arith.index_cast %427 : i32 to index
    %c0_140 = arith.constant 0 : index
    %429 = vector.load %arg2[%428, %c0_140] : memref<170x8xf32, #tpu.memory_space<vmem>>, vector<64x8xf32>
    %430 = vector.broadcast %6 : vector<1x8xf32> to vector<64x8xf32>
    %431 = arith.mulf %429, %430 : vector<64x8xf32>
    %432 = vector.broadcast %7 : vector<1x8xf32> to vector<64x8xf32>
    %433 = arith.addf %431, %432 : vector<64x8xf32>
    %cst_141 = arith.constant 0.000000e+00 : f32
    %434 = vector.broadcast %cst_141 : f32 to vector<64x8xf32>
    %435 = arith.maximumf %433, %434 : vector<64x8xf32>
    %436 = vector.extract_strided_slice %8 {offsets = [0, 26], sizes = [64, 1], strides = [1, 1]} : vector<64x27xf32> to vector<64x1xf32>
    %437 = vector.broadcast %436 : vector<64x1xf32> to vector<64x8xf32>
    %438 = arith.mulf %435, %437 : vector<64x8xf32>
    %c208 = arith.constant 208 : index
    %c0_142 = arith.constant 0 : index
    %439 = vector.load %arg3[%c208, %c0_142] : memref<216x8xf32, #tpu.memory_space<vmem>>, vector<8x8xf32>
    %cst_143 = arith.constant dense<0.000000e+00> : vector<64x8xf32>
    %440 = tpu.matmul %438, %439, %cst_143 {dimension_numbers = #tpu.dot_dimension_numbers<[1], [0], [0], [1], [0, 0, 1, 1], [], []>} : vector<64x8xf32>, vector<8x8xf32>, vector<64x8xf32> -> vector<64x8xf32>
    %441 = arith.addf %425, %440 : vector<64x8xf32>
    %c0_144 = arith.constant 0 : index
    %c0_145 = arith.constant 0 : index
    %442 = vector.load %arg4[%c0_144, %c0_145] : memref<1x8xf32, #tpu.memory_space<vmem>>, vector<1x8xf32>
    %443 = vector.broadcast %442 : vector<1x8xf32> to vector<64x8xf32>
    %444 = arith.addf %441, %443 : vector<64x8xf32>
    %c0_146 = arith.constant 0 : index
    %c0_147 = arith.constant 0 : index
    %445 = vector.load %arg9[%c0_146, %c0_147] : memref<64x8xf32, #tpu.memory_space<vmem>>, vector<64x8xf32>
    tpu.vector_store %arg9[%c0_146, %c0_147], %444 {strides = array<i32>} : memref<64x8xf32, #tpu.memory_space<vmem>>, vector<64x8xf32>,
    %c0_148 = arith.constant 0 : index
    %c0_149 = arith.constant 0 : index
    %446 = vector.load %arg8[%c0_148, %c0_149] : memref<64x1xf32, #tpu.memory_space<vmem>>, vector<64x1xf32>
    %447 = vector.broadcast %446 : vector<64x1xf32> to vector<64x8xf32>
    %448 = arith.mulf %444, %447 : vector<64x8xf32>
    %c0_150 = arith.constant 0 : index
    %c0_151 = arith.constant 0 : index
    %c0_152 = arith.constant 0 : index
    %449 = vector.load %arg10[%c0_150, %c0_151, %c0_152] : memref<1x1x8xf32, #tpu.memory_space<vmem>>, vector<1x1x8xf32>
    %cst_153 = arith.constant dense<0.000000e+00> : vector<8xf32>
    %450 = vector.multi_reduction <add>, %448, %cst_153 [0] : vector<64x8xf32> to vector<8xf32>
    %451 = vector.shape_cast %450 : vector<8xf32> to vector<1x1x8xf32>
    %452 = arith.addf %449, %451 : vector<1x1x8xf32>
    %c0_154 = arith.constant 0 : index
    %c0_155 = arith.constant 0 : index
    %c0_156 = arith.constant 0 : index
    %453 = vector.load %arg10[%c0_154, %c0_155, %c0_156] : memref<1x1x8xf32, #tpu.memory_space<vmem>>, vector<1x1x8xf32>
    tpu.vector_store %arg10[%c0_154, %c0_155, %c0_156], %452 {strides = array<i32>} : memref<1x1x8xf32, #tpu.memory_space<vmem>>, vector<1x1x8xf32>,
    %c0_157 = arith.constant 0 : index
    %c0_158 = arith.constant 0 : index
    %c0_159 = arith.constant 0 : index
    %454 = vector.load %arg11[%c0_157, %c0_158, %c0_159] : memref<1x1x8xf32, #tpu.memory_space<vmem>>, vector<1x1x8xf32>
    %455 = arith.mulf %448, %448 : vector<64x8xf32>
    %cst_160 = arith.constant dense<0.000000e+00> : vector<8xf32>
    %456 = vector.multi_reduction <add>, %455, %cst_160 [0] : vector<64x8xf32> to vector<8xf32>
    %457 = vector.shape_cast %456 : vector<8xf32> to vector<1x1x8xf32>
    %458 = arith.addf %454, %457 : vector<1x1x8xf32>
    %c0_161 = arith.constant 0 : index
    %c0_162 = arith.constant 0 : index
    %c0_163 = arith.constant 0 : index
    %459 = vector.load %arg11[%c0_161, %c0_162, %c0_163] : memref<1x1x8xf32, #tpu.memory_space<vmem>>, vector<1x1x8xf32>
    tpu.vector_store %arg11[%c0_161, %c0_162, %c0_163], %458 {strides = array<i32>} : memref<1x1x8xf32, #tpu.memory_space<vmem>>, vector<1x1x8xf32>,
    return
  }
  func.func @transform_0(%arg0: i32, %arg1: i32) -> (i32, i32) {
    %c0_i32 = arith.constant 0 : i32
    %c0_i32_0 = arith.constant 0 : i32
    %c0_i32_1 = arith.constant 0 : i32
    return %c0_i32, %c0_i32_0 : i32, i32
  }
  func.func @transform_1(%arg0: i32, %arg1: i32) -> (i32, i32) {
    %c0_i32 = arith.constant 0 : i32
    %c0_i32_0 = arith.constant 0 : i32
    %c0_i32_1 = arith.constant 0 : i32
    return %c0_i32, %c0_i32_0 : i32, i32
  }
  func.func @transform_2(%arg0: i32, %arg1: i32) -> (i32, i32) {
    %c0_i32 = arith.constant 0 : i32
    %c0_i32_0 = arith.constant 0 : i32
    %c0_i32_1 = arith.constant 0 : i32
    return %c0_i32, %c0_i32_0 : i32, i32
  }
  func.func @transform_3(%arg0: i32, %arg1: i32) -> (i32, i32) {
    %c0_i32 = arith.constant 0 : i32
    %c0_i32_0 = arith.constant 0 : i32
    %c0_i32_1 = arith.constant 0 : i32
    return %c0_i32, %c0_i32_0 : i32, i32
  }
  func.func @transform_4(%arg0: i32, %arg1: i32) -> (i32, i32) {
    %c0_i32 = arith.constant 0 : i32
    %c0_i32_0 = arith.constant 0 : i32
    %c0_i32_1 = arith.constant 0 : i32
    return %c0_i32, %c0_i32_0 : i32, i32
  }
  func.func @transform_5(%arg0: i32, %arg1: i32) -> (i32, i32) {
    %c1_i32 = arith.constant 1 : i32
    %0 = arith.muli %arg0, %c1_i32 : i32
    %1 = arith.addi %0, %arg1 : i32
    %c0_i32 = arith.constant 0 : i32
    %c0_i32_0 = arith.constant 0 : i32
    return %1, %c0_i32 : i32, i32
  }
  func.func @transform_6(%arg0: i32, %arg1: i32) -> (i32, i32) {
    %c1_i32 = arith.constant 1 : i32
    %0 = arith.muli %arg0, %c1_i32 : i32
    %1 = arith.addi %0, %arg1 : i32
    %c0_i32 = arith.constant 0 : i32
    %c0_i32_0 = arith.constant 0 : i32
    return %1, %c0_i32 : i32, i32
  }
  func.func @transform_7(%arg0: i32, %arg1: i32) -> (i32, i32) {
    %c1_i32 = arith.constant 1 : i32
    %0 = arith.muli %arg0, %c1_i32 : i32
    %1 = arith.addi %0, %arg1 : i32
    %c0_i32 = arith.constant 0 : i32
    %c0_i32_0 = arith.constant 0 : i32
    return %1, %c0_i32 : i32, i32
  }
  func.func @transform_8(%arg0: i32, %arg1: i32) -> (i32, i32, i32) {
    %c0_i32 = arith.constant 0 : i32
    %c0_i32_0 = arith.constant 0 : i32
    %c0_i32_1 = arith.constant 0 : i32
    return %arg0, %c0_i32, %c0_i32_0 : i32, i32, i32
  }
  func.func @transform_9(%arg0: i32, %arg1: i32) -> (i32, i32, i32) {
    %c0_i32 = arith.constant 0 : i32
    %c0_i32_0 = arith.constant 0 : i32
    %c0_i32_1 = arith.constant 0 : i32
    return %arg0, %c0_i32, %c0_i32_0 : i32, i32, i32
  }
}

</mosaic_0001>

<llo_original>
// kernel: tile.38
$region0: #{tile.38}
  #allocation0 [shape = 's32[1]{0}', space=sflag, size = 0x4, scoped, tag = 'scoped memory for tile.38']
  %s0 = inlined_call_operand.vmem [shape: f32[16], index: 0, kind: input, shape index: {}]
  %s1 = inlined_call_operand.vmem [shape: f32[8,16], index: 1, kind: output, shape index: {}]
  // Predicated region
  $region2: #{tile.38} parent=0 // pred_check
    _
  $region3: #{tile.38} parent=0 // pred_check_branch
    %3 = sbr.rel (0) target = $region5
  $region4: #{tile.38} parent=0 // pred_region
    _
  $region5: #{tile.38} parent=0 // pred_fallthru
    _
  %v4 = vld [vmem:[%s0] ss:$0 sm:$0xff]
  %5 = vst [vmem:[%s1] sm:$0xff] %v4

// kernel: tile.39
$region0: #{tile.39}
  %s0 = inlined_call_operand.vmem [shape: f32[8,16], index: 0, kind: input, shape index: {}]
  %s1 = inlined_call_operand.vmem [shape: f32[1,128], index: 1, kind: output, shape index: {}]
  $region1: #{tile.39} parent=0
    #allocation0 [shape = 'u8[4096]{0}', space=vmem, size = 0x1000, scoped, tag = 'scoped mem for output reshape']
    %v2 = vld [vmem:[%s0] sm:$0x1]
    %vm3 = vcmask 130048
    %4 = vst.msk [vmem:[#allocation0] sm:$0x1] %vm3, %v2
    %s5 = scalar_lea.vmem %s0, 7
    %v6 = vld [vmem:[%s5] sm:$0x1]
    %7 = vrot.lane.b32.xlu0 %v6, 112
    %v8 = vpop.permute.xlu0 %7
    %vm9 = vcmask 1048448
    %10 = vst.msk [vmem:[#allocation0] sm:$0x1] %vm9, %v8
    %s11 = scalar_lea.vmem %s0, 6
    %v12 = vld [vmem:[%s11] sm:$0x1]
    %13 = vrot.lane.b32.xlu0 %v12, 96
    %v14 = vpop.permute.xlu0 %13
    %vm15 = vcmask 917248
    %16 = vst.msk [vmem:[#allocation0] sm:$0x1] %vm15, %v14
    %s17 = scalar_lea.vmem %s0, 5
    %v18 = vld [vmem:[%s17] sm:$0x1]
    %19 = vrot.lane.b32.xlu0 %v18, 80
    %v20 = vpop.permute.xlu0 %19
    %vm21 = vcmask 786048
    %22 = vst.msk [vmem:[#allocation0] sm:$0x1] %vm21, %v20
    %s23 = scalar_lea.vmem %s0, 4
    %v24 = vld [vmem:[%s23] sm:$0x1]
    %25 = vrot.lane.b32.xlu0 %v24, 64
    %v26 = vpop.permute.xlu0 %25
    %vm27 = vcmask 654848
    %28 = vst.msk [vmem:[#allocation0] sm:$0x1] %vm27, %v26
    %s29 = scalar_lea.vmem %s0, 3
    %v30 = vld [vmem:[%s29] sm:$0x1]
    %31 = vrot.lane.b32.xlu0 %v30, 48
    %v32 = vpop.permute.xlu0 %31
    %vm33 = vcmask 523648
    %34 = vst.msk [vmem:[#allocation0] sm:$0x1] %vm33, %v32
    %s35 = scalar_lea.vmem %s0, 2
    %v36 = vld [vmem:[%s35] sm:$0x1]
    %37 = vrot.lane.b32.xlu0 %v36, 32
    %v38 = vpop.permute.xlu0 %37
    %vm39 = vcmask 392448
    %40 = vst.msk [vmem:[#allocation0] sm:$0x1] %vm39, %v38
    %s41 = scalar_lea.vmem %s0, 1
    %v42 = vld [vmem:[%s41] sm:$0x1]
    %43 = vrot.lane.b32.xlu0 %v42, 16
    %v44 = vpop.permute.xlu0 %43
    %vm45 = vcmask 261248
    %46 = vst.msk [vmem:[#allocation0] sm:$0x1] %vm45, %v44
    %s48 = sshllo.u32 0, 1
    %v50 = vld [vmem:[#allocation0] sm:%s48]
    %s51 = sshllo.u32 0, 1
    %52 = vst [vmem:[%s1] sm:%s51] %v50

// kernel: conv_block_forward.7
$region0: #{conv_block_forward.7}
  #allocation0 [shape = 'u32[]', space=smem, size = 0x4, offset = 0x4, fixed_abs, tag = 'smem constant byte address 0x4 - core index']
  #allocation1 [shape = 'u32[144,128]{1,0:T(1,128)}', space=vmem, size = 0x12000, scoped, tag = 'internal scratch']
  %s0 = inlined_call_operand.vmem [shape: f32[16,128], index: 0, kind: input, shape index: {}]
  %s1 = inlined_call_operand.vmem [shape: f32[1,128], index: 1, kind: input, shape index: {}]
  %s2 = inlined_call_operand.vmem [shape: f32[1,128], index: 2, kind: input, shape index: {}]
  %s3 = inlined_call_operand.vmem [shape: f32[16,128], index: 3, kind: input, shape index: {}]
  %s4 = inlined_call_operand.vmem [shape: f32[1,128], index: 4, kind: input, shape index: {}]
  %s5 = inlined_call_operand.vmem [shape: f32[1,128], index: 5, kind: input, shape index: {}]
  %s6 = inlined_call_operand.vmem [shape: f32[16,128], index: 6, kind: output, shape index: {}]
  %s7 = sld [smem:[#allocation0]]
  $region57: #{conv_block_forward.7} parent=0
    _
  %s9 = ssub.s32 1, %s7
  %s10 = scalar_select 0, %s9, %s7
  loop: start=0, step=1, limit=4
  $region2: #{conv_block_forward.7} parent=0 // loop_pre_header
    _
  $region3: #{conv_block_forward.7} parent=0 // loop_header
    %s12 = sphi 0, %s16
    %p13 = scmp.ge.s32.totalorder %s12, 4
    %s22 = sphi 0, %s24
    %s25 = sphi 0, %s22
    %s26 = sphi 0, %s25
    %s42 = sphi 0, %s26
    %s46 = sphi 0, %s46
    %s48 = sphi 0, %s46
    %s49 = sphi 0, %s48
    %s63 = sphi 0, %s49
    %s67 = sphi 0, %s67
    %s69 = sphi 0, %s67
    %s70 = sphi 0, %s69
    %s84 = sphi 0, %s70
    %s90 = sphi 0, %s92
    %s93 = sphi 0, %s90
    %s94 = sphi 0, %s93
    %s110 = sphi 0, %s94
    %s114 = sphi 0, %s114
    %s116 = sphi 0, %s114
    %s117 = sphi 0, %s116
    %s131 = sphi 0, %s117
    %s135 = sphi 0, %s135
    %s137 = sphi 0, %s135
    %s138 = sphi 0, %s137
    %s152 = sphi 0, %s138
    %s158 = sphi 0, %s160
    %s161 = sphi 0, %s158
    %s162 = sphi 0, %s161
    %s178 = sphi 0, %s162
  $region4: #{conv_block_forward.7} parent=0 // loop_header_branch
    %15 = sbr.rel (%p13) target = $region8
  $region5: #{conv_block_forward.7} parent=0 // loop_body
    %s17 = ssub.s32 %s12, 1
    %s18 = ssub.s32 %s12, 2
    %s19 = sadd.s32 %s12, 1
    %s20 = ssub.s32 %s12, %s19
    %p21 = scmp.eq.s32.totalorder %s20, 0
    %s23 = sadd.s32 %s22, 1
    %s24 = scalar_select %p21, %s22, %s23
    %p27 = pneg %p21
    %p28 = scmp.eq.s32.totalorder %s12, 1
    %p29 = por %p27, %p28
    %p30 = scmp.ne.s32.totalorder %s22, %s25
    %p31 = scmp.eq.s32.totalorder %s12, 0
    %p32 = por %p30, %p31
    %p33 = scmp.ne.s32.totalorder %s22, %s25
    %p34 = scmp.eq.s32.totalorder %s17, 1
    %p35 = por %p33, %p34
    %p36 = scmp.ne.s32.totalorder %s25, %s26
    %p37 = scmp.eq.s32.totalorder %s17, 0
    %p38 = por %p36, %p37
    %p39 = scmp.ne.s32.totalorder %s25, %s26
    %p40 = scmp.eq.s32.totalorder %s18, 1
    %p41 = por %p39, %p40
    %p43 = scmp.ne.s32.totalorder %s26, %s42
    %p44 = scmp.eq.s32.totalorder %s18, 0
    %p45 = por %p43, %p44
    %s47 = sadd.s32 %s46, 1
    %p50 = scmp.eq.s32.totalorder %s12, 1
    %p51 = scmp.ne.s32.totalorder %s46, %s48
    %p52 = scmp.eq.s32.totalorder %s12, 0
    %p53 = por %p51, %p52
    %p54 = scmp.ne.s32.totalorder %s46, %s48
    %p55 = scmp.eq.s32.totalorder %s17, 1
    %p56 = por %p54, %p55
    %p57 = scmp.ne.s32.totalorder %s48, %s49
    %p58 = scmp.eq.s32.totalorder %s17, 0
    %p59 = por %p57, %p58
    %p60 = scmp.ne.s32.totalorder %s48, %s49
    %p61 = scmp.eq.s32.totalorder %s18, 1
    %p62 = por %p60, %p61
    %p64 = scmp.ne.s32.totalorder %s49, %s63
    %p65 = scmp.eq.s32.totalorder %s18, 0
    %p66 = por %p64, %p65
    %s68 = sadd.s32 %s67, 1
    %p71 = scmp.eq.s32.totalorder %s12, 1
    %p72 = scmp.ne.s32.totalorder %s67, %s69
    %p73 = scmp.eq.s32.totalorder %s12, 0
    %p74 = por %p72, %p73
    %p75 = scmp.ne.s32.totalorder %s67, %s69
    %p76 = scmp.eq.s32.totalorder %s17, 1
    %p77 = por %p75, %p76
    %p78 = scmp.ne.s32.totalorder %s69, %s70
    %p79 = scmp.eq.s32.totalorder %s17, 0
    %p80 = por %p78, %p79
    %p81 = scmp.ne.s32.totalorder %s69, %s70
    %p82 = scmp.eq.s32.totalorder %s18, 1
    %p83 = por %p81, %p82
    %p85 = scmp.ne.s32.totalorder %s70, %s84
    %p86 = scmp.eq.s32.totalorder %s18, 0
    %p87 = por %p85, %p86
    %s88 = ssub.s32 %s12, %s19
    %p89 = scmp.eq.s32.totalorder %s88, 0
    %s91 = sadd.s32 %s90, 1
    %s92 = scalar_select %p89, %s90, %s91
    %p95 = pneg %p89
    %p96 = scmp.eq.s32.totalorder %s12, 1
    %p97 = por %p95, %p96
    %p98 = scmp.ne.s32.totalorder %s90, %s93
    %p99 = scmp.eq.s32.totalorder %s12, 0
    %p100 = por %p98, %p99
    %p101 = scmp.ne.s32.totalorder %s90, %s93
    %p102 = scmp.eq.s32.totalorder %s17, 1
    %p103 = por %p101, %p102
    %p104 = scmp.ne.s32.totalorder %s93, %s94
    %p105 = scmp.eq.s32.totalorder %s17, 0
    %p106 = por %p104, %p105
    %p107 = scmp.ne.s32.totalorder %s93, %s94
    %p108 = scmp.eq.s32.totalorder %s18, 1
    %p109 = por %p107, %p108
    %p111 = scmp.ne.s32.totalorder %s94, %s110
    %p112 = scmp.eq.s32.totalorder %s18, 0
    %p113 = por %p111, %p112
    %s115 = sadd.s32 %s114, 1
    %p118 = scmp.eq.s32.totalorder %s12, 1
    %p119 = scmp.ne.s32.totalorder %s114, %s116
    %p120 = scmp.eq.s32.totalorder %s12, 0
    %p121 = por %p119, %p120
    %p122 = scmp.ne.s32.totalorder %s114, %s116
    %p123 = scmp.eq.s32.totalorder %s17, 1
    %p124 = por %p122, %p123
    %p125 = scmp.ne.s32.totalorder %s116, %s117
    %p126 = scmp.eq.s32.totalorder %s17, 0
    %p127 = por %p125, %p126
    %p128 = scmp.ne.s32.totalorder %s116, %s117
    %p129 = scmp.eq.s32.totalorder %s18, 1
    %p130 = por %p128, %p129
    %p132 = scmp.ne.s32.totalorder %s117, %s131
    %p133 = scmp.eq.s32.totalorder %s18, 0
    %p134 = por %p132, %p133
    %s136 = sadd.s32 %s135, 1
    %p139 = scmp.eq.s32.totalorder %s12, 1
    %p140 = scmp.ne.s32.totalorder %s135, %s137
    %p141 = scmp.eq.s32.totalorder %s12, 0
    %p142 = por %p140, %p141
    %p143 = scmp.ne.s32.totalorder %s135, %s137
    %p144 = scmp.eq.s32.totalorder %s17, 1
    %p145 = por %p143, %p144
    %p146 = scmp.ne.s32.totalorder %s137, %s138
    %p147 = scmp.eq.s32.totalorder %s17, 0
    %p148 = por %p146, %p147
    %p149 = scmp.ne.s32.totalorder %s137, %s138
    %p150 = scmp.eq.s32.totalorder %s18, 1
    %p151 = por %p149, %p150
    %p153 = scmp.ne.s32.totalorder %s138, %s152
    %p154 = scmp.eq.s32.totalorder %s18, 0
    %p155 = por %p153, %p154
    %s156 = ssub.s32 %s12, %s19
    %p157 = scmp.eq.s32.totalorder %s156, 0
    %s159 = sadd.s32 %s158, 1
    %s160 = scalar_select %p157, %s158, %s159
    %p163 = pneg %p157
    %p164 = scmp.eq.s32.totalorder %s12, 1
    %p165 = por %p163, %p164
    %p166 = scmp.ne.s32.totalorder %s158, %s161
    %p167 = scmp.eq.s32.totalorder %s12, 0
    %p168 = por %p166, %p167
    %p169 = scmp.ne.s32.totalorder %s158, %s161
    %p170 = scmp.eq.s32.totalorder %s17, 1
    %p171 = por %p169, %p170
    %p172 = scmp.ne.s32.totalorder %s161, %s162
    %p173 = scmp.eq.s32.totalorder %s17, 0
    %p174 = por %p172, %p173
    %p175 = scmp.ne.s32.totalorder %s161, %s162
    %p176 = scmp.eq.s32.totalorder %s18, 1
    %p177 = por %p175, %p176
    %p179 = scmp.ne.s32.totalorder %s162, %s178
    %p180 = scmp.eq.s32.totalorder %s18, 0
    %p181 = por %p179, %p180
    %p182 = scmp.le.s32.totalorder 1, %s12
    %p183 = scmp.lt.s32.totalorder %s12, 3
    %p184 = pnand %p182, %p183
    %p185 = pneg %p184
    // Predicated region
    $region9: #{conv_block_forward.7} parent=5 // pred_check
      _
    $region10: #{conv_block_forward.7} parent=5 // pred_check_branch
      %187 = sbr.rel (%p184) target = $region12
    $region11: #{conv_block_forward.7} parent=5 // pred_region
      %s188 = ssub.s32 %s12, 1
      // Predicated region
      $region13: #{conv_block_forward.7} parent=11 // pred_check
        %p189 = pneg %p59
      $region14: #{conv_block_forward.7} parent=11 // pred_check_branch
        %191 = sbr.rel (%p189) target = $region16
      $region15: #{conv_block_forward.7} parent=11 // pred_region
        _
      $region16: #{conv_block_forward.7} parent=11 // pred_fallthru
        _
      // Predicated region
      $region17: #{conv_block_forward.7} parent=11 // pred_check
        %p192 = pneg %p80
      $region18: #{conv_block_forward.7} parent=11 // pred_check_branch
        %194 = sbr.rel (%p192) target = $region20
      $region19: #{conv_block_forward.7} parent=11 // pred_region
        _
      $region20: #{conv_block_forward.7} parent=11 // pred_fallthru
        _
      // Predicated region
      $region21: #{conv_block_forward.7} parent=11 // pred_check
        %p195 = pneg %p127
      $region22: #{conv_block_forward.7} parent=11 // pred_check_branch
        %197 = sbr.rel (%p195) target = $region24
      $region23: #{conv_block_forward.7} parent=11 // pred_region
        _
      $region24: #{conv_block_forward.7} parent=11 // pred_fallthru
        _
      // Predicated region
      $region25: #{conv_block_forward.7} parent=11 // pred_check
        %p198 = pneg %p148
      $region26: #{conv_block_forward.7} parent=11 // pred_check_branch
        %200 = sbr.rel (%p198) target = $region28
      $region27: #{conv_block_forward.7} parent=11 // pred_region
        _
      $region28: #{conv_block_forward.7} parent=11 // pred_fallthru
        _
    $region12: #{conv_block_forward.7} parent=5 // pred_fallthru
      _
    %p201 = scmp.lt.s32.totalorder %s12, 2
    // Predicated region
    $region29: #{conv_block_forward.7} parent=5 // pred_check
      %p202 = pneg %p201
    $region30: #{conv_block_forward.7} parent=5 // pred_check_branch
      %204 = sbr.rel (%p202) target = $region32
    $region31: #{conv_block_forward.7} parent=5 // pred_region
      // Predicated region
      $region33: #{conv_block_forward.7} parent=31 // pred_check
        %p205 = pneg %p32
      $region34: #{conv_block_forward.7} parent=31 // pred_check_branch
        %207 = sbr.rel (%p205) target = $region36
      $region35: #{conv_block_forward.7} parent=31 // pred_region
        %p208 = scmp.lt.s32.totalorder %s12, 1
        %s209 = scalar_select %p208, %s12, 1
        %s210 = smul.addr %s209, 8
        %s211 = scalar_lea.vmem %s0, %s210
      $region36: #{conv_block_forward.7} parent=31 // pred_fallthru
        _
      // Predicated region
      $region37: #{conv_block_forward.7} parent=31 // pred_check
        %p212 = pneg %p100
      $region38: #{conv_block_forward.7} parent=31 // pred_check_branch
        %214 = sbr.rel (%p212) target = $region40
      $region39: #{conv_block_forward.7} parent=31 // pred_region
        %p215 = scmp.lt.s32.totalorder %s12, 1
        %s216 = scalar_select %p215, %s12, 1
        %s217 = smul.addr %s216, 8
        %s218 = scalar_lea.vmem %s3, %s217
      $region40: #{conv_block_forward.7} parent=31 // pred_fallthru
        _
    $region32: #{conv_block_forward.7} parent=5 // pred_fallthru
      _
    %p219 = scmp.le.s32.totalorder 1, %s12
    %p220 = scmp.lt.s32.totalorder %s12, 3
    %p221 = pnand %p219, %p220
    %p222 = pneg %p221
    // Predicated region
    $region41: #{conv_block_forward.7} parent=5 // pred_check
      _
    $region42: #{conv_block_forward.7} parent=5 // pred_check_branch
      %224 = sbr.rel (%p221) target = $region44
    $region43: #{conv_block_forward.7} parent=5 // pred_region
      %s225 = ssub.s32 %s12, 1
      %p226 = scmp.lt.s32.totalorder %s17, 1
      %s227 = scalar_select %p226, %s17, 1
      %s228 = smul.addr %s227, 8
      %s229 = scalar_lea.vmem %s0, %s228
      %p230 = pneg %p38
      %p231 = pneg %p35
      %p232 = pneg %p59
      %p233 = pneg %p56
      %p234 = pneg %p80
      %p235 = pneg %p77
      %p236 = scmp.lt.s32.totalorder %s17, 1
      %s237 = scalar_select %p236, %s17, 1
      %s238 = smul.addr %s237, 8
      %s239 = scalar_lea.vmem %s3, %s238
      %p240 = pneg %p106
      %p241 = pneg %p103
      %p242 = pneg %p127
      %p243 = pneg %p124
      %p244 = pneg %p148
      %p245 = pneg %p145
      %p246 = pneg %p174
      %p247 = pneg %p171
      %p248 = scmp.lt.s32.totalorder %s17, 1
      %s249 = scalar_select %p248, %s17, 1
      %s250 = smul.addr %s249, 8
      %s251 = scalar_lea.vmem %s6, %s250
      %p252 = scmp.lt.s32.totalorder %s17, 1
      %s253 = scalar_select %p252, %s17, 1
      %s254 = smul.addr %s253, 8
      %s255 = scalar_lea.vmem %s0, %s254
      %p256 = scmp.lt.s32.totalorder %s17, 1
      %s257 = scalar_select %p256, %s17, 1
      %s258 = smul.addr %s257, 8
      %s259 = scalar_lea.vmem %s3, %s258
      %p260 = scmp.lt.s32.totalorder %s17, 1
      %s261 = scalar_select %p260, %s17, 1
      %s262 = smul.addr %s261, 8
      %s263 = scalar_lea.vmem %s6, %s262
      %v264 = vld [vmem:[%s255] sm:$0xff]
      %v265 = vld [vmem:[%s1] sm:$0x1]
      %v267 = vlaneseq
      %v268 = vshrl.u32 %v267, 7
      %v269 = vsub.s32 0, %v268
      %v270 = vrot.slane %v265, %v269
      %v272 = vmul.f32 %v264, %v270
      %v273 = vld [vmem:[%s2] sm:$0x1]
      %v275 = vlaneseq
      %v276 = vshrl.u32 %v275, 7
      %v277 = vsub.s32 0, %v276
      %v278 = vrot.slane %v273, %v277
      %v280 = vadd.f32 %v272, %v278
      %v281 = vld [vmem:[%s259] sm:$0xff]
      %v282 = vld [vmem:[%s4] sm:$0x1]
      %v284 = vlaneseq
      %v285 = vshrl.u32 %v284, 7
      %v286 = vsub.s32 0, %v285
      %v287 = vrot.slane %v282, %v286
      %v289 = vmul.f32 %v281, %v287
      %v290 = vadd.f32 %v280, %v289
      %v291 = vld [vmem:[%s5] sm:$0x1]
      %v293 = vlaneseq
      %v294 = vshrl.u32 %v293, 7
      %v295 = vsub.s32 0, %v294
      %v296 = vrot.slane %v291, %v295
      %v298 = vadd.f32 %v290, %v296
      %v299 = vmax.f32 %v298, 0.0
      %300 = vst [vmem:[%s263] sm:$0xff] %v299
      %p301 = scmp.lt.s32.totalorder %s17, 1
      %s302 = scalar_select %p301, %s17, 1
      %s303 = smul.addr %s302, 8
      %s304 = scalar_lea.vmem %s6, %s303
      // Predicated region
      $region45: #{conv_block_forward.7} parent=43 // pred_check
        %p305 = pneg %p171
      $region46: #{conv_block_forward.7} parent=43 // pred_check_branch
        %307 = sbr.rel (%p305) target = $region48
      $region47: #{conv_block_forward.7} parent=43 // pred_region
        _
      $region48: #{conv_block_forward.7} parent=43 // pred_fallthru
        _
    $region44: #{conv_block_forward.7} parent=5 // pred_fallthru
      _
    %p308 = scmp.le.s32.totalorder 2, %s12
    // Predicated region
    $region49: #{conv_block_forward.7} parent=5 // pred_check
      %p309 = pneg %p308
    $region50: #{conv_block_forward.7} parent=5 // pred_check_branch
      %311 = sbr.rel (%p309) target = $region52
    $region51: #{conv_block_forward.7} parent=5 // pred_region
      %s312 = ssub.s32 %s12, 2
      // Predicated region
      $region53: #{conv_block_forward.7} parent=51 // pred_check
        %p313 = pneg %p177
      $region54: #{conv_block_forward.7} parent=51 // pred_check_branch
        %315 = sbr.rel (%p313) target = $region56
      $region55: #{conv_block_forward.7} parent=51 // pred_region
        %p316 = scmp.lt.s32.totalorder %s18, 1
        %s317 = scalar_select %p316, %s18, 1
        %s318 = smul.addr %s317, 8
        %s319 = scalar_lea.vmem %s6, %s318
      $region56: #{conv_block_forward.7} parent=51 // pred_fallthru
        _
    $region52: #{conv_block_forward.7} parent=5 // pred_fallthru
      _
  $region6: #{conv_block_forward.7} parent=0 // loop_footer
    %s16 = sadd.s32 1, %s12
  $region7: #{conv_block_forward.7} parent=0 // loop_footer_branch
    %11 = sbr.rel target = $region3
  $region8: #{conv_block_forward.7} parent=0 // loop_exit
    _

// kernel: conv_block_forward.4
$region0: #{conv_block_forward.4}
  #allocation0 [shape = 'u32[]', space=smem, size = 0x4, offset = 0x4, fixed_abs, tag = 'smem constant byte address 0x4 - core index']
  #allocation1 [shape = 'u32[144,128]{1,0:T(1,128)}', space=vmem, size = 0x12000, scoped, tag = 'internal scratch']
  %s0 = inlined_call_operand.vmem [shape: f32[128,4], index: 0, kind: input, shape index: {}]
  %s1 = inlined_call_operand.vmem [shape: f32[4,8], index: 1, kind: input, shape index: {}]
  %s2 = inlined_call_operand.vmem [shape: f32[1,8], index: 2, kind: input, shape index: {}]
  %s3 = inlined_call_operand.vmem [shape: f32[4,16], index: 3, kind: input, shape index: {}]
  %s4 = inlined_call_operand.vmem [shape: f32[1,16], index: 4, kind: input, shape index: {}]
  %s5 = inlined_call_operand.vmem [shape: f32[128,1], index: 5, kind: input, shape index: {}]
  %s6 = inlined_call_operand.vmem [shape: f32[128,8], index: 6, kind: output, shape index: {0}]
  %s7 = inlined_call_operand.vmem [shape: f32[128,16], index: 7, kind: output, shape index: {1}]
  %s8 = inlined_call_operand.vmem [shape: f32[2,1,8], index: 8, kind: output, shape index: {2}]
  %s9 = inlined_call_operand.vmem [shape: f32[2,1,8], index: 9, kind: output, shape index: {3}]
  %s10 = inlined_call_operand.vmem [shape: f32[2,1,16], index: 10, kind: output, shape index: {4}]
  %s11 = inlined_call_operand.vmem [shape: f32[2,1,16], index: 11, kind: output, shape index: {5}]
  %12 = xla_tuple %s6, %s7, %s8, %s9, %s10, %s11
  %s13 = sld [smem:[#allocation0]]
  $region101: #{conv_block_forward.4} parent=0
    _
  %s15 = ssub.s32 1, %s13
  %s16 = scalar_select 0, %s15, %s13
  loop: start=0, step=1, limit=4
  $region2: #{conv_block_forward.4} parent=0 // loop_pre_header
    _
  $region3: #{conv_block_forward.4} parent=0 // loop_header
    %s18 = sphi 0, %s22
    %p19 = scmp.ge.s32.totalorder %s18, 4
    %s25 = sphi 0, %s37
    %s26 = sphi 0, %s33
    %s27 = sphi 0, %s25
    %s28 = sphi 0, %s26
    %s29 = sphi 0, %s27
    %s30 = sphi 0, %s28
    %s42 = sphi 0, %s44
    %s45 = sphi 0, %s42
    %s46 = sphi 0, %s45
    %s62 = sphi 0, %s46
    %s66 = sphi 0, %s66
    %s68 = sphi 0, %s66
    %s69 = sphi 0, %s68
    %s83 = sphi 0, %s69
    %s87 = sphi 0, %s87
    %s89 = sphi 0, %s87
    %s90 = sphi 0, %s89
    %s104 = sphi 0, %s90
    %s108 = sphi 0, %s108
    %s110 = sphi 0, %s108
    %s111 = sphi 0, %s110
    %s125 = sphi 0, %s111
    %s129 = sphi 0, %s129
    %s131 = sphi 0, %s129
    %s132 = sphi 0, %s131
    %s146 = sphi 0, %s132
    %s154 = sphi 0, %s156
    %s157 = sphi 0, %s154
    %s158 = sphi 0, %s157
    %s174 = sphi 0, %s158
    %s182 = sphi 0, %s184
    %s185 = sphi 0, %s182
    %s186 = sphi 0, %s185
    %s202 = sphi 0, %s186
    %s210 = sphi 0, %s212
    %s213 = sphi 0, %s210
    %s214 = sphi 0, %s213
    %s230 = sphi 0, %s214
    %s236 = sphi 0, %s238
    %s239 = sphi 0, %s236
    %s240 = sphi 0, %s239
    %s256 = sphi 0, %s240
    %s262 = sphi 0, %s264
    %s265 = sphi 0, %s262
    %s266 = sphi 0, %s265
    %s282 = sphi 0, %s266
    %s288 = sphi 0, %s290
    %s291 = sphi 0, %s288
    %s292 = sphi 0, %s291
    %s308 = sphi 0, %s292
    %s314 = sphi 0, %s316
    %s317 = sphi 0, %s314
    %s318 = sphi 0, %s317
    %s334 = sphi 0, %s318
  $region4: #{conv_block_forward.4} parent=0 // loop_header_branch
    %21 = sbr.rel (%p19) target = $region8
  $region5: #{conv_block_forward.4} parent=0 // loop_body
    %s23 = ssub.s32 %s18, 1
    %s24 = ssub.s32 %s18, 2
    %s31 = sadd.s32 1, %s26
    %p32 = scmp.ge.s32.totalorder %s31, 1
    %s33 = scalar_select %p32, 0, %s31
    %s34 = sadd.s32 1, %s25
    %s35 = scalar_select %p32, %s34, %s25
    %p36 = scmp.ge.s32.totalorder %s35, 2
    %s37 = scalar_select %p36, 0, %s35
    %s38 = sadd.s32 %s25, %s26
    %s39 = sadd.s32 %s37, %s33
    %s40 = ssub.s32 %s38, %s39
    %p41 = scmp.eq.s32.totalorder %s40, 0
    %s43 = sadd.s32 %s42, 1
    %s44 = scalar_select %p41, %s42, %s43
    %p47 = pneg %p41
    %p48 = scmp.eq.s32.totalorder %s18, 1
    %p49 = por %p47, %p48
    %p50 = scmp.ne.s32.totalorder %s42, %s45
    %p51 = scmp.eq.s32.totalorder %s18, 0
    %p52 = por %p50, %p51
    %p53 = scmp.ne.s32.totalorder %s42, %s45
    %p54 = scmp.eq.s32.totalorder %s23, 1
    %p55 = por %p53, %p54
    %p56 = scmp.ne.s32.totalorder %s45, %s46
    %p57 = scmp.eq.s32.totalorder %s23, 0
    %p58 = por %p56, %p57
    %p59 = scmp.ne.s32.totalorder %s45, %s46
    %p60 = scmp.eq.s32.totalorder %s24, 1
    %p61 = por %p59, %p60
    %p63 = scmp.ne.s32.totalorder %s46, %s62
    %p64 = scmp.eq.s32.totalorder %s24, 0
    %p65 = por %p63, %p64
    %s67 = sadd.s32 %s66, 1
    %p70 = scmp.eq.s32.totalorder %s18, 1
    %p71 = scmp.ne.s32.totalorder %s66, %s68
    %p72 = scmp.eq.s32.totalorder %s18, 0
    %p73 = por %p71, %p72
    %p74 = scmp.ne.s32.totalorder %s66, %s68
    %p75 = scmp.eq.s32.totalorder %s23, 1
    %p76 = por %p74, %p75
    %p77 = scmp.ne.s32.totalorder %s68, %s69
    %p78 = scmp.eq.s32.totalorder %s23, 0
    %p79 = por %p77, %p78
    %p80 = scmp.ne.s32.totalorder %s68, %s69
    %p81 = scmp.eq.s32.totalorder %s24, 1
    %p82 = por %p80, %p81
    %p84 = scmp.ne.s32.totalorder %s69, %s83
    %p85 = scmp.eq.s32.totalorder %s24, 0
    %p86 = por %p84, %p85
    %s88 = sadd.s32 %s87, 1
    %p91 = scmp.eq.s32.totalorder %s18, 1
    %p92 = scmp.ne.s32.totalorder %s87, %s89
    %p93 = scmp.eq.s32.totalorder %s18, 0
    %p94 = por %p92, %p93
    %p95 = scmp.ne.s32.totalorder %s87, %s89
    %p96 = scmp.eq.s32.totalorder %s23, 1
    %p97 = por %p95, %p96
    %p98 = scmp.ne.s32.totalorder %s89, %s90
    %p99 = scmp.eq.s32.totalorder %s23, 0
    %p100 = por %p98, %p99
    %p101 = scmp.ne.s32.totalorder %s89, %s90
    %p102 = scmp.eq.s32.totalorder %s24, 1
    %p103 = por %p101, %p102
    %p105 = scmp.ne.s32.totalorder %s90, %s104
    %p106 = scmp.eq.s32.totalorder %s24, 0
    %p107 = por %p105, %p106
    %s109 = sadd.s32 %s108, 1
    %p112 = scmp.eq.s32.totalorder %s18, 1
    %p113 = scmp.ne.s32.totalorder %s108, %s110
    %p114 = scmp.eq.s32.totalorder %s18, 0
    %p115 = por %p113, %p114
    %p116 = scmp.ne.s32.totalorder %s108, %s110
    %p117 = scmp.eq.s32.totalorder %s23, 1
    %p118 = por %p116, %p117
    %p119 = scmp.ne.s32.totalorder %s110, %s111
    %p120 = scmp.eq.s32.totalorder %s23, 0
    %p121 = por %p119, %p120
    %p122 = scmp.ne.s32.totalorder %s110, %s111
    %p123 = scmp.eq.s32.totalorder %s24, 1
    %p124 = por %p122, %p123
    %p126 = scmp.ne.s32.totalorder %s111, %s125
    %p127 = scmp.eq.s32.totalorder %s24, 0
    %p128 = por %p126, %p127
    %s130 = sadd.s32 %s129, 1
    %p133 = scmp.eq.s32.totalorder %s18, 1
    %p134 = scmp.ne.s32.totalorder %s129, %s131
    %p135 = scmp.eq.s32.totalorder %s18, 0
    %p136 = por %p134, %p135
    %p137 = scmp.ne.s32.totalorder %s129, %s131
    %p138 = scmp.eq.s32.totalorder %s23, 1
    %p139 = por %p137, %p138
    %p140 = scmp.ne.s32.totalorder %s131, %s132
    %p141 = scmp.eq.s32.totalorder %s23, 0
    %p142 = por %p140, %p141
    %p143 = scmp.ne.s32.totalorder %s131, %s132
    %p144 = scmp.eq.s32.totalorder %s24, 1
    %p145 = por %p143, %p144
    %p147 = scmp.ne.s32.totalorder %s132, %s146
    %p148 = scmp.eq.s32.totalorder %s24, 0
    %p149 = por %p147, %p148
    %s150 = sadd.s32 %s25, %s26
    %s151 = sadd.s32 %s37, %s33
    %s152 = ssub.s32 %s150, %s151
    %p153 = scmp.eq.s32.totalorder %s152, 0
    %s155 = sadd.s32 %s154, 1
    %s156 = scalar_select %p153, %s154, %s155
    %p159 = pneg %p153
    %p160 = scmp.eq.s32.totalorder %s18, 1
    %p161 = por %p159, %p160
    %p162 = scmp.ne.s32.totalorder %s154, %s157
    %p163 = scmp.eq.s32.totalorder %s18, 0
    %p164 = por %p162, %p163
    %p165 = scmp.ne.s32.totalorder %s154, %s157
    %p166 = scmp.eq.s32.totalorder %s23, 1
    %p167 = por %p165, %p166
    %p168 = scmp.ne.s32.totalorder %s157, %s158
    %p169 = scmp.eq.s32.totalorder %s23, 0
    %p170 = por %p168, %p169
    %p171 = scmp.ne.s32.totalorder %s157, %s158
    %p172 = scmp.eq.s32.totalorder %s24, 1
    %p173 = por %p171, %p172
    %p175 = scmp.ne.s32.totalorder %s158, %s174
    %p176 = scmp.eq.s32.totalorder %s24, 0
    %p177 = por %p175, %p176
    %s178 = sadd.s32 %s25, %s26
    %s179 = sadd.s32 %s37, %s33
    %s180 = ssub.s32 %s178, %s179
    %p181 = scmp.eq.s32.totalorder %s180, 0
    %s183 = sadd.s32 %s182, 1
    %s184 = scalar_select %p181, %s182, %s183
    %p187 = pneg %p181
    %p188 = scmp.eq.s32.totalorder %s18, 1
    %p189 = por %p187, %p188
    %p190 = scmp.ne.s32.totalorder %s182, %s185
    %p191 = scmp.eq.s32.totalorder %s18, 0
    %p192 = por %p190, %p191
    %p193 = scmp.ne.s32.totalorder %s182, %s185
    %p194 = scmp.eq.s32.totalorder %s23, 1
    %p195 = por %p193, %p194
    %p196 = scmp.ne.s32.totalorder %s185, %s186
    %p197 = scmp.eq.s32.totalorder %s23, 0
    %p198 = por %p196, %p197
    %p199 = scmp.ne.s32.totalorder %s185, %s186
    %p200 = scmp.eq.s32.totalorder %s24, 1
    %p201 = por %p199, %p200
    %p203 = scmp.ne.s32.totalorder %s186, %s202
    %p204 = scmp.eq.s32.totalorder %s24, 0
    %p205 = por %p203, %p204
    %s206 = sadd.s32 %s25, %s26
    %s207 = sadd.s32 %s37, %s33
    %s208 = ssub.s32 %s206, %s207
    %p209 = scmp.eq.s32.totalorder %s208, 0
    %s211 = sadd.s32 %s210, 1
    %s212 = scalar_select %p209, %s210, %s211
    %p215 = pneg %p209
    %p216 = scmp.eq.s32.totalorder %s18, 1
    %p217 = por %p215, %p216
    %p218 = scmp.ne.s32.totalorder %s210, %s213
    %p219 = scmp.eq.s32.totalorder %s18, 0
    %p220 = por %p218, %p219
    %p221 = scmp.ne.s32.totalorder %s210, %s213
    %p222 = scmp.eq.s32.totalorder %s23, 1
    %p223 = por %p221, %p222
    %p224 = scmp.ne.s32.totalorder %s213, %s214
    %p225 = scmp.eq.s32.totalorder %s23, 0
    %p226 = por %p224, %p225
    %p227 = scmp.ne.s32.totalorder %s213, %s214
    %p228 = scmp.eq.s32.totalorder %s24, 1
    %p229 = por %p227, %p228
    %p231 = scmp.ne.s32.totalorder %s214, %s230
    %p232 = scmp.eq.s32.totalorder %s24, 0
    %p233 = por %p231, %p232
    %s234 = ssub.s32 %s25, %s37
    %p235 = scmp.eq.s32.totalorder %s234, 0
    %s237 = sadd.s32 %s236, 1
    %s238 = scalar_select %p235, %s236, %s237
    %p241 = pneg %p235
    %p242 = scmp.eq.s32.totalorder %s18, 1
    %p243 = por %p241, %p242
    %p244 = scmp.ne.s32.totalorder %s236, %s239
    %p245 = scmp.eq.s32.totalorder %s18, 0
    %p246 = por %p244, %p245
    %p247 = scmp.ne.s32.totalorder %s236, %s239
    %p248 = scmp.eq.s32.totalorder %s23, 1
    %p249 = por %p247, %p248
    %p250 = scmp.ne.s32.totalorder %s239, %s240
    %p251 = scmp.eq.s32.totalorder %s23, 0
    %p252 = por %p250, %p251
    %p253 = scmp.ne.s32.totalorder %s239, %s240
    %p254 = scmp.eq.s32.totalorder %s24, 1
    %p255 = por %p253, %p254
    %p257 = scmp.ne.s32.totalorder %s240, %s256
    %p258 = scmp.eq.s32.totalorder %s24, 0
    %p259 = por %p257, %p258
    %s260 = ssub.s32 %s25, %s37
    %p261 = scmp.eq.s32.totalorder %s260, 0
    %s263 = sadd.s32 %s262, 1
    %s264 = scalar_select %p261, %s262, %s263
    %p267 = pneg %p261
    %p268 = scmp.eq.s32.totalorder %s18, 1
    %p269 = por %p267, %p268
    %p270 = scmp.ne.s32.totalorder %s262, %s265
    %p271 = scmp.eq.s32.totalorder %s18, 0
    %p272 = por %p270, %p271
    %p273 = scmp.ne.s32.totalorder %s262, %s265
    %p274 = scmp.eq.s32.totalorder %s23, 1
    %p275 = por %p273, %p274
    %p276 = scmp.ne.s32.totalorder %s265, %s266
    %p277 = scmp.eq.s32.totalorder %s23, 0
    %p278 = por %p276, %p277
    %p279 = scmp.ne.s32.totalorder %s265, %s266
    %p280 = scmp.eq.s32.totalorder %s24, 1
    %p281 = por %p279, %p280
    %p283 = scmp.ne.s32.totalorder %s266, %s282
    %p284 = scmp.eq.s32.totalorder %s24, 0
    %p285 = por %p283, %p284
    %s286 = ssub.s32 %s25, %s37
    %p287 = scmp.eq.s32.totalorder %s286, 0
    %s289 = sadd.s32 %s288, 1
    %s290 = scalar_select %p287, %s288, %s289
    %p293 = pneg %p287
    %p294 = scmp.eq.s32.totalorder %s18, 1
    %p295 = por %p293, %p294
    %p296 = scmp.ne.s32.totalorder %s288, %s291
    %p297 = scmp.eq.s32.totalorder %s18, 0
    %p298 = por %p296, %p297
    %p299 = scmp.ne.s32.totalorder %s288, %s291
    %p300 = scmp.eq.s32.totalorder %s23, 1
    %p301 = por %p299, %p300
    %p302 = scmp.ne.s32.totalorder %s291, %s292
    %p303 = scmp.eq.s32.totalorder %s23, 0
    %p304 = por %p302, %p303
    %p305 = scmp.ne.s32.totalorder %s291, %s292
    %p306 = scmp.eq.s32.totalorder %s24, 1
    %p307 = por %p305, %p306
    %p309 = scmp.ne.s32.totalorder %s292, %s308
    %p310 = scmp.eq.s32.totalorder %s24, 0
    %p311 = por %p309, %p310
    %s312 = ssub.s32 %s25, %s37
    %p313 = scmp.eq.s32.totalorder %s312, 0
    %s315 = sadd.s32 %s314, 1
    %s316 = scalar_select %p313, %s314, %s315
    %p319 = pneg %p313
    %p320 = scmp.eq.s32.totalorder %s18, 1
    %p321 = por %p319, %p320
    %p322 = scmp.ne.s32.totalorder %s314, %s317
    %p323 = scmp.eq.s32.totalorder %s18, 0
    %p324 = por %p322, %p323
    %p325 = scmp.ne.s32.totalorder %s314, %s317
    %p326 = scmp.eq.s32.totalorder %s23, 1
    %p327 = por %p325, %p326
    %p328 = scmp.ne.s32.totalorder %s317, %s318
    %p329 = scmp.eq.s32.totalorder %s23, 0
    %p330 = por %p328, %p329
    %p331 = scmp.ne.s32.totalorder %s317, %s318
    %p332 = scmp.eq.s32.totalorder %s24, 1
    %p333 = por %p331, %p332
    %p335 = scmp.ne.s32.totalorder %s318, %s334
    %p336 = scmp.eq.s32.totalorder %s24, 0
    %p337 = por %p335, %p336
    %p338 = scmp.le.s32.totalorder 1, %s18
    %p339 = scmp.lt.s32.totalorder %s18, 3
    %p340 = pnand %p338, %p339
    %p341 = pneg %p340
    // Predicated region
    $region9: #{conv_block_forward.4} parent=5 // pred_check
      _
    $region10: #{conv_block_forward.4} parent=5 // pred_check_branch
      %343 = sbr.rel (%p340) target = $region12
    $region11: #{conv_block_forward.4} parent=5 // pred_region
      %s344 = ssub.s32 %s18, 1
      // Predicated region
      $region13: #{conv_block_forward.4} parent=11 // pred_check
        %p345 = pneg %p79
      $region14: #{conv_block_forward.4} parent=11 // pred_check_branch
        %347 = sbr.rel (%p345) target = $region16
      $region15: #{conv_block_forward.4} parent=11 // pred_region
        _
      $region16: #{conv_block_forward.4} parent=11 // pred_fallthru
        _
      // Predicated region
      $region17: #{conv_block_forward.4} parent=11 // pred_check
        %p348 = pneg %p100
      $region18: #{conv_block_forward.4} parent=11 // pred_check_branch
        %350 = sbr.rel (%p348) target = $region20
      $region19: #{conv_block_forward.4} parent=11 // pred_region
        _
      $region20: #{conv_block_forward.4} parent=11 // pred_fallthru
        _
      // Predicated region
      $region21: #{conv_block_forward.4} parent=11 // pred_check
        %p351 = pneg %p121
      $region22: #{conv_block_forward.4} parent=11 // pred_check_branch
        %353 = sbr.rel (%p351) target = $region24
      $region23: #{conv_block_forward.4} parent=11 // pred_region
        _
      $region24: #{conv_block_forward.4} parent=11 // pred_fallthru
        _
      // Predicated region
      $region25: #{conv_block_forward.4} parent=11 // pred_check
        %p354 = pneg %p142
      $region26: #{conv_block_forward.4} parent=11 // pred_check_branch
        %356 = sbr.rel (%p354) target = $region28
      $region27: #{conv_block_forward.4} parent=11 // pred_region
        _
      $region28: #{conv_block_forward.4} parent=11 // pred_fallthru
        _
    $region12: #{conv_block_forward.4} parent=5 // pred_fallthru
      _
    %p357 = scmp.lt.s32.totalorder %s18, 2
    // Predicated region
    $region29: #{conv_block_forward.4} parent=5 // pred_check
      %p358 = pneg %p357
    $region30: #{conv_block_forward.4} parent=5 // pred_check_branch
      %360 = sbr.rel (%p358) target = $region32
    $region31: #{conv_block_forward.4} parent=5 // pred_region
      // Predicated region
      $region33: #{conv_block_forward.4} parent=31 // pred_check
        %p361 = pneg %p52
      $region34: #{conv_block_forward.4} parent=31 // pred_check_branch
        %363 = sbr.rel (%p361) target = $region36
      $region35: #{conv_block_forward.4} parent=31 // pred_region
        %s364 = sadd.s32 %s25, %s26
        %s365 = smul.u32 8, %s364
        %p366 = scmp.lt.s32.totalorder %s365, 15
        %s367 = scalar_select %p366, %s365, 15
        %s368 = smul.addr %s367, 8
        %s369 = scalar_lea.vmem %s0, %s368
        %s370 = sadd.s32 %s25, %s26
        %s371 = smul.u32 8, %s370
      $region36: #{conv_block_forward.4} parent=31 // pred_fallthru
        _
      // Predicated region
      $region37: #{conv_block_forward.4} parent=31 // pred_check
        %p372 = pneg %p164
      $region38: #{conv_block_forward.4} parent=31 // pred_check_branch
        %374 = sbr.rel (%p372) target = $region40
      $region39: #{conv_block_forward.4} parent=31 // pred_region
        %s375 = sadd.s32 %s25, %s26
        %s376 = smul.u32 8, %s375
        %p377 = scmp.lt.s32.totalorder %s376, 15
        %s378 = scalar_select %p377, %s376, 15
        %s379 = smul.addr %s378, 8
        %s380 = scalar_lea.vmem %s5, %s379
        %s381 = sadd.s32 %s25, %s26
        %s382 = smul.u32 8, %s381
      $region40: #{conv_block_forward.4} parent=31 // pred_fallthru
        _
    $region32: #{conv_block_forward.4} parent=5 // pred_fallthru
      _
    %p383 = scmp.le.s32.totalorder 1, %s18
    %p384 = scmp.lt.s32.totalorder %s18, 3
    %p385 = pnand %p383, %p384
    %p386 = pneg %p385
    // Predicated region
    $region41: #{conv_block_forward.4} parent=5 // pred_check
      _
    $region42: #{conv_block_forward.4} parent=5 // pred_check_branch
      %388 = sbr.rel (%p385) target = $region44
    $region43: #{conv_block_forward.4} parent=5 // pred_region
      %s389 = ssub.s32 %s18, 1
      %s390 = sadd.s32 %s27, %s28
      %s391 = smul.u32 8, %s390
      %p392 = scmp.lt.s32.totalorder %s391, 15
      %s393 = scalar_select %p392, %s391, 15
      %s394 = smul.addr %s393, 8
      %s395 = scalar_lea.vmem %s0, %s394
      %p396 = pneg %p58
      %p397 = pneg %p55
      %p398 = pneg %p79
      %p399 = pneg %p76
      %p400 = pneg %p100
      %p401 = pneg %p97
      %p402 = pneg %p121
      %p403 = pneg %p118
      %p404 = pneg %p142
      %p405 = pneg %p139
      %s406 = sadd.s32 %s27, %s28
      %s407 = smul.u32 8, %s406
      %p408 = scmp.lt.s32.totalorder %s407, 15
      %s409 = scalar_select %p408, %s407, 15
      %s410 = smul.addr %s409, 8
      %s411 = scalar_lea.vmem %s5, %s410
      %p412 = pneg %p170
      %p413 = pneg %p167
      %p414 = pneg %p198
      %p415 = pneg %p195
      %s416 = sadd.s32 %s27, %s28
      %s417 = smul.u32 8, %s416
      %p418 = scmp.lt.s32.totalorder %s417, 15
      %s419 = scalar_select %p418, %s417, 15
      %s420 = smul.addr %s419, 8
      %s421 = scalar_lea.vmem %s6, %s420
      %p422 = pneg %p226
      %p423 = pneg %p223
      %s424 = sadd.s32 %s27, %s28
      %s425 = smul.u32 8, %s424
      %p426 = scmp.lt.s32.totalorder %s425, 15
      %s427 = scalar_select %p426, %s425, 15
      %s428 = smul.addr %s427, 8
      %s429 = scalar_lea.vmem %s7, %s428
      %p430 = pneg %p252
      %p431 = pneg %p249
      %p432 = scmp.lt.s32.totalorder %s27, 1
      %s433 = scalar_select %p432, %s27, 1
      %s434 = scalar_lea.vmem %s8, %s433
      %p435 = pneg %p278
      %p436 = pneg %p275
      %p437 = scmp.lt.s32.totalorder %s27, 1
      %s438 = scalar_select %p437, %s27, 1
      %s439 = scalar_lea.vmem %s9, %s438
      %p440 = pneg %p304
      %p441 = pneg %p301
      %p442 = scmp.lt.s32.totalorder %s27, 1
      %s443 = scalar_select %p442, %s27, 1
      %s444 = scalar_lea.vmem %s10, %s443
      %p445 = pneg %p330
      %p446 = pneg %p327
      %p447 = scmp.lt.s32.totalorder %s27, 1
      %s448 = scalar_select %p447, %s27, 1
      %s449 = scalar_lea.vmem %s11, %s448
      %s450 = sadd.s32 %s27, %s28
      %s451 = smul.u32 8, %s450
      %p452 = scmp.lt.s32.totalorder %s451, 15
      %s453 = scalar_select %p452, %s451, 15
      %s454 = smul.addr %s453, 8
      %s455 = scalar_lea.vmem %s0, %s454
      %s456 = sadd.s32 %s27, %s28
      %s457 = smul.u32 8, %s456
      %s458 = sadd.s32 %s27, %s28
      %s459 = smul.u32 8, %s458
      %p460 = scmp.lt.s32.totalorder %s459, 15
      %s461 = scalar_select %p460, %s459, 15
      %s462 = smul.addr %s461, 8
      %s463 = scalar_lea.vmem %s5, %s462
      %s464 = sadd.s32 %s27, %s28
      %s465 = smul.u32 8, %s464
      %s466 = sadd.s32 %s27, %s28
      %s467 = smul.u32 8, %s466
      %p468 = scmp.lt.s32.totalorder %s467, 15
      %s469 = scalar_select %p468, %s467, 15
      %s470 = smul.addr %s469, 8
      %s471 = scalar_lea.vmem %s6, %s470
      %s472 = sadd.s32 %s27, %s28
      %s473 = smul.u32 8, %s472
      %s474 = sadd.s32 %s27, %s28
      %s475 = smul.u32 8, %s474
      %p476 = scmp.lt.s32.totalorder %s475, 15
      %s477 = scalar_select %p476, %s475, 15
      %s478 = smul.addr %s477, 8
      %s479 = scalar_lea.vmem %s7, %s478
      %s480 = sadd.s32 %s27, %s28
      %s481 = smul.u32 8, %s480
      %p482 = scmp.lt.s32.totalorder %s27, 1
      %s483 = scalar_select %p482, %s27, 1
      %s484 = scalar_lea.vmem %s8, %s483
      %p485 = scmp.lt.s32.totalorder %s27, 1
      %s486 = scalar_select %p485, %s27, 1
      %s487 = scalar_lea.vmem %s9, %s486
      %p488 = scmp.lt.s32.totalorder %s27, 1
      %s489 = scalar_select %p488, %s27, 1
      %s490 = scalar_lea.vmem %s10, %s489
      %p491 = scmp.lt.s32.totalorder %s27, 1
      %s492 = scalar_select %p491, %s27, 1
      %s493 = scalar_lea.vmem %s11, %s492
      %p494 = scmp.eq.s32.totalorder %s28, 0
      // Predicated region
      $region45: #{conv_block_forward.4} parent=43 // pred_check
        %p495 = pneg %p494
      $region46: #{conv_block_forward.4} parent=43 // pred_check_branch
        %497 = sbr.rel (%p495) target = $region48
      $region47: #{conv_block_forward.4} parent=43 // pred_region
        %vm498 = vcmask 57344
        %499 = vst.msk [vmem:[%s484] sm:$0x1] %vm498, 0.0
        %500 = vst.msk [vmem:[%s487] sm:$0x1] %vm498, 0.0
        %vm501 = vcmask 122880
        %502 = vst.msk [vmem:[%s490] sm:$0x1] %vm501, 0.0
        %503 = vst.msk [vmem:[%s493] sm:$0x1] %vm501, 0.0
      $region48: #{conv_block_forward.4} parent=43 // pred_fallthru
        _
      %v504 = vld [vmem:[%s455] sm:$0xff]
      %v505 = vld [vmem:[%s455 + $0x8] sm:$0xff]
      %v506 = vld [vmem:[%s455 + $0x10] sm:$0xff]
      %v507 = vld [vmem:[%s455 + $0x18] sm:$0xff]
      %v508 = vld [vmem:[%s455 + $0x20] sm:$0xff]
      %v509 = vld [vmem:[%s455 + $0x28] sm:$0xff]
      %v510 = vld [vmem:[%s455 + $0x30] sm:$0xff]
      %v511 = vld [vmem:[%s455 + $0x38] sm:$0xff]
      %v512 = vld [vmem:[%s463] sm:$0xff]
      %v513 = vld [vmem:[%s463 + $0x8] sm:$0xff]
      %v514 = vld [vmem:[%s463 + $0x10] sm:$0xff]
      %v515 = vld [vmem:[%s463 + $0x18] sm:$0xff]
      %v516 = vld [vmem:[%s463 + $0x20] sm:$0xff]
      %v517 = vld [vmem:[%s463 + $0x28] sm:$0xff]
      %v518 = vld [vmem:[%s463 + $0x30] sm:$0xff]
      %v519 = vld [vmem:[%s463 + $0x38] sm:$0xff]
      %v520 = vld [vmem:[%s1] sm:$0xf]
      %v521 = vld [vmem:[%s2] sm:$0x1]
      %v523 = vlaneseq
      %v524 = vshrl.u32 %v523, 7
      %v525 = vsub.s32 0, %v524
      %v526 = vrot.slane %v521, %v525
      %vm528 = vcmask 31744
      %v530 = vsel %vm528, %v504, 0
      %v533 = vsel %vm528, %v505, 0
      %v536 = vsel %vm528, %v506, 0
      %v539 = vsel %vm528, %v507, 0
      %v542 = vsel %vm528, %v508, 0
      %v545 = vsel %vm528, %v509, 0
      %v548 = vsel %vm528, %v510, 0
      %v551 = vsel %vm528, %v511, 0
      %vm553 = vcmask 1043456
      %v555 = vsel %vm553, %v520, 0
      %557 = vmatprep.subr.mxu0 0.0
      %558 = vmatpush1.msra.mxu0 %v555
      %559 = vmatprep.subr.mxu0 0.0
      %560 = vmatpush1.msra.mxu0 0.0
      %561 = vmatprep.subr.mxu0 0.0
      %562 = vmatpush1.msra.mxu0 0.0
      %563 = vmatprep.subr.mxu0 0.0
      %564 = vmatpush1.msra.mxu0 0.0
      %565 = vmatprep.subr.mxu0 0.0
      %566 = vmatpush1.msra.mxu0 0.0
      %567 = vmatprep.subr.mxu0 0.0
      %568 = vmatpush1.msra.mxu0 0.0
      %569 = vmatprep.subr.mxu0 0.0
      %570 = vmatpush1.msra.mxu0 0.0
      %571 = vmatprep.subr.mxu0 0.0
      %572 = vmatpush1.msra.mxu0 0.0
      %573 = vmatprep.subr.mxu0 0.0
      %574 = vmatpush1.msra.mxu0 0.0
      %575 = vmatprep.subr.mxu0 0.0
      %576 = vmatpush1.msra.mxu0 0.0
      %577 = vmatprep.subr.mxu0 0.0
      %578 = vmatpush1.msra.mxu0 0.0
      %579 = vmatprep.subr.mxu0 0.0
      %580 = vmatpush1.msra.mxu0 0.0
      %581 = vmatprep.subr.mxu0 0.0
      %582 = vmatpush1.msra.mxu0 0.0
      %583 = vmatprep.subr.mxu0 0.0
      %584 = vmatpush1.msra.mxu0 0.0
      %585 = vmatprep.subr.mxu0 0.0
      %586 = vmatpush1.msra.mxu0 0.0
      %587 = vmatprep.subr.mxu0 0.0
      %588 = vmatpush1.msra.mxu0 0.0
      %589 = vmatprep.subr.mxu0 0.0
      %590 = vmatpush1.msra.mxu0 0.0
      %591 = vmatprep.subr.mxu0 0.0
      %592 = vmatpush1.msra.mxu0 0.0
      %593 = vmatprep.subr.mxu0 0.0
      %594 = vmatpush1.msra.mxu0 0.0
      %595 = vmatprep.subr.mxu0 0.0
      %596 = vmatpush1.msra.mxu0 0.0
      %597 = vmatprep.subr.mxu0 0.0
      %598 = vmatpush1.msra.mxu0 0.0
      %599 = vmatprep.subr.mxu0 0.0
      %600 = vmatpush1.msra.mxu0 0.0
      %601 = vmatprep.subr.mxu0 0.0
      %602 = vmatpush1.msra.mxu0 0.0
      %603 = vmatprep.subr.mxu0 0.0
      %604 = vmatpush1.msra.mxu0 0.0
      %605 = vmatprep.subr.mxu0 0.0
      %606 = vmatpush1.msra.mxu0 0.0
      %607 = vmatprep.subr.mxu0 0.0
      %608 = vmatpush1.msra.mxu0 0.0
      %609 = vmatprep.subr.mxu0 0.0
      %610 = vmatpush1.msra.mxu0 0.0
      %611 = vmatprep.subr.mxu0 0.0
      %612 = vmatpush1.msra.mxu0 0.0
      %613 = vmatprep.subr.mxu0 0.0
      %614 = vmatpush1.msra.mxu0 0.0
      %615 = vmatprep.subr.mxu0 0.0
      %616 = vmatpush1.msra.mxu0 0.0
      %617 = vmatprep.subr.mxu0 0.0
      %618 = vmatpush1.msra.mxu0 0.0
      %619 = vmatprep.subr.mxu0 0.0
      %620 = vmatpush1.msra.mxu0 0.0
      %621 = vmatprep.mubr.f32.mxu0 0.0
      %622 = vmatmul.mubr.f32.gmra.mrb[0].mxu0 %v530
      %v623 = vpop.f32.mrb[0].mxu0
      %v624 = vadd.f32 %v526, %v623
      %v625 = vpop.f32.mrb[0].mxu0
      %626 = vmatprep.mubr.f32.mxu0 0.0
      %627 = vmatmul.mubr.f32.gmra.mrb[0].mxu0 %v533
      %v628 = vpop.f32.mrb[0].mxu0
      %v629 = vadd.f32 %v526, %v628
      %v630 = vpop.f32.mrb[0].mxu0
      %631 = vmatprep.mubr.f32.mxu0 0.0
      %632 = vmatmul.mubr.f32.gmra.mrb[0].mxu0 %v536
      %v633 = vpop.f32.mrb[0].mxu0
      %v634 = vadd.f32 %v526, %v633
      %v635 = vpop.f32.mrb[0].mxu0
      %636 = vmatprep.mubr.f32.mxu0 0.0
      %637 = vmatmul.mubr.f32.gmra.mrb[0].mxu0 %v539
      %v638 = vpop.f32.mrb[0].mxu0
      %v639 = vadd.f32 %v526, %v638
      %v640 = vpop.f32.mrb[0].mxu0
      %641 = vmatprep.mubr.f32.mxu0 0.0
      %642 = vmatmul.mubr.f32.gmra.mrb[0].mxu0 %v542
      %v643 = vpop.f32.mrb[0].mxu0
      %v644 = vadd.f32 %v526, %v643
      %v645 = vpop.f32.mrb[0].mxu0
      %646 = vmatprep.mubr.f32.mxu0 0.0
      %647 = vmatmul.mubr.f32.gmra.mrb[0].mxu0 %v545
      %v648 = vpop.f32.mrb[0].mxu0
      %v649 = vadd.f32 %v526, %v648
      %v650 = vpop.f32.mrb[0].mxu0
      %651 = vmatprep.mubr.f32.mxu0 0.0
      %652 = vmatmul.mubr.f32.gmra.mrb[0].mxu0 %v548
      %v653 = vpop.f32.mrb[0].mxu0
      %v654 = vadd.f32 %v526, %v653
      %v655 = vpop.f32.mrb[0].mxu0
      %656 = vmatprep.mubr.f32.mxu0 0.0
      %657 = vmatmul.mubr.f32.gmra.mrb[0].mxu0 %v551
      %v658 = vpop.f32.mrb[0].mxu0
      %v659 = vadd.f32 %v526, %v658
      %v660 = vpop.f32.mrb[0].mxu0
      %661 = vdwg.mxu0
      %vm662 = vcmask 64512
      %663 = vst.msk [vmem:[%s471] sm:$0xff] %vm662, %v624
      %664 = vst.msk [vmem:[%s471 + $0x8] sm:$0xff] %vm662, %v629
      %665 = vst.msk [vmem:[%s471 + $0x10] sm:$0xff] %vm662, %v634
      %666 = vst.msk [vmem:[%s471 + $0x18] sm:$0xff] %vm662, %v639
      %667 = vst.msk [vmem:[%s471 + $0x20] sm:$0xff] %vm662, %v644
      %668 = vst.msk [vmem:[%s471 + $0x28] sm:$0xff] %vm662, %v649
      %669 = vst.msk [vmem:[%s471 + $0x30] sm:$0xff] %vm662, %v654
      %670 = vst.msk [vmem:[%s471 + $0x38] sm:$0xff] %vm662, %v659
      %672 = vset.pattern.permute.xlu0 0
      %673 = vperm.xlu0 %672, %v512
      %v674 = vpop.permute.xlu0 %673
      %677 = vset.pattern.permute.xlu0 0
      %678 = vperm.xlu0 %677, %v513
      %v679 = vpop.permute.xlu0 %678
      %682 = vset.pattern.permute.xlu0 0
      %683 = vperm.xlu0 %682, %v514
      %v684 = vpop.permute.xlu0 %683
      %687 = vset.pattern.permute.xlu0 0
      %688 = vperm.xlu0 %687, %v515
      %v689 = vpop.permute.xlu0 %688
      %692 = vset.pattern.permute.xlu0 0
      %693 = vperm.xlu0 %692, %v516
      %v694 = vpop.permute.xlu0 %693
      %697 = vset.pattern.permute.xlu0 0
      %698 = vperm.xlu0 %697, %v517
      %v699 = vpop.permute.xlu0 %698
      %702 = vset.pattern.permute.xlu0 0
      %703 = vperm.xlu0 %702, %v518
      %v704 = vpop.permute.xlu0 %703
      %707 = vset.pattern.permute.xlu0 0
      %708 = vperm.xlu0 %707, %v519
      %v709 = vpop.permute.xlu0 %708
      %v711 = vmul.f32 %v624, %v674
      %v712 = vmul.f32 %v629, %v679
      %v713 = vmul.f32 %v634, %v684
      %v714 = vmul.f32 %v639, %v689
      %v715 = vmul.f32 %v644, %v694
      %v716 = vmul.f32 %v649, %v699
      %v717 = vmul.f32 %v654, %v704
      %v718 = vmul.f32 %v659, %v709
      %v719 = vld [vmem:[%s484] sm:$0x1]
      %v720 = vsel %vm662, %v711, 0.0
      %v721 = vsel %vm662, %v712, 0.0
      %v722 = vadd.f32 %v720, %v721
      %v723 = vsel %vm662, %v713, 0.0
      %v724 = vadd.f32 %v722, %v723
      %v725 = vsel %vm662, %v714, 0.0
      %v726 = vadd.f32 %v724, %v725
      %v727 = vsel %vm662, %v715, 0.0
      %v728 = vadd.f32 %v726, %v727
      %v729 = vsel %vm662, %v716, 0.0
      %v730 = vadd.f32 %v728, %v729
      %v731 = vsel %vm662, %v717, 0.0
      %v732 = vadd.f32 %v730, %v731
      %v733 = vsel %vm662, %v718, 0.0
      %v734 = vadd.f32 %v732, %v733
      %v735 = vrot.slane %v734, 4
      %v736 = vadd.f32 %v734, %v735
      %v737 = vrot.slane %v736, 2
      %v738 = vadd.f32 %v736, %v737
      %v739 = vrot.slane %v738, 1
      %v740 = vadd.f32 %v738, %v739
      %v741 = vadd.f32 %v719, %v740
      %vm742 = vcmask 57344
      %743 = vst.msk [vmem:[%s484] sm:$0x1] %vm742, %v741
      %v744 = vld [vmem:[%s487] sm:$0x1]
      %v745 = vmul.f32 %v711, %v711
      %v746 = vmul.f32 %v712, %v712
      %v747 = vmul.f32 %v713, %v713
      %v748 = vmul.f32 %v714, %v714
      %v749 = vmul.f32 %v715, %v715
      %v750 = vmul.f32 %v716, %v716
      %v751 = vmul.f32 %v717, %v717
      %v752 = vmul.f32 %v718, %v718
      %v753 = vsel %vm662, %v745, 0.0
      %v754 = vsel %vm662, %v746, 0.0
      %v755 = vadd.f32 %v753, %v754
      %v756 = vsel %vm662, %v747, 0.0
      %v757 = vadd.f32 %v755, %v756
      %v758 = vsel %vm662, %v748, 0.0
      %v759 = vadd.f32 %v757, %v758
      %v760 = vsel %vm662, %v749, 0.0
      %v761 = vadd.f32 %v759, %v760
      %v762 = vsel %vm662, %v750, 0.0
      %v763 = vadd.f32 %v761, %v762
      %v764 = vsel %vm662, %v751, 0.0
      %v765 = vadd.f32 %v763, %v764
      %v766 = vsel %vm662, %v752, 0.0
      %v767 = vadd.f32 %v765, %v766
      %v768 = vrot.slane %v767, 4
      %v769 = vadd.f32 %v767, %v768
      %v770 = vrot.slane %v769, 2
      %v771 = vadd.f32 %v769, %v770
      %v772 = vrot.slane %v771, 1
      %v773 = vadd.f32 %v771, %v772
      %v774 = vadd.f32 %v744, %v773
      %775 = vst.msk [vmem:[%s487] sm:$0x1] %vm742, %v774
      %v776 = vld [vmem:[%s3] sm:$0xf]
      %v777 = vld [vmem:[%s4] sm:$0x1]
      %v779 = vlaneseq
      %v780 = vshrl.u32 %v779, 7
      %v781 = vsub.s32 0, %v780
      %v782 = vrot.slane %v777, %v781
      %v785 = vsel %vm553, %v776, 0
      %787 = vmatprep.subr.mxu0 0.0
      %788 = vmatpush1.msra.mxu0 %v785
      %789 = vmatprep.subr.mxu0 0.0
      %790 = vmatpush1.msra.mxu0 0.0
      %791 = vmatprep.subr.mxu0 0.0
      %792 = vmatpush1.msra.mxu0 0.0
      %793 = vmatprep.subr.mxu0 0.0
      %794 = vmatpush1.msra.mxu0 0.0
      %795 = vmatprep.subr.mxu0 0.0
      %796 = vmatpush1.msra.mxu0 0.0
      %797 = vmatprep.subr.mxu0 0.0
      %798 = vmatpush1.msra.mxu0 0.0
      %799 = vmatprep.subr.mxu0 0.0
      %800 = vmatpush1.msra.mxu0 0.0
      %801 = vmatprep.subr.mxu0 0.0
      %802 = vmatpush1.msra.mxu0 0.0
      %803 = vmatprep.subr.mxu0 0.0
      %804 = vmatpush1.msra.mxu0 0.0
      %805 = vmatprep.subr.mxu0 0.0
      %806 = vmatpush1.msra.mxu0 0.0
      %807 = vmatprep.subr.mxu0 0.0
      %808 = vmatpush1.msra.mxu0 0.0
      %809 = vmatprep.subr.mxu0 0.0
      %810 = vmatpush1.msra.mxu0 0.0
      %811 = vmatprep.subr.mxu0 0.0
      %812 = vmatpush1.msra.mxu0 0.0
      %813 = vmatprep.subr.mxu0 0.0
      %814 = vmatpush1.msra.mxu0 0.0
      %815 = vmatprep.subr.mxu0 0.0
      %816 = vmatpush1.msra.mxu0 0.0
      %817 = vmatprep.subr.mxu0 0.0
      %818 = vmatpush1.msra.mxu0 0.0
      %819 = vmatprep.subr.mxu0 0.0
      %820 = vmatpush1.msra.mxu0 0.0
      %821 = vmatprep.subr.mxu0 0.0
      %822 = vmatpush1.msra.mxu0 0.0
      %823 = vmatprep.subr.mxu0 0.0
      %824 = vmatpush1.msra.mxu0 0.0
      %825 = vmatprep.subr.mxu0 0.0
      %826 = vmatpush1.msra.mxu0 0.0
      %827 = vmatprep.subr.mxu0 0.0
      %828 = vmatpush1.msra.mxu0 0.0
      %829 = vmatprep.subr.mxu0 0.0
      %830 = vmatpush1.msra.mxu0 0.0
      %831 = vmatprep.subr.mxu0 0.0
      %832 = vmatpush1.msra.mxu0 0.0
      %833 = vmatprep.subr.mxu0 0.0
      %834 = vmatpush1.msra.mxu0 0.0
      %835 = vmatprep.subr.mxu0 0.0
      %836 = vmatpush1.msra.mxu0 0.0
      %837 = vmatprep.subr.mxu0 0.0
      %838 = vmatpush1.msra.mxu0 0.0
      %839 = vmatprep.subr.mxu0 0.0
      %840 = vmatpush1.msra.mxu0 0.0
      %841 = vmatprep.subr.mxu0 0.0
      %842 = vmatpush1.msra.mxu0 0.0
      %843 = vmatprep.subr.mxu0 0.0
      %844 = vmatpush1.msra.mxu0 0.0
      %845 = vmatprep.subr.mxu0 0.0
      %846 = vmatpush1.msra.mxu0 0.0
      %847 = vmatprep.subr.mxu0 0.0
      %848 = vmatpush1.msra.mxu0 0.0
      %849 = vmatprep.subr.mxu0 0.0
      %850 = vmatpush1.msra.mxu0 0.0
      %851 = vmatprep.mubr.f32.mxu0 0.0
      %852 = vmatmul.mubr.f32.gmra.mrb[0].mxu0 %v530
      %v853 = vpop.f32.mrb[0].mxu0
      %v854 = vadd.f32 %v782, %v853
      %v855 = vpop.f32.mrb[0].mxu0
      %856 = vmatprep.mubr.f32.mxu0 0.0
      %857 = vmatmul.mubr.f32.gmra.mrb[0].mxu0 %v533
      %v858 = vpop.f32.mrb[0].mxu0
      %v859 = vadd.f32 %v782, %v858
      %v860 = vpop.f32.mrb[0].mxu0
      %861 = vmatprep.mubr.f32.mxu0 0.0
      %862 = vmatmul.mubr.f32.gmra.mrb[0].mxu0 %v536
      %v863 = vpop.f32.mrb[0].mxu0
      %v864 = vadd.f32 %v782, %v863
      %v865 = vpop.f32.mrb[0].mxu0
      %866 = vmatprep.mubr.f32.mxu0 0.0
      %867 = vmatmul.mubr.f32.gmra.mrb[0].mxu0 %v539
      %v868 = vpop.f32.mrb[0].mxu0
      %v869 = vadd.f32 %v782, %v868
      %v870 = vpop.f32.mrb[0].mxu0
      %871 = vmatprep.mubr.f32.mxu0 0.0
      %872 = vmatmul.mubr.f32.gmra.mrb[0].mxu0 %v542
      %v873 = vpop.f32.mrb[0].mxu0
      %v874 = vadd.f32 %v782, %v873
      %v875 = vpop.f32.mrb[0].mxu0
      %876 = vmatprep.mubr.f32.mxu0 0.0
      %877 = vmatmul.mubr.f32.gmra.mrb[0].mxu0 %v545
      %v878 = vpop.f32.mrb[0].mxu0
      %v879 = vadd.f32 %v782, %v878
      %v880 = vpop.f32.mrb[0].mxu0
      %881 = vmatprep.mubr.f32.mxu0 0.0
      %882 = vmatmul.mubr.f32.gmra.mrb[0].mxu0 %v548
      %v883 = vpop.f32.mrb[0].mxu0
      %v884 = vadd.f32 %v782, %v883
      %v885 = vpop.f32.mrb[0].mxu0
      %886 = vmatprep.mubr.f32.mxu0 0.0
      %887 = vmatmul.mubr.f32.gmra.mrb[0].mxu0 %v551
      %v888 = vpop.f32.mrb[0].mxu0
      %v889 = vadd.f32 %v782, %v888
      %v890 = vpop.f32.mrb[0].mxu0
      %891 = vdwg.mxu0
      %vm892 = vcmask 130048
      %893 = vst.msk [vmem:[%s479] sm:$0xff] %vm892, %v854
      %894 = vst.msk [vmem:[%s479 + $0x8] sm:$0xff] %vm892, %v859
      %895 = vst.msk [vmem:[%s479 + $0x10] sm:$0xff] %vm892, %v864
      %896 = vst.msk [vmem:[%s479 + $0x18] sm:$0xff] %vm892, %v869
      %897 = vst.msk [vmem:[%s479 + $0x20] sm:$0xff] %vm892, %v874
      %898 = vst.msk [vmem:[%s479 + $0x28] sm:$0xff] %vm892, %v879
      %899 = vst.msk [vmem:[%s479 + $0x30] sm:$0xff] %vm892, %v884
      %900 = vst.msk [vmem:[%s479 + $0x38] sm:$0xff] %vm892, %v889
      %v901 = vmul.f32 %v854, %v674
      %v902 = vmul.f32 %v859, %v679
      %v903 = vmul.f32 %v864, %v684
      %v904 = vmul.f32 %v869, %v689
      %v905 = vmul.f32 %v874, %v694
      %v906 = vmul.f32 %v879, %v699
      %v907 = vmul.f32 %v884, %v704
      %v908 = vmul.f32 %v889, %v709
      %v909 = vld [vmem:[%s490] sm:$0x1]
      %v910 = vsel %vm892, %v901, 0.0
      %v911 = vsel %vm892, %v902, 0.0
      %v912 = vadd.f32 %v910, %v911
      %v913 = vsel %vm892, %v903, 0.0
      %v914 = vadd.f32 %v912, %v913
      %v915 = vsel %vm892, %v904, 0.0
      %v916 = vadd.f32 %v914, %v915
      %v917 = vsel %vm892, %v905, 0.0
      %v918 = vadd.f32 %v916, %v917
      %v919 = vsel %vm892, %v906, 0.0
      %v920 = vadd.f32 %v918, %v919
      %v921 = vsel %vm892, %v907, 0.0
      %v922 = vadd.f32 %v920, %v921
      %v923 = vsel %vm892, %v908, 0.0
      %v924 = vadd.f32 %v922, %v923
      %v925 = vrot.slane %v924, 4
      %v926 = vadd.f32 %v924, %v925
      %v927 = vrot.slane %v926, 2
      %v928 = vadd.f32 %v926, %v927
      %v929 = vrot.slane %v928, 1
      %v930 = vadd.f32 %v928, %v929
      %v931 = vadd.f32 %v909, %v930
      %vm932 = vcmask 122880
      %933 = vst.msk [vmem:[%s490] sm:$0x1] %vm932, %v931
      %v934 = vld [vmem:[%s493] sm:$0x1]
      %v935 = vmul.f32 %v901, %v901
      %v936 = vmul.f32 %v902, %v902
      %v937 = vmul.f32 %v903, %v903
      %v938 = vmul.f32 %v904, %v904
      %v939 = vmul.f32 %v905, %v905
      %v940 = vmul.f32 %v906, %v906
      %v941 = vmul.f32 %v907, %v907
      %v942 = vmul.f32 %v908, %v908
      %v943 = vsel %vm892, %v935, 0.0
      %v944 = vsel %vm892, %v936, 0.0
      %v945 = vadd.f32 %v943, %v944
      %v946 = vsel %vm892, %v937, 0.0
      %v947 = vadd.f32 %v945, %v946
      %v948 = vsel %vm892, %v938, 0.0
      %v949 = vadd.f32 %v947, %v948
      %v950 = vsel %vm892, %v939, 0.0
      %v951 = vadd.f32 %v949, %v950
      %v952 = vsel %vm892, %v940, 0.0
      %v953 = vadd.f32 %v951, %v952
      %v954 = vsel %vm892, %v941, 0.0
      %v955 = vadd.f32 %v953, %v954
      %v956 = vsel %vm892, %v942, 0.0
      %v957 = vadd.f32 %v955, %v956
      %v958 = vrot.slane %v957, 4
      %v959 = vadd.f32 %v957, %v958
      %v960 = vrot.slane %v959, 2
      %v961 = vadd.f32 %v959, %v960
      %v962 = vrot.slane %v961, 1
      %v963 = vadd.f32 %v961, %v962
      %v964 = vadd.f32 %v934, %v963
      %965 = vst.msk [vmem:[%s493] sm:$0x1] %vm932, %v964
      %s966 = sadd.s32 %s27, %s28
      %s967 = smul.u32 8, %s966
      %p968 = scmp.lt.s32.totalorder %s967, 15
      %s969 = scalar_select %p968, %s967, 15
      %s970 = smul.addr %s969, 8
      %s971 = scalar_lea.vmem %s6, %s970
      %s972 = sadd.s32 %s27, %s28
      %s973 = smul.u32 8, %s972
      %p974 = scmp.lt.s32.totalorder %s973, 15
      %s975 = scalar_select %p974, %s973, 15
      %s976 = smul.addr %s975, 8
      %s977 = scalar_lea.vmem %s7, %s976
      %p978 = scmp.lt.s32.totalorder %s27, 1
      %s979 = scalar_select %p978, %s27, 1
      %s980 = scalar_lea.vmem %s8, %s979
      %p981 = scmp.lt.s32.totalorder %s27, 1
      %s982 = scalar_select %p981, %s27, 1
      %s983 = scalar_lea.vmem %s9, %s982
      %p984 = scmp.lt.s32.totalorder %s27, 1
      %s985 = scalar_select %p984, %s27, 1
      %s986 = scalar_lea.vmem %s10, %s985
      %p987 = scmp.lt.s32.totalorder %s27, 1
      %s988 = scalar_select %p987, %s27, 1
      %s989 = scalar_lea.vmem %s11, %s988
      // Predicated region
      $region49: #{conv_block_forward.4} parent=43 // pred_check
        %p990 = pneg %p195
      $region50: #{conv_block_forward.4} parent=43 // pred_check_branch
        %992 = sbr.rel (%p990) target = $region52
      $region51: #{conv_block_forward.4} parent=43 // pred_region
        %s993 = sadd.s32 %s27, %s28
        %s994 = smul.u32 8, %s993
      $region52: #{conv_block_forward.4} parent=43 // pred_fallthru
        _
      // Predicated region
      $region53: #{conv_block_forward.4} parent=43 // pred_check
        %p995 = pneg %p223
      $region54: #{conv_block_forward.4} parent=43 // pred_check_branch
        %997 = sbr.rel (%p995) target = $region56
      $region55: #{conv_block_forward.4} parent=43 // pred_region
        %s998 = sadd.s32 %s27, %s28
        %s999 = smul.u32 8, %s998
      $region56: #{conv_block_forward.4} parent=43 // pred_fallthru
        _
      // Predicated region
      $region57: #{conv_block_forward.4} parent=43 // pred_check
        %p1000 = pneg %p249
      $region58: #{conv_block_forward.4} parent=43 // pred_check_branch
        %1002 = sbr.rel (%p1000) target = $region60
      $region59: #{conv_block_forward.4} parent=43 // pred_region
        _
      $region60: #{conv_block_forward.4} parent=43 // pred_fallthru
        _
      // Predicated region
      $region61: #{conv_block_forward.4} parent=43 // pred_check
        %p1003 = pneg %p275
      $region62: #{conv_block_forward.4} parent=43 // pred_check_branch
        %1005 = sbr.rel (%p1003) target = $region64
      $region63: #{conv_block_forward.4} parent=43 // pred_region
        _
      $region64: #{conv_block_forward.4} parent=43 // pred_fallthru
        _
      // Predicated region
      $region65: #{conv_block_forward.4} parent=43 // pred_check
        %p1006 = pneg %p301
      $region66: #{conv_block_forward.4} parent=43 // pred_check_branch
        %1008 = sbr.rel (%p1006) target = $region68
      $region67: #{conv_block_forward.4} parent=43 // pred_region
        _
      $region68: #{conv_block_forward.4} parent=43 // pred_fallthru
        _
      // Predicated region
      $region69: #{conv_block_forward.4} parent=43 // pred_check
        %p1009 = pneg %p327
      $region70: #{conv_block_forward.4} parent=43 // pred_check_branch
        %1011 = sbr.rel (%p1009) target = $region72
      $region71: #{conv_block_forward.4} parent=43 // pred_region
        _
      $region72: #{conv_block_forward.4} parent=43 // pred_fallthru
        _
    $region44: #{conv_block_forward.4} parent=5 // pred_fallthru
      _
    %p1012 = scmp.le.s32.totalorder 2, %s18
    // Predicated region
    $region73: #{conv_block_forward.4} parent=5 // pred_check
      %p1013 = pneg %p1012
    $region74: #{conv_block_forward.4} parent=5 // pred_check_branch
      %1015 = sbr.rel (%p1013) target = $region76
    $region75: #{conv_block_forward.4} parent=5 // pred_region
      %s1016 = ssub.s32 %s18, 2
      // Predicated region
      $region77: #{conv_block_forward.4} parent=75 // pred_check
        %p1017 = pneg %p201
      $region78: #{conv_block_forward.4} parent=75 // pred_check_branch
        %1019 = sbr.rel (%p1017) target = $region80
      $region79: #{conv_block_forward.4} parent=75 // pred_region
        %s1020 = sadd.s32 %s29, %s30
        %s1021 = smul.u32 8, %s1020
        %p1022 = scmp.lt.s32.totalorder %s1021, 15
        %s1023 = scalar_select %p1022, %s1021, 15
        %s1024 = smul.addr %s1023, 8
        %s1025 = scalar_lea.vmem %s6, %s1024
      $region80: #{conv_block_forward.4} parent=75 // pred_fallthru
        _
      // Predicated region
      $region81: #{conv_block_forward.4} parent=75 // pred_check
        %p1026 = pneg %p229
      $region82: #{conv_block_forward.4} parent=75 // pred_check_branch
        %1028 = sbr.rel (%p1026) target = $region84
      $region83: #{conv_block_forward.4} parent=75 // pred_region
        %s1029 = sadd.s32 %s29, %s30
        %s1030 = smul.u32 8, %s1029
        %p1031 = scmp.lt.s32.totalorder %s1030, 15
        %s1032 = scalar_select %p1031, %s1030, 15
        %s1033 = smul.addr %s1032, 8
        %s1034 = scalar_lea.vmem %s7, %s1033
      $region84: #{conv_block_forward.4} parent=75 // pred_fallthru
        _
      // Predicated region
      $region85: #{conv_block_forward.4} parent=75 // pred_check
        %p1035 = pneg %p255
      $region86: #{conv_block_forward.4} parent=75 // pred_check_branch
        %1037 = sbr.rel (%p1035) target = $region88
      $region87: #{conv_block_forward.4} parent=75 // pred_region
        %p1038 = scmp.lt.s32.totalorder %s29, 1
        %s1039 = scalar_select %p1038, %s29, 1
        %s1040 = scalar_lea.vmem %s8, %s1039
      $region88: #{conv_block_forward.4} parent=75 // pred_fallthru
        _
      // Predicated region
      $region89: #{conv_block_forward.4} parent=75 // pred_check
        %p1041 = pneg %p281
      $region90: #{conv_block_forward.4} parent=75 // pred_check_branch
        %1043 = sbr.rel (%p1041) target = $region92
      $region91: #{conv_block_forward.4} parent=75 // pred_region
        %p1044 = scmp.lt.s32.totalorder %s29, 1
        %s1045 = scalar_select %p1044, %s29, 1
        %s1046 = scalar_lea.vmem %s9, %s1045
      $region92: #{conv_block_forward.4} parent=75 // pred_fallthru
        _
      // Predicated region
      $region93: #{conv_block_forward.4} parent=75 // pred_check
        %p1047 = pneg %p307
      $region94: #{conv_block_forward.4} parent=75 // pred_check_branch
        %1049 = sbr.rel (%p1047) target = $region96
      $region95: #{conv_block_forward.4} parent=75 // pred_region
        %p1050 = scmp.lt.s32.totalorder %s29, 1
        %s1051 = scalar_select %p1050, %s29, 1
        %s1052 = scalar_lea.vmem %s10, %s1051
      $region96: #{conv_block_forward.4} parent=75 // pred_fallthru
        _
      // Predicated region
      $region97: #{conv_block_forward.4} parent=75 // pred_check
        %p1053 = pneg %p333
      $region98: #{conv_block_forward.4} parent=75 // pred_check_branch
        %1055 = sbr.rel (%p1053) target = $region100
      $region99: #{conv_block_forward.4} parent=75 // pred_region
        %p1056 = scmp.lt.s32.totalorder %s29, 1
        %s1057 = scalar_select %p1056, %s29, 1
        %s1058 = scalar_lea.vmem %s11, %s1057
      $region100: #{conv_block_forward.4} parent=75 // pred_fallthru
        _
    $region76: #{conv_block_forward.4} parent=5 // pred_fallthru
      _
  $region6: #{conv_block_forward.4} parent=0 // loop_footer
    %s22 = sadd.s32 1, %s18
  $region7: #{conv_block_forward.4} parent=0 // loop_footer_branch
    %17 = sbr.rel target = $region3
  $region8: #{conv_block_forward.4} parent=0 // loop_exit
    _

// kernel: conv_block_forward.6
$region0: #{conv_block_forward.6}
  #allocation0 [shape = 'u32[]', space=smem, size = 0x4, offset = 0x4, fixed_abs, tag = 'smem constant byte address 0x4 - core index']
  #allocation1 [shape = 'u32[144,128]{1,0:T(1,128)}', space=vmem, size = 0x12000, scoped, tag = 'internal scratch']
  %s0 = inlined_call_operand.vmem [shape: f32[128,8], index: 0, kind: input, shape index: {}]
  %s1 = inlined_call_operand.vmem [shape: f32[8,16], index: 1, kind: input, shape index: {}]
  %s2 = inlined_call_operand.vmem [shape: f32[1,16], index: 2, kind: input, shape index: {}]
  %s3 = inlined_call_operand.vmem [shape: f32[1,8], index: 3, kind: input, shape index: {}]
  %s4 = inlined_call_operand.vmem [shape: f32[1,8], index: 4, kind: input, shape index: {}]
  %s5 = inlined_call_operand.vmem [shape: f32[128,1], index: 5, kind: input, shape index: {}]
  %s6 = inlined_call_operand.vmem [shape: f32[128,16], index: 6, kind: output, shape index: {0}]
  %s7 = inlined_call_operand.vmem [shape: f32[2,1,16], index: 7, kind: output, shape index: {1}]
  %s8 = inlined_call_operand.vmem [shape: f32[2,1,16], index: 8, kind: output, shape index: {2}]
  %9 = xla_tuple %s6, %s7, %s8
  %s10 = sld [smem:[#allocation0]]
  $region77: #{conv_block_forward.6} parent=0
    _
  %s12 = ssub.s32 1, %s10
  %s13 = scalar_select 0, %s12, %s10
  loop: start=0, step=1, limit=4
  $region2: #{conv_block_forward.6} parent=0 // loop_pre_header
    _
  $region3: #{conv_block_forward.6} parent=0 // loop_header
    %s15 = sphi 0, %s19
    %p16 = scmp.ge.s32.totalorder %s15, 4
    %s22 = sphi 0, %s34
    %s23 = sphi 0, %s30
    %s24 = sphi 0, %s22
    %s25 = sphi 0, %s23
    %s26 = sphi 0, %s24
    %s27 = sphi 0, %s25
    %s39 = sphi 0, %s41
    %s42 = sphi 0, %s39
    %s43 = sphi 0, %s42
    %s59 = sphi 0, %s43
    %s63 = sphi 0, %s63
    %s65 = sphi 0, %s63
    %s66 = sphi 0, %s65
    %s80 = sphi 0, %s66
    %s84 = sphi 0, %s84
    %s86 = sphi 0, %s84
    %s87 = sphi 0, %s86
    %s101 = sphi 0, %s87
    %s105 = sphi 0, %s105
    %s107 = sphi 0, %s105
    %s108 = sphi 0, %s107
    %s122 = sphi 0, %s108
    %s126 = sphi 0, %s126
    %s128 = sphi 0, %s126
    %s129 = sphi 0, %s128
    %s143 = sphi 0, %s129
    %s151 = sphi 0, %s153
    %s154 = sphi 0, %s151
    %s155 = sphi 0, %s154
    %s171 = sphi 0, %s155
    %s179 = sphi 0, %s181
    %s182 = sphi 0, %s179
    %s183 = sphi 0, %s182
    %s199 = sphi 0, %s183
    %s205 = sphi 0, %s207
    %s208 = sphi 0, %s205
    %s209 = sphi 0, %s208
    %s225 = sphi 0, %s209
    %s231 = sphi 0, %s233
    %s234 = sphi 0, %s231
    %s235 = sphi 0, %s234
    %s251 = sphi 0, %s235
  $region4: #{conv_block_forward.6} parent=0 // loop_header_branch
    %18 = sbr.rel (%p16) target = $region8
  $region5: #{conv_block_forward.6} parent=0 // loop_body
    %s20 = ssub.s32 %s15, 1
    %s21 = ssub.s32 %s15, 2
    %s28 = sadd.s32 1, %s23
    %p29 = scmp.ge.s32.totalorder %s28, 1
    %s30 = scalar_select %p29, 0, %s28
    %s31 = sadd.s32 1, %s22
    %s32 = scalar_select %p29, %s31, %s22
    %p33 = scmp.ge.s32.totalorder %s32, 2
    %s34 = scalar_select %p33, 0, %s32
    %s35 = sadd.s32 %s22, %s23
    %s36 = sadd.s32 %s34, %s30
    %s37 = ssub.s32 %s35, %s36
    %p38 = scmp.eq.s32.totalorder %s37, 0
    %s40 = sadd.s32 %s39, 1
    %s41 = scalar_select %p38, %s39, %s40
    %p44 = pneg %p38
    %p45 = scmp.eq.s32.totalorder %s15, 1
    %p46 = por %p44, %p45
    %p47 = scmp.ne.s32.totalorder %s39, %s42
    %p48 = scmp.eq.s32.totalorder %s15, 0
    %p49 = por %p47, %p48
    %p50 = scmp.ne.s32.totalorder %s39, %s42
    %p51 = scmp.eq.s32.totalorder %s20, 1
    %p52 = por %p50, %p51
    %p53 = scmp.ne.s32.totalorder %s42, %s43
    %p54 = scmp.eq.s32.totalorder %s20, 0
    %p55 = por %p53, %p54
    %p56 = scmp.ne.s32.totalorder %s42, %s43
    %p57 = scmp.eq.s32.totalorder %s21, 1
    %p58 = por %p56, %p57
    %p60 = scmp.ne.s32.totalorder %s43, %s59
    %p61 = scmp.eq.s32.totalorder %s21, 0
    %p62 = por %p60, %p61
    %s64 = sadd.s32 %s63, 1
    %p67 = scmp.eq.s32.totalorder %s15, 1
    %p68 = scmp.ne.s32.totalorder %s63, %s65
    %p69 = scmp.eq.s32.totalorder %s15, 0
    %p70 = por %p68, %p69
    %p71 = scmp.ne.s32.totalorder %s63, %s65
    %p72 = scmp.eq.s32.totalorder %s20, 1
    %p73 = por %p71, %p72
    %p74 = scmp.ne.s32.totalorder %s65, %s66
    %p75 = scmp.eq.s32.totalorder %s20, 0
    %p76 = por %p74, %p75
    %p77 = scmp.ne.s32.totalorder %s65, %s66
    %p78 = scmp.eq.s32.totalorder %s21, 1
    %p79 = por %p77, %p78
    %p81 = scmp.ne.s32.totalorder %s66, %s80
    %p82 = scmp.eq.s32.totalorder %s21, 0
    %p83 = por %p81, %p82
    %s85 = sadd.s32 %s84, 1
    %p88 = scmp.eq.s32.totalorder %s15, 1
    %p89 = scmp.ne.s32.totalorder %s84, %s86
    %p90 = scmp.eq.s32.totalorder %s15, 0
    %p91 = por %p89, %p90
    %p92 = scmp.ne.s32.totalorder %s84, %s86
    %p93 = scmp.eq.s32.totalorder %s20, 1
    %p94 = por %p92, %p93
    %p95 = scmp.ne.s32.totalorder %s86, %s87
    %p96 = scmp.eq.s32.totalorder %s20, 0
    %p97 = por %p95, %p96
    %p98 = scmp.ne.s32.totalorder %s86, %s87
    %p99 = scmp.eq.s32.totalorder %s21, 1
    %p100 = por %p98, %p99
    %p102 = scmp.ne.s32.totalorder %s87, %s101
    %p103 = scmp.eq.s32.totalorder %s21, 0
    %p104 = por %p102, %p103
    %s106 = sadd.s32 %s105, 1
    %p109 = scmp.eq.s32.totalorder %s15, 1
    %p110 = scmp.ne.s32.totalorder %s105, %s107
    %p111 = scmp.eq.s32.totalorder %s15, 0
    %p112 = por %p110, %p111
    %p113 = scmp.ne.s32.totalorder %s105, %s107
    %p114 = scmp.eq.s32.totalorder %s20, 1
    %p115 = por %p113, %p114
    %p116 = scmp.ne.s32.totalorder %s107, %s108
    %p117 = scmp.eq.s32.totalorder %s20, 0
    %p118 = por %p116, %p117
    %p119 = scmp.ne.s32.totalorder %s107, %s108
    %p120 = scmp.eq.s32.totalorder %s21, 1
    %p121 = por %p119, %p120
    %p123 = scmp.ne.s32.totalorder %s108, %s122
    %p124 = scmp.eq.s32.totalorder %s21, 0
    %p125 = por %p123, %p124
    %s127 = sadd.s32 %s126, 1
    %p130 = scmp.eq.s32.totalorder %s15, 1
    %p131 = scmp.ne.s32.totalorder %s126, %s128
    %p132 = scmp.eq.s32.totalorder %s15, 0
    %p133 = por %p131, %p132
    %p134 = scmp.ne.s32.totalorder %s126, %s128
    %p135 = scmp.eq.s32.totalorder %s20, 1
    %p136 = por %p134, %p135
    %p137 = scmp.ne.s32.totalorder %s128, %s129
    %p138 = scmp.eq.s32.totalorder %s20, 0
    %p139 = por %p137, %p138
    %p140 = scmp.ne.s32.totalorder %s128, %s129
    %p141 = scmp.eq.s32.totalorder %s21, 1
    %p142 = por %p140, %p141
    %p144 = scmp.ne.s32.totalorder %s129, %s143
    %p145 = scmp.eq.s32.totalorder %s21, 0
    %p146 = por %p144, %p145
    %s147 = sadd.s32 %s22, %s23
    %s148 = sadd.s32 %s34, %s30
    %s149 = ssub.s32 %s147, %s148
    %p150 = scmp.eq.s32.totalorder %s149, 0
    %s152 = sadd.s32 %s151, 1
    %s153 = scalar_select %p150, %s151, %s152
    %p156 = pneg %p150
    %p157 = scmp.eq.s32.totalorder %s15, 1
    %p158 = por %p156, %p157
    %p159 = scmp.ne.s32.totalorder %s151, %s154
    %p160 = scmp.eq.s32.totalorder %s15, 0
    %p161 = por %p159, %p160
    %p162 = scmp.ne.s32.totalorder %s151, %s154
    %p163 = scmp.eq.s32.totalorder %s20, 1
    %p164 = por %p162, %p163
    %p165 = scmp.ne.s32.totalorder %s154, %s155
    %p166 = scmp.eq.s32.totalorder %s20, 0
    %p167 = por %p165, %p166
    %p168 = scmp.ne.s32.totalorder %s154, %s155
    %p169 = scmp.eq.s32.totalorder %s21, 1
    %p170 = por %p168, %p169
    %p172 = scmp.ne.s32.totalorder %s155, %s171
    %p173 = scmp.eq.s32.totalorder %s21, 0
    %p174 = por %p172, %p173
    %s175 = sadd.s32 %s22, %s23
    %s176 = sadd.s32 %s34, %s30
    %s177 = ssub.s32 %s175, %s176
    %p178 = scmp.eq.s32.totalorder %s177, 0
    %s180 = sadd.s32 %s179, 1
    %s181 = scalar_select %p178, %s179, %s180
    %p184 = pneg %p178
    %p185 = scmp.eq.s32.totalorder %s15, 1
    %p186 = por %p184, %p185
    %p187 = scmp.ne.s32.totalorder %s179, %s182
    %p188 = scmp.eq.s32.totalorder %s15, 0
    %p189 = por %p187, %p188
    %p190 = scmp.ne.s32.totalorder %s179, %s182
    %p191 = scmp.eq.s32.totalorder %s20, 1
    %p192 = por %p190, %p191
    %p193 = scmp.ne.s32.totalorder %s182, %s183
    %p194 = scmp.eq.s32.totalorder %s20, 0
    %p195 = por %p193, %p194
    %p196 = scmp.ne.s32.totalorder %s182, %s183
    %p197 = scmp.eq.s32.totalorder %s21, 1
    %p198 = por %p196, %p197
    %p200 = scmp.ne.s32.totalorder %s183, %s199
    %p201 = scmp.eq.s32.totalorder %s21, 0
    %p202 = por %p200, %p201
    %s203 = ssub.s32 %s22, %s34
    %p204 = scmp.eq.s32.totalorder %s203, 0
    %s206 = sadd.s32 %s205, 1
    %s207 = scalar_select %p204, %s205, %s206
    %p210 = pneg %p204
    %p211 = scmp.eq.s32.totalorder %s15, 1
    %p212 = por %p210, %p211
    %p213 = scmp.ne.s32.totalorder %s205, %s208
    %p214 = scmp.eq.s32.totalorder %s15, 0
    %p215 = por %p213, %p214
    %p216 = scmp.ne.s32.totalorder %s205, %s208
    %p217 = scmp.eq.s32.totalorder %s20, 1
    %p218 = por %p216, %p217
    %p219 = scmp.ne.s32.totalorder %s208, %s209
    %p220 = scmp.eq.s32.totalorder %s20, 0
    %p221 = por %p219, %p220
    %p222 = scmp.ne.s32.totalorder %s208, %s209
    %p223 = scmp.eq.s32.totalorder %s21, 1
    %p224 = por %p222, %p223
    %p226 = scmp.ne.s32.totalorder %s209, %s225
    %p227 = scmp.eq.s32.totalorder %s21, 0
    %p228 = por %p226, %p227
    %s229 = ssub.s32 %s22, %s34
    %p230 = scmp.eq.s32.totalorder %s229, 0
    %s232 = sadd.s32 %s231, 1
    %s233 = scalar_select %p230, %s231, %s232
    %p236 = pneg %p230
    %p237 = scmp.eq.s32.totalorder %s15, 1
    %p238 = por %p236, %p237
    %p239 = scmp.ne.s32.totalorder %s231, %s234
    %p240 = scmp.eq.s32.totalorder %s15, 0
    %p241 = por %p239, %p240
    %p242 = scmp.ne.s32.totalorder %s231, %s234
    %p243 = scmp.eq.s32.totalorder %s20, 1
    %p244 = por %p242, %p243
    %p245 = scmp.ne.s32.totalorder %s234, %s235
    %p246 = scmp.eq.s32.totalorder %s20, 0
    %p247 = por %p245, %p246
    %p248 = scmp.ne.s32.totalorder %s234, %s235
    %p249 = scmp.eq.s32.totalorder %s21, 1
    %p250 = por %p248, %p249
    %p252 = scmp.ne.s32.totalorder %s235, %s251
    %p253 = scmp.eq.s32.totalorder %s21, 0
    %p254 = por %p252, %p253
    %p255 = scmp.le.s32.totalorder 1, %s15
    %p256 = scmp.lt.s32.totalorder %s15, 3
    %p257 = pnand %p255, %p256
    %p258 = pneg %p257
    // Predicated region
    $region9: #{conv_block_forward.6} parent=5 // pred_check
      _
    $region10: #{conv_block_forward.6} parent=5 // pred_check_branch
      %260 = sbr.rel (%p257) target = $region12
    $region11: #{conv_block_forward.6} parent=5 // pred_region
      %s261 = ssub.s32 %s15, 1
      // Predicated region
      $region13: #{conv_block_forward.6} parent=11 // pred_check
        %p262 = pneg %p76
      $region14: #{conv_block_forward.6} parent=11 // pred_check_branch
        %264 = sbr.rel (%p262) target = $region16
      $region15: #{conv_block_forward.6} parent=11 // pred_region
        _
      $region16: #{conv_block_forward.6} parent=11 // pred_fallthru
        _
      // Predicated region
      $region17: #{conv_block_forward.6} parent=11 // pred_check
        %p265 = pneg %p97
      $region18: #{conv_block_forward.6} parent=11 // pred_check_branch
        %267 = sbr.rel (%p265) target = $region20
      $region19: #{conv_block_forward.6} parent=11 // pred_region
        _
      $region20: #{conv_block_forward.6} parent=11 // pred_fallthru
        _
      // Predicated region
      $region21: #{conv_block_forward.6} parent=11 // pred_check
        %p268 = pneg %p118
      $region22: #{conv_block_forward.6} parent=11 // pred_check_branch
        %270 = sbr.rel (%p268) target = $region24
      $region23: #{conv_block_forward.6} parent=11 // pred_region
        _
      $region24: #{conv_block_forward.6} parent=11 // pred_fallthru
        _
      // Predicated region
      $region25: #{conv_block_forward.6} parent=11 // pred_check
        %p271 = pneg %p139
      $region26: #{conv_block_forward.6} parent=11 // pred_check_branch
        %273 = sbr.rel (%p271) target = $region28
      $region27: #{conv_block_forward.6} parent=11 // pred_region
        _
      $region28: #{conv_block_forward.6} parent=11 // pred_fallthru
        _
    $region12: #{conv_block_forward.6} parent=5 // pred_fallthru
      _
    %p274 = scmp.lt.s32.totalorder %s15, 2
    // Predicated region
    $region29: #{conv_block_forward.6} parent=5 // pred_check
      %p275 = pneg %p274
    $region30: #{conv_block_forward.6} parent=5 // pred_check_branch
      %277 = sbr.rel (%p275) target = $region32
    $region31: #{conv_block_forward.6} parent=5 // pred_region
      // Predicated region
      $region33: #{conv_block_forward.6} parent=31 // pred_check
        %p278 = pneg %p49
      $region34: #{conv_block_forward.6} parent=31 // pred_check_branch
        %280 = sbr.rel (%p278) target = $region36
      $region35: #{conv_block_forward.6} parent=31 // pred_region
        %s281 = sadd.s32 %s22, %s23
        %s282 = smul.u32 8, %s281
        %p283 = scmp.lt.s32.totalorder %s282, 15
        %s284 = scalar_select %p283, %s282, 15
        %s285 = smul.addr %s284, 8
        %s286 = scalar_lea.vmem %s0, %s285
        %s287 = sadd.s32 %s22, %s23
        %s288 = smul.u32 8, %s287
      $region36: #{conv_block_forward.6} parent=31 // pred_fallthru
        _
      // Predicated region
      $region37: #{conv_block_forward.6} parent=31 // pred_check
        %p289 = pneg %p161
      $region38: #{conv_block_forward.6} parent=31 // pred_check_branch
        %291 = sbr.rel (%p289) target = $region40
      $region39: #{conv_block_forward.6} parent=31 // pred_region
        %s292 = sadd.s32 %s22, %s23
        %s293 = smul.u32 8, %s292
        %p294 = scmp.lt.s32.totalorder %s293, 15
        %s295 = scalar_select %p294, %s293, 15
        %s296 = smul.addr %s295, 8
        %s297 = scalar_lea.vmem %s5, %s296
        %s298 = sadd.s32 %s22, %s23
        %s299 = smul.u32 8, %s298
      $region40: #{conv_block_forward.6} parent=31 // pred_fallthru
        _
    $region32: #{conv_block_forward.6} parent=5 // pred_fallthru
      _
    %p300 = scmp.le.s32.totalorder 1, %s15
    %p301 = scmp.lt.s32.totalorder %s15, 3
    %p302 = pnand %p300, %p301
    %p303 = pneg %p302
    // Predicated region
    $region41: #{conv_block_forward.6} parent=5 // pred_check
      _
    $region42: #{conv_block_forward.6} parent=5 // pred_check_branch
      %305 = sbr.rel (%p302) target = $region44
    $region43: #{conv_block_forward.6} parent=5 // pred_region
      %s306 = ssub.s32 %s15, 1
      %s307 = sadd.s32 %s24, %s25
      %s308 = smul.u32 8, %s307
      %p309 = scmp.lt.s32.totalorder %s308, 15
      %s310 = scalar_select %p309, %s308, 15
      %s311 = smul.addr %s310, 8
      %s312 = scalar_lea.vmem %s0, %s311
      %p313 = pneg %p55
      %p314 = pneg %p52
      %p315 = pneg %p76
      %p316 = pneg %p73
      %p317 = pneg %p97
      %p318 = pneg %p94
      %p319 = pneg %p118
      %p320 = pneg %p115
      %p321 = pneg %p139
      %p322 = pneg %p136
      %s323 = sadd.s32 %s24, %s25
      %s324 = smul.u32 8, %s323
      %p325 = scmp.lt.s32.totalorder %s324, 15
      %s326 = scalar_select %p325, %s324, 15
      %s327 = smul.addr %s326, 8
      %s328 = scalar_lea.vmem %s5, %s327
      %p329 = pneg %p167
      %p330 = pneg %p164
      %p331 = pneg %p195
      %p332 = pneg %p192
      %s333 = sadd.s32 %s24, %s25
      %s334 = smul.u32 8, %s333
      %p335 = scmp.lt.s32.totalorder %s334, 15
      %s336 = scalar_select %p335, %s334, 15
      %s337 = smul.addr %s336, 8
      %s338 = scalar_lea.vmem %s6, %s337
      %p339 = pneg %p221
      %p340 = pneg %p218
      %p341 = scmp.lt.s32.totalorder %s24, 1
      %s342 = scalar_select %p341, %s24, 1
      %s343 = scalar_lea.vmem %s7, %s342
      %p344 = pneg %p247
      %p345 = pneg %p244
      %p346 = scmp.lt.s32.totalorder %s24, 1
      %s347 = scalar_select %p346, %s24, 1
      %s348 = scalar_lea.vmem %s8, %s347
      %s349 = sadd.s32 %s24, %s25
      %s350 = smul.u32 8, %s349
      %p351 = scmp.lt.s32.totalorder %s350, 15
      %s352 = scalar_select %p351, %s350, 15
      %s353 = smul.addr %s352, 8
      %s354 = scalar_lea.vmem %s0, %s353
      %s355 = sadd.s32 %s24, %s25
      %s356 = smul.u32 8, %s355
      %s357 = sadd.s32 %s24, %s25
      %s358 = smul.u32 8, %s357
      %p359 = scmp.lt.s32.totalorder %s358, 15
      %s360 = scalar_select %p359, %s358, 15
      %s361 = smul.addr %s360, 8
      %s362 = scalar_lea.vmem %s5, %s361
      %s363 = sadd.s32 %s24, %s25
      %s364 = smul.u32 8, %s363
      %s365 = sadd.s32 %s24, %s25
      %s366 = smul.u32 8, %s365
      %p367 = scmp.lt.s32.totalorder %s366, 15
      %s368 = scalar_select %p367, %s366, 15
      %s369 = smul.addr %s368, 8
      %s370 = scalar_lea.vmem %s6, %s369
      %s371 = sadd.s32 %s24, %s25
      %s372 = smul.u32 8, %s371
      %p373 = scmp.lt.s32.totalorder %s24, 1
      %s374 = scalar_select %p373, %s24, 1
      %s375 = scalar_lea.vmem %s7, %s374
      %p376 = scmp.lt.s32.totalorder %s24, 1
      %s377 = scalar_select %p376, %s24, 1
      %s378 = scalar_lea.vmem %s8, %s377
      %p379 = scmp.eq.s32.totalorder %s25, 0
      // Predicated region
      $region45: #{conv_block_forward.6} parent=43 // pred_check
        %p380 = pneg %p379
      $region46: #{conv_block_forward.6} parent=43 // pred_check_branch
        %382 = sbr.rel (%p380) target = $region48
      $region47: #{conv_block_forward.6} parent=43 // pred_region
        %vm383 = vcmask 122880
        %384 = vst.msk [vmem:[%s375] sm:$0x1] %vm383, 0.0
        %385 = vst.msk [vmem:[%s378] sm:$0x1] %vm383, 0.0
      $region48: #{conv_block_forward.6} parent=43 // pred_fallthru
        _
      %v386 = vld [vmem:[%s354] sm:$0xff]
      %v387 = vld [vmem:[%s354 + $0x8] sm:$0xff]
      %v388 = vld [vmem:[%s354 + $0x10] sm:$0xff]
      %v389 = vld [vmem:[%s354 + $0x18] sm:$0xff]
      %v390 = vld [vmem:[%s354 + $0x20] sm:$0xff]
      %v391 = vld [vmem:[%s354 + $0x28] sm:$0xff]
      %v392 = vld [vmem:[%s354 + $0x30] sm:$0xff]
      %v393 = vld [vmem:[%s354 + $0x38] sm:$0xff]
      %v394 = vld [vmem:[%s3] sm:$0x1]
      %v396 = vlaneseq
      %v397 = vshrl.u32 %v396, 7
      %v398 = vsub.s32 0, %v397
      %v399 = vrot.slane %v394, %v398
      %v401 = vmul.f32 %v386, %v399
      %v402 = vmul.f32 %v387, %v399
      %v403 = vmul.f32 %v388, %v399
      %v404 = vmul.f32 %v389, %v399
      %v405 = vmul.f32 %v390, %v399
      %v406 = vmul.f32 %v391, %v399
      %v407 = vmul.f32 %v392, %v399
      %v408 = vmul.f32 %v393, %v399
      %v409 = vld [vmem:[%s4] sm:$0x1]
      %v411 = vlaneseq
      %v412 = vshrl.u32 %v411, 7
      %v413 = vsub.s32 0, %v412
      %v414 = vrot.slane %v409, %v413
      %v416 = vadd.f32 %v401, %v414
      %v417 = vadd.f32 %v402, %v414
      %v418 = vadd.f32 %v403, %v414
      %v419 = vadd.f32 %v404, %v414
      %v420 = vadd.f32 %v405, %v414
      %v421 = vadd.f32 %v406, %v414
      %v422 = vadd.f32 %v407, %v414
      %v423 = vadd.f32 %v408, %v414
      %v424 = vmax.f32 %v416, 0.0
      %v425 = vmax.f32 %v417, 0.0
      %v426 = vmax.f32 %v418, 0.0
      %v427 = vmax.f32 %v419, 0.0
      %v428 = vmax.f32 %v420, 0.0
      %v429 = vmax.f32 %v421, 0.0
      %v430 = vmax.f32 %v422, 0.0
      %v431 = vmax.f32 %v423, 0.0
      %v432 = vld [vmem:[%s1] sm:$0xff]
      %v433 = vld [vmem:[%s2] sm:$0x1]
      %v435 = vlaneseq
      %v436 = vshrl.u32 %v435, 7
      %v437 = vsub.s32 0, %v436
      %v438 = vrot.slane %v433, %v437
      %vm440 = vcmask 64512
      %v442 = vsel %vm440, %v424, 0
      %v445 = vsel %vm440, %v425, 0
      %v448 = vsel %vm440, %v426, 0
      %v451 = vsel %vm440, %v427, 0
      %v454 = vsel %vm440, %v428, 0
      %v457 = vsel %vm440, %v429, 0
      %v460 = vsel %vm440, %v430, 0
      %v463 = vsel %vm440, %v431, 0
      %465 = vmatprep.subr.mxu0 0.0
      %466 = vmatpush1.msra.mxu0 %v432
      %467 = vmatprep.subr.mxu0 0.0
      %468 = vmatpush1.msra.mxu0 0.0
      %469 = vmatprep.subr.mxu0 0.0
      %470 = vmatpush1.msra.mxu0 0.0
      %471 = vmatprep.subr.mxu0 0.0
      %472 = vmatpush1.msra.mxu0 0.0
      %473 = vmatprep.subr.mxu0 0.0
      %474 = vmatpush1.msra.mxu0 0.0
      %475 = vmatprep.subr.mxu0 0.0
      %476 = vmatpush1.msra.mxu0 0.0
      %477 = vmatprep.subr.mxu0 0.0
      %478 = vmatpush1.msra.mxu0 0.0
      %479 = vmatprep.subr.mxu0 0.0
      %480 = vmatpush1.msra.mxu0 0.0
      %481 = vmatprep.subr.mxu0 0.0
      %482 = vmatpush1.msra.mxu0 0.0
      %483 = vmatprep.subr.mxu0 0.0
      %484 = vmatpush1.msra.mxu0 0.0
      %485 = vmatprep.subr.mxu0 0.0
      %486 = vmatpush1.msra.mxu0 0.0
      %487 = vmatprep.subr.mxu0 0.0
      %488 = vmatpush1.msra.mxu0 0.0
      %489 = vmatprep.subr.mxu0 0.0
      %490 = vmatpush1.msra.mxu0 0.0
      %491 = vmatprep.subr.mxu0 0.0
      %492 = vmatpush1.msra.mxu0 0.0
      %493 = vmatprep.subr.mxu0 0.0
      %494 = vmatpush1.msra.mxu0 0.0
      %495 = vmatprep.subr.mxu0 0.0
      %496 = vmatpush1.msra.mxu0 0.0
      %497 = vmatprep.subr.mxu0 0.0
      %498 = vmatpush1.msra.mxu0 0.0
      %499 = vmatprep.subr.mxu0 0.0
      %500 = vmatpush1.msra.mxu0 0.0
      %501 = vmatprep.subr.mxu0 0.0
      %502 = vmatpush1.msra.mxu0 0.0
      %503 = vmatprep.subr.mxu0 0.0
      %504 = vmatpush1.msra.mxu0 0.0
      %505 = vmatprep.subr.mxu0 0.0
      %506 = vmatpush1.msra.mxu0 0.0
      %507 = vmatprep.subr.mxu0 0.0
      %508 = vmatpush1.msra.mxu0 0.0
      %509 = vmatprep.subr.mxu0 0.0
      %510 = vmatpush1.msra.mxu0 0.0
      %511 = vmatprep.subr.mxu0 0.0
      %512 = vmatpush1.msra.mxu0 0.0
      %513 = vmatprep.subr.mxu0 0.0
      %514 = vmatpush1.msra.mxu0 0.0
      %515 = vmatprep.subr.mxu0 0.0
      %516 = vmatpush1.msra.mxu0 0.0
      %517 = vmatprep.subr.mxu0 0.0
      %518 = vmatpush1.msra.mxu0 0.0
      %519 = vmatprep.subr.mxu0 0.0
      %520 = vmatpush1.msra.mxu0 0.0
      %521 = vmatprep.subr.mxu0 0.0
      %522 = vmatpush1.msra.mxu0 0.0
      %523 = vmatprep.subr.mxu0 0.0
      %524 = vmatpush1.msra.mxu0 0.0
      %525 = vmatprep.subr.mxu0 0.0
      %526 = vmatpush1.msra.mxu0 0.0
      %527 = vmatprep.subr.mxu0 0.0
      %528 = vmatpush1.msra.mxu0 0.0
      %529 = vmatprep.mubr.f32.mxu0 0.0
      %530 = vmatmul.mubr.f32.gmra.mrb[0].mxu0 %v442
      %v531 = vpop.f32.mrb[0].mxu0
      %v532 = vadd.f32 %v438, %v531
      %v533 = vpop.f32.mrb[0].mxu0
      %534 = vmatprep.mubr.f32.mxu0 0.0
      %535 = vmatmul.mubr.f32.gmra.mrb[0].mxu0 %v445
      %v536 = vpop.f32.mrb[0].mxu0
      %v537 = vadd.f32 %v438, %v536
      %v538 = vpop.f32.mrb[0].mxu0
      %539 = vmatprep.mubr.f32.mxu0 0.0
      %540 = vmatmul.mubr.f32.gmra.mrb[0].mxu0 %v448
      %v541 = vpop.f32.mrb[0].mxu0
      %v542 = vadd.f32 %v438, %v541
      %v543 = vpop.f32.mrb[0].mxu0
      %544 = vmatprep.mubr.f32.mxu0 0.0
      %545 = vmatmul.mubr.f32.gmra.mrb[0].mxu0 %v451
      %v546 = vpop.f32.mrb[0].mxu0
      %v547 = vadd.f32 %v438, %v546
      %v548 = vpop.f32.mrb[0].mxu0
      %549 = vmatprep.mubr.f32.mxu0 0.0
      %550 = vmatmul.mubr.f32.gmra.mrb[0].mxu0 %v454
      %v551 = vpop.f32.mrb[0].mxu0
      %v552 = vadd.f32 %v438, %v551
      %v553 = vpop.f32.mrb[0].mxu0
      %554 = vmatprep.mubr.f32.mxu0 0.0
      %555 = vmatmul.mubr.f32.gmra.mrb[0].mxu0 %v457
      %v556 = vpop.f32.mrb[0].mxu0
      %v557 = vadd.f32 %v438, %v556
      %v558 = vpop.f32.mrb[0].mxu0
      %559 = vmatprep.mubr.f32.mxu0 0.0
      %560 = vmatmul.mubr.f32.gmra.mrb[0].mxu0 %v460
      %v561 = vpop.f32.mrb[0].mxu0
      %v562 = vadd.f32 %v438, %v561
      %v563 = vpop.f32.mrb[0].mxu0
      %564 = vmatprep.mubr.f32.mxu0 0.0
      %565 = vmatmul.mubr.f32.gmra.mrb[0].mxu0 %v463
      %v566 = vpop.f32.mrb[0].mxu0
      %v567 = vadd.f32 %v438, %v566
      %v568 = vpop.f32.mrb[0].mxu0
      %569 = vdwg.mxu0
      %vm570 = vcmask 130048
      %571 = vst.msk [vmem:[%s370] sm:$0xff] %vm570, %v532
      %572 = vst.msk [vmem:[%s370 + $0x8] sm:$0xff] %vm570, %v537
      %573 = vst.msk [vmem:[%s370 + $0x10] sm:$0xff] %vm570, %v542
      %574 = vst.msk [vmem:[%s370 + $0x18] sm:$0xff] %vm570, %v547
      %575 = vst.msk [vmem:[%s370 + $0x20] sm:$0xff] %vm570, %v552
      %576 = vst.msk [vmem:[%s370 + $0x28] sm:$0xff] %vm570, %v557
      %577 = vst.msk [vmem:[%s370 + $0x30] sm:$0xff] %vm570, %v562
      %578 = vst.msk [vmem:[%s370 + $0x38] sm:$0xff] %vm570, %v567
      %v579 = vld [vmem:[%s362] sm:$0xff]
      %v580 = vld [vmem:[%s362 + $0x8] sm:$0xff]
      %v581 = vld [vmem:[%s362 + $0x10] sm:$0xff]
      %v582 = vld [vmem:[%s362 + $0x18] sm:$0xff]
      %v583 = vld [vmem:[%s362 + $0x20] sm:$0xff]
      %v584 = vld [vmem:[%s362 + $0x28] sm:$0xff]
      %v585 = vld [vmem:[%s362 + $0x30] sm:$0xff]
      %v586 = vld [vmem:[%s362 + $0x38] sm:$0xff]
      %588 = vset.pattern.permute.xlu0 0
      %589 = vperm.xlu0 %588, %v579
      %v590 = vpop.permute.xlu0 %589
      %593 = vset.pattern.permute.xlu0 0
      %594 = vperm.xlu0 %593, %v580
      %v595 = vpop.permute.xlu0 %594
      %598 = vset.pattern.permute.xlu0 0
      %599 = vperm.xlu0 %598, %v581
      %v600 = vpop.permute.xlu0 %599
      %603 = vset.pattern.permute.xlu0 0
      %604 = vperm.xlu0 %603, %v582
      %v605 = vpop.permute.xlu0 %604
      %608 = vset.pattern.permute.xlu0 0
      %609 = vperm.xlu0 %608, %v583
      %v610 = vpop.permute.xlu0 %609
      %613 = vset.pattern.permute.xlu0 0
      %614 = vperm.xlu0 %613, %v584
      %v615 = vpop.permute.xlu0 %614
      %618 = vset.pattern.permute.xlu0 0
      %619 = vperm.xlu0 %618, %v585
      %v620 = vpop.permute.xlu0 %619
      %623 = vset.pattern.permute.xlu0 0
      %624 = vperm.xlu0 %623, %v586
      %v625 = vpop.permute.xlu0 %624
      %v627 = vmul.f32 %v532, %v590
      %v628 = vmul.f32 %v537, %v595
      %v629 = vmul.f32 %v542, %v600
      %v630 = vmul.f32 %v547, %v605
      %v631 = vmul.f32 %v552, %v610
      %v632 = vmul.f32 %v557, %v615
      %v633 = vmul.f32 %v562, %v620
      %v634 = vmul.f32 %v567, %v625
      %v635 = vld [vmem:[%s375] sm:$0x1]
      %v636 = vsel %vm570, %v627, 0.0
      %v637 = vsel %vm570, %v628, 0.0
      %v638 = vadd.f32 %v636, %v637
      %v639 = vsel %vm570, %v629, 0.0
      %v640 = vadd.f32 %v638, %v639
      %v641 = vsel %vm570, %v630, 0.0
      %v642 = vadd.f32 %v640, %v641
      %v643 = vsel %vm570, %v631, 0.0
      %v644 = vadd.f32 %v642, %v643
      %v645 = vsel %vm570, %v632, 0.0
      %v646 = vadd.f32 %v644, %v645
      %v647 = vsel %vm570, %v633, 0.0
      %v648 = vadd.f32 %v646, %v647
      %v649 = vsel %vm570, %v634, 0.0
      %v650 = vadd.f32 %v648, %v649
      %v651 = vrot.slane %v650, 4
      %v652 = vadd.f32 %v650, %v651
      %v653 = vrot.slane %v652, 2
      %v654 = vadd.f32 %v652, %v653
      %v655 = vrot.slane %v654, 1
      %v656 = vadd.f32 %v654, %v655
      %v657 = vadd.f32 %v635, %v656
      %vm658 = vcmask 122880
      %659 = vst.msk [vmem:[%s375] sm:$0x1] %vm658, %v657
      %v660 = vld [vmem:[%s378] sm:$0x1]
      %v661 = vmul.f32 %v627, %v627
      %v662 = vmul.f32 %v628, %v628
      %v663 = vmul.f32 %v629, %v629
      %v664 = vmul.f32 %v630, %v630
      %v665 = vmul.f32 %v631, %v631
      %v666 = vmul.f32 %v632, %v632
      %v667 = vmul.f32 %v633, %v633
      %v668 = vmul.f32 %v634, %v634
      %v669 = vsel %vm570, %v661, 0.0
      %v670 = vsel %vm570, %v662, 0.0
      %v671 = vadd.f32 %v669, %v670
      %v672 = vsel %vm570, %v663, 0.0
      %v673 = vadd.f32 %v671, %v672
      %v674 = vsel %vm570, %v664, 0.0
      %v675 = vadd.f32 %v673, %v674
      %v676 = vsel %vm570, %v665, 0.0
      %v677 = vadd.f32 %v675, %v676
      %v678 = vsel %vm570, %v666, 0.0
      %v679 = vadd.f32 %v677, %v678
      %v680 = vsel %vm570, %v667, 0.0
      %v681 = vadd.f32 %v679, %v680
      %v682 = vsel %vm570, %v668, 0.0
      %v683 = vadd.f32 %v681, %v682
      %v684 = vrot.slane %v683, 4
      %v685 = vadd.f32 %v683, %v684
      %v686 = vrot.slane %v685, 2
      %v687 = vadd.f32 %v685, %v686
      %v688 = vrot.slane %v687, 1
      %v689 = vadd.f32 %v687, %v688
      %v690 = vadd.f32 %v660, %v689
      %691 = vst.msk [vmem:[%s378] sm:$0x1] %vm658, %v690
      %s692 = sadd.s32 %s24, %s25
      %s693 = smul.u32 8, %s692
      %p694 = scmp.lt.s32.totalorder %s693, 15
      %s695 = scalar_select %p694, %s693, 15
      %s696 = smul.addr %s695, 8
      %s697 = scalar_lea.vmem %s6, %s696
      %p698 = scmp.lt.s32.totalorder %s24, 1
      %s699 = scalar_select %p698, %s24, 1
      %s700 = scalar_lea.vmem %s7, %s699
      %p701 = scmp.lt.s32.totalorder %s24, 1
      %s702 = scalar_select %p701, %s24, 1
      %s703 = scalar_lea.vmem %s8, %s702
      // Predicated region
      $region49: #{conv_block_forward.6} parent=43 // pred_check
        %p704 = pneg %p192
      $region50: #{conv_block_forward.6} parent=43 // pred_check_branch
        %706 = sbr.rel (%p704) target = $region52
      $region51: #{conv_block_forward.6} parent=43 // pred_region
        %s707 = sadd.s32 %s24, %s25
        %s708 = smul.u32 8, %s707
      $region52: #{conv_block_forward.6} parent=43 // pred_fallthru
        _
      // Predicated region
      $region53: #{conv_block_forward.6} parent=43 // pred_check
        %p709 = pneg %p218
      $region54: #{conv_block_forward.6} parent=43 // pred_check_branch
        %711 = sbr.rel (%p709) target = $region56
      $region55: #{conv_block_forward.6} parent=43 // pred_region
        _
      $region56: #{conv_block_forward.6} parent=43 // pred_fallthru
        _
      // Predicated region
      $region57: #{conv_block_forward.6} parent=43 // pred_check
        %p712 = pneg %p244
      $region58: #{conv_block_forward.6} parent=43 // pred_check_branch
        %714 = sbr.rel (%p712) target = $region60
      $region59: #{conv_block_forward.6} parent=43 // pred_region
        _
      $region60: #{conv_block_forward.6} parent=43 // pred_fallthru
        _
    $region44: #{conv_block_forward.6} parent=5 // pred_fallthru
      _
    %p715 = scmp.le.s32.totalorder 2, %s15
    // Predicated region
    $region61: #{conv_block_forward.6} parent=5 // pred_check
      %p716 = pneg %p715
    $region62: #{conv_block_forward.6} parent=5 // pred_check_branch
      %718 = sbr.rel (%p716) target = $region64
    $region63: #{conv_block_forward.6} parent=5 // pred_region
      %s719 = ssub.s32 %s15, 2
      // Predicated region
      $region65: #{conv_block_forward.6} parent=63 // pred_check
        %p720 = pneg %p198
      $region66: #{conv_block_forward.6} parent=63 // pred_check_branch
        %722 = sbr.rel (%p720) target = $region68
      $region67: #{conv_block_forward.6} parent=63 // pred_region
        %s723 = sadd.s32 %s26, %s27
        %s724 = smul.u32 8, %s723
        %p725 = scmp.lt.s32.totalorder %s724, 15
        %s726 = scalar_select %p725, %s724, 15
        %s727 = smul.addr %s726, 8
        %s728 = scalar_lea.vmem %s6, %s727
      $region68: #{conv_block_forward.6} parent=63 // pred_fallthru
        _
      // Predicated region
      $region69: #{conv_block_forward.6} parent=63 // pred_check
        %p729 = pneg %p224
      $region70: #{conv_block_forward.6} parent=63 // pred_check_branch
        %731 = sbr.rel (%p729) target = $region72
      $region71: #{conv_block_forward.6} parent=63 // pred_region
        %p732 = scmp.lt.s32.totalorder %s26, 1
        %s733 = scalar_select %p732, %s26, 1
        %s734 = scalar_lea.vmem %s7, %s733
      $region72: #{conv_block_forward.6} parent=63 // pred_fallthru
        _
      // Predicated region
      $region73: #{conv_block_forward.6} parent=63 // pred_check
        %p735 = pneg %p250
      $region74: #{conv_block_forward.6} parent=63 // pred_check_branch
        %737 = sbr.rel (%p735) target = $region76
      $region75: #{conv_block_forward.6} parent=63 // pred_region
        %p738 = scmp.lt.s32.totalorder %s26, 1
        %s739 = scalar_select %p738, %s26, 1
        %s740 = scalar_lea.vmem %s8, %s739
      $region76: #{conv_block_forward.6} parent=63 // pred_fallthru
        _
    $region64: #{conv_block_forward.6} parent=5 // pred_fallthru
      _
  $region6: #{conv_block_forward.6} parent=0 // loop_footer
    %s19 = sadd.s32 1, %s15
  $region7: #{conv_block_forward.6} parent=0 // loop_footer_branch
    %14 = sbr.rel target = $region3
  $region8: #{conv_block_forward.6} parent=0 // loop_exit
    _

// kernel: conv_block_forward.5
$region0: #{conv_block_forward.5}
  #allocation0 [shape = 'u32[]', space=smem, size = 0x4, offset = 0x4, fixed_abs, tag = 'smem constant byte address 0x4 - core index']
  #allocation1 [shape = 'u32[144,128]{1,0:T(1,128)}', space=vmem, size = 0x12000, scoped, tag = 'internal scratch']
  %s0 = inlined_call_operand.vmem [shape: f32[170,8], index: 0, kind: input, shape index: {}]
  %s1 = inlined_call_operand.vmem [shape: f32[216,8], index: 1, kind: input, shape index: {}]
  %s2 = inlined_call_operand.vmem [shape: f32[1,8], index: 2, kind: input, shape index: {}]
  %s3 = inlined_call_operand.vmem [shape: f32[1,8], index: 3, kind: input, shape index: {}]
  %s4 = inlined_call_operand.vmem [shape: f32[1,8], index: 4, kind: input, shape index: {}]
  %s5 = inlined_call_operand.vmem [shape: f32[128,27], index: 5, kind: input, shape index: {}]
  %s6 = inlined_call_operand.vmem [shape: f32[128,1], index: 6, kind: input, shape index: {}]
  %s7 = inlined_call_operand.vmem [shape: f32[128,8], index: 7, kind: output, shape index: {0}]
  %s8 = inlined_call_operand.vmem [shape: f32[2,1,8], index: 8, kind: output, shape index: {1}]
  %s9 = inlined_call_operand.vmem [shape: f32[2,1,8], index: 9, kind: output, shape index: {2}]
  %10 = xla_tuple %s7, %s8, %s9
  %s11 = sld [smem:[#allocation0]]
  $region81: #{conv_block_forward.5} parent=0
    _
  %s13 = ssub.s32 1, %s11
  %s14 = scalar_select 0, %s13, %s11
  loop: start=0, step=1, limit=4
  $region2: #{conv_block_forward.5} parent=0 // loop_pre_header
    _
  $region3: #{conv_block_forward.5} parent=0 // loop_header
    %s16 = sphi 0, %s20
    %p17 = scmp.ge.s32.totalorder %s16, 4
    %s23 = sphi 0, %s35
    %s24 = sphi 0, %s31
    %s25 = sphi 0, %s23
    %s26 = sphi 0, %s24
    %s27 = sphi 0, %s25
    %s28 = sphi 0, %s26
    %s36 = sphi 0, %s36
    %s38 = sphi 0, %s36
    %s39 = sphi 0, %s38
    %s53 = sphi 0, %s39
    %s57 = sphi 0, %s57
    %s59 = sphi 0, %s57
    %s60 = sphi 0, %s59
    %s74 = sphi 0, %s60
    %s78 = sphi 0, %s78
    %s80 = sphi 0, %s78
    %s81 = sphi 0, %s80
    %s95 = sphi 0, %s81
    %s99 = sphi 0, %s99
    %s101 = sphi 0, %s99
    %s102 = sphi 0, %s101
    %s116 = sphi 0, %s102
    %s120 = sphi 0, %s120
    %s122 = sphi 0, %s120
    %s123 = sphi 0, %s122
    %s137 = sphi 0, %s123
    %s145 = sphi 0, %s147
    %s148 = sphi 0, %s145
    %s149 = sphi 0, %s148
    %s165 = sphi 0, %s149
    %s173 = sphi 0, %s175
    %s176 = sphi 0, %s173
    %s177 = sphi 0, %s176
    %s193 = sphi 0, %s177
    %s201 = sphi 0, %s203
    %s204 = sphi 0, %s201
    %s205 = sphi 0, %s204
    %s221 = sphi 0, %s205
    %s227 = sphi 0, %s229
    %s230 = sphi 0, %s227
    %s231 = sphi 0, %s230
    %s247 = sphi 0, %s231
    %s253 = sphi 0, %s255
    %s256 = sphi 0, %s253
    %s257 = sphi 0, %s256
    %s273 = sphi 0, %s257
  $region4: #{conv_block_forward.5} parent=0 // loop_header_branch
    %19 = sbr.rel (%p17) target = $region8
  $region5: #{conv_block_forward.5} parent=0 // loop_body
    %s21 = ssub.s32 %s16, 1
    %s22 = ssub.s32 %s16, 2
    %s29 = sadd.s32 1, %s24
    %p30 = scmp.ge.s32.totalorder %s29, 1
    %s31 = scalar_select %p30, 0, %s29
    %s32 = sadd.s32 1, %s23
    %s33 = scalar_select %p30, %s32, %s23
    %p34 = scmp.ge.s32.totalorder %s33, 2
    %s35 = scalar_select %p34, 0, %s33
    %s37 = sadd.s32 %s36, 1
    %p40 = scmp.eq.s32.totalorder %s16, 1
    %p41 = scmp.ne.s32.totalorder %s36, %s38
    %p42 = scmp.eq.s32.totalorder %s16, 0
    %p43 = por %p41, %p42
    %p44 = scmp.ne.s32.totalorder %s36, %s38
    %p45 = scmp.eq.s32.totalorder %s21, 1
    %p46 = por %p44, %p45
    %p47 = scmp.ne.s32.totalorder %s38, %s39
    %p48 = scmp.eq.s32.totalorder %s21, 0
    %p49 = por %p47, %p48
    %p50 = scmp.ne.s32.totalorder %s38, %s39
    %p51 = scmp.eq.s32.totalorder %s22, 1
    %p52 = por %p50, %p51
    %p54 = scmp.ne.s32.totalorder %s39, %s53
    %p55 = scmp.eq.s32.totalorder %s22, 0
    %p56 = por %p54, %p55
    %s58 = sadd.s32 %s57, 1
    %p61 = scmp.eq.s32.totalorder %s16, 1
    %p62 = scmp.ne.s32.totalorder %s57, %s59
    %p63 = scmp.eq.s32.totalorder %s16, 0
    %p64 = por %p62, %p63
    %p65 = scmp.ne.s32.totalorder %s57, %s59
    %p66 = scmp.eq.s32.totalorder %s21, 1
    %p67 = por %p65, %p66
    %p68 = scmp.ne.s32.totalorder %s59, %s60
    %p69 = scmp.eq.s32.totalorder %s21, 0
    %p70 = por %p68, %p69
    %p71 = scmp.ne.s32.totalorder %s59, %s60
    %p72 = scmp.eq.s32.totalorder %s22, 1
    %p73 = por %p71, %p72
    %p75 = scmp.ne.s32.totalorder %s60, %s74
    %p76 = scmp.eq.s32.totalorder %s22, 0
    %p77 = por %p75, %p76
    %s79 = sadd.s32 %s78, 1
    %p82 = scmp.eq.s32.totalorder %s16, 1
    %p83 = scmp.ne.s32.totalorder %s78, %s80
    %p84 = scmp.eq.s32.totalorder %s16, 0
    %p85 = por %p83, %p84
    %p86 = scmp.ne.s32.totalorder %s78, %s80
    %p87 = scmp.eq.s32.totalorder %s21, 1
    %p88 = por %p86, %p87
    %p89 = scmp.ne.s32.totalorder %s80, %s81
    %p90 = scmp.eq.s32.totalorder %s21, 0
    %p91 = por %p89, %p90
    %p92 = scmp.ne.s32.totalorder %s80, %s81
    %p93 = scmp.eq.s32.totalorder %s22, 1
    %p94 = por %p92, %p93
    %p96 = scmp.ne.s32.totalorder %s81, %s95
    %p97 = scmp.eq.s32.totalorder %s22, 0
    %p98 = por %p96, %p97
    %s100 = sadd.s32 %s99, 1
    %p103 = scmp.eq.s32.totalorder %s16, 1
    %p104 = scmp.ne.s32.totalorder %s99, %s101
    %p105 = scmp.eq.s32.totalorder %s16, 0
    %p106 = por %p104, %p105
    %p107 = scmp.ne.s32.totalorder %s99, %s101
    %p108 = scmp.eq.s32.totalorder %s21, 1
    %p109 = por %p107, %p108
    %p110 = scmp.ne.s32.totalorder %s101, %s102
    %p111 = scmp.eq.s32.totalorder %s21, 0
    %p112 = por %p110, %p111
    %p113 = scmp.ne.s32.totalorder %s101, %s102
    %p114 = scmp.eq.s32.totalorder %s22, 1
    %p115 = por %p113, %p114
    %p117 = scmp.ne.s32.totalorder %s102, %s116
    %p118 = scmp.eq.s32.totalorder %s22, 0
    %p119 = por %p117, %p118
    %s121 = sadd.s32 %s120, 1
    %p124 = scmp.eq.s32.totalorder %s16, 1
    %p125 = scmp.ne.s32.totalorder %s120, %s122
    %p126 = scmp.eq.s32.totalorder %s16, 0
    %p127 = por %p125, %p126
    %p128 = scmp.ne.s32.totalorder %s120, %s122
    %p129 = scmp.eq.s32.totalorder %s21, 1
    %p130 = por %p128, %p129
    %p131 = scmp.ne.s32.totalorder %s122, %s123
    %p132 = scmp.eq.s32.totalorder %s21, 0
    %p133 = por %p131, %p132
    %p134 = scmp.ne.s32.totalorder %s122, %s123
    %p135 = scmp.eq.s32.totalorder %s22, 1
    %p136 = por %p134, %p135
    %p138 = scmp.ne.s32.totalorder %s123, %s137
    %p139 = scmp.eq.s32.totalorder %s22, 0
    %p140 = por %p138, %p139
    %s141 = sadd.s32 %s23, %s24
    %s142 = sadd.s32 %s35, %s31
    %s143 = ssub.s32 %s141, %s142
    %p144 = scmp.eq.s32.totalorder %s143, 0
    %s146 = sadd.s32 %s145, 1
    %s147 = scalar_select %p144, %s145, %s146
    %p150 = pneg %p144
    %p151 = scmp.eq.s32.totalorder %s16, 1
    %p152 = por %p150, %p151
    %p153 = scmp.ne.s32.totalorder %s145, %s148
    %p154 = scmp.eq.s32.totalorder %s16, 0
    %p155 = por %p153, %p154
    %p156 = scmp.ne.s32.totalorder %s145, %s148
    %p157 = scmp.eq.s32.totalorder %s21, 1
    %p158 = por %p156, %p157
    %p159 = scmp.ne.s32.totalorder %s148, %s149
    %p160 = scmp.eq.s32.totalorder %s21, 0
    %p161 = por %p159, %p160
    %p162 = scmp.ne.s32.totalorder %s148, %s149
    %p163 = scmp.eq.s32.totalorder %s22, 1
    %p164 = por %p162, %p163
    %p166 = scmp.ne.s32.totalorder %s149, %s165
    %p167 = scmp.eq.s32.totalorder %s22, 0
    %p168 = por %p166, %p167
    %s169 = sadd.s32 %s23, %s24
    %s170 = sadd.s32 %s35, %s31
    %s171 = ssub.s32 %s169, %s170
    %p172 = scmp.eq.s32.totalorder %s171, 0
    %s174 = sadd.s32 %s173, 1
    %s175 = scalar_select %p172, %s173, %s174
    %p178 = pneg %p172
    %p179 = scmp.eq.s32.totalorder %s16, 1
    %p180 = por %p178, %p179
    %p181 = scmp.ne.s32.totalorder %s173, %s176
    %p182 = scmp.eq.s32.totalorder %s16, 0
    %p183 = por %p181, %p182
    %p184 = scmp.ne.s32.totalorder %s173, %s176
    %p185 = scmp.eq.s32.totalorder %s21, 1
    %p186 = por %p184, %p185
    %p187 = scmp.ne.s32.totalorder %s176, %s177
    %p188 = scmp.eq.s32.totalorder %s21, 0
    %p189 = por %p187, %p188
    %p190 = scmp.ne.s32.totalorder %s176, %s177
    %p191 = scmp.eq.s32.totalorder %s22, 1
    %p192 = por %p190, %p191
    %p194 = scmp.ne.s32.totalorder %s177, %s193
    %p195 = scmp.eq.s32.totalorder %s22, 0
    %p196 = por %p194, %p195
    %s197 = sadd.s32 %s23, %s24
    %s198 = sadd.s32 %s35, %s31
    %s199 = ssub.s32 %s197, %s198
    %p200 = scmp.eq.s32.totalorder %s199, 0
    %s202 = sadd.s32 %s201, 1
    %s203 = scalar_select %p200, %s201, %s202
    %p206 = pneg %p200
    %p207 = scmp.eq.s32.totalorder %s16, 1
    %p208 = por %p206, %p207
    %p209 = scmp.ne.s32.totalorder %s201, %s204
    %p210 = scmp.eq.s32.totalorder %s16, 0
    %p211 = por %p209, %p210
    %p212 = scmp.ne.s32.totalorder %s201, %s204
    %p213 = scmp.eq.s32.totalorder %s21, 1
    %p214 = por %p212, %p213
    %p215 = scmp.ne.s32.totalorder %s204, %s205
    %p216 = scmp.eq.s32.totalorder %s21, 0
    %p217 = por %p215, %p216
    %p218 = scmp.ne.s32.totalorder %s204, %s205
    %p219 = scmp.eq.s32.totalorder %s22, 1
    %p220 = por %p218, %p219
    %p222 = scmp.ne.s32.totalorder %s205, %s221
    %p223 = scmp.eq.s32.totalorder %s22, 0
    %p224 = por %p222, %p223
    %s225 = ssub.s32 %s23, %s35
    %p226 = scmp.eq.s32.totalorder %s225, 0
    %s228 = sadd.s32 %s227, 1
    %s229 = scalar_select %p226, %s227, %s228
    %p232 = pneg %p226
    %p233 = scmp.eq.s32.totalorder %s16, 1
    %p234 = por %p232, %p233
    %p235 = scmp.ne.s32.totalorder %s227, %s230
    %p236 = scmp.eq.s32.totalorder %s16, 0
    %p237 = por %p235, %p236
    %p238 = scmp.ne.s32.totalorder %s227, %s230
    %p239 = scmp.eq.s32.totalorder %s21, 1
    %p240 = por %p238, %p239
    %p241 = scmp.ne.s32.totalorder %s230, %s231
    %p242 = scmp.eq.s32.totalorder %s21, 0
    %p243 = por %p241, %p242
    %p244 = scmp.ne.s32.totalorder %s230, %s231
    %p245 = scmp.eq.s32.totalorder %s22, 1
    %p246 = por %p244, %p245
    %p248 = scmp.ne.s32.totalorder %s231, %s247
    %p249 = scmp.eq.s32.totalorder %s22, 0
    %p250 = por %p248, %p249
    %s251 = ssub.s32 %s23, %s35
    %p252 = scmp.eq.s32.totalorder %s251, 0
    %s254 = sadd.s32 %s253, 1
    %s255 = scalar_select %p252, %s253, %s254
    %p258 = pneg %p252
    %p259 = scmp.eq.s32.totalorder %s16, 1
    %p260 = por %p258, %p259
    %p261 = scmp.ne.s32.totalorder %s253, %s256
    %p262 = scmp.eq.s32.totalorder %s16, 0
    %p263 = por %p261, %p262
    %p264 = scmp.ne.s32.totalorder %s253, %s256
    %p265 = scmp.eq.s32.totalorder %s21, 1
    %p266 = por %p264, %p265
    %p267 = scmp.ne.s32.totalorder %s256, %s257
    %p268 = scmp.eq.s32.totalorder %s21, 0
    %p269 = por %p267, %p268
    %p270 = scmp.ne.s32.totalorder %s256, %s257
    %p271 = scmp.eq.s32.totalorder %s22, 1
    %p272 = por %p270, %p271
    %p274 = scmp.ne.s32.totalorder %s257, %s273
    %p275 = scmp.eq.s32.totalorder %s22, 0
    %p276 = por %p274, %p275
    %p277 = scmp.le.s32.totalorder 1, %s16
    %p278 = scmp.lt.s32.totalorder %s16, 3
    %p279 = pnand %p277, %p278
    %p280 = pneg %p279
    // Predicated region
    $region9: #{conv_block_forward.5} parent=5 // pred_check
      _
    $region10: #{conv_block_forward.5} parent=5 // pred_check_branch
      %282 = sbr.rel (%p279) target = $region12
    $region11: #{conv_block_forward.5} parent=5 // pred_region
      %s283 = ssub.s32 %s16, 1
      // Predicated region
      $region13: #{conv_block_forward.5} parent=11 // pred_check
        %p284 = pneg %p49
      $region14: #{conv_block_forward.5} parent=11 // pred_check_branch
        %286 = sbr.rel (%p284) target = $region16
      $region15: #{conv_block_forward.5} parent=11 // pred_region
        _
      $region16: #{conv_block_forward.5} parent=11 // pred_fallthru
        _
      // Predicated region
      $region17: #{conv_block_forward.5} parent=11 // pred_check
        %p287 = pneg %p70
      $region18: #{conv_block_forward.5} parent=11 // pred_check_branch
        %289 = sbr.rel (%p287) target = $region20
      $region19: #{conv_block_forward.5} parent=11 // pred_region
        _
      $region20: #{conv_block_forward.5} parent=11 // pred_fallthru
        _
      // Predicated region
      $region21: #{conv_block_forward.5} parent=11 // pred_check
        %p290 = pneg %p91
      $region22: #{conv_block_forward.5} parent=11 // pred_check_branch
        %292 = sbr.rel (%p290) target = $region24
      $region23: #{conv_block_forward.5} parent=11 // pred_region
        _
      $region24: #{conv_block_forward.5} parent=11 // pred_fallthru
        _
      // Predicated region
      $region25: #{conv_block_forward.5} parent=11 // pred_check
        %p293 = pneg %p112
      $region26: #{conv_block_forward.5} parent=11 // pred_check_branch
        %295 = sbr.rel (%p293) target = $region28
      $region27: #{conv_block_forward.5} parent=11 // pred_region
        _
      $region28: #{conv_block_forward.5} parent=11 // pred_fallthru
        _
      // Predicated region
      $region29: #{conv_block_forward.5} parent=11 // pred_check
        %p296 = pneg %p133
      $region30: #{conv_block_forward.5} parent=11 // pred_check_branch
        %298 = sbr.rel (%p296) target = $region32
      $region31: #{conv_block_forward.5} parent=11 // pred_region
        _
      $region32: #{conv_block_forward.5} parent=11 // pred_fallthru
        _
    $region12: #{conv_block_forward.5} parent=5 // pred_fallthru
      _
    %p299 = scmp.lt.s32.totalorder %s16, 2
    // Predicated region
    $region33: #{conv_block_forward.5} parent=5 // pred_check
      %p300 = pneg %p299
    $region34: #{conv_block_forward.5} parent=5 // pred_check_branch
      %302 = sbr.rel (%p300) target = $region36
    $region35: #{conv_block_forward.5} parent=5 // pred_region
      // Predicated region
      $region37: #{conv_block_forward.5} parent=35 // pred_check
        %p303 = pneg %p155
      $region38: #{conv_block_forward.5} parent=35 // pred_check_branch
        %305 = sbr.rel (%p303) target = $region40
      $region39: #{conv_block_forward.5} parent=35 // pred_region
        %s306 = sadd.s32 %s23, %s24
        %s307 = smul.u32 8, %s306
        %p308 = scmp.lt.s32.totalorder %s307, 15
        %s309 = scalar_select %p308, %s307, 15
        %s310 = smul.addr %s309, 8
        %s311 = scalar_lea.vmem %s5, %s310
        %s312 = sadd.s32 %s23, %s24
        %s313 = smul.u32 8, %s312
      $region40: #{conv_block_forward.5} parent=35 // pred_fallthru
        _
      // Predicated region
      $region41: #{conv_block_forward.5} parent=35 // pred_check
        %p314 = pneg %p183
      $region42: #{conv_block_forward.5} parent=35 // pred_check_branch
        %316 = sbr.rel (%p314) target = $region44
      $region43: #{conv_block_forward.5} parent=35 // pred_region
        %s317 = sadd.s32 %s23, %s24
        %s318 = smul.u32 8, %s317
        %p319 = scmp.lt.s32.totalorder %s318, 15
        %s320 = scalar_select %p319, %s318, 15
        %s321 = smul.addr %s320, 8
        %s322 = scalar_lea.vmem %s6, %s321
        %s323 = sadd.s32 %s23, %s24
        %s324 = smul.u32 8, %s323
      $region44: #{conv_block_forward.5} parent=35 // pred_fallthru
        _
    $region36: #{conv_block_forward.5} parent=5 // pred_fallthru
      _
    %p325 = scmp.le.s32.totalorder 1, %s16
    %p326 = scmp.lt.s32.totalorder %s16, 3
    %p327 = pnand %p325, %p326
    %p328 = pneg %p327
    // Predicated region
    $region45: #{conv_block_forward.5} parent=5 // pred_check
      _
    $region46: #{conv_block_forward.5} parent=5 // pred_check_branch
      %330 = sbr.rel (%p327) target = $region48
    $region47: #{conv_block_forward.5} parent=5 // pred_region
      %s331 = ssub.s32 %s16, 1
      %p332 = pneg %p49
      %p333 = pneg %p46
      %p334 = pneg %p70
      %p335 = pneg %p67
      %p336 = pneg %p91
      %p337 = pneg %p88
      %p338 = pneg %p112
      %p339 = pneg %p109
      %p340 = pneg %p133
      %p341 = pneg %p130
      %s342 = sadd.s32 %s25, %s26
      %s343 = smul.u32 8, %s342
      %p344 = scmp.lt.s32.totalorder %s343, 15
      %s345 = scalar_select %p344, %s343, 15
      %s346 = smul.addr %s345, 8
      %s347 = scalar_lea.vmem %s5, %s346
      %p348 = pneg %p161
      %p349 = pneg %p158
      %s350 = sadd.s32 %s25, %s26
      %s351 = smul.u32 8, %s350
      %p352 = scmp.lt.s32.totalorder %s351, 15
      %s353 = scalar_select %p352, %s351, 15
      %s354 = smul.addr %s353, 8
      %s355 = scalar_lea.vmem %s6, %s354
      %p356 = pneg %p189
      %p357 = pneg %p186
      %p358 = pneg %p217
      %p359 = pneg %p214
      %s360 = sadd.s32 %s25, %s26
      %s361 = smul.u32 8, %s360
      %p362 = scmp.lt.s32.totalorder %s361, 15
      %s363 = scalar_select %p362, %s361, 15
      %s364 = smul.addr %s363, 8
      %s365 = scalar_lea.vmem %s7, %s364
      %p366 = pneg %p243
      %p367 = pneg %p240
      %p368 = scmp.lt.s32.totalorder %s25, 1
      %s369 = scalar_select %p368, %s25, 1
      %s370 = scalar_lea.vmem %s8, %s369
      %p371 = pneg %p269
      %p372 = pneg %p266
      %p373 = scmp.lt.s32.totalorder %s25, 1
      %s374 = scalar_select %p373, %s25, 1
      %s375 = scalar_lea.vmem %s9, %s374
      %s376 = sadd.s32 %s25, %s26
      %s377 = smul.u32 8, %s376
      %p378 = scmp.lt.s32.totalorder %s377, 15
      %s379 = scalar_select %p378, %s377, 15
      %s380 = smul.addr %s379, 8
      %s381 = scalar_lea.vmem %s5, %s380
      %s382 = sadd.s32 %s25, %s26
      %s383 = smul.u32 8, %s382
      %s384 = sadd.s32 %s25, %s26
      %s385 = smul.u32 8, %s384
      %p386 = scmp.lt.s32.totalorder %s385, 15
      %s387 = scalar_select %p386, %s385, 15
      %s388 = smul.addr %s387, 8
      %s389 = scalar_lea.vmem %s6, %s388
      %s390 = sadd.s32 %s25, %s26
      %s391 = smul.u32 8, %s390
      %s392 = sadd.s32 %s25, %s26
      %s393 = smul.u32 8, %s392
      %p394 = scmp.lt.s32.totalorder %s393, 15
      %s395 = scalar_select %p394, %s393, 15
      %s396 = smul.addr %s395, 8
      %s397 = scalar_lea.vmem %s7, %s396
      %s398 = sadd.s32 %s25, %s26
      %s399 = smul.u32 8, %s398
      %p400 = scmp.lt.s32.totalorder %s25, 1
      %s401 = scalar_select %p400, %s25, 1
      %s402 = scalar_lea.vmem %s8, %s401
      %p403 = scmp.lt.s32.totalorder %s25, 1
      %s404 = scalar_select %p403, %s25, 1
      %s405 = scalar_lea.vmem %s9, %s404
      %p406 = scmp.eq.s32.totalorder %s26, 0
      // Predicated region
      $region49: #{conv_block_forward.5} parent=47 // pred_check
        %p407 = pneg %p406
      $region50: #{conv_block_forward.5} parent=47 // pred_check_branch
        %409 = sbr.rel (%p407) target = $region52
      $region51: #{conv_block_forward.5} parent=47 // pred_region
        %vm410 = vcmask 57344
        %411 = vst.msk [vmem:[%s402] sm:$0x1] %vm410, 0.0
        %412 = vst.msk [vmem:[%s405] sm:$0x1] %vm410, 0.0
      $region52: #{conv_block_forward.5} parent=47 // pred_fallthru
        _
      %s413 = sadd.s32 %s25, %s26
      %s414 = smul.u32 %s413, 64
      %v415 = vld [vmem:[%s3] sm:$0x1]
      %v416 = vld [vmem:[%s4] sm:$0x1]
      %v417 = vld [vmem:[%s381] sm:$0xff]
      %v418 = vld [vmem:[%s381 + $0x8] sm:$0xff]
      %v419 = vld [vmem:[%s381 + $0x10] sm:$0xff]
      %v420 = vld [vmem:[%s381 + $0x18] sm:$0xff]
      %v421 = vld [vmem:[%s381 + $0x20] sm:$0xff]
      %v422 = vld [vmem:[%s381 + $0x28] sm:$0xff]
      %v423 = vld [vmem:[%s381 + $0x30] sm:$0xff]
      %v424 = vld [vmem:[%s381 + $0x38] sm:$0xff]
      %s425 = scalar_lea.vmem %s0, %s414
      %v426 = vld [vmem:[%s425] sm:$0xff]
      %v427 = vld [vmem:[%s425 + $0x8] sm:$0xff]
      %v428 = vld [vmem:[%s425 + $0x10] sm:$0xff]
      %v429 = vld [vmem:[%s425 + $0x18] sm:$0xff]
      %v430 = vld [vmem:[%s425 + $0x20] sm:$0xff]
      %v431 = vld [vmem:[%s425 + $0x28] sm:$0xff]
      %v432 = vld [vmem:[%s425 + $0x30] sm:$0xff]
      %v433 = vld [vmem:[%s425 + $0x38] sm:$0xff]
      %v435 = vlaneseq
      %v436 = vshrl.u32 %v435, 7
      %v437 = vsub.s32 0, %v436
      %v438 = vrot.slane %v415, %v437
      %v440 = vmul.f32 %v426, %v438
      %v441 = vmul.f32 %v427, %v438
      %v442 = vmul.f32 %v428, %v438
      %v443 = vmul.f32 %v429, %v438
      %v444 = vmul.f32 %v430, %v438
      %v445 = vmul.f32 %v431, %v438
      %v446 = vmul.f32 %v432, %v438
      %v447 = vmul.f32 %v433, %v438
      %v449 = vlaneseq
      %v450 = vshrl.u32 %v449, 7
      %v451 = vsub.s32 0, %v450
      %v452 = vrot.slane %v416, %v451
      %v454 = vadd.f32 %v440, %v452
      %v455 = vadd.f32 %v441, %v452
      %v456 = vadd.f32 %v442, %v452
      %v457 = vadd.f32 %v443, %v452
      %v458 = vadd.f32 %v444, %v452
      %v459 = vadd.f32 %v445, %v452
      %v460 = vadd.f32 %v446, %v452
      %v461 = vadd.f32 %v447, %v452
      %v462 = vmax.f32 %v454, 0.0
      %v463 = vmax.f32 %v455, 0.0
      %v464 = vmax.f32 %v456, 0.0
      %v465 = vmax.f32 %v457, 0.0
      %v466 = vmax.f32 %v458, 0.0
      %v467 = vmax.f32 %v459, 0.0
      %v468 = vmax.f32 %v460, 0.0
      %v469 = vmax.f32 %v461, 0.0
      %471 = vset.pattern.permute.xlu0 0
      %472 = vperm.xlu0 %471, %v417
      %v473 = vpop.permute.xlu0 %472
      %476 = vset.pattern.permute.xlu0 0
      %477 = vperm.xlu0 %476, %v418
      %v478 = vpop.permute.xlu0 %477
      %481 = vset.pattern.permute.xlu0 0
      %482 = vperm.xlu0 %481, %v419
      %v483 = vpop.permute.xlu0 %482
      %486 = vset.pattern.permute.xlu0 0
      %487 = vperm.xlu0 %486, %v420
      %v488 = vpop.permute.xlu0 %487
      %491 = vset.pattern.permute.xlu0 0
      %492 = vperm.xlu0 %491, %v421
      %v493 = vpop.permute.xlu0 %492
      %496 = vset.pattern.permute.xlu0 0
      %497 = vperm.xlu0 %496, %v422
      %v498 = vpop.permute.xlu0 %497
      %501 = vset.pattern.permute.xlu0 0
      %502 = vperm.xlu0 %501, %v423
      %v503 = vpop.permute.xlu0 %502
      %506 = vset.pattern.permute.xlu0 0
      %507 = vperm.xlu0 %506, %v424
      %v508 = vpop.permute.xlu0 %507
      %v510 = vmul.f32 %v462, %v473
      %v511 = vmul.f32 %v463, %v478
      %v512 = vmul.f32 %v464, %v483
      %v513 = vmul.f32 %v465, %v488
      %v514 = vmul.f32 %v466, %v493
      %v515 = vmul.f32 %v467, %v498
      %v516 = vmul.f32 %v468, %v503
      %v517 = vmul.f32 %v469, %v508
      %v518 = vld [vmem:[%s1] sm:$0xff]
      %s519 = sadd.s32 %s414, 1
      %s520 = scalar_lea.vmem %s0, %s519
      %v521 = vld [vmem:[%s520] sm:$0xff]
      %v522 = vld [vmem:[%s520 + $0x8] sm:$0xff]
      %v523 = vld [vmem:[%s520 + $0x10] sm:$0xff]
      %v524 = vld [vmem:[%s520 + $0x18] sm:$0xff]
      %v525 = vld [vmem:[%s520 + $0x20] sm:$0xff]
      %v526 = vld [vmem:[%s520 + $0x28] sm:$0xff]
      %v527 = vld [vmem:[%s520 + $0x30] sm:$0xff]
      %v528 = vld [vmem:[%s520 + $0x38] sm:$0xff]
      %v529 = vmul.f32 %v521, %v438
      %v530 = vmul.f32 %v522, %v438
      %v531 = vmul.f32 %v523, %v438
      %v532 = vmul.f32 %v524, %v438
      %v533 = vmul.f32 %v525, %v438
      %v534 = vmul.f32 %v526, %v438
      %v535 = vmul.f32 %v527, %v438
      %v536 = vmul.f32 %v528, %v438
      %v537 = vadd.f32 %v529, %v452
      %v538 = vadd.f32 %v530, %v452
      %v539 = vadd.f32 %v531, %v452
      %v540 = vadd.f32 %v532, %v452
      %v541 = vadd.f32 %v533, %v452
      %v542 = vadd.f32 %v534, %v452
      %v543 = vadd.f32 %v535, %v452
      %v544 = vadd.f32 %v536, %v452
      %v545 = vmax.f32 %v537, 0.0
      %v546 = vmax.f32 %v538, 0.0
      %v547 = vmax.f32 %v539, 0.0
      %v548 = vmax.f32 %v540, 0.0
      %v549 = vmax.f32 %v541, 0.0
      %v550 = vmax.f32 %v542, 0.0
      %v551 = vmax.f32 %v543, 0.0
      %v552 = vmax.f32 %v544, 0.0
      %553 = vset.pattern.permute.xlu0 1
      %554 = vperm.xlu0 %553, %v417
      %v555 = vpop.permute.xlu0 %554
      %557 = vset.pattern.permute.xlu0 1
      %558 = vperm.xlu0 %557, %v418
      %v559 = vpop.permute.xlu0 %558
      %561 = vset.pattern.permute.xlu0 1
      %562 = vperm.xlu0 %561, %v419
      %v563 = vpop.permute.xlu0 %562
      %565 = vset.pattern.permute.xlu0 1
      %566 = vperm.xlu0 %565, %v420
      %v567 = vpop.permute.xlu0 %566
      %569 = vset.pattern.permute.xlu0 1
      %570 = vperm.xlu0 %569, %v421
      %v571 = vpop.permute.xlu0 %570
      %573 = vset.pattern.permute.xlu0 1
      %574 = vperm.xlu0 %573, %v422
      %v575 = vpop.permute.xlu0 %574
      %577 = vset.pattern.permute.xlu0 1
      %578 = vperm.xlu0 %577, %v423
      %v579 = vpop.permute.xlu0 %578
      %581 = vset.pattern.permute.xlu0 1
      %582 = vperm.xlu0 %581, %v424
      %v583 = vpop.permute.xlu0 %582
      %v585 = vmul.f32 %v545, %v555
      %v586 = vmul.f32 %v546, %v559
      %v587 = vmul.f32 %v547, %v563
      %v588 = vmul.f32 %v548, %v567
      %v589 = vmul.f32 %v549, %v571
      %v590 = vmul.f32 %v550, %v575
      %v591 = vmul.f32 %v551, %v579
      %v592 = vmul.f32 %v552, %v583
      %v593 = vld [vmem:[%s1 + $0x8] sm:$0xff]
      %vm594 = vcmask 64512
      %v596 = vsel %vm594, %v585, 0
      %v599 = vsel %vm594, %v586, 0
      %v602 = vsel %vm594, %v587, 0
      %v605 = vsel %vm594, %v588, 0
      %v608 = vsel %vm594, %v589, 0
      %v611 = vsel %vm594, %v590, 0
      %v614 = vsel %vm594, %v591, 0
      %v617 = vsel %vm594, %v592, 0
      %619 = vmatprep.subr.mxu0 0.0
      %620 = vmatpush1.msra.mxu0 %v593
      %621 = vmatprep.subr.mxu0 0.0
      %622 = vmatpush1.msra.mxu0 0.0
      %623 = vmatprep.subr.mxu0 0.0
      %624 = vmatpush1.msra.mxu0 0.0
      %625 = vmatprep.subr.mxu0 0.0
      %626 = vmatpush1.msra.mxu0 0.0
      %627 = vmatprep.subr.mxu0 0.0
      %628 = vmatpush1.msra.mxu0 0.0
      %629 = vmatprep.subr.mxu0 0.0
      %630 = vmatpush1.msra.mxu0 0.0
      %631 = vmatprep.subr.mxu0 0.0
      %632 = vmatpush1.msra.mxu0 0.0
      %633 = vmatprep.subr.mxu0 0.0
      %634 = vmatpush1.msra.mxu0 0.0
      %635 = vmatprep.subr.mxu0 0.0
      %636 = vmatpush1.msra.mxu0 0.0
      %637 = vmatprep.subr.mxu0 0.0
      %638 = vmatpush1.msra.mxu0 0.0
      %639 = vmatprep.subr.mxu0 0.0
      %640 = vmatpush1.msra.mxu0 0.0
      %641 = vmatprep.subr.mxu0 0.0
      %642 = vmatpush1.msra.mxu0 0.0
      %643 = vmatprep.subr.mxu0 0.0
      %644 = vmatpush1.msra.mxu0 0.0
      %645 = vmatprep.subr.mxu0 0.0
      %646 = vmatpush1.msra.mxu0 0.0
      %647 = vmatprep.subr.mxu0 0.0
      %648 = vmatpush1.msra.mxu0 0.0
      %649 = vmatprep.subr.mxu0 0.0
      %650 = vmatpush1.msra.mxu0 0.0
      %651 = vmatprep.subr.mxu0 0.0
      %652 = vmatpush1.msra.mxu0 0.0
      %653 = vmatprep.subr.mxu0 0.0
      %654 = vmatpush1.msra.mxu0 0.0
      %655 = vmatprep.subr.mxu0 0.0
      %656 = vmatpush1.msra.mxu0 0.0
      %657 = vmatprep.subr.mxu0 0.0
      %658 = vmatpush1.msra.mxu0 0.0
      %659 = vmatprep.subr.mxu0 0.0
      %660 = vmatpush1.msra.mxu0 0.0
      %661 = vmatprep.subr.mxu0 0.0
      %662 = vmatpush1.msra.mxu0 0.0
      %663 = vmatprep.subr.mxu0 0.0
      %664 = vmatpush1.msra.mxu0 0.0
      %665 = vmatprep.subr.mxu0 0.0
      %666 = vmatpush1.msra.mxu0 0.0
      %667 = vmatprep.subr.mxu0 0.0
      %668 = vmatpush1.msra.mxu0 0.0
      %669 = vmatprep.subr.mxu0 0.0
      %670 = vmatpush1.msra.mxu0 0.0
      %671 = vmatprep.subr.mxu0 0.0
      %672 = vmatpush1.msra.mxu0 0.0
      %673 = vmatprep.subr.mxu0 0.0
      %674 = vmatpush1.msra.mxu0 0.0
      %675 = vmatprep.subr.mxu0 0.0
      %676 = vmatpush1.msra.mxu0 0.0
      %677 = vmatprep.subr.mxu0 0.0
      %678 = vmatpush1.msra.mxu0 0.0
      %679 = vmatprep.subr.mxu0 0.0
      %680 = vmatpush1.msra.mxu0 0.0
      %681 = vmatprep.subr.mxu0 0.0
      %682 = vmatpush1.msra.mxu0 0.0
      %683 = vmatprep.mubr.f32.mxu0 0.0
      %684 = vmatmul.mubr.f32.gmra.mrb[0].mxu0 %v596
      %v685 = vpop.f32.mrb[0].mxu0
      %v686 = vadd.f32 0.0, %v685
      %v687 = vpop.f32.mrb[0].mxu0
      %688 = vmatprep.mubr.f32.mxu0 0.0
      %689 = vmatmul.mubr.f32.gmra.mrb[0].mxu0 %v599
      %v690 = vpop.f32.mrb[0].mxu0
      %v691 = vadd.f32 0.0, %v690
      %v692 = vpop.f32.mrb[0].mxu0
      %693 = vmatprep.mubr.f32.mxu0 0.0
      %694 = vmatmul.mubr.f32.gmra.mrb[0].mxu0 %v602
      %v695 = vpop.f32.mrb[0].mxu0
      %v696 = vadd.f32 0.0, %v695
      %v697 = vpop.f32.mrb[0].mxu0
      %698 = vmatprep.mubr.f32.mxu0 0.0
      %699 = vmatmul.mubr.f32.gmra.mrb[0].mxu0 %v605
      %v700 = vpop.f32.mrb[0].mxu0
      %v701 = vadd.f32 0.0, %v700
      %v702 = vpop.f32.mrb[0].mxu0
      %703 = vmatprep.mubr.f32.mxu0 0.0
      %704 = vmatmul.mubr.f32.gmra.mrb[0].mxu0 %v608
      %v705 = vpop.f32.mrb[0].mxu0
      %v706 = vadd.f32 0.0, %v705
      %v707 = vpop.f32.mrb[0].mxu0
      %708 = vmatprep.mubr.f32.mxu0 0.0
      %709 = vmatmul.mubr.f32.gmra.mrb[0].mxu0 %v611
      %v710 = vpop.f32.mrb[0].mxu0
      %v711 = vadd.f32 0.0, %v710
      %v712 = vpop.f32.mrb[0].mxu0
      %713 = vmatprep.mubr.f32.mxu0 0.0
      %714 = vmatmul.mubr.f32.gmra.mrb[0].mxu0 %v614
      %v715 = vpop.f32.mrb[0].mxu0
      %v716 = vadd.f32 0.0, %v715
      %v717 = vpop.f32.mrb[0].mxu0
      %718 = vmatprep.mubr.f32.mxu0 0.0
      %719 = vmatmul.mubr.f32.gmra.mrb[0].mxu0 %v617
      %v720 = vpop.f32.mrb[0].mxu0
      %v721 = vadd.f32 0.0, %v720
      %v722 = vpop.f32.mrb[0].mxu0
      %723 = vdwg.mxu0
      %v725 = vsel %vm594, %v510, 0
      %v728 = vsel %vm594, %v511, 0
      %v731 = vsel %vm594, %v512, 0
      %v734 = vsel %vm594, %v513, 0
      %v737 = vsel %vm594, %v514, 0
      %v740 = vsel %vm594, %v515, 0
      %v743 = vsel %vm594, %v516, 0
      %v746 = vsel %vm594, %v517, 0
      %748 = vmatprep.subr.mxu0 0.0
      %749 = vmatpush1.msra.mxu0 %v518
      %750 = vmatprep.subr.mxu0 0.0
      %751 = vmatpush1.msra.mxu0 0.0
      %752 = vmatprep.subr.mxu0 0.0
      %753 = vmatpush1.msra.mxu0 0.0
      %754 = vmatprep.subr.mxu0 0.0
      %755 = vmatpush1.msra.mxu0 0.0
      %756 = vmatprep.subr.mxu0 0.0
      %757 = vmatpush1.msra.mxu0 0.0
      %758 = vmatprep.subr.mxu0 0.0
      %759 = vmatpush1.msra.mxu0 0.0
      %760 = vmatprep.subr.mxu0 0.0
      %761 = vmatpush1.msra.mxu0 0.0
      %762 = vmatprep.subr.mxu0 0.0
      %763 = vmatpush1.msra.mxu0 0.0
      %764 = vmatprep.subr.mxu0 0.0
      %765 = vmatpush1.msra.mxu0 0.0
      %766 = vmatprep.subr.mxu0 0.0
      %767 = vmatpush1.msra.mxu0 0.0
      %768 = vmatprep.subr.mxu0 0.0
      %769 = vmatpush1.msra.mxu0 0.0
      %770 = vmatprep.subr.mxu0 0.0
      %771 = vmatpush1.msra.mxu0 0.0
      %772 = vmatprep.subr.mxu0 0.0
      %773 = vmatpush1.msra.mxu0 0.0
      %774 = vmatprep.subr.mxu0 0.0
      %775 = vmatpush1.msra.mxu0 0.0
      %776 = vmatprep.subr.mxu0 0.0
      %777 = vmatpush1.msra.mxu0 0.0
      %778 = vmatprep.subr.mxu0 0.0
      %779 = vmatpush1.msra.mxu0 0.0
      %780 = vmatprep.subr.mxu0 0.0
      %781 = vmatpush1.msra.mxu0 0.0
      %782 = vmatprep.subr.mxu0 0.0
      %783 = vmatpush1.msra.mxu0 0.0
      %784 = vmatprep.subr.mxu0 0.0
      %785 = vmatpush1.msra.mxu0 0.0
      %786 = vmatprep.subr.mxu0 0.0
      %787 = vmatpush1.msra.mxu0 0.0
      %788 = vmatprep.subr.mxu0 0.0
      %789 = vmatpush1.msra.mxu0 0.0
      %790 = vmatprep.subr.mxu0 0.0
      %791 = vmatpush1.msra.mxu0 0.0
      %792 = vmatprep.subr.mxu0 0.0
      %793 = vmatpush1.msra.mxu0 0.0
      %794 = vmatprep.subr.mxu0 0.0
      %795 = vmatpush1.msra.mxu0 0.0
      %796 = vmatprep.subr.mxu0 0.0
      %797 = vmatpush1.msra.mxu0 0.0
      %798 = vmatprep.subr.mxu0 0.0
      %799 = vmatpush1.msra.mxu0 0.0
      %800 = vmatprep.subr.mxu0 0.0
      %801 = vmatpush1.msra.mxu0 0.0
      %802 = vmatprep.subr.mxu0 0.0
      %803 = vmatpush1.msra.mxu0 0.0
      %804 = vmatprep.subr.mxu0 0.0
      %805 = vmatpush1.msra.mxu0 0.0
      %806 = vmatprep.subr.mxu0 0.0
      %807 = vmatpush1.msra.mxu0 0.0
      %808 = vmatprep.subr.mxu0 0.0
      %809 = vmatpush1.msra.mxu0 0.0
      %810 = vmatprep.subr.mxu0 0.0
      %811 = vmatpush1.msra.mxu0 0.0
      %812 = vmatprep.mubr.f32.mxu0 0.0
      %813 = vmatmul.mubr.f32.gmra.mrb[0].mxu0 %v725
      %v814 = vpop.f32.mrb[0].mxu0
      %v815 = vadd.f32 %v686, %v814
      %v816 = vpop.f32.mrb[0].mxu0
      %817 = vmatprep.mubr.f32.mxu0 0.0
      %818 = vmatmul.mubr.f32.gmra.mrb[0].mxu0 %v728
      %v819 = vpop.f32.mrb[0].mxu0
      %v820 = vadd.f32 %v691, %v819
      %v821 = vpop.f32.mrb[0].mxu0
      %822 = vmatprep.mubr.f32.mxu0 0.0
      %823 = vmatmul.mubr.f32.gmra.mrb[0].mxu0 %v731
      %v824 = vpop.f32.mrb[0].mxu0
      %v825 = vadd.f32 %v696, %v824
      %v826 = vpop.f32.mrb[0].mxu0
      %827 = vmatprep.mubr.f32.mxu0 0.0
      %828 = vmatmul.mubr.f32.gmra.mrb[0].mxu0 %v734
      %v829 = vpop.f32.mrb[0].mxu0
      %v830 = vadd.f32 %v701, %v829
      %v831 = vpop.f32.mrb[0].mxu0
      %832 = vmatprep.mubr.f32.mxu0 0.0
      %833 = vmatmul.mubr.f32.gmra.mrb[0].mxu0 %v737
      %v834 = vpop.f32.mrb[0].mxu0
      %v835 = vadd.f32 %v706, %v834
      %v836 = vpop.f32.mrb[0].mxu0
      %837 = vmatprep.mubr.f32.mxu0 0.0
      %838 = vmatmul.mubr.f32.gmra.mrb[0].mxu0 %v740
      %v839 = vpop.f32.mrb[0].mxu0
      %v840 = vadd.f32 %v711, %v839
      %v841 = vpop.f32.mrb[0].mxu0
      %842 = vmatprep.mubr.f32.mxu0 0.0
      %843 = vmatmul.mubr.f32.gmra.mrb[0].mxu0 %v743
      %v844 = vpop.f32.mrb[0].mxu0
      %v845 = vadd.f32 %v716, %v844
      %v846 = vpop.f32.mrb[0].mxu0
      %847 = vmatprep.mubr.f32.mxu0 0.0
      %848 = vmatmul.mubr.f32.gmra.mrb[0].mxu0 %v746
      %v849 = vpop.f32.mrb[0].mxu0
      %v850 = vadd.f32 %v721, %v849
      %v851 = vpop.f32.mrb[0].mxu0
      %852 = vdwg.mxu0
      %s853 = sadd.s32 %s414, 2
      %s854 = scalar_lea.vmem %s0, %s853
      %v855 = vld [vmem:[%s854] sm:$0xff]
      %v856 = vld [vmem:[%s854 + $0x8] sm:$0xff]
      %v857 = vld [vmem:[%s854 + $0x10] sm:$0xff]
      %v858 = vld [vmem:[%s854 + $0x18] sm:$0xff]
      %v859 = vld [vmem:[%s854 + $0x20] sm:$0xff]
      %v860 = vld [vmem:[%s854 + $0x28] sm:$0xff]
      %v861 = vld [vmem:[%s854 + $0x30] sm:$0xff]
      %v862 = vld [vmem:[%s854 + $0x38] sm:$0xff]
      %v863 = vmul.f32 %v855, %v438
      %v864 = vmul.f32 %v856, %v438
      %v865 = vmul.f32 %v857, %v438
      %v866 = vmul.f32 %v858, %v438
      %v867 = vmul.f32 %v859, %v438
      %v868 = vmul.f32 %v860, %v438
      %v869 = vmul.f32 %v861, %v438
      %v870 = vmul.f32 %v862, %v438
      %v871 = vadd.f32 %v863, %v452
      %v872 = vadd.f32 %v864, %v452
      %v873 = vadd.f32 %v865, %v452
      %v874 = vadd.f32 %v866, %v452
      %v875 = vadd.f32 %v867, %v452
      %v876 = vadd.f32 %v868, %v452
      %v877 = vadd.f32 %v869, %v452
      %v878 = vadd.f32 %v870, %v452
      %v879 = vmax.f32 %v871, 0.0
      %v880 = vmax.f32 %v872, 0.0
      %v881 = vmax.f32 %v873, 0.0
      %v882 = vmax.f32 %v874, 0.0
      %v883 = vmax.f32 %v875, 0.0
      %v884 = vmax.f32 %v876, 0.0
      %v885 = vmax.f32 %v877, 0.0
      %v886 = vmax.f32 %v878, 0.0
      %887 = vset.pattern.permute.xlu0 2
      %888 = vperm.xlu0 %887, %v417
      %v889 = vpop.permute.xlu0 %888
      %891 = vset.pattern.permute.xlu0 2
      %892 = vperm.xlu0 %891, %v418
      %v893 = vpop.permute.xlu0 %892
      %895 = vset.pattern.permute.xlu0 2
      %896 = vperm.xlu0 %895, %v419
      %v897 = vpop.permute.xlu0 %896
      %899 = vset.pattern.permute.xlu0 2
      %900 = vperm.xlu0 %899, %v420
      %v901 = vpop.permute.xlu0 %900
      %903 = vset.pattern.permute.xlu0 2
      %904 = vperm.xlu0 %903, %v421
      %v905 = vpop.permute.xlu0 %904
      %907 = vset.pattern.permute.xlu0 2
      %908 = vperm.xlu0 %907, %v422
      %v909 = vpop.permute.xlu0 %908
      %911 = vset.pattern.permute.xlu0 2
      %912 = vperm.xlu0 %911, %v423
      %v913 = vpop.permute.xlu0 %912
      %915 = vset.pattern.permute.xlu0 2
      %916 = vperm.xlu0 %915, %v424
      %v917 = vpop.permute.xlu0 %916
      %v919 = vmul.f32 %v879, %v889
      %v920 = vmul.f32 %v880, %v893
      %v921 = vmul.f32 %v881, %v897
      %v922 = vmul.f32 %v882, %v901
      %v923 = vmul.f32 %v883, %v905
      %v924 = vmul.f32 %v884, %v909
      %v925 = vmul.f32 %v885, %v913
      %v926 = vmul.f32 %v886, %v917
      %v927 = vld [vmem:[%s1 + $0x10] sm:$0xff]
      %v929 = vsel %vm594, %v919, 0
      %v932 = vsel %vm594, %v920, 0
      %v935 = vsel %vm594, %v921, 0
      %v938 = vsel %vm594, %v922, 0
      %v941 = vsel %vm594, %v923, 0
      %v944 = vsel %vm594, %v924, 0
      %v947 = vsel %vm594, %v925, 0
      %v950 = vsel %vm594, %v926, 0
      %952 = vmatprep.subr.mxu0 0.0
      %953 = vmatpush1.msra.mxu0 %v927
      %954 = vmatprep.subr.mxu0 0.0
      %955 = vmatpush1.msra.mxu0 0.0
      %956 = vmatprep.subr.mxu0 0.0
      %957 = vmatpush1.msra.mxu0 0.0
      %958 = vmatprep.subr.mxu0 0.0
      %959 = vmatpush1.msra.mxu0 0.0
      %960 = vmatprep.subr.mxu0 0.0
      %961 = vmatpush1.msra.mxu0 0.0
      %962 = vmatprep.subr.mxu0 0.0
      %963 = vmatpush1.msra.mxu0 0.0
      %964 = vmatprep.subr.mxu0 0.0
      %965 = vmatpush1.msra.mxu0 0.0
      %966 = vmatprep.subr.mxu0 0.0
      %967 = vmatpush1.msra.mxu0 0.0
      %968 = vmatprep.subr.mxu0 0.0
      %969 = vmatpush1.msra.mxu0 0.0
      %970 = vmatprep.subr.mxu0 0.0
      %971 = vmatpush1.msra.mxu0 0.0
      %972 = vmatprep.subr.mxu0 0.0
      %973 = vmatpush1.msra.mxu0 0.0
      %974 = vmatprep.subr.mxu0 0.0
      %975 = vmatpush1.msra.mxu0 0.0
      %976 = vmatprep.subr.mxu0 0.0
      %977 = vmatpush1.msra.mxu0 0.0
      %978 = vmatprep.subr.mxu0 0.0
      %979 = vmatpush1.msra.mxu0 0.0
      %980 = vmatprep.subr.mxu0 0.0
      %981 = vmatpush1.msra.mxu0 0.0
      %982 = vmatprep.subr.mxu0 0.0
      %983 = vmatpush1.msra.mxu0 0.0
      %984 = vmatprep.subr.mxu0 0.0
      %985 = vmatpush1.msra.mxu0 0.0
      %986 = vmatprep.subr.mxu0 0.0
      %987 = vmatpush1.msra.mxu0 0.0
      %988 = vmatprep.subr.mxu0 0.0
      %989 = vmatpush1.msra.mxu0 0.0
      %990 = vmatprep.subr.mxu0 0.0
      %991 = vmatpush1.msra.mxu0 0.0
      %992 = vmatprep.subr.mxu0 0.0
      %993 = vmatpush1.msra.mxu0 0.0
      %994 = vmatprep.subr.mxu0 0.0
      %995 = vmatpush1.msra.mxu0 0.0
      %996 = vmatprep.subr.mxu0 0.0
      %997 = vmatpush1.msra.mxu0 0.0
      %998 = vmatprep.subr.mxu0 0.0
      %999 = vmatpush1.msra.mxu0 0.0
      %1000 = vmatprep.subr.mxu0 0.0
      %1001 = vmatpush1.msra.mxu0 0.0
      %1002 = vmatprep.subr.mxu0 0.0
      %1003 = vmatpush1.msra.mxu0 0.0
      %1004 = vmatprep.subr.mxu0 0.0
      %1005 = vmatpush1.msra.mxu0 0.0
      %1006 = vmatprep.subr.mxu0 0.0
      %1007 = vmatpush1.msra.mxu0 0.0
      %1008 = vmatprep.subr.mxu0 0.0
      %1009 = vmatpush1.msra.mxu0 0.0
      %1010 = vmatprep.subr.mxu0 0.0
      %1011 = vmatpush1.msra.mxu0 0.0
      %1012 = vmatprep.subr.mxu0 0.0
      %1013 = vmatpush1.msra.mxu0 0.0
      %1014 = vmatprep.subr.mxu0 0.0
      %1015 = vmatpush1.msra.mxu0 0.0
      %1016 = vmatprep.mubr.f32.mxu0 0.0
      %1017 = vmatmul.mubr.f32.gmra.mrb[0].mxu0 %v929
      %v1018 = vpop.f32.mrb[0].mxu0
      %v1019 = vadd.f32 0.0, %v1018
      %v1020 = vpop.f32.mrb[0].mxu0
      %1021 = vmatprep.mubr.f32.mxu0 0.0
      %1022 = vmatmul.mubr.f32.gmra.mrb[0].mxu0 %v932
      %v1023 = vpop.f32.mrb[0].mxu0
      %v1024 = vadd.f32 0.0, %v1023
      %v1025 = vpop.f32.mrb[0].mxu0
      %1026 = vmatprep.mubr.f32.mxu0 0.0
      %1027 = vmatmul.mubr.f32.gmra.mrb[0].mxu0 %v935
      %v1028 = vpop.f32.mrb[0].mxu0
      %v1029 = vadd.f32 0.0, %v1028
      %v1030 = vpop.f32.mrb[0].mxu0
      %1031 = vmatprep.mubr.f32.mxu0 0.0
      %1032 = vmatmul.mubr.f32.gmra.mrb[0].mxu0 %v938
      %v1033 = vpop.f32.mrb[0].mxu0
      %v1034 = vadd.f32 0.0, %v1033
      %v1035 = vpop.f32.mrb[0].mxu0
      %1036 = vmatprep.mubr.f32.mxu0 0.0
      %1037 = vmatmul.mubr.f32.gmra.mrb[0].mxu0 %v941
      %v1038 = vpop.f32.mrb[0].mxu0
      %v1039 = vadd.f32 0.0, %v1038
      %v1040 = vpop.f32.mrb[0].mxu0
      %1041 = vmatprep.mubr.f32.mxu0 0.0
      %1042 = vmatmul.mubr.f32.gmra.mrb[0].mxu0 %v944
      %v1043 = vpop.f32.mrb[0].mxu0
      %v1044 = vadd.f32 0.0, %v1043
      %v1045 = vpop.f32.mrb[0].mxu0
      %1046 = vmatprep.mubr.f32.mxu0 0.0
      %1047 = vmatmul.mubr.f32.gmra.mrb[0].mxu0 %v947
      %v1048 = vpop.f32.mrb[0].mxu0
      %v1049 = vadd.f32 0.0, %v1048
      %v1050 = vpop.f32.mrb[0].mxu0
      %1051 = vmatprep.mubr.f32.mxu0 0.0
      %1052 = vmatmul.mubr.f32.gmra.mrb[0].mxu0 %v950
      %v1053 = vpop.f32.mrb[0].mxu0
      %v1054 = vadd.f32 0.0, %v1053
      %v1055 = vpop.f32.mrb[0].mxu0
      %1056 = vdwg.mxu0
      %v1057 = vadd.f32 %v815, %v1019
      %v1058 = vadd.f32 %v820, %v1024
      %v1059 = vadd.f32 %v825, %v1029
      %v1060 = vadd.f32 %v830, %v1034
      %v1061 = vadd.f32 %v835, %v1039
      %v1062 = vadd.f32 %v840, %v1044
      %v1063 = vadd.f32 %v845, %v1049
      %v1064 = vadd.f32 %v850, %v1054
      %s1065 = sadd.s32 %s414, 4
      %s1066 = scalar_lea.vmem %s0, %s1065
      %v1067 = vld [vmem:[%s1066] sm:$0xff]
      %v1068 = vld [vmem:[%s1066 + $0x8] sm:$0xff]
      %v1069 = vld [vmem:[%s1066 + $0x10] sm:$0xff]
      %v1070 = vld [vmem:[%s1066 + $0x18] sm:$0xff]
      %v1071 = vld [vmem:[%s1066 + $0x20] sm:$0xff]
      %v1072 = vld [vmem:[%s1066 + $0x28] sm:$0xff]
      %v1073 = vld [vmem:[%s1066 + $0x30] sm:$0xff]
      %v1074 = vld [vmem:[%s1066 + $0x38] sm:$0xff]
      %v1075 = vmul.f32 %v1067, %v438
      %v1076 = vmul.f32 %v1068, %v438
      %v1077 = vmul.f32 %v1069, %v438
      %v1078 = vmul.f32 %v1070, %v438
      %v1079 = vmul.f32 %v1071, %v438
      %v1080 = vmul.f32 %v1072, %v438
      %v1081 = vmul.f32 %v1073, %v438
      %v1082 = vmul.f32 %v1074, %v438
      %v1083 = vadd.f32 %v1075, %v452
      %v1084 = vadd.f32 %v1076, %v452
      %v1085 = vadd.f32 %v1077, %v452
      %v1086 = vadd.f32 %v1078, %v452
      %v1087 = vadd.f32 %v1079, %v452
      %v1088 = vadd.f32 %v1080, %v452
      %v1089 = vadd.f32 %v1081, %v452
      %v1090 = vadd.f32 %v1082, %v452
      %v1091 = vmax.f32 %v1083, 0.0
      %v1092 = vmax.f32 %v1084, 0.0
      %v1093 = vmax.f32 %v1085, 0.0
      %v1094 = vmax.f32 %v1086, 0.0
      %v1095 = vmax.f32 %v1087, 0.0
      %v1096 = vmax.f32 %v1088, 0.0
      %v1097 = vmax.f32 %v1089, 0.0
      %v1098 = vmax.f32 %v1090, 0.0
      %1099 = vset.pattern.permute.xlu0 3
      %1100 = vperm.xlu0 %1099, %v417
      %v1101 = vpop.permute.xlu0 %1100
      %1103 = vset.pattern.permute.xlu0 3
      %1104 = vperm.xlu0 %1103, %v418
      %v1105 = vpop.permute.xlu0 %1104
      %1107 = vset.pattern.permute.xlu0 3
      %1108 = vperm.xlu0 %1107, %v419
      %v1109 = vpop.permute.xlu0 %1108
      %1111 = vset.pattern.permute.xlu0 3
      %1112 = vperm.xlu0 %1111, %v420
      %v1113 = vpop.permute.xlu0 %1112
      %1115 = vset.pattern.permute.xlu0 3
      %1116 = vperm.xlu0 %1115, %v421
      %v1117 = vpop.permute.xlu0 %1116
      %1119 = vset.pattern.permute.xlu0 3
      %1120 = vperm.xlu0 %1119, %v422
      %v1121 = vpop.permute.xlu0 %1120
      %1123 = vset.pattern.permute.xlu0 3
      %1124 = vperm.xlu0 %1123, %v423
      %v1125 = vpop.permute.xlu0 %1124
      %1127 = vset.pattern.permute.xlu0 3
      %1128 = vperm.xlu0 %1127, %v424
      %v1129 = vpop.permute.xlu0 %1128
      %v1131 = vmul.f32 %v1091, %v1101
      %v1132 = vmul.f32 %v1092, %v1105
      %v1133 = vmul.f32 %v1093, %v1109
      %v1134 = vmul.f32 %v1094, %v1113
      %v1135 = vmul.f32 %v1095, %v1117
      %v1136 = vmul.f32 %v1096, %v1121
      %v1137 = vmul.f32 %v1097, %v1125
      %v1138 = vmul.f32 %v1098, %v1129
      %v1139 = vld [vmem:[%s1 + $0x18] sm:$0xff]
      %v1141 = vsel %vm594, %v1131, 0
      %v1144 = vsel %vm594, %v1132, 0
      %v1147 = vsel %vm594, %v1133, 0
      %v1150 = vsel %vm594, %v1134, 0
      %v1153 = vsel %vm594, %v1135, 0
      %v1156 = vsel %vm594, %v1136, 0
      %v1159 = vsel %vm594, %v1137, 0
      %v1162 = vsel %vm594, %v1138, 0
      %1164 = vmatprep.subr.mxu0 0.0
      %1165 = vmatpush1.msra.mxu0 %v1139
      %1166 = vmatprep.subr.mxu0 0.0
      %1167 = vmatpush1.msra.mxu0 0.0
      %1168 = vmatprep.subr.mxu0 0.0
      %1169 = vmatpush1.msra.mxu0 0.0
      %1170 = vmatprep.subr.mxu0 0.0
      %1171 = vmatpush1.msra.mxu0 0.0
      %1172 = vmatprep.subr.mxu0 0.0
      %1173 = vmatpush1.msra.mxu0 0.0
      %1174 = vmatprep.subr.mxu0 0.0
      %1175 = vmatpush1.msra.mxu0 0.0
      %1176 = vmatprep.subr.mxu0 0.0
      %1177 = vmatpush1.msra.mxu0 0.0
      %1178 = vmatprep.subr.mxu0 0.0
      %1179 = vmatpush1.msra.mxu0 0.0
      %1180 = vmatprep.subr.mxu0 0.0
      %1181 = vmatpush1.msra.mxu0 0.0
      %1182 = vmatprep.subr.mxu0 0.0
      %1183 = vmatpush1.msra.mxu0 0.0
      %1184 = vmatprep.subr.mxu0 0.0
      %1185 = vmatpush1.msra.mxu0 0.0
      %1186 = vmatprep.subr.mxu0 0.0
      %1187 = vmatpush1.msra.mxu0 0.0
      %1188 = vmatprep.subr.mxu0 0.0
      %1189 = vmatpush1.msra.mxu0 0.0
      %1190 = vmatprep.subr.mxu0 0.0
      %1191 = vmatpush1.msra.mxu0 0.0
      %1192 = vmatprep.subr.mxu0 0.0
      %1193 = vmatpush1.msra.mxu0 0.0
      %1194 = vmatprep.subr.mxu0 0.0
      %1195 = vmatpush1.msra.mxu0 0.0
      %1196 = vmatprep.subr.mxu0 0.0
      %1197 = vmatpush1.msra.mxu0 0.0
      %1198 = vmatprep.subr.mxu0 0.0
      %1199 = vmatpush1.msra.mxu0 0.0
      %1200 = vmatprep.subr.mxu0 0.0
      %1201 = vmatpush1.msra.mxu0 0.0
      %1202 = vmatprep.subr.mxu0 0.0
      %1203 = vmatpush1.msra.mxu0 0.0
      %1204 = vmatprep.subr.mxu0 0.0
      %1205 = vmatpush1.msra.mxu0 0.0
      %1206 = vmatprep.subr.mxu0 0.0
      %1207 = vmatpush1.msra.mxu0 0.0
      %1208 = vmatprep.subr.mxu0 0.0
      %1209 = vmatpush1.msra.mxu0 0.0
      %1210 = vmatprep.subr.mxu0 0.0
      %1211 = vmatpush1.msra.mxu0 0.0
      %1212 = vmatprep.subr.mxu0 0.0
      %1213 = vmatpush1.msra.mxu0 0.0
      %1214 = vmatprep.subr.mxu0 0.0
      %1215 = vmatpush1.msra.mxu0 0.0
      %1216 = vmatprep.subr.mxu0 0.0
      %1217 = vmatpush1.msra.mxu0 0.0
      %1218 = vmatprep.subr.mxu0 0.0
      %1219 = vmatpush1.msra.mxu0 0.0
      %1220 = vmatprep.subr.mxu0 0.0
      %1221 = vmatpush1.msra.mxu0 0.0
      %1222 = vmatprep.subr.mxu0 0.0
      %1223 = vmatpush1.msra.mxu0 0.0
      %1224 = vmatprep.subr.mxu0 0.0
      %1225 = vmatpush1.msra.mxu0 0.0
      %1226 = vmatprep.subr.mxu0 0.0
      %1227 = vmatpush1.msra.mxu0 0.0
      %1228 = vmatprep.mubr.f32.mxu0 0.0
      %1229 = vmatmul.mubr.f32.gmra.mrb[0].mxu0 %v1141
      %v1230 = vpop.f32.mrb[0].mxu0
      %v1231 = vadd.f32 0.0, %v1230
      %v1232 = vpop.f32.mrb[0].mxu0
      %1233 = vmatprep.mubr.f32.mxu0 0.0
      %1234 = vmatmul.mubr.f32.gmra.mrb[0].mxu0 %v1144
      %v1235 = vpop.f32.mrb[0].mxu0
      %v1236 = vadd.f32 0.0, %v1235
      %v1237 = vpop.f32.mrb[0].mxu0
      %1238 = vmatprep.mubr.f32.mxu0 0.0
      %1239 = vmatmul.mubr.f32.gmra.mrb[0].mxu0 %v1147
      %v1240 = vpop.f32.mrb[0].mxu0
      %v1241 = vadd.f32 0.0, %v1240
      %v1242 = vpop.f32.mrb[0].mxu0
      %1243 = vmatprep.mubr.f32.mxu0 0.0
      %1244 = vmatmul.mubr.f32.gmra.mrb[0].mxu0 %v1150
      %v1245 = vpop.f32.mrb[0].mxu0
      %v1246 = vadd.f32 0.0, %v1245
      %v1247 = vpop.f32.mrb[0].mxu0
      %1248 = vmatprep.mubr.f32.mxu0 0.0
      %1249 = vmatmul.mubr.f32.gmra.mrb[0].mxu0 %v1153
      %v1250 = vpop.f32.mrb[0].mxu0
      %v1251 = vadd.f32 0.0, %v1250
      %v1252 = vpop.f32.mrb[0].mxu0
      %1253 = vmatprep.mubr.f32.mxu0 0.0
      %1254 = vmatmul.mubr.f32.gmra.mrb[0].mxu0 %v1156
      %v1255 = vpop.f32.mrb[0].mxu0
      %v1256 = vadd.f32 0.0, %v1255
      %v1257 = vpop.f32.mrb[0].mxu0
      %1258 = vmatprep.mubr.f32.mxu0 0.0
      %1259 = vmatmul.mubr.f32.gmra.mrb[0].mxu0 %v1159
      %v1260 = vpop.f32.mrb[0].mxu0
      %v1261 = vadd.f32 0.0, %v1260
      %v1262 = vpop.f32.mrb[0].mxu0
      %1263 = vmatprep.mubr.f32.mxu0 0.0
      %1264 = vmatmul.mubr.f32.gmra.mrb[0].mxu0 %v1162
      %v1265 = vpop.f32.mrb[0].mxu0
      %v1266 = vadd.f32 0.0, %v1265
      %v1267 = vpop.f32.mrb[0].mxu0
      %1268 = vdwg.mxu0
      %v1269 = vadd.f32 %v1057, %v1231
      %v1270 = vadd.f32 %v1058, %v1236
      %v1271 = vadd.f32 %v1059, %v1241
      %v1272 = vadd.f32 %v1060, %v1246
      %v1273 = vadd.f32 %v1061, %v1251
      %v1274 = vadd.f32 %v1062, %v1256
      %v1275 = vadd.f32 %v1063, %v1261
      %v1276 = vadd.f32 %v1064, %v1266
      %s1277 = sadd.s32 %s414, 5
      %s1278 = scalar_lea.vmem %s0, %s1277
      %v1279 = vld [vmem:[%s1278] sm:$0xff]
      %v1280 = vld [vmem:[%s1278 + $0x8] sm:$0xff]
      %v1281 = vld [vmem:[%s1278 + $0x10] sm:$0xff]
      %v1282 = vld [vmem:[%s1278 + $0x18] sm:$0xff]
      %v1283 = vld [vmem:[%s1278 + $0x20] sm:$0xff]
      %v1284 = vld [vmem:[%s1278 + $0x28] sm:$0xff]
      %v1285 = vld [vmem:[%s1278 + $0x30] sm:$0xff]
      %v1286 = vld [vmem:[%s1278 + $0x38] sm:$0xff]
      %v1287 = vmul.f32 %v1279, %v438
      %v1288 = vmul.f32 %v1280, %v438
      %v1289 = vmul.f32 %v1281, %v438
      %v1290 = vmul.f32 %v1282, %v438
      %v1291 = vmul.f32 %v1283, %v438
      %v1292 = vmul.f32 %v1284, %v438
      %v1293 = vmul.f32 %v1285, %v438
      %v1294 = vmul.f32 %v1286, %v438
      %v1295 = vadd.f32 %v1287, %v452
      %v1296 = vadd.f32 %v1288, %v452
      %v1297 = vadd.f32 %v1289, %v452
      %v1298 = vadd.f32 %v1290, %v452
      %v1299 = vadd.f32 %v1291, %v452
      %v1300 = vadd.f32 %v1292, %v452
      %v1301 = vadd.f32 %v1293, %v452
      %v1302 = vadd.f32 %v1294, %v452
      %v1303 = vmax.f32 %v1295, 0.0
      %v1304 = vmax.f32 %v1296, 0.0
      %v1305 = vmax.f32 %v1297, 0.0
      %v1306 = vmax.f32 %v1298, 0.0
      %v1307 = vmax.f32 %v1299, 0.0
      %v1308 = vmax.f32 %v1300, 0.0
      %v1309 = vmax.f32 %v1301, 0.0
      %v1310 = vmax.f32 %v1302, 0.0
      %1311 = vset.pattern.permute.xlu0 4
      %1312 = vperm.xlu0 %1311, %v417
      %v1313 = vpop.permute.xlu0 %1312
      %1315 = vset.pattern.permute.xlu0 4
      %1316 = vperm.xlu0 %1315, %v418
      %v1317 = vpop.permute.xlu0 %1316
      %1319 = vset.pattern.permute.xlu0 4
      %1320 = vperm.xlu0 %1319, %v419
      %v1321 = vpop.permute.xlu0 %1320
      %1323 = vset.pattern.permute.xlu0 4
      %1324 = vperm.xlu0 %1323, %v420
      %v1325 = vpop.permute.xlu0 %1324
      %1327 = vset.pattern.permute.xlu0 4
      %1328 = vperm.xlu0 %1327, %v421
      %v1329 = vpop.permute.xlu0 %1328
      %1331 = vset.pattern.permute.xlu0 4
      %1332 = vperm.xlu0 %1331, %v422
      %v1333 = vpop.permute.xlu0 %1332
      %1335 = vset.pattern.permute.xlu0 4
      %1336 = vperm.xlu0 %1335, %v423
      %v1337 = vpop.permute.xlu0 %1336
      %1339 = vset.pattern.permute.xlu0 4
      %1340 = vperm.xlu0 %1339, %v424
      %v1341 = vpop.permute.xlu0 %1340
      %v1343 = vmul.f32 %v1303, %v1313
      %v1344 = vmul.f32 %v1304, %v1317
      %v1345 = vmul.f32 %v1305, %v1321
      %v1346 = vmul.f32 %v1306, %v1325
      %v1347 = vmul.f32 %v1307, %v1329
      %v1348 = vmul.f32 %v1308, %v1333
      %v1349 = vmul.f32 %v1309, %v1337
      %v1350 = vmul.f32 %v1310, %v1341
      %v1351 = vld [vmem:[%s1 + $0x20] sm:$0xff]
      %v1353 = vsel %vm594, %v1343, 0
      %v1356 = vsel %vm594, %v1344, 0
      %v1359 = vsel %vm594, %v1345, 0
      %v1362 = vsel %vm594, %v1346, 0
      %v1365 = vsel %vm594, %v1347, 0
      %v1368 = vsel %vm594, %v1348, 0
      %v1371 = vsel %vm594, %v1349, 0
      %v1374 = vsel %vm594, %v1350, 0
      %1376 = vmatprep.subr.mxu0 0.0
      %1377 = vmatpush1.msra.mxu0 %v1351
      %1378 = vmatprep.subr.mxu0 0.0
      %1379 = vmatpush1.msra.mxu0 0.0
      %1380 = vmatprep.subr.mxu0 0.0
      %1381 = vmatpush1.msra.mxu0 0.0
      %1382 = vmatprep.subr.mxu0 0.0
      %1383 = vmatpush1.msra.mxu0 0.0
      %1384 = vmatprep.subr.mxu0 0.0
      %1385 = vmatpush1.msra.mxu0 0.0
      %1386 = vmatprep.subr.mxu0 0.0
      %1387 = vmatpush1.msra.mxu0 0.0
      %1388 = vmatprep.subr.mxu0 0.0
      %1389 = vmatpush1.msra.mxu0 0.0
      %1390 = vmatprep.subr.mxu0 0.0
      %1391 = vmatpush1.msra.mxu0 0.0
      %1392 = vmatprep.subr.mxu0 0.0
      %1393 = vmatpush1.msra.mxu0 0.0
      %1394 = vmatprep.subr.mxu0 0.0
      %1395 = vmatpush1.msra.mxu0 0.0
      %1396 = vmatprep.subr.mxu0 0.0
      %1397 = vmatpush1.msra.mxu0 0.0
      %1398 = vmatprep.subr.mxu0 0.0
      %1399 = vmatpush1.msra.mxu0 0.0
      %1400 = vmatprep.subr.mxu0 0.0
      %1401 = vmatpush1.msra.mxu0 0.0
      %1402 = vmatprep.subr.mxu0 0.0
      %1403 = vmatpush1.msra.mxu0 0.0
      %1404 = vmatprep.subr.mxu0 0.0
      %1405 = vmatpush1.msra.mxu0 0.0
      %1406 = vmatprep.subr.mxu0 0.0
      %1407 = vmatpush1.msra.mxu0 0.0
      %1408 = vmatprep.subr.mxu0 0.0
      %1409 = vmatpush1.msra.mxu0 0.0
      %1410 = vmatprep.subr.mxu0 0.0
      %1411 = vmatpush1.msra.mxu0 0.0
      %1412 = vmatprep.subr.mxu0 0.0
      %1413 = vmatpush1.msra.mxu0 0.0
      %1414 = vmatprep.subr.mxu0 0.0
      %1415 = vmatpush1.msra.mxu0 0.0
      %1416 = vmatprep.subr.mxu0 0.0
      %1417 = vmatpush1.msra.mxu0 0.0
      %1418 = vmatprep.subr.mxu0 0.0
      %1419 = vmatpush1.msra.mxu0 0.0
      %1420 = vmatprep.subr.mxu0 0.0
      %1421 = vmatpush1.msra.mxu0 0.0
      %1422 = vmatprep.subr.mxu0 0.0
      %1423 = vmatpush1.msra.mxu0 0.0
      %1424 = vmatprep.subr.mxu0 0.0
      %1425 = vmatpush1.msra.mxu0 0.0
      %1426 = vmatprep.subr.mxu0 0.0
      %1427 = vmatpush1.msra.mxu0 0.0
      %1428 = vmatprep.subr.mxu0 0.0
      %1429 = vmatpush1.msra.mxu0 0.0
      %1430 = vmatprep.subr.mxu0 0.0
      %1431 = vmatpush1.msra.mxu0 0.0
      %1432 = vmatprep.subr.mxu0 0.0
      %1433 = vmatpush1.msra.mxu0 0.0
      %1434 = vmatprep.subr.mxu0 0.0
      %1435 = vmatpush1.msra.mxu0 0.0
      %1436 = vmatprep.subr.mxu0 0.0
      %1437 = vmatpush1.msra.mxu0 0.0
      %1438 = vmatprep.subr.mxu0 0.0
      %1439 = vmatpush1.msra.mxu0 0.0
      %1440 = vmatprep.mubr.f32.mxu0 0.0
      %1441 = vmatmul.mubr.f32.gmra.mrb[0].mxu0 %v1353
      %v1442 = vpop.f32.mrb[0].mxu0
      %v1443 = vadd.f32 0.0, %v1442
      %v1444 = vpop.f32.mrb[0].mxu0
      %1445 = vmatprep.mubr.f32.mxu0 0.0
      %1446 = vmatmul.mubr.f32.gmra.mrb[0].mxu0 %v1356
      %v1447 = vpop.f32.mrb[0].mxu0
      %v1448 = vadd.f32 0.0, %v1447
      %v1449 = vpop.f32.mrb[0].mxu0
      %1450 = vmatprep.mubr.f32.mxu0 0.0
      %1451 = vmatmul.mubr.f32.gmra.mrb[0].mxu0 %v1359
      %v1452 = vpop.f32.mrb[0].mxu0
      %v1453 = vadd.f32 0.0, %v1452
      %v1454 = vpop.f32.mrb[0].mxu0
      %1455 = vmatprep.mubr.f32.mxu0 0.0
      %1456 = vmatmul.mubr.f32.gmra.mrb[0].mxu0 %v1362
      %v1457 = vpop.f32.mrb[0].mxu0
      %v1458 = vadd.f32 0.0, %v1457
      %v1459 = vpop.f32.mrb[0].mxu0
      %1460 = vmatprep.mubr.f32.mxu0 0.0
      %1461 = vmatmul.mubr.f32.gmra.mrb[0].mxu0 %v1365
      %v1462 = vpop.f32.mrb[0].mxu0
      %v1463 = vadd.f32 0.0, %v1462
      %v1464 = vpop.f32.mrb[0].mxu0
      %1465 = vmatprep.mubr.f32.mxu0 0.0
      %1466 = vmatmul.mubr.f32.gmra.mrb[0].mxu0 %v1368
      %v1467 = vpop.f32.mrb[0].mxu0
      %v1468 = vadd.f32 0.0, %v1467
      %v1469 = vpop.f32.mrb[0].mxu0
      %1470 = vmatprep.mubr.f32.mxu0 0.0
      %1471 = vmatmul.mubr.f32.gmra.mrb[0].mxu0 %v1371
      %v1472 = vpop.f32.mrb[0].mxu0
      %v1473 = vadd.f32 0.0, %v1472
      %v1474 = vpop.f32.mrb[0].mxu0
      %1475 = vmatprep.mubr.f32.mxu0 0.0
      %1476 = vmatmul.mubr.f32.gmra.mrb[0].mxu0 %v1374
      %v1477 = vpop.f32.mrb[0].mxu0
      %v1478 = vadd.f32 0.0, %v1477
      %v1479 = vpop.f32.mrb[0].mxu0
      %1480 = vdwg.mxu0
      %v1481 = vadd.f32 %v1269, %v1443
      %v1482 = vadd.f32 %v1270, %v1448
      %v1483 = vadd.f32 %v1271, %v1453
      %v1484 = vadd.f32 %v1272, %v1458
      %v1485 = vadd.f32 %v1273, %v1463
      %v1486 = vadd.f32 %v1274, %v1468
      %v1487 = vadd.f32 %v1275, %v1473
      %v1488 = vadd.f32 %v1276, %v1478
      %s1489 = sadd.s32 %s414, 6
      %s1490 = scalar_lea.vmem %s0, %s1489
      %v1491 = vld [vmem:[%s1490] sm:$0xff]
      %v1492 = vld [vmem:[%s1490 + $0x8] sm:$0xff]
      %v1493 = vld [vmem:[%s1490 + $0x10] sm:$0xff]
      %v1494 = vld [vmem:[%s1490 + $0x18] sm:$0xff]
      %v1495 = vld [vmem:[%s1490 + $0x20] sm:$0xff]
      %v1496 = vld [vmem:[%s1490 + $0x28] sm:$0xff]
      %v1497 = vld [vmem:[%s1490 + $0x30] sm:$0xff]
      %v1498 = vld [vmem:[%s1490 + $0x38] sm:$0xff]
      %v1499 = vmul.f32 %v1491, %v438
      %v1500 = vmul.f32 %v1492, %v438
      %v1501 = vmul.f32 %v1493, %v438
      %v1502 = vmul.f32 %v1494, %v438
      %v1503 = vmul.f32 %v1495, %v438
      %v1504 = vmul.f32 %v1496, %v438
      %v1505 = vmul.f32 %v1497, %v438
      %v1506 = vmul.f32 %v1498, %v438
      %v1507 = vadd.f32 %v1499, %v452
      %v1508 = vadd.f32 %v1500, %v452
      %v1509 = vadd.f32 %v1501, %v452
      %v1510 = vadd.f32 %v1502, %v452
      %v1511 = vadd.f32 %v1503, %v452
      %v1512 = vadd.f32 %v1504, %v452
      %v1513 = vadd.f32 %v1505, %v452
      %v1514 = vadd.f32 %v1506, %v452
      %v1515 = vmax.f32 %v1507, 0.0
      %v1516 = vmax.f32 %v1508, 0.0
      %v1517 = vmax.f32 %v1509, 0.0
      %v1518 = vmax.f32 %v1510, 0.0
      %v1519 = vmax.f32 %v1511, 0.0
      %v1520 = vmax.f32 %v1512, 0.0
      %v1521 = vmax.f32 %v1513, 0.0
      %v1522 = vmax.f32 %v1514, 0.0
      %1523 = vset.pattern.permute.xlu0 5
      %1524 = vperm.xlu0 %1523, %v417
      %v1525 = vpop.permute.xlu0 %1524
      %1527 = vset.pattern.permute.xlu0 5
      %1528 = vperm.xlu0 %1527, %v418
      %v1529 = vpop.permute.xlu0 %1528
      %1531 = vset.pattern.permute.xlu0 5
      %1532 = vperm.xlu0 %1531, %v419
      %v1533 = vpop.permute.xlu0 %1532
      %1535 = vset.pattern.permute.xlu0 5
      %1536 = vperm.xlu0 %1535, %v420
      %v1537 = vpop.permute.xlu0 %1536
      %1539 = vset.pattern.permute.xlu0 5
      %1540 = vperm.xlu0 %1539, %v421
      %v1541 = vpop.permute.xlu0 %1540
      %1543 = vset.pattern.permute.xlu0 5
      %1544 = vperm.xlu0 %1543, %v422
      %v1545 = vpop.permute.xlu0 %1544
      %1547 = vset.pattern.permute.xlu0 5
      %1548 = vperm.xlu0 %1547, %v423
      %v1549 = vpop.permute.xlu0 %1548
      %1551 = vset.pattern.permute.xlu0 5
      %1552 = vperm.xlu0 %1551, %v424
      %v1553 = vpop.permute.xlu0 %1552
      %v1555 = vmul.f32 %v1515, %v1525
      %v1556 = vmul.f32 %v1516, %v1529
      %v1557 = vmul.f32 %v1517, %v1533
      %v1558 = vmul.f32 %v1518, %v1537
      %v1559 = vmul.f32 %v1519, %v1541
      %v1560 = vmul.f32 %v1520, %v1545
      %v1561 = vmul.f32 %v1521, %v1549
      %v1562 = vmul.f32 %v1522, %v1553
      %v1563 = vld [vmem:[%s1 + $0x28] sm:$0xff]
      %v1565 = vsel %vm594, %v1555, 0
      %v1568 = vsel %vm594, %v1556, 0
      %v1571 = vsel %vm594, %v1557, 0
      %v1574 = vsel %vm594, %v1558, 0
      %v1577 = vsel %vm594, %v1559, 0
      %v1580 = vsel %vm594, %v1560, 0
      %v1583 = vsel %vm594, %v1561, 0
      %v1586 = vsel %vm594, %v1562, 0
      %1588 = vmatprep.subr.mxu0 0.0
      %1589 = vmatpush1.msra.mxu0 %v1563
      %1590 = vmatprep.subr.mxu0 0.0
      %1591 = vmatpush1.msra.mxu0 0.0
      %1592 = vmatprep.subr.mxu0 0.0
      %1593 = vmatpush1.msra.mxu0 0.0
      %1594 = vmatprep.subr.mxu0 0.0
      %1595 = vmatpush1.msra.mxu0 0.0
      %1596 = vmatprep.subr.mxu0 0.0
      %1597 = vmatpush1.msra.mxu0 0.0
      %1598 = vmatprep.subr.mxu0 0.0
      %1599 = vmatpush1.msra.mxu0 0.0
      %1600 = vmatprep.subr.mxu0 0.0
      %1601 = vmatpush1.msra.mxu0 0.0
      %1602 = vmatprep.subr.mxu0 0.0
      %1603 = vmatpush1.msra.mxu0 0.0
      %1604 = vmatprep.subr.mxu0 0.0
      %1605 = vmatpush1.msra.mxu0 0.0
      %1606 = vmatprep.subr.mxu0 0.0
      %1607 = vmatpush1.msra.mxu0 0.0
      %1608 = vmatprep.subr.mxu0 0.0
      %1609 = vmatpush1.msra.mxu0 0.0
      %1610 = vmatprep.subr.mxu0 0.0
      %1611 = vmatpush1.msra.mxu0 0.0
      %1612 = vmatprep.subr.mxu0 0.0
      %1613 = vmatpush1.msra.mxu0 0.0
      %1614 = vmatprep.subr.mxu0 0.0
      %1615 = vmatpush1.msra.mxu0 0.0
      %1616 = vmatprep.subr.mxu0 0.0
      %1617 = vmatpush1.msra.mxu0 0.0
      %1618 = vmatprep.subr.mxu0 0.0
      %1619 = vmatpush1.msra.mxu0 0.0
      %1620 = vmatprep.subr.mxu0 0.0
      %1621 = vmatpush1.msra.mxu0 0.0
      %1622 = vmatprep.subr.mxu0 0.0
      %1623 = vmatpush1.msra.mxu0 0.0
      %1624 = vmatprep.subr.mxu0 0.0
      %1625 = vmatpush1.msra.mxu0 0.0
      %1626 = vmatprep.subr.mxu0 0.0
      %1627 = vmatpush1.msra.mxu0 0.0
      %1628 = vmatprep.subr.mxu0 0.0
      %1629 = vmatpush1.msra.mxu0 0.0
      %1630 = vmatprep.subr.mxu0 0.0
      %1631 = vmatpush1.msra.mxu0 0.0
      %1632 = vmatprep.subr.mxu0 0.0
      %1633 = vmatpush1.msra.mxu0 0.0
      %1634 = vmatprep.subr.mxu0 0.0
      %1635 = vmatpush1.msra.mxu0 0.0
      %1636 = vmatprep.subr.mxu0 0.0
      %1637 = vmatpush1.msra.mxu0 0.0
      %1638 = vmatprep.subr.mxu0 0.0
      %1639 = vmatpush1.msra.mxu0 0.0
      %1640 = vmatprep.subr.mxu0 0.0
      %1641 = vmatpush1.msra.mxu0 0.0
      %1642 = vmatprep.subr.mxu0 0.0
      %1643 = vmatpush1.msra.mxu0 0.0
      %1644 = vmatprep.subr.mxu0 0.0
      %1645 = vmatpush1.msra.mxu0 0.0
      %1646 = vmatprep.subr.mxu0 0.0
      %1647 = vmatpush1.msra.mxu0 0.0
      %1648 = vmatprep.subr.mxu0 0.0
      %1649 = vmatpush1.msra.mxu0 0.0
      %1650 = vmatprep.subr.mxu0 0.0
      %1651 = vmatpush1.msra.mxu0 0.0
      %1652 = vmatprep.mubr.f32.mxu0 0.0
      %1653 = vmatmul.mubr.f32.gmra.mrb[0].mxu0 %v1565
      %v1654 = vpop.f32.mrb[0].mxu0
      %v1655 = vadd.f32 0.0, %v1654
      %v1656 = vpop.f32.mrb[0].mxu0
      %1657 = vmatprep.mubr.f32.mxu0 0.0
      %1658 = vmatmul.mubr.f32.gmra.mrb[0].mxu0 %v1568
      %v1659 = vpop.f32.mrb[0].mxu0
      %v1660 = vadd.f32 0.0, %v1659
      %v1661 = vpop.f32.mrb[0].mxu0
      %1662 = vmatprep.mubr.f32.mxu0 0.0
      %1663 = vmatmul.mubr.f32.gmra.mrb[0].mxu0 %v1571
      %v1664 = vpop.f32.mrb[0].mxu0
      %v1665 = vadd.f32 0.0, %v1664
      %v1666 = vpop.f32.mrb[0].mxu0
      %1667 = vmatprep.mubr.f32.mxu0 0.0
      %1668 = vmatmul.mubr.f32.gmra.mrb[0].mxu0 %v1574
      %v1669 = vpop.f32.mrb[0].mxu0
      %v1670 = vadd.f32 0.0, %v1669
      %v1671 = vpop.f32.mrb[0].mxu0
      %1672 = vmatprep.mubr.f32.mxu0 0.0
      %1673 = vmatmul.mubr.f32.gmra.mrb[0].mxu0 %v1577
      %v1674 = vpop.f32.mrb[0].mxu0
      %v1675 = vadd.f32 0.0, %v1674
      %v1676 = vpop.f32.mrb[0].mxu0
      %1677 = vmatprep.mubr.f32.mxu0 0.0
      %1678 = vmatmul.mubr.f32.gmra.mrb[0].mxu0 %v1580
      %v1679 = vpop.f32.mrb[0].mxu0
      %v1680 = vadd.f32 0.0, %v1679
      %v1681 = vpop.f32.mrb[0].mxu0
      %1682 = vmatprep.mubr.f32.mxu0 0.0
      %1683 = vmatmul.mubr.f32.gmra.mrb[0].mxu0 %v1583
      %v1684 = vpop.f32.mrb[0].mxu0
      %v1685 = vadd.f32 0.0, %v1684
      %v1686 = vpop.f32.mrb[0].mxu0
      %1687 = vmatprep.mubr.f32.mxu0 0.0
      %1688 = vmatmul.mubr.f32.gmra.mrb[0].mxu0 %v1586
      %v1689 = vpop.f32.mrb[0].mxu0
      %v1690 = vadd.f32 0.0, %v1689
      %v1691 = vpop.f32.mrb[0].mxu0
      %1692 = vdwg.mxu0
      %v1693 = vadd.f32 %v1481, %v1655
      %v1694 = vadd.f32 %v1482, %v1660
      %v1695 = vadd.f32 %v1483, %v1665
      %v1696 = vadd.f32 %v1484, %v1670
      %v1697 = vadd.f32 %v1485, %v1675
      %v1698 = vadd.f32 %v1486, %v1680
      %v1699 = vadd.f32 %v1487, %v1685
      %v1700 = vadd.f32 %v1488, %v1690
      %s1701 = sadd.s32 %s414, 8
      %s1702 = scalar_lea.vmem %s0, %s1701
      %v1703 = vld [vmem:[%s1702] sm:$0xff]
      %v1704 = vld [vmem:[%s1702 + $0x8] sm:$0xff]
      %v1705 = vld [vmem:[%s1702 + $0x10] sm:$0xff]
      %v1706 = vld [vmem:[%s1702 + $0x18] sm:$0xff]
      %v1707 = vld [vmem:[%s1702 + $0x20] sm:$0xff]
      %v1708 = vld [vmem:[%s1702 + $0x28] sm:$0xff]
      %v1709 = vld [vmem:[%s1702 + $0x30] sm:$0xff]
      %v1710 = vld [vmem:[%s1702 + $0x38] sm:$0xff]
      %v1711 = vmul.f32 %v1703, %v438
      %v1712 = vmul.f32 %v1704, %v438
      %v1713 = vmul.f32 %v1705, %v438
      %v1714 = vmul.f32 %v1706, %v438
      %v1715 = vmul.f32 %v1707, %v438
      %v1716 = vmul.f32 %v1708, %v438
      %v1717 = vmul.f32 %v1709, %v438
      %v1718 = vmul.f32 %v1710, %v438
      %v1719 = vadd.f32 %v1711, %v452
      %v1720 = vadd.f32 %v1712, %v452
      %v1721 = vadd.f32 %v1713, %v452
      %v1722 = vadd.f32 %v1714, %v452
      %v1723 = vadd.f32 %v1715, %v452
      %v1724 = vadd.f32 %v1716, %v452
      %v1725 = vadd.f32 %v1717, %v452
      %v1726 = vadd.f32 %v1718, %v452
      %v1727 = vmax.f32 %v1719, 0.0
      %v1728 = vmax.f32 %v1720, 0.0
      %v1729 = vmax.f32 %v1721, 0.0
      %v1730 = vmax.f32 %v1722, 0.0
      %v1731 = vmax.f32 %v1723, 0.0
      %v1732 = vmax.f32 %v1724, 0.0
      %v1733 = vmax.f32 %v1725, 0.0
      %v1734 = vmax.f32 %v1726, 0.0
      %1735 = vset.pattern.permute.xlu0 6
      %1736 = vperm.xlu0 %1735, %v417
      %v1737 = vpop.permute.xlu0 %1736
      %1739 = vset.pattern.permute.xlu0 6
      %1740 = vperm.xlu0 %1739, %v418
      %v1741 = vpop.permute.xlu0 %1740
      %1743 = vset.pattern.permute.xlu0 6
      %1744 = vperm.xlu0 %1743, %v419
      %v1745 = vpop.permute.xlu0 %1744
      %1747 = vset.pattern.permute.xlu0 6
      %1748 = vperm.xlu0 %1747, %v420
      %v1749 = vpop.permute.xlu0 %1748
      %1751 = vset.pattern.permute.xlu0 6
      %1752 = vperm.xlu0 %1751, %v421
      %v1753 = vpop.permute.xlu0 %1752
      %1755 = vset.pattern.permute.xlu0 6
      %1756 = vperm.xlu0 %1755, %v422
      %v1757 = vpop.permute.xlu0 %1756
      %1759 = vset.pattern.permute.xlu0 6
      %1760 = vperm.xlu0 %1759, %v423
      %v1761 = vpop.permute.xlu0 %1760
      %1763 = vset.pattern.permute.xlu0 6
      %1764 = vperm.xlu0 %1763, %v424
      %v1765 = vpop.permute.xlu0 %1764
      %v1767 = vmul.f32 %v1727, %v1737
      %v1768 = vmul.f32 %v1728, %v1741
      %v1769 = vmul.f32 %v1729, %v1745
      %v1770 = vmul.f32 %v1730, %v1749
      %v1771 = vmul.f32 %v1731, %v1753
      %v1772 = vmul.f32 %v1732, %v1757
      %v1773 = vmul.f32 %v1733, %v1761
      %v1774 = vmul.f32 %v1734, %v1765
      %v1775 = vld [vmem:[%s1 + $0x30] sm:$0xff]
      %v1777 = vsel %vm594, %v1767, 0
      %v1780 = vsel %vm594, %v1768, 0
      %v1783 = vsel %vm594, %v1769, 0
      %v1786 = vsel %vm594, %v1770, 0
      %v1789 = vsel %vm594, %v1771, 0
      %v1792 = vsel %vm594, %v1772, 0
      %v1795 = vsel %vm594, %v1773, 0
      %v1798 = vsel %vm594, %v1774, 0
      %1800 = vmatprep.subr.mxu0 0.0
      %1801 = vmatpush1.msra.mxu0 %v1775
      %1802 = vmatprep.subr.mxu0 0.0
      %1803 = vmatpush1.msra.mxu0 0.0
      %1804 = vmatprep.subr.mxu0 0.0
      %1805 = vmatpush1.msra.mxu0 0.0
      %1806 = vmatprep.subr.mxu0 0.0
      %1807 = vmatpush1.msra.mxu0 0.0
      %1808 = vmatprep.subr.mxu0 0.0
      %1809 = vmatpush1.msra.mxu0 0.0
      %1810 = vmatprep.subr.mxu0 0.0
      %1811 = vmatpush1.msra.mxu0 0.0
      %1812 = vmatprep.subr.mxu0 0.0
      %1813 = vmatpush1.msra.mxu0 0.0
      %1814 = vmatprep.subr.mxu0 0.0
      %1815 = vmatpush1.msra.mxu0 0.0
      %1816 = vmatprep.subr.mxu0 0.0
      %1817 = vmatpush1.msra.mxu0 0.0
      %1818 = vmatprep.subr.mxu0 0.0
      %1819 = vmatpush1.msra.mxu0 0.0
      %1820 = vmatprep.subr.mxu0 0.0
      %1821 = vmatpush1.msra.mxu0 0.0
      %1822 = vmatprep.subr.mxu0 0.0
      %1823 = vmatpush1.msra.mxu0 0.0
      %1824 = vmatprep.subr.mxu0 0.0
      %1825 = vmatpush1.msra.mxu0 0.0
      %1826 = vmatprep.subr.mxu0 0.0
      %1827 = vmatpush1.msra.mxu0 0.0
      %1828 = vmatprep.subr.mxu0 0.0
      %1829 = vmatpush1.msra.mxu0 0.0
      %1830 = vmatprep.subr.mxu0 0.0
      %1831 = vmatpush1.msra.mxu0 0.0
      %1832 = vmatprep.subr.mxu0 0.0
      %1833 = vmatpush1.msra.mxu0 0.0
      %1834 = vmatprep.subr.mxu0 0.0
      %1835 = vmatpush1.msra.mxu0 0.0
      %1836 = vmatprep.subr.mxu0 0.0
      %1837 = vmatpush1.msra.mxu0 0.0
      %1838 = vmatprep.subr.mxu0 0.0
      %1839 = vmatpush1.msra.mxu0 0.0
      %1840 = vmatprep.subr.mxu0 0.0
      %1841 = vmatpush1.msra.mxu0 0.0
      %1842 = vmatprep.subr.mxu0 0.0
      %1843 = vmatpush1.msra.mxu0 0.0
      %1844 = vmatprep.subr.mxu0 0.0
      %1845 = vmatpush1.msra.mxu0 0.0
      %1846 = vmatprep.subr.mxu0 0.0
      %1847 = vmatpush1.msra.mxu0 0.0
      %1848 = vmatprep.subr.mxu0 0.0
      %1849 = vmatpush1.msra.mxu0 0.0
      %1850 = vmatprep.subr.mxu0 0.0
      %1851 = vmatpush1.msra.mxu0 0.0
      %1852 = vmatprep.subr.mxu0 0.0
      %1853 = vmatpush1.msra.mxu0 0.0
      %1854 = vmatprep.subr.mxu0 0.0
      %1855 = vmatpush1.msra.mxu0 0.0
      %1856 = vmatprep.subr.mxu0 0.0
      %1857 = vmatpush1.msra.mxu0 0.0
      %1858 = vmatprep.subr.mxu0 0.0
      %1859 = vmatpush1.msra.mxu0 0.0
      %1860 = vmatprep.subr.mxu0 0.0
      %1861 = vmatpush1.msra.mxu0 0.0
      %1862 = vmatprep.subr.mxu0 0.0
      %1863 = vmatpush1.msra.mxu0 0.0
      %1864 = vmatprep.mubr.f32.mxu0 0.0
      %1865 = vmatmul.mubr.f32.gmra.mrb[0].mxu0 %v1777
      %v1866 = vpop.f32.mrb[0].mxu0
      %v1867 = vadd.f32 0.0, %v1866
      %v1868 = vpop.f32.mrb[0].mxu0
      %1869 = vmatprep.mubr.f32.mxu0 0.0
      %1870 = vmatmul.mubr.f32.gmra.mrb[0].mxu0 %v1780
      %v1871 = vpop.f32.mrb[0].mxu0
      %v1872 = vadd.f32 0.0, %v1871
      %v1873 = vpop.f32.mrb[0].mxu0
      %1874 = vmatprep.mubr.f32.mxu0 0.0
      %1875 = vmatmul.mubr.f32.gmra.mrb[0].mxu0 %v1783
      %v1876 = vpop.f32.mrb[0].mxu0
      %v1877 = vadd.f32 0.0, %v1876
      %v1878 = vpop.f32.mrb[0].mxu0
      %1879 = vmatprep.mubr.f32.mxu0 0.0
      %1880 = vmatmul.mubr.f32.gmra.mrb[0].mxu0 %v1786
      %v1881 = vpop.f32.mrb[0].mxu0
      %v1882 = vadd.f32 0.0, %v1881
      %v1883 = vpop.f32.mrb[0].mxu0
      %1884 = vmatprep.mubr.f32.mxu0 0.0
      %1885 = vmatmul.mubr.f32.gmra.mrb[0].mxu0 %v1789
      %v1886 = vpop.f32.mrb[0].mxu0
      %v1887 = vadd.f32 0.0, %v1886
      %v1888 = vpop.f32.mrb[0].mxu0
      %1889 = vmatprep.mubr.f32.mxu0 0.0
      %1890 = vmatmul.mubr.f32.gmra.mrb[0].mxu0 %v1792
      %v1891 = vpop.f32.mrb[0].mxu0
      %v1892 = vadd.f32 0.0, %v1891
      %v1893 = vpop.f32.mrb[0].mxu0
      %1894 = vmatprep.mubr.f32.mxu0 0.0
      %1895 = vmatmul.mubr.f32.gmra.mrb[0].mxu0 %v1795
      %v1896 = vpop.f32.mrb[0].mxu0
      %v1897 = vadd.f32 0.0, %v1896
      %v1898 = vpop.f32.mrb[0].mxu0
      %1899 = vmatprep.mubr.f32.mxu0 0.0
      %1900 = vmatmul.mubr.f32.gmra.mrb[0].mxu0 %v1798
      %v1901 = vpop.f32.mrb[0].mxu0
      %v1902 = vadd.f32 0.0, %v1901
      %v1903 = vpop.f32.mrb[0].mxu0
      %1904 = vdwg.mxu0
      %v1905 = vadd.f32 %v1693, %v1867
      %v1906 = vadd.f32 %v1694, %v1872
      %v1907 = vadd.f32 %v1695, %v1877
      %v1908 = vadd.f32 %v1696, %v1882
      %v1909 = vadd.f32 %v1697, %v1887
      %v1910 = vadd.f32 %v1698, %v1892
      %v1911 = vadd.f32 %v1699, %v1897
      %v1912 = vadd.f32 %v1700, %v1902
      %s1913 = sadd.s32 %s414, 9
      %s1914 = scalar_lea.vmem %s0, %s1913
      %v1915 = vld [vmem:[%s1914] sm:$0xff]
      %v1916 = vld [vmem:[%s1914 + $0x8] sm:$0xff]
      %v1917 = vld [vmem:[%s1914 + $0x10] sm:$0xff]
      %v1918 = vld [vmem:[%s1914 + $0x18] sm:$0xff]
      %v1919 = vld [vmem:[%s1914 + $0x20] sm:$0xff]
      %v1920 = vld [vmem:[%s1914 + $0x28] sm:$0xff]
      %v1921 = vld [vmem:[%s1914 + $0x30] sm:$0xff]
      %v1922 = vld [vmem:[%s1914 + $0x38] sm:$0xff]
      %v1923 = vmul.f32 %v1915, %v438
      %v1924 = vmul.f32 %v1916, %v438
      %v1925 = vmul.f32 %v1917, %v438
      %v1926 = vmul.f32 %v1918, %v438
      %v1927 = vmul.f32 %v1919, %v438
      %v1928 = vmul.f32 %v1920, %v438
      %v1929 = vmul.f32 %v1921, %v438
      %v1930 = vmul.f32 %v1922, %v438
      %v1931 = vadd.f32 %v1923, %v452
      %v1932 = vadd.f32 %v1924, %v452
      %v1933 = vadd.f32 %v1925, %v452
      %v1934 = vadd.f32 %v1926, %v452
      %v1935 = vadd.f32 %v1927, %v452
      %v1936 = vadd.f32 %v1928, %v452
      %v1937 = vadd.f32 %v1929, %v452
      %v1938 = vadd.f32 %v1930, %v452
      %v1939 = vmax.f32 %v1931, 0.0
      %v1940 = vmax.f32 %v1932, 0.0
      %v1941 = vmax.f32 %v1933, 0.0
      %v1942 = vmax.f32 %v1934, 0.0
      %v1943 = vmax.f32 %v1935, 0.0
      %v1944 = vmax.f32 %v1936, 0.0
      %v1945 = vmax.f32 %v1937, 0.0
      %v1946 = vmax.f32 %v1938, 0.0
      %1947 = vset.pattern.permute.xlu0 7
      %1948 = vperm.xlu0 %1947, %v417
      %v1949 = vpop.permute.xlu0 %1948
      %1951 = vset.pattern.permute.xlu0 7
      %1952 = vperm.xlu0 %1951, %v418
      %v1953 = vpop.permute.xlu0 %1952
      %1955 = vset.pattern.permute.xlu0 7
      %1956 = vperm.xlu0 %1955, %v419
      %v1957 = vpop.permute.xlu0 %1956
      %1959 = vset.pattern.permute.xlu0 7
      %1960 = vperm.xlu0 %1959, %v420
      %v1961 = vpop.permute.xlu0 %1960
      %1963 = vset.pattern.permute.xlu0 7
      %1964 = vperm.xlu0 %1963, %v421
      %v1965 = vpop.permute.xlu0 %1964
      %1967 = vset.pattern.permute.xlu0 7
      %1968 = vperm.xlu0 %1967, %v422
      %v1969 = vpop.permute.xlu0 %1968
      %1971 = vset.pattern.permute.xlu0 7
      %1972 = vperm.xlu0 %1971, %v423
      %v1973 = vpop.permute.xlu0 %1972
      %1975 = vset.pattern.permute.xlu0 7
      %1976 = vperm.xlu0 %1975, %v424
      %v1977 = vpop.permute.xlu0 %1976
      %v1979 = vmul.f32 %v1939, %v1949
      %v1980 = vmul.f32 %v1940, %v1953
      %v1981 = vmul.f32 %v1941, %v1957
      %v1982 = vmul.f32 %v1942, %v1961
      %v1983 = vmul.f32 %v1943, %v1965
      %v1984 = vmul.f32 %v1944, %v1969
      %v1985 = vmul.f32 %v1945, %v1973
      %v1986 = vmul.f32 %v1946, %v1977
      %v1987 = vld [vmem:[%s1 + $0x38] sm:$0xff]
      %v1989 = vsel %vm594, %v1979, 0
      %v1992 = vsel %vm594, %v1980, 0
      %v1995 = vsel %vm594, %v1981, 0
      %v1998 = vsel %vm594, %v1982, 0
      %v2001 = vsel %vm594, %v1983, 0
      %v2004 = vsel %vm594, %v1984, 0
      %v2007 = vsel %vm594, %v1985, 0
      %v2010 = vsel %vm594, %v1986, 0
      %2012 = vmatprep.subr.mxu0 0.0
      %2013 = vmatpush1.msra.mxu0 %v1987
      %2014 = vmatprep.subr.mxu0 0.0
      %2015 = vmatpush1.msra.mxu0 0.0
      %2016 = vmatprep.subr.mxu0 0.0
      %2017 = vmatpush1.msra.mxu0 0.0
      %2018 = vmatprep.subr.mxu0 0.0
      %2019 = vmatpush1.msra.mxu0 0.0
      %2020 = vmatprep.subr.mxu0 0.0
      %2021 = vmatpush1.msra.mxu0 0.0
      %2022 = vmatprep.subr.mxu0 0.0
      %2023 = vmatpush1.msra.mxu0 0.0
      %2024 = vmatprep.subr.mxu0 0.0
      %2025 = vmatpush1.msra.mxu0 0.0
      %2026 = vmatprep.subr.mxu0 0.0
      %2027 = vmatpush1.msra.mxu0 0.0
      %2028 = vmatprep.subr.mxu0 0.0
      %2029 = vmatpush1.msra.mxu0 0.0
      %2030 = vmatprep.subr.mxu0 0.0
      %2031 = vmatpush1.msra.mxu0 0.0
      %2032 = vmatprep.subr.mxu0 0.0
      %2033 = vmatpush1.msra.mxu0 0.0
      %2034 = vmatprep.subr.mxu0 0.0
      %2035 = vmatpush1.msra.mxu0 0.0
      %2036 = vmatprep.subr.mxu0 0.0
      %2037 = vmatpush1.msra.mxu0 0.0
      %2038 = vmatprep.subr.mxu0 0.0
      %2039 = vmatpush1.msra.mxu0 0.0
      %2040 = vmatprep.subr.mxu0 0.0
      %2041 = vmatpush1.msra.mxu0 0.0
      %2042 = vmatprep.subr.mxu0 0.0
      %2043 = vmatpush1.msra.mxu0 0.0
      %2044 = vmatprep.subr.mxu0 0.0
      %2045 = vmatpush1.msra.mxu0 0.0
      %2046 = vmatprep.subr.mxu0 0.0
      %2047 = vmatpush1.msra.mxu0 0.0
      %2048 = vmatprep.subr.mxu0 0.0
      %2049 = vmatpush1.msra.mxu0 0.0
      %2050 = vmatprep.subr.mxu0 0.0
      %2051 = vmatpush1.msra.mxu0 0.0
      %2052 = vmatprep.subr.mxu0 0.0
      %2053 = vmatpush1.msra.mxu0 0.0
      %2054 = vmatprep.subr.mxu0 0.0
      %2055 = vmatpush1.msra.mxu0 0.0
      %2056 = vmatprep.subr.mxu0 0.0
      %2057 = vmatpush1.msra.mxu0 0.0
      %2058 = vmatprep.subr.mxu0 0.0
      %2059 = vmatpush1.msra.mxu0 0.0
      %2060 = vmatprep.subr.mxu0 0.0
      %2061 = vmatpush1.msra.mxu0 0.0
      %2062 = vmatprep.subr.mxu0 0.0
      %2063 = vmatpush1.msra.mxu0 0.0
      %2064 = vmatprep.subr.mxu0 0.0
      %2065 = vmatpush1.msra.mxu0 0.0
      %2066 = vmatprep.subr.mxu0 0.0
      %2067 = vmatpush1.msra.mxu0 0.0
      %2068 = vmatprep.subr.mxu0 0.0
      %2069 = vmatpush1.msra.mxu0 0.0
      %2070 = vmatprep.subr.mxu0 0.0
      %2071 = vmatpush1.msra.mxu0 0.0
      %2072 = vmatprep.subr.mxu0 0.0
      %2073 = vmatpush1.msra.mxu0 0.0
      %2074 = vmatprep.subr.mxu0 0.0
      %2075 = vmatpush1.msra.mxu0 0.0
      %2076 = vmatprep.mubr.f32.mxu0 0.0
      %2077 = vmatmul.mubr.f32.gmra.mrb[0].mxu0 %v1989
      %v2078 = vpop.f32.mrb[0].mxu0
      %v2079 = vadd.f32 0.0, %v2078
      %v2080 = vpop.f32.mrb[0].mxu0
      %2081 = vmatprep.mubr.f32.mxu0 0.0
      %2082 = vmatmul.mubr.f32.gmra.mrb[0].mxu0 %v1992
      %v2083 = vpop.f32.mrb[0].mxu0
      %v2084 = vadd.f32 0.0, %v2083
      %v2085 = vpop.f32.mrb[0].mxu0
      %2086 = vmatprep.mubr.f32.mxu0 0.0
      %2087 = vmatmul.mubr.f32.gmra.mrb[0].mxu0 %v1995
      %v2088 = vpop.f32.mrb[0].mxu0
      %v2089 = vadd.f32 0.0, %v2088
      %v2090 = vpop.f32.mrb[0].mxu0
      %2091 = vmatprep.mubr.f32.mxu0 0.0
      %2092 = vmatmul.mubr.f32.gmra.mrb[0].mxu0 %v1998
      %v2093 = vpop.f32.mrb[0].mxu0
      %v2094 = vadd.f32 0.0, %v2093
      %v2095 = vpop.f32.mrb[0].mxu0
      %2096 = vmatprep.mubr.f32.mxu0 0.0
      %2097 = vmatmul.mubr.f32.gmra.mrb[0].mxu0 %v2001
      %v2098 = vpop.f32.mrb[0].mxu0
      %v2099 = vadd.f32 0.0, %v2098
      %v2100 = vpop.f32.mrb[0].mxu0
      %2101 = vmatprep.mubr.f32.mxu0 0.0
      %2102 = vmatmul.mubr.f32.gmra.mrb[0].mxu0 %v2004
      %v2103 = vpop.f32.mrb[0].mxu0
      %v2104 = vadd.f32 0.0, %v2103
      %v2105 = vpop.f32.mrb[0].mxu0
      %2106 = vmatprep.mubr.f32.mxu0 0.0
      %2107 = vmatmul.mubr.f32.gmra.mrb[0].mxu0 %v2007
      %v2108 = vpop.f32.mrb[0].mxu0
      %v2109 = vadd.f32 0.0, %v2108
      %v2110 = vpop.f32.mrb[0].mxu0
      %2111 = vmatprep.mubr.f32.mxu0 0.0
      %2112 = vmatmul.mubr.f32.gmra.mrb[0].mxu0 %v2010
      %v2113 = vpop.f32.mrb[0].mxu0
      %v2114 = vadd.f32 0.0, %v2113
      %v2115 = vpop.f32.mrb[0].mxu0
      %2116 = vdwg.mxu0
      %v2117 = vadd.f32 %v1905, %v2079
      %v2118 = vadd.f32 %v1906, %v2084
      %v2119 = vadd.f32 %v1907, %v2089
      %v2120 = vadd.f32 %v1908, %v2094
      %v2121 = vadd.f32 %v1909, %v2099
      %v2122 = vadd.f32 %v1910, %v2104
      %v2123 = vadd.f32 %v1911, %v2109
      %v2124 = vadd.f32 %v1912, %v2114
      %s2125 = sadd.s32 %s414, 10
      %s2126 = scalar_lea.vmem %s0, %s2125
      %v2127 = vld [vmem:[%s2126] sm:$0xff]
      %v2128 = vld [vmem:[%s2126 + $0x8] sm:$0xff]
      %v2129 = vld [vmem:[%s2126 + $0x10] sm:$0xff]
      %v2130 = vld [vmem:[%s2126 + $0x18] sm:$0xff]
      %v2131 = vld [vmem:[%s2126 + $0x20] sm:$0xff]
      %v2132 = vld [vmem:[%s2126 + $0x28] sm:$0xff]
      %v2133 = vld [vmem:[%s2126 + $0x30] sm:$0xff]
      %v2134 = vld [vmem:[%s2126 + $0x38] sm:$0xff]
      %v2135 = vmul.f32 %v2127, %v438
      %v2136 = vmul.f32 %v2128, %v438
      %v2137 = vmul.f32 %v2129, %v438
      %v2138 = vmul.f32 %v2130, %v438
      %v2139 = vmul.f32 %v2131, %v438
      %v2140 = vmul.f32 %v2132, %v438
      %v2141 = vmul.f32 %v2133, %v438
      %v2142 = vmul.f32 %v2134, %v438
      %v2143 = vadd.f32 %v2135, %v452
      %v2144 = vadd.f32 %v2136, %v452
      %v2145 = vadd.f32 %v2137, %v452
      %v2146 = vadd.f32 %v2138, %v452
      %v2147 = vadd.f32 %v2139, %v452
      %v2148 = vadd.f32 %v2140, %v452
      %v2149 = vadd.f32 %v2141, %v452
      %v2150 = vadd.f32 %v2142, %v452
      %v2151 = vmax.f32 %v2143, 0.0
      %v2152 = vmax.f32 %v2144, 0.0
      %v2153 = vmax.f32 %v2145, 0.0
      %v2154 = vmax.f32 %v2146, 0.0
      %v2155 = vmax.f32 %v2147, 0.0
      %v2156 = vmax.f32 %v2148, 0.0
      %v2157 = vmax.f32 %v2149, 0.0
      %v2158 = vmax.f32 %v2150, 0.0
      %2159 = vset.pattern.permute.xlu0 8
      %2160 = vperm.xlu0 %2159, %v417
      %v2161 = vpop.permute.xlu0 %2160
      %2163 = vset.pattern.permute.xlu0 8
      %2164 = vperm.xlu0 %2163, %v418
      %v2165 = vpop.permute.xlu0 %2164
      %2167 = vset.pattern.permute.xlu0 8
      %2168 = vperm.xlu0 %2167, %v419
      %v2169 = vpop.permute.xlu0 %2168
      %2171 = vset.pattern.permute.xlu0 8
      %2172 = vperm.xlu0 %2171, %v420
      %v2173 = vpop.permute.xlu0 %2172
      %2175 = vset.pattern.permute.xlu0 8
      %2176 = vperm.xlu0 %2175, %v421
      %v2177 = vpop.permute.xlu0 %2176
      %2179 = vset.pattern.permute.xlu0 8
      %2180 = vperm.xlu0 %2179, %v422
      %v2181 = vpop.permute.xlu0 %2180
      %2183 = vset.pattern.permute.xlu0 8
      %2184 = vperm.xlu0 %2183, %v423
      %v2185 = vpop.permute.xlu0 %2184
      %2187 = vset.pattern.permute.xlu0 8
      %2188 = vperm.xlu0 %2187, %v424
      %v2189 = vpop.permute.xlu0 %2188
      %v2191 = vmul.f32 %v2151, %v2161
      %v2192 = vmul.f32 %v2152, %v2165
      %v2193 = vmul.f32 %v2153, %v2169
      %v2194 = vmul.f32 %v2154, %v2173
      %v2195 = vmul.f32 %v2155, %v2177
      %v2196 = vmul.f32 %v2156, %v2181
      %v2197 = vmul.f32 %v2157, %v2185
      %v2198 = vmul.f32 %v2158, %v2189
      %v2199 = vld [vmem:[%s1 + $0x40] sm:$0xff]
      %v2201 = vsel %vm594, %v2191, 0
      %v2204 = vsel %vm594, %v2192, 0
      %v2207 = vsel %vm594, %v2193, 0
      %v2210 = vsel %vm594, %v2194, 0
      %v2213 = vsel %vm594, %v2195, 0
      %v2216 = vsel %vm594, %v2196, 0
      %v2219 = vsel %vm594, %v2197, 0
      %v2222 = vsel %vm594, %v2198, 0
      %2224 = vmatprep.subr.mxu0 0.0
      %2225 = vmatpush1.msra.mxu0 %v2199
      %2226 = vmatprep.subr.mxu0 0.0
      %2227 = vmatpush1.msra.mxu0 0.0
      %2228 = vmatprep.subr.mxu0 0.0
      %2229 = vmatpush1.msra.mxu0 0.0
      %2230 = vmatprep.subr.mxu0 0.0
      %2231 = vmatpush1.msra.mxu0 0.0
      %2232 = vmatprep.subr.mxu0 0.0
      %2233 = vmatpush1.msra.mxu0 0.0
      %2234 = vmatprep.subr.mxu0 0.0
      %2235 = vmatpush1.msra.mxu0 0.0
      %2236 = vmatprep.subr.mxu0 0.0
      %2237 = vmatpush1.msra.mxu0 0.0
      %2238 = vmatprep.subr.mxu0 0.0
      %2239 = vmatpush1.msra.mxu0 0.0
      %2240 = vmatprep.subr.mxu0 0.0
      %2241 = vmatpush1.msra.mxu0 0.0
      %2242 = vmatprep.subr.mxu0 0.0
      %2243 = vmatpush1.msra.mxu0 0.0
      %2244 = vmatprep.subr.mxu0 0.0
      %2245 = vmatpush1.msra.mxu0 0.0
      %2246 = vmatprep.subr.mxu0 0.0
      %2247 = vmatpush1.msra.mxu0 0.0
      %2248 = vmatprep.subr.mxu0 0.0
      %2249 = vmatpush1.msra.mxu0 0.0
      %2250 = vmatprep.subr.mxu0 0.0
      %2251 = vmatpush1.msra.mxu0 0.0
      %2252 = vmatprep.subr.mxu0 0.0
      %2253 = vmatpush1.msra.mxu0 0.0
      %2254 = vmatprep.subr.mxu0 0.0
      %2255 = vmatpush1.msra.mxu0 0.0
      %2256 = vmatprep.subr.mxu0 0.0
      %2257 = vmatpush1.msra.mxu0 0.0
      %2258 = vmatprep.subr.mxu0 0.0
      %2259 = vmatpush1.msra.mxu0 0.0
      %2260 = vmatprep.subr.mxu0 0.0
      %2261 = vmatpush1.msra.mxu0 0.0
      %2262 = vmatprep.subr.mxu0 0.0
      %2263 = vmatpush1.msra.mxu0 0.0
      %2264 = vmatprep.subr.mxu0 0.0
      %2265 = vmatpush1.msra.mxu0 0.0
      %2266 = vmatprep.subr.mxu0 0.0
      %2267 = vmatpush1.msra.mxu0 0.0
      %2268 = vmatprep.subr.mxu0 0.0
      %2269 = vmatpush1.msra.mxu0 0.0
      %2270 = vmatprep.subr.mxu0 0.0
      %2271 = vmatpush1.msra.mxu0 0.0
      %2272 = vmatprep.subr.mxu0 0.0
      %2273 = vmatpush1.msra.mxu0 0.0
      %2274 = vmatprep.subr.mxu0 0.0
      %2275 = vmatpush1.msra.mxu0 0.0
      %2276 = vmatprep.subr.mxu0 0.0
      %2277 = vmatpush1.msra.mxu0 0.0
      %2278 = vmatprep.subr.mxu0 0.0
      %2279 = vmatpush1.msra.mxu0 0.0
      %2280 = vmatprep.subr.mxu0 0.0
      %2281 = vmatpush1.msra.mxu0 0.0
      %2282 = vmatprep.subr.mxu0 0.0
      %2283 = vmatpush1.msra.mxu0 0.0
      %2284 = vmatprep.subr.mxu0 0.0
      %2285 = vmatpush1.msra.mxu0 0.0
      %2286 = vmatprep.subr.mxu0 0.0
      %2287 = vmatpush1.msra.mxu0 0.0
      %2288 = vmatprep.mubr.f32.mxu0 0.0
      %2289 = vmatmul.mubr.f32.gmra.mrb[0].mxu0 %v2201
      %v2290 = vpop.f32.mrb[0].mxu0
      %v2291 = vadd.f32 0.0, %v2290
      %v2292 = vpop.f32.mrb[0].mxu0
      %2293 = vmatprep.mubr.f32.mxu0 0.0
      %2294 = vmatmul.mubr.f32.gmra.mrb[0].mxu0 %v2204
      %v2295 = vpop.f32.mrb[0].mxu0
      %v2296 = vadd.f32 0.0, %v2295
      %v2297 = vpop.f32.mrb[0].mxu0
      %2298 = vmatprep.mubr.f32.mxu0 0.0
      %2299 = vmatmul.mubr.f32.gmra.mrb[0].mxu0 %v2207
      %v2300 = vpop.f32.mrb[0].mxu0
      %v2301 = vadd.f32 0.0, %v2300
      %v2302 = vpop.f32.mrb[0].mxu0
      %2303 = vmatprep.mubr.f32.mxu0 0.0
      %2304 = vmatmul.mubr.f32.gmra.mrb[0].mxu0 %v2210
      %v2305 = vpop.f32.mrb[0].mxu0
      %v2306 = vadd.f32 0.0, %v2305
      %v2307 = vpop.f32.mrb[0].mxu0
      %2308 = vmatprep.mubr.f32.mxu0 0.0
      %2309 = vmatmul.mubr.f32.gmra.mrb[0].mxu0 %v2213
      %v2310 = vpop.f32.mrb[0].mxu0
      %v2311 = vadd.f32 0.0, %v2310
      %v2312 = vpop.f32.mrb[0].mxu0
      %2313 = vmatprep.mubr.f32.mxu0 0.0
      %2314 = vmatmul.mubr.f32.gmra.mrb[0].mxu0 %v2216
      %v2315 = vpop.f32.mrb[0].mxu0
      %v2316 = vadd.f32 0.0, %v2315
      %v2317 = vpop.f32.mrb[0].mxu0
      %2318 = vmatprep.mubr.f32.mxu0 0.0
      %2319 = vmatmul.mubr.f32.gmra.mrb[0].mxu0 %v2219
      %v2320 = vpop.f32.mrb[0].mxu0
      %v2321 = vadd.f32 0.0, %v2320
      %v2322 = vpop.f32.mrb[0].mxu0
      %2323 = vmatprep.mubr.f32.mxu0 0.0
      %2324 = vmatmul.mubr.f32.gmra.mrb[0].mxu0 %v2222
      %v2325 = vpop.f32.mrb[0].mxu0
      %v2326 = vadd.f32 0.0, %v2325
      %v2327 = vpop.f32.mrb[0].mxu0
      %2328 = vdwg.mxu0
      %v2329 = vadd.f32 %v2117, %v2291
      %v2330 = vadd.f32 %v2118, %v2296
      %v2331 = vadd.f32 %v2119, %v2301
      %v2332 = vadd.f32 %v2120, %v2306
      %v2333 = vadd.f32 %v2121, %v2311
      %v2334 = vadd.f32 %v2122, %v2316
      %v2335 = vadd.f32 %v2123, %v2321
      %v2336 = vadd.f32 %v2124, %v2326
      %s2337 = sadd.s32 %s414, 16
      %s2338 = scalar_lea.vmem %s0, %s2337
      %v2339 = vld [vmem:[%s2338] sm:$0xff]
      %v2340 = vld [vmem:[%s2338 + $0x8] sm:$0xff]
      %v2341 = vld [vmem:[%s2338 + $0x10] sm:$0xff]
      %v2342 = vld [vmem:[%s2338 + $0x18] sm:$0xff]
      %v2343 = vld [vmem:[%s2338 + $0x20] sm:$0xff]
      %v2344 = vld [vmem:[%s2338 + $0x28] sm:$0xff]
      %v2345 = vld [vmem:[%s2338 + $0x30] sm:$0xff]
      %v2346 = vld [vmem:[%s2338 + $0x38] sm:$0xff]
      %v2347 = vmul.f32 %v2339, %v438
      %v2348 = vmul.f32 %v2340, %v438
      %v2349 = vmul.f32 %v2341, %v438
      %v2350 = vmul.f32 %v2342, %v438
      %v2351 = vmul.f32 %v2343, %v438
      %v2352 = vmul.f32 %v2344, %v438
      %v2353 = vmul.f32 %v2345, %v438
      %v2354 = vmul.f32 %v2346, %v438
      %v2355 = vadd.f32 %v2347, %v452
      %v2356 = vadd.f32 %v2348, %v452
      %v2357 = vadd.f32 %v2349, %v452
      %v2358 = vadd.f32 %v2350, %v452
      %v2359 = vadd.f32 %v2351, %v452
      %v2360 = vadd.f32 %v2352, %v452
      %v2361 = vadd.f32 %v2353, %v452
      %v2362 = vadd.f32 %v2354, %v452
      %v2363 = vmax.f32 %v2355, 0.0
      %v2364 = vmax.f32 %v2356, 0.0
      %v2365 = vmax.f32 %v2357, 0.0
      %v2366 = vmax.f32 %v2358, 0.0
      %v2367 = vmax.f32 %v2359, 0.0
      %v2368 = vmax.f32 %v2360, 0.0
      %v2369 = vmax.f32 %v2361, 0.0
      %v2370 = vmax.f32 %v2362, 0.0
      %2371 = vset.pattern.permute.xlu0 9
      %2372 = vperm.xlu0 %2371, %v417
      %v2373 = vpop.permute.xlu0 %2372
      %2375 = vset.pattern.permute.xlu0 9
      %2376 = vperm.xlu0 %2375, %v418
      %v2377 = vpop.permute.xlu0 %2376
      %2379 = vset.pattern.permute.xlu0 9
      %2380 = vperm.xlu0 %2379, %v419
      %v2381 = vpop.permute.xlu0 %2380
      %2383 = vset.pattern.permute.xlu0 9
      %2384 = vperm.xlu0 %2383, %v420
      %v2385 = vpop.permute.xlu0 %2384
      %2387 = vset.pattern.permute.xlu0 9
      %2388 = vperm.xlu0 %2387, %v421
      %v2389 = vpop.permute.xlu0 %2388
      %2391 = vset.pattern.permute.xlu0 9
      %2392 = vperm.xlu0 %2391, %v422
      %v2393 = vpop.permute.xlu0 %2392
      %2395 = vset.pattern.permute.xlu0 9
      %2396 = vperm.xlu0 %2395, %v423
      %v2397 = vpop.permute.xlu0 %2396
      %2399 = vset.pattern.permute.xlu0 9
      %2400 = vperm.xlu0 %2399, %v424
      %v2401 = vpop.permute.xlu0 %2400
      %v2403 = vmul.f32 %v2363, %v2373
      %v2404 = vmul.f32 %v2364, %v2377
      %v2405 = vmul.f32 %v2365, %v2381
      %v2406 = vmul.f32 %v2366, %v2385
      %v2407 = vmul.f32 %v2367, %v2389
      %v2408 = vmul.f32 %v2368, %v2393
      %v2409 = vmul.f32 %v2369, %v2397
      %v2410 = vmul.f32 %v2370, %v2401
      %v2411 = vld [vmem:[%s1 + $0x48] sm:$0xff]
      %v2413 = vsel %vm594, %v2403, 0
      %v2416 = vsel %vm594, %v2404, 0
      %v2419 = vsel %vm594, %v2405, 0
      %v2422 = vsel %vm594, %v2406, 0
      %v2425 = vsel %vm594, %v2407, 0
      %v2428 = vsel %vm594, %v2408, 0
      %v2431 = vsel %vm594, %v2409, 0
      %v2434 = vsel %vm594, %v2410, 0
      %2436 = vmatprep.subr.mxu0 0.0
      %2437 = vmatpush1.msra.mxu0 %v2411
      %2438 = vmatprep.subr.mxu0 0.0
      %2439 = vmatpush1.msra.mxu0 0.0
      %2440 = vmatprep.subr.mxu0 0.0
      %2441 = vmatpush1.msra.mxu0 0.0
      %2442 = vmatprep.subr.mxu0 0.0
      %2443 = vmatpush1.msra.mxu0 0.0
      %2444 = vmatprep.subr.mxu0 0.0
      %2445 = vmatpush1.msra.mxu0 0.0
      %2446 = vmatprep.subr.mxu0 0.0
      %2447 = vmatpush1.msra.mxu0 0.0
      %2448 = vmatprep.subr.mxu0 0.0
      %2449 = vmatpush1.msra.mxu0 0.0
      %2450 = vmatprep.subr.mxu0 0.0
      %2451 = vmatpush1.msra.mxu0 0.0
      %2452 = vmatprep.subr.mxu0 0.0
      %2453 = vmatpush1.msra.mxu0 0.0
      %2454 = vmatprep.subr.mxu0 0.0
      %2455 = vmatpush1.msra.mxu0 0.0
      %2456 = vmatprep.subr.mxu0 0.0
      %2457 = vmatpush1.msra.mxu0 0.0
      %2458 = vmatprep.subr.mxu0 0.0
      %2459 = vmatpush1.msra.mxu0 0.0
      %2460 = vmatprep.subr.mxu0 0.0
      %2461 = vmatpush1.msra.mxu0 0.0
      %2462 = vmatprep.subr.mxu0 0.0
      %2463 = vmatpush1.msra.mxu0 0.0
      %2464 = vmatprep.subr.mxu0 0.0
      %2465 = vmatpush1.msra.mxu0 0.0
      %2466 = vmatprep.subr.mxu0 0.0
      %2467 = vmatpush1.msra.mxu0 0.0
      %2468 = vmatprep.subr.mxu0 0.0
      %2469 = vmatpush1.msra.mxu0 0.0
      %2470 = vmatprep.subr.mxu0 0.0
      %2471 = vmatpush1.msra.mxu0 0.0
      %2472 = vmatprep.subr.mxu0 0.0
      %2473 = vmatpush1.msra.mxu0 0.0
      %2474 = vmatprep.subr.mxu0 0.0
      %2475 = vmatpush1.msra.mxu0 0.0
      %2476 = vmatprep.subr.mxu0 0.0
      %2477 = vmatpush1.msra.mxu0 0.0
      %2478 = vmatprep.subr.mxu0 0.0
      %2479 = vmatpush1.msra.mxu0 0.0
      %2480 = vmatprep.subr.mxu0 0.0
      %2481 = vmatpush1.msra.mxu0 0.0
      %2482 = vmatprep.subr.mxu0 0.0
      %2483 = vmatpush1.msra.mxu0 0.0
      %2484 = vmatprep.subr.mxu0 0.0
      %2485 = vmatpush1.msra.mxu0 0.0
      %2486 = vmatprep.subr.mxu0 0.0
      %2487 = vmatpush1.msra.mxu0 0.0
      %2488 = vmatprep.subr.mxu0 0.0
      %2489 = vmatpush1.msra.mxu0 0.0
      %2490 = vmatprep.subr.mxu0 0.0
      %2491 = vmatpush1.msra.mxu0 0.0
      %2492 = vmatprep.subr.mxu0 0.0
      %2493 = vmatpush1.msra.mxu0 0.0
      %2494 = vmatprep.subr.mxu0 0.0
      %2495 = vmatpush1.msra.mxu0 0.0
      %2496 = vmatprep.subr.mxu0 0.0
      %2497 = vmatpush1.msra.mxu0 0.0
      %2498 = vmatprep.subr.mxu0 0.0
      %2499 = vmatpush1.msra.mxu0 0.0
      %2500 = vmatprep.mubr.f32.mxu0 0.0
      %2501 = vmatmul.mubr.f32.gmra.mrb[0].mxu0 %v2413
      %v2502 = vpop.f32.mrb[0].mxu0
      %v2503 = vadd.f32 0.0, %v2502
      %v2504 = vpop.f32.mrb[0].mxu0
      %2505 = vmatprep.mubr.f32.mxu0 0.0
      %2506 = vmatmul.mubr.f32.gmra.mrb[0].mxu0 %v2416
      %v2507 = vpop.f32.mrb[0].mxu0
      %v2508 = vadd.f32 0.0, %v2507
      %v2509 = vpop.f32.mrb[0].mxu0
      %2510 = vmatprep.mubr.f32.mxu0 0.0
      %2511 = vmatmul.mubr.f32.gmra.mrb[0].mxu0 %v2419
      %v2512 = vpop.f32.mrb[0].mxu0
      %v2513 = vadd.f32 0.0, %v2512
      %v2514 = vpop.f32.mrb[0].mxu0
      %2515 = vmatprep.mubr.f32.mxu0 0.0
      %2516 = vmatmul.mubr.f32.gmra.mrb[0].mxu0 %v2422
      %v2517 = vpop.f32.mrb[0].mxu0
      %v2518 = vadd.f32 0.0, %v2517
      %v2519 = vpop.f32.mrb[0].mxu0
      %2520 = vmatprep.mubr.f32.mxu0 0.0
      %2521 = vmatmul.mubr.f32.gmra.mrb[0].mxu0 %v2425
      %v2522 = vpop.f32.mrb[0].mxu0
      %v2523 = vadd.f32 0.0, %v2522
      %v2524 = vpop.f32.mrb[0].mxu0
      %2525 = vmatprep.mubr.f32.mxu0 0.0
      %2526 = vmatmul.mubr.f32.gmra.mrb[0].mxu0 %v2428
      %v2527 = vpop.f32.mrb[0].mxu0
      %v2528 = vadd.f32 0.0, %v2527
      %v2529 = vpop.f32.mrb[0].mxu0
      %2530 = vmatprep.mubr.f32.mxu0 0.0
      %2531 = vmatmul.mubr.f32.gmra.mrb[0].mxu0 %v2431
      %v2532 = vpop.f32.mrb[0].mxu0
      %v2533 = vadd.f32 0.0, %v2532
      %v2534 = vpop.f32.mrb[0].mxu0
      %2535 = vmatprep.mubr.f32.mxu0 0.0
      %2536 = vmatmul.mubr.f32.gmra.mrb[0].mxu0 %v2434
      %v2537 = vpop.f32.mrb[0].mxu0
      %v2538 = vadd.f32 0.0, %v2537
      %v2539 = vpop.f32.mrb[0].mxu0
      %2540 = vdwg.mxu0
      %v2541 = vadd.f32 %v2329, %v2503
      %v2542 = vadd.f32 %v2330, %v2508
      %v2543 = vadd.f32 %v2331, %v2513
      %v2544 = vadd.f32 %v2332, %v2518
      %v2545 = vadd.f32 %v2333, %v2523
      %v2546 = vadd.f32 %v2334, %v2528
      %v2547 = vadd.f32 %v2335, %v2533
      %v2548 = vadd.f32 %v2336, %v2538
      %s2549 = sadd.s32 %s414, 17
      %s2550 = scalar_lea.vmem %s0, %s2549
      %v2551 = vld [vmem:[%s2550] sm:$0xff]
      %v2552 = vld [vmem:[%s2550 + $0x8] sm:$0xff]
      %v2553 = vld [vmem:[%s2550 + $0x10] sm:$0xff]
      %v2554 = vld [vmem:[%s2550 + $0x18] sm:$0xff]
      %v2555 = vld [vmem:[%s2550 + $0x20] sm:$0xff]
      %v2556 = vld [vmem:[%s2550 + $0x28] sm:$0xff]
      %v2557 = vld [vmem:[%s2550 + $0x30] sm:$0xff]
      %v2558 = vld [vmem:[%s2550 + $0x38] sm:$0xff]
      %v2559 = vmul.f32 %v2551, %v438
      %v2560 = vmul.f32 %v2552, %v438
      %v2561 = vmul.f32 %v2553, %v438
      %v2562 = vmul.f32 %v2554, %v438
      %v2563 = vmul.f32 %v2555, %v438
      %v2564 = vmul.f32 %v2556, %v438
      %v2565 = vmul.f32 %v2557, %v438
      %v2566 = vmul.f32 %v2558, %v438
      %v2567 = vadd.f32 %v2559, %v452
      %v2568 = vadd.f32 %v2560, %v452
      %v2569 = vadd.f32 %v2561, %v452
      %v2570 = vadd.f32 %v2562, %v452
      %v2571 = vadd.f32 %v2563, %v452
      %v2572 = vadd.f32 %v2564, %v452
      %v2573 = vadd.f32 %v2565, %v452
      %v2574 = vadd.f32 %v2566, %v452
      %v2575 = vmax.f32 %v2567, 0.0
      %v2576 = vmax.f32 %v2568, 0.0
      %v2577 = vmax.f32 %v2569, 0.0
      %v2578 = vmax.f32 %v2570, 0.0
      %v2579 = vmax.f32 %v2571, 0.0
      %v2580 = vmax.f32 %v2572, 0.0
      %v2581 = vmax.f32 %v2573, 0.0
      %v2582 = vmax.f32 %v2574, 0.0
      %2583 = vset.pattern.permute.xlu0 10
      %2584 = vperm.xlu0 %2583, %v417
      %v2585 = vpop.permute.xlu0 %2584
      %2587 = vset.pattern.permute.xlu0 10
      %2588 = vperm.xlu0 %2587, %v418
      %v2589 = vpop.permute.xlu0 %2588
      %2591 = vset.pattern.permute.xlu0 10
      %2592 = vperm.xlu0 %2591, %v419
      %v2593 = vpop.permute.xlu0 %2592
      %2595 = vset.pattern.permute.xlu0 10
      %2596 = vperm.xlu0 %2595, %v420
      %v2597 = vpop.permute.xlu0 %2596
      %2599 = vset.pattern.permute.xlu0 10
      %2600 = vperm.xlu0 %2599, %v421
      %v2601 = vpop.permute.xlu0 %2600
      %2603 = vset.pattern.permute.xlu0 10
      %2604 = vperm.xlu0 %2603, %v422
      %v2605 = vpop.permute.xlu0 %2604
      %2607 = vset.pattern.permute.xlu0 10
      %2608 = vperm.xlu0 %2607, %v423
      %v2609 = vpop.permute.xlu0 %2608
      %2611 = vset.pattern.permute.xlu0 10
      %2612 = vperm.xlu0 %2611, %v424
      %v2613 = vpop.permute.xlu0 %2612
      %v2615 = vmul.f32 %v2575, %v2585
      %v2616 = vmul.f32 %v2576, %v2589
      %v2617 = vmul.f32 %v2577, %v2593
      %v2618 = vmul.f32 %v2578, %v2597
      %v2619 = vmul.f32 %v2579, %v2601
      %v2620 = vmul.f32 %v2580, %v2605
      %v2621 = vmul.f32 %v2581, %v2609
      %v2622 = vmul.f32 %v2582, %v2613
      %v2623 = vld [vmem:[%s1 + $0x50] sm:$0xff]
      %v2625 = vsel %vm594, %v2615, 0
      %v2628 = vsel %vm594, %v2616, 0
      %v2631 = vsel %vm594, %v2617, 0
      %v2634 = vsel %vm594, %v2618, 0
      %v2637 = vsel %vm594, %v2619, 0
      %v2640 = vsel %vm594, %v2620, 0
      %v2643 = vsel %vm594, %v2621, 0
      %v2646 = vsel %vm594, %v2622, 0
      %2648 = vmatprep.subr.mxu0 0.0
      %2649 = vmatpush1.msra.mxu0 %v2623
      %2650 = vmatprep.subr.mxu0 0.0
      %2651 = vmatpush1.msra.mxu0 0.0
      %2652 = vmatprep.subr.mxu0 0.0
      %2653 = vmatpush1.msra.mxu0 0.0
      %2654 = vmatprep.subr.mxu0 0.0
      %2655 = vmatpush1.msra.mxu0 0.0
      %2656 = vmatprep.subr.mxu0 0.0
      %2657 = vmatpush1.msra.mxu0 0.0
      %2658 = vmatprep.subr.mxu0 0.0
      %2659 = vmatpush1.msra.mxu0 0.0
      %2660 = vmatprep.subr.mxu0 0.0
      %2661 = vmatpush1.msra.mxu0 0.0
      %2662 = vmatprep.subr.mxu0 0.0
      %2663 = vmatpush1.msra.mxu0 0.0
      %2664 = vmatprep.subr.mxu0 0.0
      %2665 = vmatpush1.msra.mxu0 0.0
      %2666 = vmatprep.subr.mxu0 0.0
      %2667 = vmatpush1.msra.mxu0 0.0
      %2668 = vmatprep.subr.mxu0 0.0
      %2669 = vmatpush1.msra.mxu0 0.0
      %2670 = vmatprep.subr.mxu0 0.0
      %2671 = vmatpush1.msra.mxu0 0.0
      %2672 = vmatprep.subr.mxu0 0.0
      %2673 = vmatpush1.msra.mxu0 0.0
      %2674 = vmatprep.subr.mxu0 0.0
      %2675 = vmatpush1.msra.mxu0 0.0
      %2676 = vmatprep.subr.mxu0 0.0
      %2677 = vmatpush1.msra.mxu0 0.0
      %2678 = vmatprep.subr.mxu0 0.0
      %2679 = vmatpush1.msra.mxu0 0.0
      %2680 = vmatprep.subr.mxu0 0.0
      %2681 = vmatpush1.msra.mxu0 0.0
      %2682 = vmatprep.subr.mxu0 0.0
      %2683 = vmatpush1.msra.mxu0 0.0
      %2684 = vmatprep.subr.mxu0 0.0
      %2685 = vmatpush1.msra.mxu0 0.0
      %2686 = vmatprep.subr.mxu0 0.0
      %2687 = vmatpush1.msra.mxu0 0.0
      %2688 = vmatprep.subr.mxu0 0.0
      %2689 = vmatpush1.msra.mxu0 0.0
      %2690 = vmatprep.subr.mxu0 0.0
      %2691 = vmatpush1.msra.mxu0 0.0
      %2692 = vmatprep.subr.mxu0 0.0
      %2693 = vmatpush1.msra.mxu0 0.0
      %2694 = vmatprep.subr.mxu0 0.0
      %2695 = vmatpush1.msra.mxu0 0.0
      %2696 = vmatprep.subr.mxu0 0.0
      %2697 = vmatpush1.msra.mxu0 0.0
      %2698 = vmatprep.subr.mxu0 0.0
      %2699 = vmatpush1.msra.mxu0 0.0
      %2700 = vmatprep.subr.mxu0 0.0
      %2701 = vmatpush1.msra.mxu0 0.0
      %2702 = vmatprep.subr.mxu0 0.0
      %2703 = vmatpush1.msra.mxu0 0.0
      %2704 = vmatprep.subr.mxu0 0.0
      %2705 = vmatpush1.msra.mxu0 0.0
      %2706 = vmatprep.subr.mxu0 0.0
      %2707 = vmatpush1.msra.mxu0 0.0
      %2708 = vmatprep.subr.mxu0 0.0
      %2709 = vmatpush1.msra.mxu0 0.0
      %2710 = vmatprep.subr.mxu0 0.0
      %2711 = vmatpush1.msra.mxu0 0.0
      %2712 = vmatprep.mubr.f32.mxu0 0.0
      %2713 = vmatmul.mubr.f32.gmra.mrb[0].mxu0 %v2625
      %v2714 = vpop.f32.mrb[0].mxu0
      %v2715 = vadd.f32 0.0, %v2714
      %v2716 = vpop.f32.mrb[0].mxu0
      %2717 = vmatprep.mubr.f32.mxu0 0.0
      %2718 = vmatmul.mubr.f32.gmra.mrb[0].mxu0 %v2628
      %v2719 = vpop.f32.mrb[0].mxu0
      %v2720 = vadd.f32 0.0, %v2719
      %v2721 = vpop.f32.mrb[0].mxu0
      %2722 = vmatprep.mubr.f32.mxu0 0.0
      %2723 = vmatmul.mubr.f32.gmra.mrb[0].mxu0 %v2631
      %v2724 = vpop.f32.mrb[0].mxu0
      %v2725 = vadd.f32 0.0, %v2724
      %v2726 = vpop.f32.mrb[0].mxu0
      %2727 = vmatprep.mubr.f32.mxu0 0.0
      %2728 = vmatmul.mubr.f32.gmra.mrb[0].mxu0 %v2634
      %v2729 = vpop.f32.mrb[0].mxu0
      %v2730 = vadd.f32 0.0, %v2729
      %v2731 = vpop.f32.mrb[0].mxu0
      %2732 = vmatprep.mubr.f32.mxu0 0.0
      %2733 = vmatmul.mubr.f32.gmra.mrb[0].mxu0 %v2637
      %v2734 = vpop.f32.mrb[0].mxu0
      %v2735 = vadd.f32 0.0, %v2734
      %v2736 = vpop.f32.mrb[0].mxu0
      %2737 = vmatprep.mubr.f32.mxu0 0.0
      %2738 = vmatmul.mubr.f32.gmra.mrb[0].mxu0 %v2640
      %v2739 = vpop.f32.mrb[0].mxu0
      %v2740 = vadd.f32 0.0, %v2739
      %v2741 = vpop.f32.mrb[0].mxu0
      %2742 = vmatprep.mubr.f32.mxu0 0.0
      %2743 = vmatmul.mubr.f32.gmra.mrb[0].mxu0 %v2643
      %v2744 = vpop.f32.mrb[0].mxu0
      %v2745 = vadd.f32 0.0, %v2744
      %v2746 = vpop.f32.mrb[0].mxu0
      %2747 = vmatprep.mubr.f32.mxu0 0.0
      %2748 = vmatmul.mubr.f32.gmra.mrb[0].mxu0 %v2646
      %v2749 = vpop.f32.mrb[0].mxu0
      %v2750 = vadd.f32 0.0, %v2749
      %v2751 = vpop.f32.mrb[0].mxu0
      %2752 = vdwg.mxu0
      %v2753 = vadd.f32 %v2541, %v2715
      %v2754 = vadd.f32 %v2542, %v2720
      %v2755 = vadd.f32 %v2543, %v2725
      %v2756 = vadd.f32 %v2544, %v2730
      %v2757 = vadd.f32 %v2545, %v2735
      %v2758 = vadd.f32 %v2546, %v2740
      %v2759 = vadd.f32 %v2547, %v2745
      %v2760 = vadd.f32 %v2548, %v2750
      %s2761 = sadd.s32 %s414, 18
      %s2762 = scalar_lea.vmem %s0, %s2761
      %v2763 = vld [vmem:[%s2762] sm:$0xff]
      %v2764 = vld [vmem:[%s2762 + $0x8] sm:$0xff]
      %v2765 = vld [vmem:[%s2762 + $0x10] sm:$0xff]
      %v2766 = vld [vmem:[%s2762 + $0x18] sm:$0xff]
      %v2767 = vld [vmem:[%s2762 + $0x20] sm:$0xff]
      %v2768 = vld [vmem:[%s2762 + $0x28] sm:$0xff]
      %v2769 = vld [vmem:[%s2762 + $0x30] sm:$0xff]
      %v2770 = vld [vmem:[%s2762 + $0x38] sm:$0xff]
      %v2771 = vmul.f32 %v2763, %v438
      %v2772 = vmul.f32 %v2764, %v438
      %v2773 = vmul.f32 %v2765, %v438
      %v2774 = vmul.f32 %v2766, %v438
      %v2775 = vmul.f32 %v2767, %v438
      %v2776 = vmul.f32 %v2768, %v438
      %v2777 = vmul.f32 %v2769, %v438
      %v2778 = vmul.f32 %v2770, %v438
      %v2779 = vadd.f32 %v2771, %v452
      %v2780 = vadd.f32 %v2772, %v452
      %v2781 = vadd.f32 %v2773, %v452
      %v2782 = vadd.f32 %v2774, %v452
      %v2783 = vadd.f32 %v2775, %v452
      %v2784 = vadd.f32 %v2776, %v452
      %v2785 = vadd.f32 %v2777, %v452
      %v2786 = vadd.f32 %v2778, %v452
      %v2787 = vmax.f32 %v2779, 0.0
      %v2788 = vmax.f32 %v2780, 0.0
      %v2789 = vmax.f32 %v2781, 0.0
      %v2790 = vmax.f32 %v2782, 0.0
      %v2791 = vmax.f32 %v2783, 0.0
      %v2792 = vmax.f32 %v2784, 0.0
      %v2793 = vmax.f32 %v2785, 0.0
      %v2794 = vmax.f32 %v2786, 0.0
      %2795 = vset.pattern.permute.xlu0 11
      %2796 = vperm.xlu0 %2795, %v417
      %v2797 = vpop.permute.xlu0 %2796
      %2799 = vset.pattern.permute.xlu0 11
      %2800 = vperm.xlu0 %2799, %v418
      %v2801 = vpop.permute.xlu0 %2800
      %2803 = vset.pattern.permute.xlu0 11
      %2804 = vperm.xlu0 %2803, %v419
      %v2805 = vpop.permute.xlu0 %2804
      %2807 = vset.pattern.permute.xlu0 11
      %2808 = vperm.xlu0 %2807, %v420
      %v2809 = vpop.permute.xlu0 %2808
      %2811 = vset.pattern.permute.xlu0 11
      %2812 = vperm.xlu0 %2811, %v421
      %v2813 = vpop.permute.xlu0 %2812
      %2815 = vset.pattern.permute.xlu0 11
      %2816 = vperm.xlu0 %2815, %v422
      %v2817 = vpop.permute.xlu0 %2816
      %2819 = vset.pattern.permute.xlu0 11
      %2820 = vperm.xlu0 %2819, %v423
      %v2821 = vpop.permute.xlu0 %2820
      %2823 = vset.pattern.permute.xlu0 11
      %2824 = vperm.xlu0 %2823, %v424
      %v2825 = vpop.permute.xlu0 %2824
      %v2827 = vmul.f32 %v2787, %v2797
      %v2828 = vmul.f32 %v2788, %v2801
      %v2829 = vmul.f32 %v2789, %v2805
      %v2830 = vmul.f32 %v2790, %v2809
      %v2831 = vmul.f32 %v2791, %v2813
      %v2832 = vmul.f32 %v2792, %v2817
      %v2833 = vmul.f32 %v2793, %v2821
      %v2834 = vmul.f32 %v2794, %v2825
      %v2835 = vld [vmem:[%s1 + $0x58] sm:$0xff]
      %v2837 = vsel %vm594, %v2827, 0
      %v2840 = vsel %vm594, %v2828, 0
      %v2843 = vsel %vm594, %v2829, 0
      %v2846 = vsel %vm594, %v2830, 0
      %v2849 = vsel %vm594, %v2831, 0
      %v2852 = vsel %vm594, %v2832, 0
      %v2855 = vsel %vm594, %v2833, 0
      %v2858 = vsel %vm594, %v2834, 0
      %2860 = vmatprep.subr.mxu0 0.0
      %2861 = vmatpush1.msra.mxu0 %v2835
      %2862 = vmatprep.subr.mxu0 0.0
      %2863 = vmatpush1.msra.mxu0 0.0
      %2864 = vmatprep.subr.mxu0 0.0
      %2865 = vmatpush1.msra.mxu0 0.0
      %2866 = vmatprep.subr.mxu0 0.0
      %2867 = vmatpush1.msra.mxu0 0.0
      %2868 = vmatprep.subr.mxu0 0.0
      %2869 = vmatpush1.msra.mxu0 0.0
      %2870 = vmatprep.subr.mxu0 0.0
      %2871 = vmatpush1.msra.mxu0 0.0
      %2872 = vmatprep.subr.mxu0 0.0
      %2873 = vmatpush1.msra.mxu0 0.0
      %2874 = vmatprep.subr.mxu0 0.0
      %2875 = vmatpush1.msra.mxu0 0.0
      %2876 = vmatprep.subr.mxu0 0.0
      %2877 = vmatpush1.msra.mxu0 0.0
      %2878 = vmatprep.subr.mxu0 0.0
      %2879 = vmatpush1.msra.mxu0 0.0
      %2880 = vmatprep.subr.mxu0 0.0
      %2881 = vmatpush1.msra.mxu0 0.0
      %2882 = vmatprep.subr.mxu0 0.0
      %2883 = vmatpush1.msra.mxu0 0.0
      %2884 = vmatprep.subr.mxu0 0.0
      %2885 = vmatpush1.msra.mxu0 0.0
      %2886 = vmatprep.subr.mxu0 0.0
      %2887 = vmatpush1.msra.mxu0 0.0
      %2888 = vmatprep.subr.mxu0 0.0
      %2889 = vmatpush1.msra.mxu0 0.0
      %2890 = vmatprep.subr.mxu0 0.0
      %2891 = vmatpush1.msra.mxu0 0.0
      %2892 = vmatprep.subr.mxu0 0.0
      %2893 = vmatpush1.msra.mxu0 0.0
      %2894 = vmatprep.subr.mxu0 0.0
      %2895 = vmatpush1.msra.mxu0 0.0
      %2896 = vmatprep.subr.mxu0 0.0
      %2897 = vmatpush1.msra.mxu0 0.0
      %2898 = vmatprep.subr.mxu0 0.0
      %2899 = vmatpush1.msra.mxu0 0.0
      %2900 = vmatprep.subr.mxu0 0.0
      %2901 = vmatpush1.msra.mxu0 0.0
      %2902 = vmatprep.subr.mxu0 0.0
      %2903 = vmatpush1.msra.mxu0 0.0
      %2904 = vmatprep.subr.mxu0 0.0
      %2905 = vmatpush1.msra.mxu0 0.0
      %2906 = vmatprep.subr.mxu0 0.0
      %2907 = vmatpush1.msra.mxu0 0.0
      %2908 = vmatprep.subr.mxu0 0.0
      %2909 = vmatpush1.msra.mxu0 0.0
      %2910 = vmatprep.subr.mxu0 0.0
      %2911 = vmatpush1.msra.mxu0 0.0
      %2912 = vmatprep.subr.mxu0 0.0
      %2913 = vmatpush1.msra.mxu0 0.0
      %2914 = vmatprep.subr.mxu0 0.0
      %2915 = vmatpush1.msra.mxu0 0.0
      %2916 = vmatprep.subr.mxu0 0.0
      %2917 = vmatpush1.msra.mxu0 0.0
      %2918 = vmatprep.subr.mxu0 0.0
      %2919 = vmatpush1.msra.mxu0 0.0
      %2920 = vmatprep.subr.mxu0 0.0
      %2921 = vmatpush1.msra.mxu0 0.0
      %2922 = vmatprep.subr.mxu0 0.0
      %2923 = vmatpush1.msra.mxu0 0.0
      %2924 = vmatprep.mubr.f32.mxu0 0.0
      %2925 = vmatmul.mubr.f32.gmra.mrb[0].mxu0 %v2837
      %v2926 = vpop.f32.mrb[0].mxu0
      %v2927 = vadd.f32 0.0, %v2926
      %v2928 = vpop.f32.mrb[0].mxu0
      %2929 = vmatprep.mubr.f32.mxu0 0.0
      %2930 = vmatmul.mubr.f32.gmra.mrb[0].mxu0 %v2840
      %v2931 = vpop.f32.mrb[0].mxu0
      %v2932 = vadd.f32 0.0, %v2931
      %v2933 = vpop.f32.mrb[0].mxu0
      %2934 = vmatprep.mubr.f32.mxu0 0.0
      %2935 = vmatmul.mubr.f32.gmra.mrb[0].mxu0 %v2843
      %v2936 = vpop.f32.mrb[0].mxu0
      %v2937 = vadd.f32 0.0, %v2936
      %v2938 = vpop.f32.mrb[0].mxu0
      %2939 = vmatprep.mubr.f32.mxu0 0.0
      %2940 = vmatmul.mubr.f32.gmra.mrb[0].mxu0 %v2846
      %v2941 = vpop.f32.mrb[0].mxu0
      %v2942 = vadd.f32 0.0, %v2941
      %v2943 = vpop.f32.mrb[0].mxu0
      %2944 = vmatprep.mubr.f32.mxu0 0.0
      %2945 = vmatmul.mubr.f32.gmra.mrb[0].mxu0 %v2849
      %v2946 = vpop.f32.mrb[0].mxu0
      %v2947 = vadd.f32 0.0, %v2946
      %v2948 = vpop.f32.mrb[0].mxu0
      %2949 = vmatprep.mubr.f32.mxu0 0.0
      %2950 = vmatmul.mubr.f32.gmra.mrb[0].mxu0 %v2852
      %v2951 = vpop.f32.mrb[0].mxu0
      %v2952 = vadd.f32 0.0, %v2951
      %v2953 = vpop.f32.mrb[0].mxu0
      %2954 = vmatprep.mubr.f32.mxu0 0.0
      %2955 = vmatmul.mubr.f32.gmra.mrb[0].mxu0 %v2855
      %v2956 = vpop.f32.mrb[0].mxu0
      %v2957 = vadd.f32 0.0, %v2956
      %v2958 = vpop.f32.mrb[0].mxu0
      %2959 = vmatprep.mubr.f32.mxu0 0.0
      %2960 = vmatmul.mubr.f32.gmra.mrb[0].mxu0 %v2858
      %v2961 = vpop.f32.mrb[0].mxu0
      %v2962 = vadd.f32 0.0, %v2961
      %v2963 = vpop.f32.mrb[0].mxu0
      %2964 = vdwg.mxu0
      %v2965 = vadd.f32 %v2753, %v2927
      %v2966 = vadd.f32 %v2754, %v2932
      %v2967 = vadd.f32 %v2755, %v2937
      %v2968 = vadd.f32 %v2756, %v2942
      %v2969 = vadd.f32 %v2757, %v2947
      %v2970 = vadd.f32 %v2758, %v2952
      %v2971 = vadd.f32 %v2759, %v2957
      %v2972 = vadd.f32 %v2760, %v2962
      %s2973 = sadd.s32 %s414, 20
      %s2974 = scalar_lea.vmem %s0, %s2973
      %v2975 = vld [vmem:[%s2974] sm:$0xff]
      %v2976 = vld [vmem:[%s2974 + $0x8] sm:$0xff]
      %v2977 = vld [vmem:[%s2974 + $0x10] sm:$0xff]
      %v2978 = vld [vmem:[%s2974 + $0x18] sm:$0xff]
      %v2979 = vld [vmem:[%s2974 + $0x20] sm:$0xff]
      %v2980 = vld [vmem:[%s2974 + $0x28] sm:$0xff]
      %v2981 = vld [vmem:[%s2974 + $0x30] sm:$0xff]
      %v2982 = vld [vmem:[%s2974 + $0x38] sm:$0xff]
      %v2983 = vmul.f32 %v2975, %v438
      %v2984 = vmul.f32 %v2976, %v438
      %v2985 = vmul.f32 %v2977, %v438
      %v2986 = vmul.f32 %v2978, %v438
      %v2987 = vmul.f32 %v2979, %v438
      %v2988 = vmul.f32 %v2980, %v438
      %v2989 = vmul.f32 %v2981, %v438
      %v2990 = vmul.f32 %v2982, %v438
      %v2991 = vadd.f32 %v2983, %v452
      %v2992 = vadd.f32 %v2984, %v452
      %v2993 = vadd.f32 %v2985, %v452
      %v2994 = vadd.f32 %v2986, %v452
      %v2995 = vadd.f32 %v2987, %v452
      %v2996 = vadd.f32 %v2988, %v452
      %v2997 = vadd.f32 %v2989, %v452
      %v2998 = vadd.f32 %v2990, %v452
      %v2999 = vmax.f32 %v2991, 0.0
      %v3000 = vmax.f32 %v2992, 0.0
      %v3001 = vmax.f32 %v2993, 0.0
      %v3002 = vmax.f32 %v2994, 0.0
      %v3003 = vmax.f32 %v2995, 0.0
      %v3004 = vmax.f32 %v2996, 0.0
      %v3005 = vmax.f32 %v2997, 0.0
      %v3006 = vmax.f32 %v2998, 0.0
      %3007 = vset.pattern.permute.xlu0 12
      %3008 = vperm.xlu0 %3007, %v417
      %v3009 = vpop.permute.xlu0 %3008
      %3011 = vset.pattern.permute.xlu0 12
      %3012 = vperm.xlu0 %3011, %v418
      %v3013 = vpop.permute.xlu0 %3012
      %3015 = vset.pattern.permute.xlu0 12
      %3016 = vperm.xlu0 %3015, %v419
      %v3017 = vpop.permute.xlu0 %3016
      %3019 = vset.pattern.permute.xlu0 12
      %3020 = vperm.xlu0 %3019, %v420
      %v3021 = vpop.permute.xlu0 %3020
      %3023 = vset.pattern.permute.xlu0 12
      %3024 = vperm.xlu0 %3023, %v421
      %v3025 = vpop.permute.xlu0 %3024
      %3027 = vset.pattern.permute.xlu0 12
      %3028 = vperm.xlu0 %3027, %v422
      %v3029 = vpop.permute.xlu0 %3028
      %3031 = vset.pattern.permute.xlu0 12
      %3032 = vperm.xlu0 %3031, %v423
      %v3033 = vpop.permute.xlu0 %3032
      %3035 = vset.pattern.permute.xlu0 12
      %3036 = vperm.xlu0 %3035, %v424
      %v3037 = vpop.permute.xlu0 %3036
      %v3039 = vmul.f32 %v2999, %v3009
      %v3040 = vmul.f32 %v3000, %v3013
      %v3041 = vmul.f32 %v3001, %v3017
      %v3042 = vmul.f32 %v3002, %v3021
      %v3043 = vmul.f32 %v3003, %v3025
      %v3044 = vmul.f32 %v3004, %v3029
      %v3045 = vmul.f32 %v3005, %v3033
      %v3046 = vmul.f32 %v3006, %v3037
      %v3047 = vld [vmem:[%s1 + $0x60] sm:$0xff]
      %v3049 = vsel %vm594, %v3039, 0
      %v3052 = vsel %vm594, %v3040, 0
      %v3055 = vsel %vm594, %v3041, 0
      %v3058 = vsel %vm594, %v3042, 0
      %v3061 = vsel %vm594, %v3043, 0
      %v3064 = vsel %vm594, %v3044, 0
      %v3067 = vsel %vm594, %v3045, 0
      %v3070 = vsel %vm594, %v3046, 0
      %3072 = vmatprep.subr.mxu0 0.0
      %3073 = vmatpush1.msra.mxu0 %v3047
      %3074 = vmatprep.subr.mxu0 0.0
      %3075 = vmatpush1.msra.mxu0 0.0
      %3076 = vmatprep.subr.mxu0 0.0
      %3077 = vmatpush1.msra.mxu0 0.0
      %3078 = vmatprep.subr.mxu0 0.0
      %3079 = vmatpush1.msra.mxu0 0.0
      %3080 = vmatprep.subr.mxu0 0.0
      %3081 = vmatpush1.msra.mxu0 0.0
      %3082 = vmatprep.subr.mxu0 0.0
      %3083 = vmatpush1.msra.mxu0 0.0
      %3084 = vmatprep.subr.mxu0 0.0
      %3085 = vmatpush1.msra.mxu0 0.0
      %3086 = vmatprep.subr.mxu0 0.0
      %3087 = vmatpush1.msra.mxu0 0.0
      %3088 = vmatprep.subr.mxu0 0.0
      %3089 = vmatpush1.msra.mxu0 0.0
      %3090 = vmatprep.subr.mxu0 0.0
      %3091 = vmatpush1.msra.mxu0 0.0
      %3092 = vmatprep.subr.mxu0 0.0
      %3093 = vmatpush1.msra.mxu0 0.0
      %3094 = vmatprep.subr.mxu0 0.0
      %3095 = vmatpush1.msra.mxu0 0.0
      %3096 = vmatprep.subr.mxu0 0.0
      %3097 = vmatpush1.msra.mxu0 0.0
      %3098 = vmatprep.subr.mxu0 0.0
      %3099 = vmatpush1.msra.mxu0 0.0
      %3100 = vmatprep.subr.mxu0 0.0
      %3101 = vmatpush1.msra.mxu0 0.0
      %3102 = vmatprep.subr.mxu0 0.0
      %3103 = vmatpush1.msra.mxu0 0.0
      %3104 = vmatprep.subr.mxu0 0.0
      %3105 = vmatpush1.msra.mxu0 0.0
      %3106 = vmatprep.subr.mxu0 0.0
      %3107 = vmatpush1.msra.mxu0 0.0
      %3108 = vmatprep.subr.mxu0 0.0
      %3109 = vmatpush1.msra.mxu0 0.0
      %3110 = vmatprep.subr.mxu0 0.0
      %3111 = vmatpush1.msra.mxu0 0.0
      %3112 = vmatprep.subr.mxu0 0.0
      %3113 = vmatpush1.msra.mxu0 0.0
      %3114 = vmatprep.subr.mxu0 0.0
      %3115 = vmatpush1.msra.mxu0 0.0
      %3116 = vmatprep.subr.mxu0 0.0
      %3117 = vmatpush1.msra.mxu0 0.0
      %3118 = vmatprep.subr.mxu0 0.0
      %3119 = vmatpush1.msra.mxu0 0.0
      %3120 = vmatprep.subr.mxu0 0.0
      %3121 = vmatpush1.msra.mxu0 0.0
      %3122 = vmatprep.subr.mxu0 0.0
      %3123 = vmatpush1.msra.mxu0 0.0
      %3124 = vmatprep.subr.mxu0 0.0
      %3125 = vmatpush1.msra.mxu0 0.0
      %3126 = vmatprep.subr.mxu0 0.0
      %3127 = vmatpush1.msra.mxu0 0.0
      %3128 = vmatprep.subr.mxu0 0.0
      %3129 = vmatpush1.msra.mxu0 0.0
      %3130 = vmatprep.subr.mxu0 0.0
      %3131 = vmatpush1.msra.mxu0 0.0
      %3132 = vmatprep.subr.mxu0 0.0
      %3133 = vmatpush1.msra.mxu0 0.0
      %3134 = vmatprep.subr.mxu0 0.0
      %3135 = vmatpush1.msra.mxu0 0.0
      %3136 = vmatprep.mubr.f32.mxu0 0.0
      %3137 = vmatmul.mubr.f32.gmra.mrb[0].mxu0 %v3049
      %v3138 = vpop.f32.mrb[0].mxu0
      %v3139 = vadd.f32 0.0, %v3138
      %v3140 = vpop.f32.mrb[0].mxu0
      %3141 = vmatprep.mubr.f32.mxu0 0.0
      %3142 = vmatmul.mubr.f32.gmra.mrb[0].mxu0 %v3052
      %v3143 = vpop.f32.mrb[0].mxu0
      %v3144 = vadd.f32 0.0, %v3143
      %v3145 = vpop.f32.mrb[0].mxu0
      %3146 = vmatprep.mubr.f32.mxu0 0.0
      %3147 = vmatmul.mubr.f32.gmra.mrb[0].mxu0 %v3055
      %v3148 = vpop.f32.mrb[0].mxu0
      %v3149 = vadd.f32 0.0, %v3148
      %v3150 = vpop.f32.mrb[0].mxu0
      %3151 = vmatprep.mubr.f32.mxu0 0.0
      %3152 = vmatmul.mubr.f32.gmra.mrb[0].mxu0 %v3058
      %v3153 = vpop.f32.mrb[0].mxu0
      %v3154 = vadd.f32 0.0, %v3153
      %v3155 = vpop.f32.mrb[0].mxu0
      %3156 = vmatprep.mubr.f32.mxu0 0.0
      %3157 = vmatmul.mubr.f32.gmra.mrb[0].mxu0 %v3061
      %v3158 = vpop.f32.mrb[0].mxu0
      %v3159 = vadd.f32 0.0, %v3158
      %v3160 = vpop.f32.mrb[0].mxu0
      %3161 = vmatprep.mubr.f32.mxu0 0.0
      %3162 = vmatmul.mubr.f32.gmra.mrb[0].mxu0 %v3064
      %v3163 = vpop.f32.mrb[0].mxu0
      %v3164 = vadd.f32 0.0, %v3163
      %v3165 = vpop.f32.mrb[0].mxu0
      %3166 = vmatprep.mubr.f32.mxu0 0.0
      %3167 = vmatmul.mubr.f32.gmra.mrb[0].mxu0 %v3067
      %v3168 = vpop.f32.mrb[0].mxu0
      %v3169 = vadd.f32 0.0, %v3168
      %v3170 = vpop.f32.mrb[0].mxu0
      %3171 = vmatprep.mubr.f32.mxu0 0.0
      %3172 = vmatmul.mubr.f32.gmra.mrb[0].mxu0 %v3070
      %v3173 = vpop.f32.mrb[0].mxu0
      %v3174 = vadd.f32 0.0, %v3173
      %v3175 = vpop.f32.mrb[0].mxu0
      %3176 = vdwg.mxu0
      %v3177 = vadd.f32 %v2965, %v3139
      %v3178 = vadd.f32 %v2966, %v3144
      %v3179 = vadd.f32 %v2967, %v3149
      %v3180 = vadd.f32 %v2968, %v3154
      %v3181 = vadd.f32 %v2969, %v3159
      %v3182 = vadd.f32 %v2970, %v3164
      %v3183 = vadd.f32 %v2971, %v3169
      %v3184 = vadd.f32 %v2972, %v3174
      %s3185 = sadd.s32 %s414, 21
      %s3186 = scalar_lea.vmem %s0, %s3185
      %v3187 = vld [vmem:[%s3186] sm:$0xff]
      %v3188 = vld [vmem:[%s3186 + $0x8] sm:$0xff]
      %v3189 = vld [vmem:[%s3186 + $0x10] sm:$0xff]
      %v3190 = vld [vmem:[%s3186 + $0x18] sm:$0xff]
      %v3191 = vld [vmem:[%s3186 + $0x20] sm:$0xff]
      %v3192 = vld [vmem:[%s3186 + $0x28] sm:$0xff]
      %v3193 = vld [vmem:[%s3186 + $0x30] sm:$0xff]
      %v3194 = vld [vmem:[%s3186 + $0x38] sm:$0xff]
      %v3195 = vmul.f32 %v3187, %v438
      %v3196 = vmul.f32 %v3188, %v438
      %v3197 = vmul.f32 %v3189, %v438
      %v3198 = vmul.f32 %v3190, %v438
      %v3199 = vmul.f32 %v3191, %v438
      %v3200 = vmul.f32 %v3192, %v438
      %v3201 = vmul.f32 %v3193, %v438
      %v3202 = vmul.f32 %v3194, %v438
      %v3203 = vadd.f32 %v3195, %v452
      %v3204 = vadd.f32 %v3196, %v452
      %v3205 = vadd.f32 %v3197, %v452
      %v3206 = vadd.f32 %v3198, %v452
      %v3207 = vadd.f32 %v3199, %v452
      %v3208 = vadd.f32 %v3200, %v452
      %v3209 = vadd.f32 %v3201, %v452
      %v3210 = vadd.f32 %v3202, %v452
      %v3211 = vmax.f32 %v3203, 0.0
      %v3212 = vmax.f32 %v3204, 0.0
      %v3213 = vmax.f32 %v3205, 0.0
      %v3214 = vmax.f32 %v3206, 0.0
      %v3215 = vmax.f32 %v3207, 0.0
      %v3216 = vmax.f32 %v3208, 0.0
      %v3217 = vmax.f32 %v3209, 0.0
      %v3218 = vmax.f32 %v3210, 0.0
      %3219 = vset.pattern.permute.xlu0 13
      %3220 = vperm.xlu0 %3219, %v417
      %v3221 = vpop.permute.xlu0 %3220
      %3223 = vset.pattern.permute.xlu0 13
      %3224 = vperm.xlu0 %3223, %v418
      %v3225 = vpop.permute.xlu0 %3224
      %3227 = vset.pattern.permute.xlu0 13
      %3228 = vperm.xlu0 %3227, %v419
      %v3229 = vpop.permute.xlu0 %3228
      %3231 = vset.pattern.permute.xlu0 13
      %3232 = vperm.xlu0 %3231, %v420
      %v3233 = vpop.permute.xlu0 %3232
      %3235 = vset.pattern.permute.xlu0 13
      %3236 = vperm.xlu0 %3235, %v421
      %v3237 = vpop.permute.xlu0 %3236
      %3239 = vset.pattern.permute.xlu0 13
      %3240 = vperm.xlu0 %3239, %v422
      %v3241 = vpop.permute.xlu0 %3240
      %3243 = vset.pattern.permute.xlu0 13
      %3244 = vperm.xlu0 %3243, %v423
      %v3245 = vpop.permute.xlu0 %3244
      %3247 = vset.pattern.permute.xlu0 13
      %3248 = vperm.xlu0 %3247, %v424
      %v3249 = vpop.permute.xlu0 %3248
      %v3251 = vmul.f32 %v3211, %v3221
      %v3252 = vmul.f32 %v3212, %v3225
      %v3253 = vmul.f32 %v3213, %v3229
      %v3254 = vmul.f32 %v3214, %v3233
      %v3255 = vmul.f32 %v3215, %v3237
      %v3256 = vmul.f32 %v3216, %v3241
      %v3257 = vmul.f32 %v3217, %v3245
      %v3258 = vmul.f32 %v3218, %v3249
      %v3259 = vld [vmem:[%s1 + $0x68] sm:$0xff]
      %v3261 = vsel %vm594, %v3251, 0
      %v3264 = vsel %vm594, %v3252, 0
      %v3267 = vsel %vm594, %v3253, 0
      %v3270 = vsel %vm594, %v3254, 0
      %v3273 = vsel %vm594, %v3255, 0
      %v3276 = vsel %vm594, %v3256, 0
      %v3279 = vsel %vm594, %v3257, 0
      %v3282 = vsel %vm594, %v3258, 0
      %3284 = vmatprep.subr.mxu0 0.0
      %3285 = vmatpush1.msra.mxu0 %v3259
      %3286 = vmatprep.subr.mxu0 0.0
      %3287 = vmatpush1.msra.mxu0 0.0
      %3288 = vmatprep.subr.mxu0 0.0
      %3289 = vmatpush1.msra.mxu0 0.0
      %3290 = vmatprep.subr.mxu0 0.0
      %3291 = vmatpush1.msra.mxu0 0.0
      %3292 = vmatprep.subr.mxu0 0.0
      %3293 = vmatpush1.msra.mxu0 0.0
      %3294 = vmatprep.subr.mxu0 0.0
      %3295 = vmatpush1.msra.mxu0 0.0
      %3296 = vmatprep.subr.mxu0 0.0
      %3297 = vmatpush1.msra.mxu0 0.0
      %3298 = vmatprep.subr.mxu0 0.0
      %3299 = vmatpush1.msra.mxu0 0.0
      %3300 = vmatprep.subr.mxu0 0.0
      %3301 = vmatpush1.msra.mxu0 0.0
      %3302 = vmatprep.subr.mxu0 0.0
      %3303 = vmatpush1.msra.mxu0 0.0
      %3304 = vmatprep.subr.mxu0 0.0
      %3305 = vmatpush1.msra.mxu0 0.0
      %3306 = vmatprep.subr.mxu0 0.0
      %3307 = vmatpush1.msra.mxu0 0.0
      %3308 = vmatprep.subr.mxu0 0.0
      %3309 = vmatpush1.msra.mxu0 0.0
      %3310 = vmatprep.subr.mxu0 0.0
      %3311 = vmatpush1.msra.mxu0 0.0
      %3312 = vmatprep.subr.mxu0 0.0
      %3313 = vmatpush1.msra.mxu0 0.0
      %3314 = vmatprep.subr.mxu0 0.0
      %3315 = vmatpush1.msra.mxu0 0.0
      %3316 = vmatprep.subr.mxu0 0.0
      %3317 = vmatpush1.msra.mxu0 0.0
      %3318 = vmatprep.subr.mxu0 0.0
      %3319 = vmatpush1.msra.mxu0 0.0
      %3320 = vmatprep.subr.mxu0 0.0
      %3321 = vmatpush1.msra.mxu0 0.0
      %3322 = vmatprep.subr.mxu0 0.0
      %3323 = vmatpush1.msra.mxu0 0.0
      %3324 = vmatprep.subr.mxu0 0.0
      %3325 = vmatpush1.msra.mxu0 0.0
      %3326 = vmatprep.subr.mxu0 0.0
      %3327 = vmatpush1.msra.mxu0 0.0
      %3328 = vmatprep.subr.mxu0 0.0
      %3329 = vmatpush1.msra.mxu0 0.0
      %3330 = vmatprep.subr.mxu0 0.0
      %3331 = vmatpush1.msra.mxu0 0.0
      %3332 = vmatprep.subr.mxu0 0.0
      %3333 = vmatpush1.msra.mxu0 0.0
      %3334 = vmatprep.subr.mxu0 0.0
      %3335 = vmatpush1.msra.mxu0 0.0
      %3336 = vmatprep.subr.mxu0 0.0
      %3337 = vmatpush1.msra.mxu0 0.0
      %3338 = vmatprep.subr.mxu0 0.0
      %3339 = vmatpush1.msra.mxu0 0.0
      %3340 = vmatprep.subr.mxu0 0.0
      %3341 = vmatpush1.msra.mxu0 0.0
      %3342 = vmatprep.subr.mxu0 0.0
      %3343 = vmatpush1.msra.mxu0 0.0
      %3344 = vmatprep.subr.mxu0 0.0
      %3345 = vmatpush1.msra.mxu0 0.0
      %3346 = vmatprep.subr.mxu0 0.0
      %3347 = vmatpush1.msra.mxu0 0.0
      %3348 = vmatprep.mubr.f32.mxu0 0.0
      %3349 = vmatmul.mubr.f32.gmra.mrb[0].mxu0 %v3261
      %v3350 = vpop.f32.mrb[0].mxu0
      %v3351 = vadd.f32 0.0, %v3350
      %v3352 = vpop.f32.mrb[0].mxu0
      %3353 = vmatprep.mubr.f32.mxu0 0.0
      %3354 = vmatmul.mubr.f32.gmra.mrb[0].mxu0 %v3264
      %v3355 = vpop.f32.mrb[0].mxu0
      %v3356 = vadd.f32 0.0, %v3355
      %v3357 = vpop.f32.mrb[0].mxu0
      %3358 = vmatprep.mubr.f32.mxu0 0.0
      %3359 = vmatmul.mubr.f32.gmra.mrb[0].mxu0 %v3267
      %v3360 = vpop.f32.mrb[0].mxu0
      %v3361 = vadd.f32 0.0, %v3360
      %v3362 = vpop.f32.mrb[0].mxu0
      %3363 = vmatprep.mubr.f32.mxu0 0.0
      %3364 = vmatmul.mubr.f32.gmra.mrb[0].mxu0 %v3270
      %v3365 = vpop.f32.mrb[0].mxu0
      %v3366 = vadd.f32 0.0, %v3365
      %v3367 = vpop.f32.mrb[0].mxu0
      %3368 = vmatprep.mubr.f32.mxu0 0.0
      %3369 = vmatmul.mubr.f32.gmra.mrb[0].mxu0 %v3273
      %v3370 = vpop.f32.mrb[0].mxu0
      %v3371 = vadd.f32 0.0, %v3370
      %v3372 = vpop.f32.mrb[0].mxu0
      %3373 = vmatprep.mubr.f32.mxu0 0.0
      %3374 = vmatmul.mubr.f32.gmra.mrb[0].mxu0 %v3276
      %v3375 = vpop.f32.mrb[0].mxu0
      %v3376 = vadd.f32 0.0, %v3375
      %v3377 = vpop.f32.mrb[0].mxu0
      %3378 = vmatprep.mubr.f32.mxu0 0.0
      %3379 = vmatmul.mubr.f32.gmra.mrb[0].mxu0 %v3279
      %v3380 = vpop.f32.mrb[0].mxu0
      %v3381 = vadd.f32 0.0, %v3380
      %v3382 = vpop.f32.mrb[0].mxu0
      %3383 = vmatprep.mubr.f32.mxu0 0.0
      %3384 = vmatmul.mubr.f32.gmra.mrb[0].mxu0 %v3282
      %v3385 = vpop.f32.mrb[0].mxu0
      %v3386 = vadd.f32 0.0, %v3385
      %v3387 = vpop.f32.mrb[0].mxu0
      %3388 = vdwg.mxu0
      %v3389 = vadd.f32 %v3177, %v3351
      %v3390 = vadd.f32 %v3178, %v3356
      %v3391 = vadd.f32 %v3179, %v3361
      %v3392 = vadd.f32 %v3180, %v3366
      %v3393 = vadd.f32 %v3181, %v3371
      %v3394 = vadd.f32 %v3182, %v3376
      %v3395 = vadd.f32 %v3183, %v3381
      %v3396 = vadd.f32 %v3184, %v3386
      %s3397 = sadd.s32 %s414, 22
      %s3398 = scalar_lea.vmem %s0, %s3397
      %v3399 = vld [vmem:[%s3398] sm:$0xff]
      %v3400 = vld [vmem:[%s3398 + $0x8] sm:$0xff]
      %v3401 = vld [vmem:[%s3398 + $0x10] sm:$0xff]
      %v3402 = vld [vmem:[%s3398 + $0x18] sm:$0xff]
      %v3403 = vld [vmem:[%s3398 + $0x20] sm:$0xff]
      %v3404 = vld [vmem:[%s3398 + $0x28] sm:$0xff]
      %v3405 = vld [vmem:[%s3398 + $0x30] sm:$0xff]
      %v3406 = vld [vmem:[%s3398 + $0x38] sm:$0xff]
      %v3407 = vmul.f32 %v3399, %v438
      %v3408 = vmul.f32 %v3400, %v438
      %v3409 = vmul.f32 %v3401, %v438
      %v3410 = vmul.f32 %v3402, %v438
      %v3411 = vmul.f32 %v3403, %v438
      %v3412 = vmul.f32 %v3404, %v438
      %v3413 = vmul.f32 %v3405, %v438
      %v3414 = vmul.f32 %v3406, %v438
      %v3415 = vadd.f32 %v3407, %v452
      %v3416 = vadd.f32 %v3408, %v452
      %v3417 = vadd.f32 %v3409, %v452
      %v3418 = vadd.f32 %v3410, %v452
      %v3419 = vadd.f32 %v3411, %v452
      %v3420 = vadd.f32 %v3412, %v452
      %v3421 = vadd.f32 %v3413, %v452
      %v3422 = vadd.f32 %v3414, %v452
      %v3423 = vmax.f32 %v3415, 0.0
      %v3424 = vmax.f32 %v3416, 0.0
      %v3425 = vmax.f32 %v3417, 0.0
      %v3426 = vmax.f32 %v3418, 0.0
      %v3427 = vmax.f32 %v3419, 0.0
      %v3428 = vmax.f32 %v3420, 0.0
      %v3429 = vmax.f32 %v3421, 0.0
      %v3430 = vmax.f32 %v3422, 0.0
      %3431 = vset.pattern.permute.xlu0 14
      %3432 = vperm.xlu0 %3431, %v417
      %v3433 = vpop.permute.xlu0 %3432
      %3435 = vset.pattern.permute.xlu0 14
      %3436 = vperm.xlu0 %3435, %v418
      %v3437 = vpop.permute.xlu0 %3436
      %3439 = vset.pattern.permute.xlu0 14
      %3440 = vperm.xlu0 %3439, %v419
      %v3441 = vpop.permute.xlu0 %3440
      %3443 = vset.pattern.permute.xlu0 14
      %3444 = vperm.xlu0 %3443, %v420
      %v3445 = vpop.permute.xlu0 %3444
      %3447 = vset.pattern.permute.xlu0 14
      %3448 = vperm.xlu0 %3447, %v421
      %v3449 = vpop.permute.xlu0 %3448
      %3451 = vset.pattern.permute.xlu0 14
      %3452 = vperm.xlu0 %3451, %v422
      %v3453 = vpop.permute.xlu0 %3452
      %3455 = vset.pattern.permute.xlu0 14
      %3456 = vperm.xlu0 %3455, %v423
      %v3457 = vpop.permute.xlu0 %3456
      %3459 = vset.pattern.permute.xlu0 14
      %3460 = vperm.xlu0 %3459, %v424
      %v3461 = vpop.permute.xlu0 %3460
      %v3463 = vmul.f32 %v3423, %v3433
      %v3464 = vmul.f32 %v3424, %v3437
      %v3465 = vmul.f32 %v3425, %v3441
      %v3466 = vmul.f32 %v3426, %v3445
      %v3467 = vmul.f32 %v3427, %v3449
      %v3468 = vmul.f32 %v3428, %v3453
      %v3469 = vmul.f32 %v3429, %v3457
      %v3470 = vmul.f32 %v3430, %v3461
      %v3471 = vld [vmem:[%s1 + $0x70] sm:$0xff]
      %v3473 = vsel %vm594, %v3463, 0
      %v3476 = vsel %vm594, %v3464, 0
      %v3479 = vsel %vm594, %v3465, 0
      %v3482 = vsel %vm594, %v3466, 0
      %v3485 = vsel %vm594, %v3467, 0
      %v3488 = vsel %vm594, %v3468, 0
      %v3491 = vsel %vm594, %v3469, 0
      %v3494 = vsel %vm594, %v3470, 0
      %3496 = vmatprep.subr.mxu0 0.0
      %3497 = vmatpush1.msra.mxu0 %v3471
      %3498 = vmatprep.subr.mxu0 0.0
      %3499 = vmatpush1.msra.mxu0 0.0
      %3500 = vmatprep.subr.mxu0 0.0
      %3501 = vmatpush1.msra.mxu0 0.0
      %3502 = vmatprep.subr.mxu0 0.0
      %3503 = vmatpush1.msra.mxu0 0.0
      %3504 = vmatprep.subr.mxu0 0.0
      %3505 = vmatpush1.msra.mxu0 0.0
      %3506 = vmatprep.subr.mxu0 0.0
      %3507 = vmatpush1.msra.mxu0 0.0
      %3508 = vmatprep.subr.mxu0 0.0
      %3509 = vmatpush1.msra.mxu0 0.0
      %3510 = vmatprep.subr.mxu0 0.0
      %3511 = vmatpush1.msra.mxu0 0.0
      %3512 = vmatprep.subr.mxu0 0.0
      %3513 = vmatpush1.msra.mxu0 0.0
      %3514 = vmatprep.subr.mxu0 0.0
      %3515 = vmatpush1.msra.mxu0 0.0
      %3516 = vmatprep.subr.mxu0 0.0
      %3517 = vmatpush1.msra.mxu0 0.0
      %3518 = vmatprep.subr.mxu0 0.0
      %3519 = vmatpush1.msra.mxu0 0.0
      %3520 = vmatprep.subr.mxu0 0.0
      %3521 = vmatpush1.msra.mxu0 0.0
      %3522 = vmatprep.subr.mxu0 0.0
      %3523 = vmatpush1.msra.mxu0 0.0
      %3524 = vmatprep.subr.mxu0 0.0
      %3525 = vmatpush1.msra.mxu0 0.0
      %3526 = vmatprep.subr.mxu0 0.0
      %3527 = vmatpush1.msra.mxu0 0.0
      %3528 = vmatprep.subr.mxu0 0.0
      %3529 = vmatpush1.msra.mxu0 0.0
      %3530 = vmatprep.subr.mxu0 0.0
      %3531 = vmatpush1.msra.mxu0 0.0
      %3532 = vmatprep.subr.mxu0 0.0
      %3533 = vmatpush1.msra.mxu0 0.0
      %3534 = vmatprep.subr.mxu0 0.0
      %3535 = vmatpush1.msra.mxu0 0.0
      %3536 = vmatprep.subr.mxu0 0.0
      %3537 = vmatpush1.msra.mxu0 0.0
      %3538 = vmatprep.subr.mxu0 0.0
      %3539 = vmatpush1.msra.mxu0 0.0
      %3540 = vmatprep.subr.mxu0 0.0
      %3541 = vmatpush1.msra.mxu0 0.0
      %3542 = vmatprep.subr.mxu0 0.0
      %3543 = vmatpush1.msra.mxu0 0.0
      %3544 = vmatprep.subr.mxu0 0.0
      %3545 = vmatpush1.msra.mxu0 0.0
      %3546 = vmatprep.subr.mxu0 0.0
      %3547 = vmatpush1.msra.mxu0 0.0
      %3548 = vmatprep.subr.mxu0 0.0
      %3549 = vmatpush1.msra.mxu0 0.0
      %3550 = vmatprep.subr.mxu0 0.0
      %3551 = vmatpush1.msra.mxu0 0.0
      %3552 = vmatprep.subr.mxu0 0.0
      %3553 = vmatpush1.msra.mxu0 0.0
      %3554 = vmatprep.subr.mxu0 0.0
      %3555 = vmatpush1.msra.mxu0 0.0
      %3556 = vmatprep.subr.mxu0 0.0
      %3557 = vmatpush1.msra.mxu0 0.0
      %3558 = vmatprep.subr.mxu0 0.0
      %3559 = vmatpush1.msra.mxu0 0.0
      %3560 = vmatprep.mubr.f32.mxu0 0.0
      %3561 = vmatmul.mubr.f32.gmra.mrb[0].mxu0 %v3473
      %v3562 = vpop.f32.mrb[0].mxu0
      %v3563 = vadd.f32 0.0, %v3562
      %v3564 = vpop.f32.mrb[0].mxu0
      %3565 = vmatprep.mubr.f32.mxu0 0.0
      %3566 = vmatmul.mubr.f32.gmra.mrb[0].mxu0 %v3476
      %v3567 = vpop.f32.mrb[0].mxu0
      %v3568 = vadd.f32 0.0, %v3567
      %v3569 = vpop.f32.mrb[0].mxu0
      %3570 = vmatprep.mubr.f32.mxu0 0.0
      %3571 = vmatmul.mubr.f32.gmra.mrb[0].mxu0 %v3479
      %v3572 = vpop.f32.mrb[0].mxu0
      %v3573 = vadd.f32 0.0, %v3572
      %v3574 = vpop.f32.mrb[0].mxu0
      %3575 = vmatprep.mubr.f32.mxu0 0.0
      %3576 = vmatmul.mubr.f32.gmra.mrb[0].mxu0 %v3482
      %v3577 = vpop.f32.mrb[0].mxu0
      %v3578 = vadd.f32 0.0, %v3577
      %v3579 = vpop.f32.mrb[0].mxu0
      %3580 = vmatprep.mubr.f32.mxu0 0.0
      %3581 = vmatmul.mubr.f32.gmra.mrb[0].mxu0 %v3485
      %v3582 = vpop.f32.mrb[0].mxu0
      %v3583 = vadd.f32 0.0, %v3582
      %v3584 = vpop.f32.mrb[0].mxu0
      %3585 = vmatprep.mubr.f32.mxu0 0.0
      %3586 = vmatmul.mubr.f32.gmra.mrb[0].mxu0 %v3488
      %v3587 = vpop.f32.mrb[0].mxu0
      %v3588 = vadd.f32 0.0, %v3587
      %v3589 = vpop.f32.mrb[0].mxu0
      %3590 = vmatprep.mubr.f32.mxu0 0.0
      %3591 = vmatmul.mubr.f32.gmra.mrb[0].mxu0 %v3491
      %v3592 = vpop.f32.mrb[0].mxu0
      %v3593 = vadd.f32 0.0, %v3592
      %v3594 = vpop.f32.mrb[0].mxu0
      %3595 = vmatprep.mubr.f32.mxu0 0.0
      %3596 = vmatmul.mubr.f32.gmra.mrb[0].mxu0 %v3494
      %v3597 = vpop.f32.mrb[0].mxu0
      %v3598 = vadd.f32 0.0, %v3597
      %v3599 = vpop.f32.mrb[0].mxu0
      %3600 = vdwg.mxu0
      %v3601 = vadd.f32 %v3389, %v3563
      %v3602 = vadd.f32 %v3390, %v3568
      %v3603 = vadd.f32 %v3391, %v3573
      %v3604 = vadd.f32 %v3392, %v3578
      %v3605 = vadd.f32 %v3393, %v3583
      %v3606 = vadd.f32 %v3394, %v3588
      %v3607 = vadd.f32 %v3395, %v3593
      %v3608 = vadd.f32 %v3396, %v3598
      %s3609 = sadd.s32 %s414, 24
      %s3610 = scalar_lea.vmem %s0, %s3609
      %v3611 = vld [vmem:[%s3610] sm:$0xff]
      %v3612 = vld [vmem:[%s3610 + $0x8] sm:$0xff]
      %v3613 = vld [vmem:[%s3610 + $0x10] sm:$0xff]
      %v3614 = vld [vmem:[%s3610 + $0x18] sm:$0xff]
      %v3615 = vld [vmem:[%s3610 + $0x20] sm:$0xff]
      %v3616 = vld [vmem:[%s3610 + $0x28] sm:$0xff]
      %v3617 = vld [vmem:[%s3610 + $0x30] sm:$0xff]
      %v3618 = vld [vmem:[%s3610 + $0x38] sm:$0xff]
      %v3619 = vmul.f32 %v3611, %v438
      %v3620 = vmul.f32 %v3612, %v438
      %v3621 = vmul.f32 %v3613, %v438
      %v3622 = vmul.f32 %v3614, %v438
      %v3623 = vmul.f32 %v3615, %v438
      %v3624 = vmul.f32 %v3616, %v438
      %v3625 = vmul.f32 %v3617, %v438
      %v3626 = vmul.f32 %v3618, %v438
      %v3627 = vadd.f32 %v3619, %v452
      %v3628 = vadd.f32 %v3620, %v452
      %v3629 = vadd.f32 %v3621, %v452
      %v3630 = vadd.f32 %v3622, %v452
      %v3631 = vadd.f32 %v3623, %v452
      %v3632 = vadd.f32 %v3624, %v452
      %v3633 = vadd.f32 %v3625, %v452
      %v3634 = vadd.f32 %v3626, %v452
      %v3635 = vmax.f32 %v3627, 0.0
      %v3636 = vmax.f32 %v3628, 0.0
      %v3637 = vmax.f32 %v3629, 0.0
      %v3638 = vmax.f32 %v3630, 0.0
      %v3639 = vmax.f32 %v3631, 0.0
      %v3640 = vmax.f32 %v3632, 0.0
      %v3641 = vmax.f32 %v3633, 0.0
      %v3642 = vmax.f32 %v3634, 0.0
      %3643 = vset.pattern.permute.xlu0 15
      %3644 = vperm.xlu0 %3643, %v417
      %v3645 = vpop.permute.xlu0 %3644
      %3647 = vset.pattern.permute.xlu0 15
      %3648 = vperm.xlu0 %3647, %v418
      %v3649 = vpop.permute.xlu0 %3648
      %3651 = vset.pattern.permute.xlu0 15
      %3652 = vperm.xlu0 %3651, %v419
      %v3653 = vpop.permute.xlu0 %3652
      %3655 = vset.pattern.permute.xlu0 15
      %3656 = vperm.xlu0 %3655, %v420
      %v3657 = vpop.permute.xlu0 %3656
      %3659 = vset.pattern.permute.xlu0 15
      %3660 = vperm.xlu0 %3659, %v421
      %v3661 = vpop.permute.xlu0 %3660
      %3663 = vset.pattern.permute.xlu0 15
      %3664 = vperm.xlu0 %3663, %v422
      %v3665 = vpop.permute.xlu0 %3664
      %3667 = vset.pattern.permute.xlu0 15
      %3668 = vperm.xlu0 %3667, %v423
      %v3669 = vpop.permute.xlu0 %3668
      %3671 = vset.pattern.permute.xlu0 15
      %3672 = vperm.xlu0 %3671, %v424
      %v3673 = vpop.permute.xlu0 %3672
      %v3675 = vmul.f32 %v3635, %v3645
      %v3676 = vmul.f32 %v3636, %v3649
      %v3677 = vmul.f32 %v3637, %v3653
      %v3678 = vmul.f32 %v3638, %v3657
      %v3679 = vmul.f32 %v3639, %v3661
      %v3680 = vmul.f32 %v3640, %v3665
      %v3681 = vmul.f32 %v3641, %v3669
      %v3682 = vmul.f32 %v3642, %v3673
      %v3683 = vld [vmem:[%s1 + $0x78] sm:$0xff]
      %v3685 = vsel %vm594, %v3675, 0
      %v3688 = vsel %vm594, %v3676, 0
      %v3691 = vsel %vm594, %v3677, 0
      %v3694 = vsel %vm594, %v3678, 0
      %v3697 = vsel %vm594, %v3679, 0
      %v3700 = vsel %vm594, %v3680, 0
      %v3703 = vsel %vm594, %v3681, 0
      %v3706 = vsel %vm594, %v3682, 0
      %3708 = vmatprep.subr.mxu0 0.0
      %3709 = vmatpush1.msra.mxu0 %v3683
      %3710 = vmatprep.subr.mxu0 0.0
      %3711 = vmatpush1.msra.mxu0 0.0
      %3712 = vmatprep.subr.mxu0 0.0
      %3713 = vmatpush1.msra.mxu0 0.0
      %3714 = vmatprep.subr.mxu0 0.0
      %3715 = vmatpush1.msra.mxu0 0.0
      %3716 = vmatprep.subr.mxu0 0.0
      %3717 = vmatpush1.msra.mxu0 0.0
      %3718 = vmatprep.subr.mxu0 0.0
      %3719 = vmatpush1.msra.mxu0 0.0
      %3720 = vmatprep.subr.mxu0 0.0
      %3721 = vmatpush1.msra.mxu0 0.0
      %3722 = vmatprep.subr.mxu0 0.0
      %3723 = vmatpush1.msra.mxu0 0.0
      %3724 = vmatprep.subr.mxu0 0.0
      %3725 = vmatpush1.msra.mxu0 0.0
      %3726 = vmatprep.subr.mxu0 0.0
      %3727 = vmatpush1.msra.mxu0 0.0
      %3728 = vmatprep.subr.mxu0 0.0
      %3729 = vmatpush1.msra.mxu0 0.0
      %3730 = vmatprep.subr.mxu0 0.0
      %3731 = vmatpush1.msra.mxu0 0.0
      %3732 = vmatprep.subr.mxu0 0.0
      %3733 = vmatpush1.msra.mxu0 0.0
      %3734 = vmatprep.subr.mxu0 0.0
      %3735 = vmatpush1.msra.mxu0 0.0
      %3736 = vmatprep.subr.mxu0 0.0
      %3737 = vmatpush1.msra.mxu0 0.0
      %3738 = vmatprep.subr.mxu0 0.0
      %3739 = vmatpush1.msra.mxu0 0.0
      %3740 = vmatprep.subr.mxu0 0.0
      %3741 = vmatpush1.msra.mxu0 0.0
      %3742 = vmatprep.subr.mxu0 0.0
      %3743 = vmatpush1.msra.mxu0 0.0
      %3744 = vmatprep.subr.mxu0 0.0
      %3745 = vmatpush1.msra.mxu0 0.0
      %3746 = vmatprep.subr.mxu0 0.0
      %3747 = vmatpush1.msra.mxu0 0.0
      %3748 = vmatprep.subr.mxu0 0.0
      %3749 = vmatpush1.msra.mxu0 0.0
      %3750 = vmatprep.subr.mxu0 0.0
      %3751 = vmatpush1.msra.mxu0 0.0
      %3752 = vmatprep.subr.mxu0 0.0
      %3753 = vmatpush1.msra.mxu0 0.0
      %3754 = vmatprep.subr.mxu0 0.0
      %3755 = vmatpush1.msra.mxu0 0.0
      %3756 = vmatprep.subr.mxu0 0.0
      %3757 = vmatpush1.msra.mxu0 0.0
      %3758 = vmatprep.subr.mxu0 0.0
      %3759 = vmatpush1.msra.mxu0 0.0
      %3760 = vmatprep.subr.mxu0 0.0
      %3761 = vmatpush1.msra.mxu0 0.0
      %3762 = vmatprep.subr.mxu0 0.0
      %3763 = vmatpush1.msra.mxu0 0.0
      %3764 = vmatprep.subr.mxu0 0.0
      %3765 = vmatpush1.msra.mxu0 0.0
      %3766 = vmatprep.subr.mxu0 0.0
      %3767 = vmatpush1.msra.mxu0 0.0
      %3768 = vmatprep.subr.mxu0 0.0
      %3769 = vmatpush1.msra.mxu0 0.0
      %3770 = vmatprep.subr.mxu0 0.0
      %3771 = vmatpush1.msra.mxu0 0.0
      %3772 = vmatprep.mubr.f32.mxu0 0.0
      %3773 = vmatmul.mubr.f32.gmra.mrb[0].mxu0 %v3685
      %v3774 = vpop.f32.mrb[0].mxu0
      %v3775 = vadd.f32 0.0, %v3774
      %v3776 = vpop.f32.mrb[0].mxu0
      %3777 = vmatprep.mubr.f32.mxu0 0.0
      %3778 = vmatmul.mubr.f32.gmra.mrb[0].mxu0 %v3688
      %v3779 = vpop.f32.mrb[0].mxu0
      %v3780 = vadd.f32 0.0, %v3779
      %v3781 = vpop.f32.mrb[0].mxu0
      %3782 = vmatprep.mubr.f32.mxu0 0.0
      %3783 = vmatmul.mubr.f32.gmra.mrb[0].mxu0 %v3691
      %v3784 = vpop.f32.mrb[0].mxu0
      %v3785 = vadd.f32 0.0, %v3784
      %v3786 = vpop.f32.mrb[0].mxu0
      %3787 = vmatprep.mubr.f32.mxu0 0.0
      %3788 = vmatmul.mubr.f32.gmra.mrb[0].mxu0 %v3694
      %v3789 = vpop.f32.mrb[0].mxu0
      %v3790 = vadd.f32 0.0, %v3789
      %v3791 = vpop.f32.mrb[0].mxu0
      %3792 = vmatprep.mubr.f32.mxu0 0.0
      %3793 = vmatmul.mubr.f32.gmra.mrb[0].mxu0 %v3697
      %v3794 = vpop.f32.mrb[0].mxu0
      %v3795 = vadd.f32 0.0, %v3794
      %v3796 = vpop.f32.mrb[0].mxu0
      %3797 = vmatprep.mubr.f32.mxu0 0.0
      %3798 = vmatmul.mubr.f32.gmra.mrb[0].mxu0 %v3700
      %v3799 = vpop.f32.mrb[0].mxu0
      %v3800 = vadd.f32 0.0, %v3799
      %v3801 = vpop.f32.mrb[0].mxu0
      %3802 = vmatprep.mubr.f32.mxu0 0.0
      %3803 = vmatmul.mubr.f32.gmra.mrb[0].mxu0 %v3703
      %v3804 = vpop.f32.mrb[0].mxu0
      %v3805 = vadd.f32 0.0, %v3804
      %v3806 = vpop.f32.mrb[0].mxu0
      %3807 = vmatprep.mubr.f32.mxu0 0.0
      %3808 = vmatmul.mubr.f32.gmra.mrb[0].mxu0 %v3706
      %v3809 = vpop.f32.mrb[0].mxu0
      %v3810 = vadd.f32 0.0, %v3809
      %v3811 = vpop.f32.mrb[0].mxu0
      %3812 = vdwg.mxu0
      %v3813 = vadd.f32 %v3601, %v3775
      %v3814 = vadd.f32 %v3602, %v3780
      %v3815 = vadd.f32 %v3603, %v3785
      %v3816 = vadd.f32 %v3604, %v3790
      %v3817 = vadd.f32 %v3605, %v3795
      %v3818 = vadd.f32 %v3606, %v3800
      %v3819 = vadd.f32 %v3607, %v3805
      %v3820 = vadd.f32 %v3608, %v3810
      %s3821 = sadd.s32 %s414, 25
      %s3822 = scalar_lea.vmem %s0, %s3821
      %v3823 = vld [vmem:[%s3822] sm:$0xff]
      %v3824 = vld [vmem:[%s3822 + $0x8] sm:$0xff]
      %v3825 = vld [vmem:[%s3822 + $0x10] sm:$0xff]
      %v3826 = vld [vmem:[%s3822 + $0x18] sm:$0xff]
      %v3827 = vld [vmem:[%s3822 + $0x20] sm:$0xff]
      %v3828 = vld [vmem:[%s3822 + $0x28] sm:$0xff]
      %v3829 = vld [vmem:[%s3822 + $0x30] sm:$0xff]
      %v3830 = vld [vmem:[%s3822 + $0x38] sm:$0xff]
      %v3831 = vmul.f32 %v3823, %v438
      %v3832 = vmul.f32 %v3824, %v438
      %v3833 = vmul.f32 %v3825, %v438
      %v3834 = vmul.f32 %v3826, %v438
      %v3835 = vmul.f32 %v3827, %v438
      %v3836 = vmul.f32 %v3828, %v438
      %v3837 = vmul.f32 %v3829, %v438
      %v3838 = vmul.f32 %v3830, %v438
      %v3839 = vadd.f32 %v3831, %v452
      %v3840 = vadd.f32 %v3832, %v452
      %v3841 = vadd.f32 %v3833, %v452
      %v3842 = vadd.f32 %v3834, %v452
      %v3843 = vadd.f32 %v3835, %v452
      %v3844 = vadd.f32 %v3836, %v452
      %v3845 = vadd.f32 %v3837, %v452
      %v3846 = vadd.f32 %v3838, %v452
      %v3847 = vmax.f32 %v3839, 0.0
      %v3848 = vmax.f32 %v3840, 0.0
      %v3849 = vmax.f32 %v3841, 0.0
      %v3850 = vmax.f32 %v3842, 0.0
      %v3851 = vmax.f32 %v3843, 0.0
      %v3852 = vmax.f32 %v3844, 0.0
      %v3853 = vmax.f32 %v3845, 0.0
      %v3854 = vmax.f32 %v3846, 0.0
      %3855 = vset.pattern.permute.xlu0 16
      %3856 = vperm.xlu0 %3855, %v417
      %v3857 = vpop.permute.xlu0 %3856
      %3859 = vset.pattern.permute.xlu0 16
      %3860 = vperm.xlu0 %3859, %v418
      %v3861 = vpop.permute.xlu0 %3860
      %3863 = vset.pattern.permute.xlu0 16
      %3864 = vperm.xlu0 %3863, %v419
      %v3865 = vpop.permute.xlu0 %3864
      %3867 = vset.pattern.permute.xlu0 16
      %3868 = vperm.xlu0 %3867, %v420
      %v3869 = vpop.permute.xlu0 %3868
      %3871 = vset.pattern.permute.xlu0 16
      %3872 = vperm.xlu0 %3871, %v421
      %v3873 = vpop.permute.xlu0 %3872
      %3875 = vset.pattern.permute.xlu0 16
      %3876 = vperm.xlu0 %3875, %v422
      %v3877 = vpop.permute.xlu0 %3876
      %3879 = vset.pattern.permute.xlu0 16
      %3880 = vperm.xlu0 %3879, %v423
      %v3881 = vpop.permute.xlu0 %3880
      %3883 = vset.pattern.permute.xlu0 16
      %3884 = vperm.xlu0 %3883, %v424
      %v3885 = vpop.permute.xlu0 %3884
      %v3887 = vmul.f32 %v3847, %v3857
      %v3888 = vmul.f32 %v3848, %v3861
      %v3889 = vmul.f32 %v3849, %v3865
      %v3890 = vmul.f32 %v3850, %v3869
      %v3891 = vmul.f32 %v3851, %v3873
      %v3892 = vmul.f32 %v3852, %v3877
      %v3893 = vmul.f32 %v3853, %v3881
      %v3894 = vmul.f32 %v3854, %v3885
      %v3895 = vld [vmem:[%s1 + $0x80] sm:$0xff]
      %v3897 = vsel %vm594, %v3887, 0
      %v3900 = vsel %vm594, %v3888, 0
      %v3903 = vsel %vm594, %v3889, 0
      %v3906 = vsel %vm594, %v3890, 0
      %v3909 = vsel %vm594, %v3891, 0
      %v3912 = vsel %vm594, %v3892, 0
      %v3915 = vsel %vm594, %v3893, 0
      %v3918 = vsel %vm594, %v3894, 0
      %3920 = vmatprep.subr.mxu0 0.0
      %3921 = vmatpush1.msra.mxu0 %v3895
      %3922 = vmatprep.subr.mxu0 0.0
      %3923 = vmatpush1.msra.mxu0 0.0
      %3924 = vmatprep.subr.mxu0 0.0
      %3925 = vmatpush1.msra.mxu0 0.0
      %3926 = vmatprep.subr.mxu0 0.0
      %3927 = vmatpush1.msra.mxu0 0.0
      %3928 = vmatprep.subr.mxu0 0.0
      %3929 = vmatpush1.msra.mxu0 0.0
      %3930 = vmatprep.subr.mxu0 0.0
      %3931 = vmatpush1.msra.mxu0 0.0
      %3932 = vmatprep.subr.mxu0 0.0
      %3933 = vmatpush1.msra.mxu0 0.0
      %3934 = vmatprep.subr.mxu0 0.0
      %3935 = vmatpush1.msra.mxu0 0.0
      %3936 = vmatprep.subr.mxu0 0.0
      %3937 = vmatpush1.msra.mxu0 0.0
      %3938 = vmatprep.subr.mxu0 0.0
      %3939 = vmatpush1.msra.mxu0 0.0
      %3940 = vmatprep.subr.mxu0 0.0
      %3941 = vmatpush1.msra.mxu0 0.0
      %3942 = vmatprep.subr.mxu0 0.0
      %3943 = vmatpush1.msra.mxu0 0.0
      %3944 = vmatprep.subr.mxu0 0.0
      %3945 = vmatpush1.msra.mxu0 0.0
      %3946 = vmatprep.subr.mxu0 0.0
      %3947 = vmatpush1.msra.mxu0 0.0
      %3948 = vmatprep.subr.mxu0 0.0
      %3949 = vmatpush1.msra.mxu0 0.0
      %3950 = vmatprep.subr.mxu0 0.0
      %3951 = vmatpush1.msra.mxu0 0.0
      %3952 = vmatprep.subr.mxu0 0.0
      %3953 = vmatpush1.msra.mxu0 0.0
      %3954 = vmatprep.subr.mxu0 0.0
      %3955 = vmatpush1.msra.mxu0 0.0
      %3956 = vmatprep.subr.mxu0 0.0
      %3957 = vmatpush1.msra.mxu0 0.0
      %3958 = vmatprep.subr.mxu0 0.0
      %3959 = vmatpush1.msra.mxu0 0.0
      %3960 = vmatprep.subr.mxu0 0.0
      %3961 = vmatpush1.msra.mxu0 0.0
      %3962 = vmatprep.subr.mxu0 0.0
      %3963 = vmatpush1.msra.mxu0 0.0
      %3964 = vmatprep.subr.mxu0 0.0
      %3965 = vmatpush1.msra.mxu0 0.0
      %3966 = vmatprep.subr.mxu0 0.0
      %3967 = vmatpush1.msra.mxu0 0.0
      %3968 = vmatprep.subr.mxu0 0.0
      %3969 = vmatpush1.msra.mxu0 0.0
      %3970 = vmatprep.subr.mxu0 0.0
      %3971 = vmatpush1.msra.mxu0 0.0
      %3972 = vmatprep.subr.mxu0 0.0
      %3973 = vmatpush1.msra.mxu0 0.0
      %3974 = vmatprep.subr.mxu0 0.0
      %3975 = vmatpush1.msra.mxu0 0.0
      %3976 = vmatprep.subr.mxu0 0.0
      %3977 = vmatpush1.msra.mxu0 0.0
      %3978 = vmatprep.subr.mxu0 0.0
      %3979 = vmatpush1.msra.mxu0 0.0
      %3980 = vmatprep.subr.mxu0 0.0
      %3981 = vmatpush1.msra.mxu0 0.0
      %3982 = vmatprep.subr.mxu0 0.0
      %3983 = vmatpush1.msra.mxu0 0.0
      %3984 = vmatprep.mubr.f32.mxu0 0.0
      %3985 = vmatmul.mubr.f32.gmra.mrb[0].mxu0 %v3897
      %v3986 = vpop.f32.mrb[0].mxu0
      %v3987 = vadd.f32 0.0, %v3986
      %v3988 = vpop.f32.mrb[0].mxu0
      %3989 = vmatprep.mubr.f32.mxu0 0.0
      %3990 = vmatmul.mubr.f32.gmra.mrb[0].mxu0 %v3900
      %v3991 = vpop.f32.mrb[0].mxu0
      %v3992 = vadd.f32 0.0, %v3991
      %v3993 = vpop.f32.mrb[0].mxu0
      %3994 = vmatprep.mubr.f32.mxu0 0.0
      %3995 = vmatmul.mubr.f32.gmra.mrb[0].mxu0 %v3903
      %v3996 = vpop.f32.mrb[0].mxu0
      %v3997 = vadd.f32 0.0, %v3996
      %v3998 = vpop.f32.mrb[0].mxu0
      %3999 = vmatprep.mubr.f32.mxu0 0.0
      %4000 = vmatmul.mubr.f32.gmra.mrb[0].mxu0 %v3906
      %v4001 = vpop.f32.mrb[0].mxu0
      %v4002 = vadd.f32 0.0, %v4001
      %v4003 = vpop.f32.mrb[0].mxu0
      %4004 = vmatprep.mubr.f32.mxu0 0.0
      %4005 = vmatmul.mubr.f32.gmra.mrb[0].mxu0 %v3909
      %v4006 = vpop.f32.mrb[0].mxu0
      %v4007 = vadd.f32 0.0, %v4006
      %v4008 = vpop.f32.mrb[0].mxu0
      %4009 = vmatprep.mubr.f32.mxu0 0.0
      %4010 = vmatmul.mubr.f32.gmra.mrb[0].mxu0 %v3912
      %v4011 = vpop.f32.mrb[0].mxu0
      %v4012 = vadd.f32 0.0, %v4011
      %v4013 = vpop.f32.mrb[0].mxu0
      %4014 = vmatprep.mubr.f32.mxu0 0.0
      %4015 = vmatmul.mubr.f32.gmra.mrb[0].mxu0 %v3915
      %v4016 = vpop.f32.mrb[0].mxu0
      %v4017 = vadd.f32 0.0, %v4016
      %v4018 = vpop.f32.mrb[0].mxu0
      %4019 = vmatprep.mubr.f32.mxu0 0.0
      %4020 = vmatmul.mubr.f32.gmra.mrb[0].mxu0 %v3918
      %v4021 = vpop.f32.mrb[0].mxu0
      %v4022 = vadd.f32 0.0, %v4021
      %v4023 = vpop.f32.mrb[0].mxu0
      %4024 = vdwg.mxu0
      %v4025 = vadd.f32 %v3813, %v3987
      %v4026 = vadd.f32 %v3814, %v3992
      %v4027 = vadd.f32 %v3815, %v3997
      %v4028 = vadd.f32 %v3816, %v4002
      %v4029 = vadd.f32 %v3817, %v4007
      %v4030 = vadd.f32 %v3818, %v4012
      %v4031 = vadd.f32 %v3819, %v4017
      %v4032 = vadd.f32 %v3820, %v4022
      %s4033 = sadd.s32 %s414, 26
      %s4034 = scalar_lea.vmem %s0, %s4033
      %v4035 = vld [vmem:[%s4034] sm:$0xff]
      %v4036 = vld [vmem:[%s4034 + $0x8] sm:$0xff]
      %v4037 = vld [vmem:[%s4034 + $0x10] sm:$0xff]
      %v4038 = vld [vmem:[%s4034 + $0x18] sm:$0xff]
      %v4039 = vld [vmem:[%s4034 + $0x20] sm:$0xff]
      %v4040 = vld [vmem:[%s4034 + $0x28] sm:$0xff]
      %v4041 = vld [vmem:[%s4034 + $0x30] sm:$0xff]
      %v4042 = vld [vmem:[%s4034 + $0x38] sm:$0xff]
      %v4043 = vmul.f32 %v4035, %v438
      %v4044 = vmul.f32 %v4036, %v438
      %v4045 = vmul.f32 %v4037, %v438
      %v4046 = vmul.f32 %v4038, %v438
      %v4047 = vmul.f32 %v4039, %v438
      %v4048 = vmul.f32 %v4040, %v438
      %v4049 = vmul.f32 %v4041, %v438
      %v4050 = vmul.f32 %v4042, %v438
      %v4051 = vadd.f32 %v4043, %v452
      %v4052 = vadd.f32 %v4044, %v452
      %v4053 = vadd.f32 %v4045, %v452
      %v4054 = vadd.f32 %v4046, %v452
      %v4055 = vadd.f32 %v4047, %v452
      %v4056 = vadd.f32 %v4048, %v452
      %v4057 = vadd.f32 %v4049, %v452
      %v4058 = vadd.f32 %v4050, %v452
      %v4059 = vmax.f32 %v4051, 0.0
      %v4060 = vmax.f32 %v4052, 0.0
      %v4061 = vmax.f32 %v4053, 0.0
      %v4062 = vmax.f32 %v4054, 0.0
      %v4063 = vmax.f32 %v4055, 0.0
      %v4064 = vmax.f32 %v4056, 0.0
      %v4065 = vmax.f32 %v4057, 0.0
      %v4066 = vmax.f32 %v4058, 0.0
      %4067 = vset.pattern.permute.xlu0 17
      %4068 = vperm.xlu0 %4067, %v417
      %v4069 = vpop.permute.xlu0 %4068
      %4071 = vset.pattern.permute.xlu0 17
      %4072 = vperm.xlu0 %4071, %v418
      %v4073 = vpop.permute.xlu0 %4072
      %4075 = vset.pattern.permute.xlu0 17
      %4076 = vperm.xlu0 %4075, %v419
      %v4077 = vpop.permute.xlu0 %4076
      %4079 = vset.pattern.permute.xlu0 17
      %4080 = vperm.xlu0 %4079, %v420
      %v4081 = vpop.permute.xlu0 %4080
      %4083 = vset.pattern.permute.xlu0 17
      %4084 = vperm.xlu0 %4083, %v421
      %v4085 = vpop.permute.xlu0 %4084
      %4087 = vset.pattern.permute.xlu0 17
      %4088 = vperm.xlu0 %4087, %v422
      %v4089 = vpop.permute.xlu0 %4088
      %4091 = vset.pattern.permute.xlu0 17
      %4092 = vperm.xlu0 %4091, %v423
      %v4093 = vpop.permute.xlu0 %4092
      %4095 = vset.pattern.permute.xlu0 17
      %4096 = vperm.xlu0 %4095, %v424
      %v4097 = vpop.permute.xlu0 %4096
      %v4099 = vmul.f32 %v4059, %v4069
      %v4100 = vmul.f32 %v4060, %v4073
      %v4101 = vmul.f32 %v4061, %v4077
      %v4102 = vmul.f32 %v4062, %v4081
      %v4103 = vmul.f32 %v4063, %v4085
      %v4104 = vmul.f32 %v4064, %v4089
      %v4105 = vmul.f32 %v4065, %v4093
      %v4106 = vmul.f32 %v4066, %v4097
      %v4107 = vld [vmem:[%s1 + $0x88] sm:$0xff]
      %v4109 = vsel %vm594, %v4099, 0
      %v4112 = vsel %vm594, %v4100, 0
      %v4115 = vsel %vm594, %v4101, 0
      %v4118 = vsel %vm594, %v4102, 0
      %v4121 = vsel %vm594, %v4103, 0
      %v4124 = vsel %vm594, %v4104, 0
      %v4127 = vsel %vm594, %v4105, 0
      %v4130 = vsel %vm594, %v4106, 0
      %4132 = vmatprep.subr.mxu0 0.0
      %4133 = vmatpush1.msra.mxu0 %v4107
      %4134 = vmatprep.subr.mxu0 0.0
      %4135 = vmatpush1.msra.mxu0 0.0
      %4136 = vmatprep.subr.mxu0 0.0
      %4137 = vmatpush1.msra.mxu0 0.0
      %4138 = vmatprep.subr.mxu0 0.0
      %4139 = vmatpush1.msra.mxu0 0.0
      %4140 = vmatprep.subr.mxu0 0.0
      %4141 = vmatpush1.msra.mxu0 0.0
      %4142 = vmatprep.subr.mxu0 0.0
      %4143 = vmatpush1.msra.mxu0 0.0
      %4144 = vmatprep.subr.mxu0 0.0
      %4145 = vmatpush1.msra.mxu0 0.0
      %4146 = vmatprep.subr.mxu0 0.0
      %4147 = vmatpush1.msra.mxu0 0.0
      %4148 = vmatprep.subr.mxu0 0.0
      %4149 = vmatpush1.msra.mxu0 0.0
      %4150 = vmatprep.subr.mxu0 0.0
      %4151 = vmatpush1.msra.mxu0 0.0
      %4152 = vmatprep.subr.mxu0 0.0
      %4153 = vmatpush1.msra.mxu0 0.0
      %4154 = vmatprep.subr.mxu0 0.0
      %4155 = vmatpush1.msra.mxu0 0.0
      %4156 = vmatprep.subr.mxu0 0.0
      %4157 = vmatpush1.msra.mxu0 0.0
      %4158 = vmatprep.subr.mxu0 0.0
      %4159 = vmatpush1.msra.mxu0 0.0
      %4160 = vmatprep.subr.mxu0 0.0
      %4161 = vmatpush1.msra.mxu0 0.0
      %4162 = vmatprep.subr.mxu0 0.0
      %4163 = vmatpush1.msra.mxu0 0.0
      %4164 = vmatprep.subr.mxu0 0.0
      %4165 = vmatpush1.msra.mxu0 0.0
      %4166 = vmatprep.subr.mxu0 0.0
      %4167 = vmatpush1.msra.mxu0 0.0
      %4168 = vmatprep.subr.mxu0 0.0
      %4169 = vmatpush1.msra.mxu0 0.0
      %4170 = vmatprep.subr.mxu0 0.0
      %4171 = vmatpush1.msra.mxu0 0.0
      %4172 = vmatprep.subr.mxu0 0.0
      %4173 = vmatpush1.msra.mxu0 0.0
      %4174 = vmatprep.subr.mxu0 0.0
      %4175 = vmatpush1.msra.mxu0 0.0
      %4176 = vmatprep.subr.mxu0 0.0
      %4177 = vmatpush1.msra.mxu0 0.0
      %4178 = vmatprep.subr.mxu0 0.0
      %4179 = vmatpush1.msra.mxu0 0.0
      %4180 = vmatprep.subr.mxu0 0.0
      %4181 = vmatpush1.msra.mxu0 0.0
      %4182 = vmatprep.subr.mxu0 0.0
      %4183 = vmatpush1.msra.mxu0 0.0
      %4184 = vmatprep.subr.mxu0 0.0
      %4185 = vmatpush1.msra.mxu0 0.0
      %4186 = vmatprep.subr.mxu0 0.0
      %4187 = vmatpush1.msra.mxu0 0.0
      %4188 = vmatprep.subr.mxu0 0.0
      %4189 = vmatpush1.msra.mxu0 0.0
      %4190 = vmatprep.subr.mxu0 0.0
      %4191 = vmatpush1.msra.mxu0 0.0
      %4192 = vmatprep.subr.mxu0 0.0
      %4193 = vmatpush1.msra.mxu0 0.0
      %4194 = vmatprep.subr.mxu0 0.0
      %4195 = vmatpush1.msra.mxu0 0.0
      %4196 = vmatprep.mubr.f32.mxu0 0.0
      %4197 = vmatmul.mubr.f32.gmra.mrb[0].mxu0 %v4109
      %v4198 = vpop.f32.mrb[0].mxu0
      %v4199 = vadd.f32 0.0, %v4198
      %v4200 = vpop.f32.mrb[0].mxu0
      %4201 = vmatprep.mubr.f32.mxu0 0.0
      %4202 = vmatmul.mubr.f32.gmra.mrb[0].mxu0 %v4112
      %v4203 = vpop.f32.mrb[0].mxu0
      %v4204 = vadd.f32 0.0, %v4203
      %v4205 = vpop.f32.mrb[0].mxu0
      %4206 = vmatprep.mubr.f32.mxu0 0.0
      %4207 = vmatmul.mubr.f32.gmra.mrb[0].mxu0 %v4115
      %v4208 = vpop.f32.mrb[0].mxu0
      %v4209 = vadd.f32 0.0, %v4208
      %v4210 = vpop.f32.mrb[0].mxu0
      %4211 = vmatprep.mubr.f32.mxu0 0.0
      %4212 = vmatmul.mubr.f32.gmra.mrb[0].mxu0 %v4118
      %v4213 = vpop.f32.mrb[0].mxu0
      %v4214 = vadd.f32 0.0, %v4213
      %v4215 = vpop.f32.mrb[0].mxu0
      %4216 = vmatprep.mubr.f32.mxu0 0.0
      %4217 = vmatmul.mubr.f32.gmra.mrb[0].mxu0 %v4121
      %v4218 = vpop.f32.mrb[0].mxu0
      %v4219 = vadd.f32 0.0, %v4218
      %v4220 = vpop.f32.mrb[0].mxu0
      %4221 = vmatprep.mubr.f32.mxu0 0.0
      %4222 = vmatmul.mubr.f32.gmra.mrb[0].mxu0 %v4124
      %v4223 = vpop.f32.mrb[0].mxu0
      %v4224 = vadd.f32 0.0, %v4223
      %v4225 = vpop.f32.mrb[0].mxu0
      %4226 = vmatprep.mubr.f32.mxu0 0.0
      %4227 = vmatmul.mubr.f32.gmra.mrb[0].mxu0 %v4127
      %v4228 = vpop.f32.mrb[0].mxu0
      %v4229 = vadd.f32 0.0, %v4228
      %v4230 = vpop.f32.mrb[0].mxu0
      %4231 = vmatprep.mubr.f32.mxu0 0.0
      %4232 = vmatmul.mubr.f32.gmra.mrb[0].mxu0 %v4130
      %v4233 = vpop.f32.mrb[0].mxu0
      %v4234 = vadd.f32 0.0, %v4233
      %v4235 = vpop.f32.mrb[0].mxu0
      %4236 = vdwg.mxu0
      %v4237 = vadd.f32 %v4025, %v4199
      %v4238 = vadd.f32 %v4026, %v4204
      %v4239 = vadd.f32 %v4027, %v4209
      %v4240 = vadd.f32 %v4028, %v4214
      %v4241 = vadd.f32 %v4029, %v4219
      %v4242 = vadd.f32 %v4030, %v4224
      %v4243 = vadd.f32 %v4031, %v4229
      %v4244 = vadd.f32 %v4032, %v4234
      %s4245 = sadd.s32 %s414, 32
      %s4246 = scalar_lea.vmem %s0, %s4245
      %v4247 = vld [vmem:[%s4246] sm:$0xff]
      %v4248 = vld [vmem:[%s4246 + $0x8] sm:$0xff]
      %v4249 = vld [vmem:[%s4246 + $0x10] sm:$0xff]
      %v4250 = vld [vmem:[%s4246 + $0x18] sm:$0xff]
      %v4251 = vld [vmem:[%s4246 + $0x20] sm:$0xff]
      %v4252 = vld [vmem:[%s4246 + $0x28] sm:$0xff]
      %v4253 = vld [vmem:[%s4246 + $0x30] sm:$0xff]
      %v4254 = vld [vmem:[%s4246 + $0x38] sm:$0xff]
      %v4255 = vmul.f32 %v4247, %v438
      %v4256 = vmul.f32 %v4248, %v438
      %v4257 = vmul.f32 %v4249, %v438
      %v4258 = vmul.f32 %v4250, %v438
      %v4259 = vmul.f32 %v4251, %v438
      %v4260 = vmul.f32 %v4252, %v438
      %v4261 = vmul.f32 %v4253, %v438
      %v4262 = vmul.f32 %v4254, %v438
      %v4263 = vadd.f32 %v4255, %v452
      %v4264 = vadd.f32 %v4256, %v452
      %v4265 = vadd.f32 %v4257, %v452
      %v4266 = vadd.f32 %v4258, %v452
      %v4267 = vadd.f32 %v4259, %v452
      %v4268 = vadd.f32 %v4260, %v452
      %v4269 = vadd.f32 %v4261, %v452
      %v4270 = vadd.f32 %v4262, %v452
      %v4271 = vmax.f32 %v4263, 0.0
      %v4272 = vmax.f32 %v4264, 0.0
      %v4273 = vmax.f32 %v4265, 0.0
      %v4274 = vmax.f32 %v4266, 0.0
      %v4275 = vmax.f32 %v4267, 0.0
      %v4276 = vmax.f32 %v4268, 0.0
      %v4277 = vmax.f32 %v4269, 0.0
      %v4278 = vmax.f32 %v4270, 0.0
      %4279 = vset.pattern.permute.xlu0 18
      %4280 = vperm.xlu0 %4279, %v417
      %v4281 = vpop.permute.xlu0 %4280
      %4283 = vset.pattern.permute.xlu0 18
      %4284 = vperm.xlu0 %4283, %v418
      %v4285 = vpop.permute.xlu0 %4284
      %4287 = vset.pattern.permute.xlu0 18
      %4288 = vperm.xlu0 %4287, %v419
      %v4289 = vpop.permute.xlu0 %4288
      %4291 = vset.pattern.permute.xlu0 18
      %4292 = vperm.xlu0 %4291, %v420
      %v4293 = vpop.permute.xlu0 %4292
      %4295 = vset.pattern.permute.xlu0 18
      %4296 = vperm.xlu0 %4295, %v421
      %v4297 = vpop.permute.xlu0 %4296
      %4299 = vset.pattern.permute.xlu0 18
      %4300 = vperm.xlu0 %4299, %v422
      %v4301 = vpop.permute.xlu0 %4300
      %4303 = vset.pattern.permute.xlu0 18
      %4304 = vperm.xlu0 %4303, %v423
      %v4305 = vpop.permute.xlu0 %4304
      %4307 = vset.pattern.permute.xlu0 18
      %4308 = vperm.xlu0 %4307, %v424
      %v4309 = vpop.permute.xlu0 %4308
      %v4311 = vmul.f32 %v4271, %v4281
      %v4312 = vmul.f32 %v4272, %v4285
      %v4313 = vmul.f32 %v4273, %v4289
      %v4314 = vmul.f32 %v4274, %v4293
      %v4315 = vmul.f32 %v4275, %v4297
      %v4316 = vmul.f32 %v4276, %v4301
      %v4317 = vmul.f32 %v4277, %v4305
      %v4318 = vmul.f32 %v4278, %v4309
      %v4319 = vld [vmem:[%s1 + $0x90] sm:$0xff]
      %v4321 = vsel %vm594, %v4311, 0
      %v4324 = vsel %vm594, %v4312, 0
      %v4327 = vsel %vm594, %v4313, 0
      %v4330 = vsel %vm594, %v4314, 0
      %v4333 = vsel %vm594, %v4315, 0
      %v4336 = vsel %vm594, %v4316, 0
      %v4339 = vsel %vm594, %v4317, 0
      %v4342 = vsel %vm594, %v4318, 0
      %4344 = vmatprep.subr.mxu0 0.0
      %4345 = vmatpush1.msra.mxu0 %v4319
      %4346 = vmatprep.subr.mxu0 0.0
      %4347 = vmatpush1.msra.mxu0 0.0
      %4348 = vmatprep.subr.mxu0 0.0
      %4349 = vmatpush1.msra.mxu0 0.0
      %4350 = vmatprep.subr.mxu0 0.0
      %4351 = vmatpush1.msra.mxu0 0.0
      %4352 = vmatprep.subr.mxu0 0.0
      %4353 = vmatpush1.msra.mxu0 0.0
      %4354 = vmatprep.subr.mxu0 0.0
      %4355 = vmatpush1.msra.mxu0 0.0
      %4356 = vmatprep.subr.mxu0 0.0
      %4357 = vmatpush1.msra.mxu0 0.0
      %4358 = vmatprep.subr.mxu0 0.0
      %4359 = vmatpush1.msra.mxu0 0.0
      %4360 = vmatprep.subr.mxu0 0.0
      %4361 = vmatpush1.msra.mxu0 0.0
      %4362 = vmatprep.subr.mxu0 0.0
      %4363 = vmatpush1.msra.mxu0 0.0
      %4364 = vmatprep.subr.mxu0 0.0
      %4365 = vmatpush1.msra.mxu0 0.0
      %4366 = vmatprep.subr.mxu0 0.0
      %4367 = vmatpush1.msra.mxu0 0.0
      %4368 = vmatprep.subr.mxu0 0.0
      %4369 = vmatpush1.msra.mxu0 0.0
      %4370 = vmatprep.subr.mxu0 0.0
      %4371 = vmatpush1.msra.mxu0 0.0
      %4372 = vmatprep.subr.mxu0 0.0
      %4373 = vmatpush1.msra.mxu0 0.0
      %4374 = vmatprep.subr.mxu0 0.0
      %4375 = vmatpush1.msra.mxu0 0.0
      %4376 = vmatprep.subr.mxu0 0.0
      %4377 = vmatpush1.msra.mxu0 0.0
      %4378 = vmatprep.subr.mxu0 0.0
      %4379 = vmatpush1.msra.mxu0 0.0
      %4380 = vmatprep.subr.mxu0 0.0
      %4381 = vmatpush1.msra.mxu0 0.0
      %4382 = vmatprep.subr.mxu0 0.0
      %4383 = vmatpush1.msra.mxu0 0.0
      %4384 = vmatprep.subr.mxu0 0.0
      %4385 = vmatpush1.msra.mxu0 0.0
      %4386 = vmatprep.subr.mxu0 0.0
      %4387 = vmatpush1.msra.mxu0 0.0
      %4388 = vmatprep.subr.mxu0 0.0
      %4389 = vmatpush1.msra.mxu0 0.0
      %4390 = vmatprep.subr.mxu0 0.0
      %4391 = vmatpush1.msra.mxu0 0.0
      %4392 = vmatprep.subr.mxu0 0.0
      %4393 = vmatpush1.msra.mxu0 0.0
      %4394 = vmatprep.subr.mxu0 0.0
      %4395 = vmatpush1.msra.mxu0 0.0
      %4396 = vmatprep.subr.mxu0 0.0
      %4397 = vmatpush1.msra.mxu0 0.0
      %4398 = vmatprep.subr.mxu0 0.0
      %4399 = vmatpush1.msra.mxu0 0.0
      %4400 = vmatprep.subr.mxu0 0.0
      %4401 = vmatpush1.msra.mxu0 0.0
      %4402 = vmatprep.subr.mxu0 0.0
      %4403 = vmatpush1.msra.mxu0 0.0
      %4404 = vmatprep.subr.mxu0 0.0
      %4405 = vmatpush1.msra.mxu0 0.0
      %4406 = vmatprep.subr.mxu0 0.0
      %4407 = vmatpush1.msra.mxu0 0.0
      %4408 = vmatprep.mubr.f32.mxu0 0.0
      %4409 = vmatmul.mubr.f32.gmra.mrb[0].mxu0 %v4321
      %v4410 = vpop.f32.mrb[0].mxu0
      %v4411 = vadd.f32 0.0, %v4410
      %v4412 = vpop.f32.mrb[0].mxu0
      %4413 = vmatprep.mubr.f32.mxu0 0.0
      %4414 = vmatmul.mubr.f32.gmra.mrb[0].mxu0 %v4324
      %v4415 = vpop.f32.mrb[0].mxu0
      %v4416 = vadd.f32 0.0, %v4415
      %v4417 = vpop.f32.mrb[0].mxu0
      %4418 = vmatprep.mubr.f32.mxu0 0.0
      %4419 = vmatmul.mubr.f32.gmra.mrb[0].mxu0 %v4327
      %v4420 = vpop.f32.mrb[0].mxu0
      %v4421 = vadd.f32 0.0, %v4420
      %v4422 = vpop.f32.mrb[0].mxu0
      %4423 = vmatprep.mubr.f32.mxu0 0.0
      %4424 = vmatmul.mubr.f32.gmra.mrb[0].mxu0 %v4330
      %v4425 = vpop.f32.mrb[0].mxu0
      %v4426 = vadd.f32 0.0, %v4425
      %v4427 = vpop.f32.mrb[0].mxu0
      %4428 = vmatprep.mubr.f32.mxu0 0.0
      %4429 = vmatmul.mubr.f32.gmra.mrb[0].mxu0 %v4333
      %v4430 = vpop.f32.mrb[0].mxu0
      %v4431 = vadd.f32 0.0, %v4430
      %v4432 = vpop.f32.mrb[0].mxu0
      %4433 = vmatprep.mubr.f32.mxu0 0.0
      %4434 = vmatmul.mubr.f32.gmra.mrb[0].mxu0 %v4336
      %v4435 = vpop.f32.mrb[0].mxu0
      %v4436 = vadd.f32 0.0, %v4435
      %v4437 = vpop.f32.mrb[0].mxu0
      %4438 = vmatprep.mubr.f32.mxu0 0.0
      %4439 = vmatmul.mubr.f32.gmra.mrb[0].mxu0 %v4339
      %v4440 = vpop.f32.mrb[0].mxu0
      %v4441 = vadd.f32 0.0, %v4440
      %v4442 = vpop.f32.mrb[0].mxu0
      %4443 = vmatprep.mubr.f32.mxu0 0.0
      %4444 = vmatmul.mubr.f32.gmra.mrb[0].mxu0 %v4342
      %v4445 = vpop.f32.mrb[0].mxu0
      %v4446 = vadd.f32 0.0, %v4445
      %v4447 = vpop.f32.mrb[0].mxu0
      %4448 = vdwg.mxu0
      %v4449 = vadd.f32 %v4237, %v4411
      %v4450 = vadd.f32 %v4238, %v4416
      %v4451 = vadd.f32 %v4239, %v4421
      %v4452 = vadd.f32 %v4240, %v4426
      %v4453 = vadd.f32 %v4241, %v4431
      %v4454 = vadd.f32 %v4242, %v4436
      %v4455 = vadd.f32 %v4243, %v4441
      %v4456 = vadd.f32 %v4244, %v4446
      %s4457 = sadd.s32 %s414, 33
      %s4458 = scalar_lea.vmem %s0, %s4457
      %v4459 = vld [vmem:[%s4458] sm:$0xff]
      %v4460 = vld [vmem:[%s4458 + $0x8] sm:$0xff]
      %v4461 = vld [vmem:[%s4458 + $0x10] sm:$0xff]
      %v4462 = vld [vmem:[%s4458 + $0x18] sm:$0xff]
      %v4463 = vld [vmem:[%s4458 + $0x20] sm:$0xff]
      %v4464 = vld [vmem:[%s4458 + $0x28] sm:$0xff]
      %v4465 = vld [vmem:[%s4458 + $0x30] sm:$0xff]
      %v4466 = vld [vmem:[%s4458 + $0x38] sm:$0xff]
      %v4467 = vmul.f32 %v4459, %v438
      %v4468 = vmul.f32 %v4460, %v438
      %v4469 = vmul.f32 %v4461, %v438
      %v4470 = vmul.f32 %v4462, %v438
      %v4471 = vmul.f32 %v4463, %v438
      %v4472 = vmul.f32 %v4464, %v438
      %v4473 = vmul.f32 %v4465, %v438
      %v4474 = vmul.f32 %v4466, %v438
      %v4475 = vadd.f32 %v4467, %v452
      %v4476 = vadd.f32 %v4468, %v452
      %v4477 = vadd.f32 %v4469, %v452
      %v4478 = vadd.f32 %v4470, %v452
      %v4479 = vadd.f32 %v4471, %v452
      %v4480 = vadd.f32 %v4472, %v452
      %v4481 = vadd.f32 %v4473, %v452
      %v4482 = vadd.f32 %v4474, %v452
      %v4483 = vmax.f32 %v4475, 0.0
      %v4484 = vmax.f32 %v4476, 0.0
      %v4485 = vmax.f32 %v4477, 0.0
      %v4486 = vmax.f32 %v4478, 0.0
      %v4487 = vmax.f32 %v4479, 0.0
      %v4488 = vmax.f32 %v4480, 0.0
      %v4489 = vmax.f32 %v4481, 0.0
      %v4490 = vmax.f32 %v4482, 0.0
      %4491 = vset.pattern.permute.xlu0 19
      %4492 = vperm.xlu0 %4491, %v417
      %v4493 = vpop.permute.xlu0 %4492
      %4495 = vset.pattern.permute.xlu0 19
      %4496 = vperm.xlu0 %4495, %v418
      %v4497 = vpop.permute.xlu0 %4496
      %4499 = vset.pattern.permute.xlu0 19
      %4500 = vperm.xlu0 %4499, %v419
      %v4501 = vpop.permute.xlu0 %4500
      %4503 = vset.pattern.permute.xlu0 19
      %4504 = vperm.xlu0 %4503, %v420
      %v4505 = vpop.permute.xlu0 %4504
      %4507 = vset.pattern.permute.xlu0 19
      %4508 = vperm.xlu0 %4507, %v421
      %v4509 = vpop.permute.xlu0 %4508
      %4511 = vset.pattern.permute.xlu0 19
      %4512 = vperm.xlu0 %4511, %v422
      %v4513 = vpop.permute.xlu0 %4512
      %4515 = vset.pattern.permute.xlu0 19
      %4516 = vperm.xlu0 %4515, %v423
      %v4517 = vpop.permute.xlu0 %4516
      %4519 = vset.pattern.permute.xlu0 19
      %4520 = vperm.xlu0 %4519, %v424
      %v4521 = vpop.permute.xlu0 %4520
      %v4523 = vmul.f32 %v4483, %v4493
      %v4524 = vmul.f32 %v4484, %v4497
      %v4525 = vmul.f32 %v4485, %v4501
      %v4526 = vmul.f32 %v4486, %v4505
      %v4527 = vmul.f32 %v4487, %v4509
      %v4528 = vmul.f32 %v4488, %v4513
      %v4529 = vmul.f32 %v4489, %v4517
      %v4530 = vmul.f32 %v4490, %v4521
      %v4531 = vld [vmem:[%s1 + $0x98] sm:$0xff]
      %v4533 = vsel %vm594, %v4523, 0
      %v4536 = vsel %vm594, %v4524, 0
      %v4539 = vsel %vm594, %v4525, 0
      %v4542 = vsel %vm594, %v4526, 0
      %v4545 = vsel %vm594, %v4527, 0
      %v4548 = vsel %vm594, %v4528, 0
      %v4551 = vsel %vm594, %v4529, 0
      %v4554 = vsel %vm594, %v4530, 0
      %4556 = vmatprep.subr.mxu0 0.0
      %4557 = vmatpush1.msra.mxu0 %v4531
      %4558 = vmatprep.subr.mxu0 0.0
      %4559 = vmatpush1.msra.mxu0 0.0
      %4560 = vmatprep.subr.mxu0 0.0
      %4561 = vmatpush1.msra.mxu0 0.0
      %4562 = vmatprep.subr.mxu0 0.0
      %4563 = vmatpush1.msra.mxu0 0.0
      %4564 = vmatprep.subr.mxu0 0.0
      %4565 = vmatpush1.msra.mxu0 0.0
      %4566 = vmatprep.subr.mxu0 0.0
      %4567 = vmatpush1.msra.mxu0 0.0
      %4568 = vmatprep.subr.mxu0 0.0
      %4569 = vmatpush1.msra.mxu0 0.0
      %4570 = vmatprep.subr.mxu0 0.0
      %4571 = vmatpush1.msra.mxu0 0.0
      %4572 = vmatprep.subr.mxu0 0.0
      %4573 = vmatpush1.msra.mxu0 0.0
      %4574 = vmatprep.subr.mxu0 0.0
      %4575 = vmatpush1.msra.mxu0 0.0
      %4576 = vmatprep.subr.mxu0 0.0
      %4577 = vmatpush1.msra.mxu0 0.0
      %4578 = vmatprep.subr.mxu0 0.0
      %4579 = vmatpush1.msra.mxu0 0.0
      %4580 = vmatprep.subr.mxu0 0.0
      %4581 = vmatpush1.msra.mxu0 0.0
      %4582 = vmatprep.subr.mxu0 0.0
      %4583 = vmatpush1.msra.mxu0 0.0
      %4584 = vmatprep.subr.mxu0 0.0
      %4585 = vmatpush1.msra.mxu0 0.0
      %4586 = vmatprep.subr.mxu0 0.0
      %4587 = vmatpush1.msra.mxu0 0.0
      %4588 = vmatprep.subr.mxu0 0.0
      %4589 = vmatpush1.msra.mxu0 0.0
      %4590 = vmatprep.subr.mxu0 0.0
      %4591 = vmatpush1.msra.mxu0 0.0
      %4592 = vmatprep.subr.mxu0 0.0
      %4593 = vmatpush1.msra.mxu0 0.0
      %4594 = vmatprep.subr.mxu0 0.0
      %4595 = vmatpush1.msra.mxu0 0.0
      %4596 = vmatprep.subr.mxu0 0.0
      %4597 = vmatpush1.msra.mxu0 0.0
      %4598 = vmatprep.subr.mxu0 0.0
      %4599 = vmatpush1.msra.mxu0 0.0
      %4600 = vmatprep.subr.mxu0 0.0
      %4601 = vmatpush1.msra.mxu0 0.0
      %4602 = vmatprep.subr.mxu0 0.0
      %4603 = vmatpush1.msra.mxu0 0.0
      %4604 = vmatprep.subr.mxu0 0.0
      %4605 = vmatpush1.msra.mxu0 0.0
      %4606 = vmatprep.subr.mxu0 0.0
      %4607 = vmatpush1.msra.mxu0 0.0
      %4608 = vmatprep.subr.mxu0 0.0
      %4609 = vmatpush1.msra.mxu0 0.0
      %4610 = vmatprep.subr.mxu0 0.0
      %4611 = vmatpush1.msra.mxu0 0.0
      %4612 = vmatprep.subr.mxu0 0.0
      %4613 = vmatpush1.msra.mxu0 0.0
      %4614 = vmatprep.subr.mxu0 0.0
      %4615 = vmatpush1.msra.mxu0 0.0
      %4616 = vmatprep.subr.mxu0 0.0
      %4617 = vmatpush1.msra.mxu0 0.0
      %4618 = vmatprep.subr.mxu0 0.0
      %4619 = vmatpush1.msra.mxu0 0.0
      %4620 = vmatprep.mubr.f32.mxu0 0.0
      %4621 = vmatmul.mubr.f32.gmra.mrb[0].mxu0 %v4533
      %v4622 = vpop.f32.mrb[0].mxu0
      %v4623 = vadd.f32 0.0, %v4622
      %v4624 = vpop.f32.mrb[0].mxu0
      %4625 = vmatprep.mubr.f32.mxu0 0.0
      %4626 = vmatmul.mubr.f32.gmra.mrb[0].mxu0 %v4536
      %v4627 = vpop.f32.mrb[0].mxu0
      %v4628 = vadd.f32 0.0, %v4627
      %v4629 = vpop.f32.mrb[0].mxu0
      %4630 = vmatprep.mubr.f32.mxu0 0.0
      %4631 = vmatmul.mubr.f32.gmra.mrb[0].mxu0 %v4539
      %v4632 = vpop.f32.mrb[0].mxu0
      %v4633 = vadd.f32 0.0, %v4632
      %v4634 = vpop.f32.mrb[0].mxu0
      %4635 = vmatprep.mubr.f32.mxu0 0.0
      %4636 = vmatmul.mubr.f32.gmra.mrb[0].mxu0 %v4542
      %v4637 = vpop.f32.mrb[0].mxu0
      %v4638 = vadd.f32 0.0, %v4637
      %v4639 = vpop.f32.mrb[0].mxu0
      %4640 = vmatprep.mubr.f32.mxu0 0.0
      %4641 = vmatmul.mubr.f32.gmra.mrb[0].mxu0 %v4545
      %v4642 = vpop.f32.mrb[0].mxu0
      %v4643 = vadd.f32 0.0, %v4642
      %v4644 = vpop.f32.mrb[0].mxu0
      %4645 = vmatprep.mubr.f32.mxu0 0.0
      %4646 = vmatmul.mubr.f32.gmra.mrb[0].mxu0 %v4548
      %v4647 = vpop.f32.mrb[0].mxu0
      %v4648 = vadd.f32 0.0, %v4647
      %v4649 = vpop.f32.mrb[0].mxu0
      %4650 = vmatprep.mubr.f32.mxu0 0.0
      %4651 = vmatmul.mubr.f32.gmra.mrb[0].mxu0 %v4551
      %v4652 = vpop.f32.mrb[0].mxu0
      %v4653 = vadd.f32 0.0, %v4652
      %v4654 = vpop.f32.mrb[0].mxu0
      %4655 = vmatprep.mubr.f32.mxu0 0.0
      %4656 = vmatmul.mubr.f32.gmra.mrb[0].mxu0 %v4554
      %v4657 = vpop.f32.mrb[0].mxu0
      %v4658 = vadd.f32 0.0, %v4657
      %v4659 = vpop.f32.mrb[0].mxu0
      %4660 = vdwg.mxu0
      %v4661 = vadd.f32 %v4449, %v4623
      %v4662 = vadd.f32 %v4450, %v4628
      %v4663 = vadd.f32 %v4451, %v4633
      %v4664 = vadd.f32 %v4452, %v4638
      %v4665 = vadd.f32 %v4453, %v4643
      %v4666 = vadd.f32 %v4454, %v4648
      %v4667 = vadd.f32 %v4455, %v4653
      %v4668 = vadd.f32 %v4456, %v4658
      %s4669 = sadd.s32 %s414, 34
      %s4670 = scalar_lea.vmem %s0, %s4669
      %v4671 = vld [vmem:[%s4670] sm:$0xff]
      %v4672 = vld [vmem:[%s4670 + $0x8] sm:$0xff]
      %v4673 = vld [vmem:[%s4670 + $0x10] sm:$0xff]
      %v4674 = vld [vmem:[%s4670 + $0x18] sm:$0xff]
      %v4675 = vld [vmem:[%s4670 + $0x20] sm:$0xff]
      %v4676 = vld [vmem:[%s4670 + $0x28] sm:$0xff]
      %v4677 = vld [vmem:[%s4670 + $0x30] sm:$0xff]
      %v4678 = vld [vmem:[%s4670 + $0x38] sm:$0xff]
      %v4679 = vmul.f32 %v4671, %v438
      %v4680 = vmul.f32 %v4672, %v438
      %v4681 = vmul.f32 %v4673, %v438
      %v4682 = vmul.f32 %v4674, %v438
      %v4683 = vmul.f32 %v4675, %v438
      %v4684 = vmul.f32 %v4676, %v438
      %v4685 = vmul.f32 %v4677, %v438
      %v4686 = vmul.f32 %v4678, %v438
      %v4687 = vadd.f32 %v4679, %v452
      %v4688 = vadd.f32 %v4680, %v452
      %v4689 = vadd.f32 %v4681, %v452
      %v4690 = vadd.f32 %v4682, %v452
      %v4691 = vadd.f32 %v4683, %v452
      %v4692 = vadd.f32 %v4684, %v452
      %v4693 = vadd.f32 %v4685, %v452
      %v4694 = vadd.f32 %v4686, %v452
      %v4695 = vmax.f32 %v4687, 0.0
      %v4696 = vmax.f32 %v4688, 0.0
      %v4697 = vmax.f32 %v4689, 0.0
      %v4698 = vmax.f32 %v4690, 0.0
      %v4699 = vmax.f32 %v4691, 0.0
      %v4700 = vmax.f32 %v4692, 0.0
      %v4701 = vmax.f32 %v4693, 0.0
      %v4702 = vmax.f32 %v4694, 0.0
      %4703 = vset.pattern.permute.xlu0 20
      %4704 = vperm.xlu0 %4703, %v417
      %v4705 = vpop.permute.xlu0 %4704
      %4707 = vset.pattern.permute.xlu0 20
      %4708 = vperm.xlu0 %4707, %v418
      %v4709 = vpop.permute.xlu0 %4708
      %4711 = vset.pattern.permute.xlu0 20
      %4712 = vperm.xlu0 %4711, %v419
      %v4713 = vpop.permute.xlu0 %4712
      %4715 = vset.pattern.permute.xlu0 20
      %4716 = vperm.xlu0 %4715, %v420
      %v4717 = vpop.permute.xlu0 %4716
      %4719 = vset.pattern.permute.xlu0 20
      %4720 = vperm.xlu0 %4719, %v421
      %v4721 = vpop.permute.xlu0 %4720
      %4723 = vset.pattern.permute.xlu0 20
      %4724 = vperm.xlu0 %4723, %v422
      %v4725 = vpop.permute.xlu0 %4724
      %4727 = vset.pattern.permute.xlu0 20
      %4728 = vperm.xlu0 %4727, %v423
      %v4729 = vpop.permute.xlu0 %4728
      %4731 = vset.pattern.permute.xlu0 20
      %4732 = vperm.xlu0 %4731, %v424
      %v4733 = vpop.permute.xlu0 %4732
      %v4735 = vmul.f32 %v4695, %v4705
      %v4736 = vmul.f32 %v4696, %v4709
      %v4737 = vmul.f32 %v4697, %v4713
      %v4738 = vmul.f32 %v4698, %v4717
      %v4739 = vmul.f32 %v4699, %v4721
      %v4740 = vmul.f32 %v4700, %v4725
      %v4741 = vmul.f32 %v4701, %v4729
      %v4742 = vmul.f32 %v4702, %v4733
      %v4743 = vld [vmem:[%s1 + $0xa0] sm:$0xff]
      %v4745 = vsel %vm594, %v4735, 0
      %v4748 = vsel %vm594, %v4736, 0
      %v4751 = vsel %vm594, %v4737, 0
      %v4754 = vsel %vm594, %v4738, 0
      %v4757 = vsel %vm594, %v4739, 0
      %v4760 = vsel %vm594, %v4740, 0
      %v4763 = vsel %vm594, %v4741, 0
      %v4766 = vsel %vm594, %v4742, 0
      %4768 = vmatprep.subr.mxu0 0.0
      %4769 = vmatpush1.msra.mxu0 %v4743
      %4770 = vmatprep.subr.mxu0 0.0
      %4771 = vmatpush1.msra.mxu0 0.0
      %4772 = vmatprep.subr.mxu0 0.0
      %4773 = vmatpush1.msra.mxu0 0.0
      %4774 = vmatprep.subr.mxu0 0.0
      %4775 = vmatpush1.msra.mxu0 0.0
      %4776 = vmatprep.subr.mxu0 0.0
      %4777 = vmatpush1.msra.mxu0 0.0
      %4778 = vmatprep.subr.mxu0 0.0
      %4779 = vmatpush1.msra.mxu0 0.0
      %4780 = vmatprep.subr.mxu0 0.0
      %4781 = vmatpush1.msra.mxu0 0.0
      %4782 = vmatprep.subr.mxu0 0.0
      %4783 = vmatpush1.msra.mxu0 0.0
      %4784 = vmatprep.subr.mxu0 0.0
      %4785 = vmatpush1.msra.mxu0 0.0
      %4786 = vmatprep.subr.mxu0 0.0
      %4787 = vmatpush1.msra.mxu0 0.0
      %4788 = vmatprep.subr.mxu0 0.0
      %4789 = vmatpush1.msra.mxu0 0.0
      %4790 = vmatprep.subr.mxu0 0.0
      %4791 = vmatpush1.msra.mxu0 0.0
      %4792 = vmatprep.subr.mxu0 0.0
      %4793 = vmatpush1.msra.mxu0 0.0
      %4794 = vmatprep.subr.mxu0 0.0
      %4795 = vmatpush1.msra.mxu0 0.0
      %4796 = vmatprep.subr.mxu0 0.0
      %4797 = vmatpush1.msra.mxu0 0.0
      %4798 = vmatprep.subr.mxu0 0.0
      %4799 = vmatpush1.msra.mxu0 0.0
      %4800 = vmatprep.subr.mxu0 0.0
      %4801 = vmatpush1.msra.mxu0 0.0
      %4802 = vmatprep.subr.mxu0 0.0
      %4803 = vmatpush1.msra.mxu0 0.0
      %4804 = vmatprep.subr.mxu0 0.0
      %4805 = vmatpush1.msra.mxu0 0.0
      %4806 = vmatprep.subr.mxu0 0.0
      %4807 = vmatpush1.msra.mxu0 0.0
      %4808 = vmatprep.subr.mxu0 0.0
      %4809 = vmatpush1.msra.mxu0 0.0
      %4810 = vmatprep.subr.mxu0 0.0
      %4811 = vmatpush1.msra.mxu0 0.0
      %4812 = vmatprep.subr.mxu0 0.0
      %4813 = vmatpush1.msra.mxu0 0.0
      %4814 = vmatprep.subr.mxu0 0.0
      %4815 = vmatpush1.msra.mxu0 0.0
      %4816 = vmatprep.subr.mxu0 0.0
      %4817 = vmatpush1.msra.mxu0 0.0
      %4818 = vmatprep.subr.mxu0 0.0
      %4819 = vmatpush1.msra.mxu0 0.0
      %4820 = vmatprep.subr.mxu0 0.0
      %4821 = vmatpush1.msra.mxu0 0.0
      %4822 = vmatprep.subr.mxu0 0.0
      %4823 = vmatpush1.msra.mxu0 0.0
      %4824 = vmatprep.subr.mxu0 0.0
      %4825 = vmatpush1.msra.mxu0 0.0
      %4826 = vmatprep.subr.mxu0 0.0
      %4827 = vmatpush1.msra.mxu0 0.0
      %4828 = vmatprep.subr.mxu0 0.0
      %4829 = vmatpush1.msra.mxu0 0.0
      %4830 = vmatprep.subr.mxu0 0.0
      %4831 = vmatpush1.msra.mxu0 0.0
      %4832 = vmatprep.mubr.f32.mxu0 0.0
      %4833 = vmatmul.mubr.f32.gmra.mrb[0].mxu0 %v4745
      %v4834 = vpop.f32.mrb[0].mxu0
      %v4835 = vadd.f32 0.0, %v4834
      %v4836 = vpop.f32.mrb[0].mxu0
      %4837 = vmatprep.mubr.f32.mxu0 0.0
      %4838 = vmatmul.mubr.f32.gmra.mrb[0].mxu0 %v4748
      %v4839 = vpop.f32.mrb[0].mxu0
      %v4840 = vadd.f32 0.0, %v4839
      %v4841 = vpop.f32.mrb[0].mxu0
      %4842 = vmatprep.mubr.f32.mxu0 0.0
      %4843 = vmatmul.mubr.f32.gmra.mrb[0].mxu0 %v4751
      %v4844 = vpop.f32.mrb[0].mxu0
      %v4845 = vadd.f32 0.0, %v4844
      %v4846 = vpop.f32.mrb[0].mxu0
      %4847 = vmatprep.mubr.f32.mxu0 0.0
      %4848 = vmatmul.mubr.f32.gmra.mrb[0].mxu0 %v4754
      %v4849 = vpop.f32.mrb[0].mxu0
      %v4850 = vadd.f32 0.0, %v4849
      %v4851 = vpop.f32.mrb[0].mxu0
      %4852 = vmatprep.mubr.f32.mxu0 0.0
      %4853 = vmatmul.mubr.f32.gmra.mrb[0].mxu0 %v4757
      %v4854 = vpop.f32.mrb[0].mxu0
      %v4855 = vadd.f32 0.0, %v4854
      %v4856 = vpop.f32.mrb[0].mxu0
      %4857 = vmatprep.mubr.f32.mxu0 0.0
      %4858 = vmatmul.mubr.f32.gmra.mrb[0].mxu0 %v4760
      %v4859 = vpop.f32.mrb[0].mxu0
      %v4860 = vadd.f32 0.0, %v4859
      %v4861 = vpop.f32.mrb[0].mxu0
      %4862 = vmatprep.mubr.f32.mxu0 0.0
      %4863 = vmatmul.mubr.f32.gmra.mrb[0].mxu0 %v4763
      %v4864 = vpop.f32.mrb[0].mxu0
      %v4865 = vadd.f32 0.0, %v4864
      %v4866 = vpop.f32.mrb[0].mxu0
      %4867 = vmatprep.mubr.f32.mxu0 0.0
      %4868 = vmatmul.mubr.f32.gmra.mrb[0].mxu0 %v4766
      %v4869 = vpop.f32.mrb[0].mxu0
      %v4870 = vadd.f32 0.0, %v4869
      %v4871 = vpop.f32.mrb[0].mxu0
      %4872 = vdwg.mxu0
      %v4873 = vadd.f32 %v4661, %v4835
      %v4874 = vadd.f32 %v4662, %v4840
      %v4875 = vadd.f32 %v4663, %v4845
      %v4876 = vadd.f32 %v4664, %v4850
      %v4877 = vadd.f32 %v4665, %v4855
      %v4878 = vadd.f32 %v4666, %v4860
      %v4879 = vadd.f32 %v4667, %v4865
      %v4880 = vadd.f32 %v4668, %v4870
      %s4881 = sadd.s32 %s414, 36
      %s4882 = scalar_lea.vmem %s0, %s4881
      %v4883 = vld [vmem:[%s4882] sm:$0xff]
      %v4884 = vld [vmem:[%s4882 + $0x8] sm:$0xff]
      %v4885 = vld [vmem:[%s4882 + $0x10] sm:$0xff]
      %v4886 = vld [vmem:[%s4882 + $0x18] sm:$0xff]
      %v4887 = vld [vmem:[%s4882 + $0x20] sm:$0xff]
      %v4888 = vld [vmem:[%s4882 + $0x28] sm:$0xff]
      %v4889 = vld [vmem:[%s4882 + $0x30] sm:$0xff]
      %v4890 = vld [vmem:[%s4882 + $0x38] sm:$0xff]
      %v4891 = vmul.f32 %v4883, %v438
      %v4892 = vmul.f32 %v4884, %v438
      %v4893 = vmul.f32 %v4885, %v438
      %v4894 = vmul.f32 %v4886, %v438
      %v4895 = vmul.f32 %v4887, %v438
      %v4896 = vmul.f32 %v4888, %v438
      %v4897 = vmul.f32 %v4889, %v438
      %v4898 = vmul.f32 %v4890, %v438
      %v4899 = vadd.f32 %v4891, %v452
      %v4900 = vadd.f32 %v4892, %v452
      %v4901 = vadd.f32 %v4893, %v452
      %v4902 = vadd.f32 %v4894, %v452
      %v4903 = vadd.f32 %v4895, %v452
      %v4904 = vadd.f32 %v4896, %v452
      %v4905 = vadd.f32 %v4897, %v452
      %v4906 = vadd.f32 %v4898, %v452
      %v4907 = vmax.f32 %v4899, 0.0
      %v4908 = vmax.f32 %v4900, 0.0
      %v4909 = vmax.f32 %v4901, 0.0
      %v4910 = vmax.f32 %v4902, 0.0
      %v4911 = vmax.f32 %v4903, 0.0
      %v4912 = vmax.f32 %v4904, 0.0
      %v4913 = vmax.f32 %v4905, 0.0
      %v4914 = vmax.f32 %v4906, 0.0
      %4915 = vset.pattern.permute.xlu0 21
      %4916 = vperm.xlu0 %4915, %v417
      %v4917 = vpop.permute.xlu0 %4916
      %4919 = vset.pattern.permute.xlu0 21
      %4920 = vperm.xlu0 %4919, %v418
      %v4921 = vpop.permute.xlu0 %4920
      %4923 = vset.pattern.permute.xlu0 21
      %4924 = vperm.xlu0 %4923, %v419
      %v4925 = vpop.permute.xlu0 %4924
      %4927 = vset.pattern.permute.xlu0 21
      %4928 = vperm.xlu0 %4927, %v420
      %v4929 = vpop.permute.xlu0 %4928
      %4931 = vset.pattern.permute.xlu0 21
      %4932 = vperm.xlu0 %4931, %v421
      %v4933 = vpop.permute.xlu0 %4932
      %4935 = vset.pattern.permute.xlu0 21
      %4936 = vperm.xlu0 %4935, %v422
      %v4937 = vpop.permute.xlu0 %4936
      %4939 = vset.pattern.permute.xlu0 21
      %4940 = vperm.xlu0 %4939, %v423
      %v4941 = vpop.permute.xlu0 %4940
      %4943 = vset.pattern.permute.xlu0 21
      %4944 = vperm.xlu0 %4943, %v424
      %v4945 = vpop.permute.xlu0 %4944
      %v4947 = vmul.f32 %v4907, %v4917
      %v4948 = vmul.f32 %v4908, %v4921
      %v4949 = vmul.f32 %v4909, %v4925
      %v4950 = vmul.f32 %v4910, %v4929
      %v4951 = vmul.f32 %v4911, %v4933
      %v4952 = vmul.f32 %v4912, %v4937
      %v4953 = vmul.f32 %v4913, %v4941
      %v4954 = vmul.f32 %v4914, %v4945
      %v4955 = vld [vmem:[%s1 + $0xa8] sm:$0xff]
      %v4957 = vsel %vm594, %v4947, 0
      %v4960 = vsel %vm594, %v4948, 0
      %v4963 = vsel %vm594, %v4949, 0
      %v4966 = vsel %vm594, %v4950, 0
      %v4969 = vsel %vm594, %v4951, 0
      %v4972 = vsel %vm594, %v4952, 0
      %v4975 = vsel %vm594, %v4953, 0
      %v4978 = vsel %vm594, %v4954, 0
      %4980 = vmatprep.subr.mxu0 0.0
      %4981 = vmatpush1.msra.mxu0 %v4955
      %4982 = vmatprep.subr.mxu0 0.0
      %4983 = vmatpush1.msra.mxu0 0.0
      %4984 = vmatprep.subr.mxu0 0.0
      %4985 = vmatpush1.msra.mxu0 0.0
      %4986 = vmatprep.subr.mxu0 0.0
      %4987 = vmatpush1.msra.mxu0 0.0
      %4988 = vmatprep.subr.mxu0 0.0
      %4989 = vmatpush1.msra.mxu0 0.0
      %4990 = vmatprep.subr.mxu0 0.0
      %4991 = vmatpush1.msra.mxu0 0.0
      %4992 = vmatprep.subr.mxu0 0.0
      %4993 = vmatpush1.msra.mxu0 0.0
      %4994 = vmatprep.subr.mxu0 0.0
      %4995 = vmatpush1.msra.mxu0 0.0
      %4996 = vmatprep.subr.mxu0 0.0
      %4997 = vmatpush1.msra.mxu0 0.0
      %4998 = vmatprep.subr.mxu0 0.0
      %4999 = vmatpush1.msra.mxu0 0.0
      %5000 = vmatprep.subr.mxu0 0.0
      %5001 = vmatpush1.msra.mxu0 0.0
      %5002 = vmatprep.subr.mxu0 0.0
      %5003 = vmatpush1.msra.mxu0 0.0
      %5004 = vmatprep.subr.mxu0 0.0
      %5005 = vmatpush1.msra.mxu0 0.0
      %5006 = vmatprep.subr.mxu0 0.0
      %5007 = vmatpush1.msra.mxu0 0.0
      %5008 = vmatprep.subr.mxu0 0.0
      %5009 = vmatpush1.msra.mxu0 0.0
      %5010 = vmatprep.subr.mxu0 0.0
      %5011 = vmatpush1.msra.mxu0 0.0
      %5012 = vmatprep.subr.mxu0 0.0
      %5013 = vmatpush1.msra.mxu0 0.0
      %5014 = vmatprep.subr.mxu0 0.0
      %5015 = vmatpush1.msra.mxu0 0.0
      %5016 = vmatprep.subr.mxu0 0.0
      %5017 = vmatpush1.msra.mxu0 0.0
      %5018 = vmatprep.subr.mxu0 0.0
      %5019 = vmatpush1.msra.mxu0 0.0
      %5020 = vmatprep.subr.mxu0 0.0
      %5021 = vmatpush1.msra.mxu0 0.0
      %5022 = vmatprep.subr.mxu0 0.0
      %5023 = vmatpush1.msra.mxu0 0.0
      %5024 = vmatprep.subr.mxu0 0.0
      %5025 = vmatpush1.msra.mxu0 0.0
      %5026 = vmatprep.subr.mxu0 0.0
      %5027 = vmatpush1.msra.mxu0 0.0
      %5028 = vmatprep.subr.mxu0 0.0
      %5029 = vmatpush1.msra.mxu0 0.0
      %5030 = vmatprep.subr.mxu0 0.0
      %5031 = vmatpush1.msra.mxu0 0.0
      %5032 = vmatprep.subr.mxu0 0.0
      %5033 = vmatpush1.msra.mxu0 0.0
      %5034 = vmatprep.subr.mxu0 0.0
      %5035 = vmatpush1.msra.mxu0 0.0
      %5036 = vmatprep.subr.mxu0 0.0
      %5037 = vmatpush1.msra.mxu0 0.0
      %5038 = vmatprep.subr.mxu0 0.0
      %5039 = vmatpush1.msra.mxu0 0.0
      %5040 = vmatprep.subr.mxu0 0.0
      %5041 = vmatpush1.msra.mxu0 0.0
      %5042 = vmatprep.subr.mxu0 0.0
      %5043 = vmatpush1.msra.mxu0 0.0
      %5044 = vmatprep.mubr.f32.mxu0 0.0
      %5045 = vmatmul.mubr.f32.gmra.mrb[0].mxu0 %v4957
      %v5046 = vpop.f32.mrb[0].mxu0
      %v5047 = vadd.f32 0.0, %v5046
      %v5048 = vpop.f32.mrb[0].mxu0
      %5049 = vmatprep.mubr.f32.mxu0 0.0
      %5050 = vmatmul.mubr.f32.gmra.mrb[0].mxu0 %v4960
      %v5051 = vpop.f32.mrb[0].mxu0
      %v5052 = vadd.f32 0.0, %v5051
      %v5053 = vpop.f32.mrb[0].mxu0
      %5054 = vmatprep.mubr.f32.mxu0 0.0
      %5055 = vmatmul.mubr.f32.gmra.mrb[0].mxu0 %v4963
      %v5056 = vpop.f32.mrb[0].mxu0
      %v5057 = vadd.f32 0.0, %v5056
      %v5058 = vpop.f32.mrb[0].mxu0
      %5059 = vmatprep.mubr.f32.mxu0 0.0
      %5060 = vmatmul.mubr.f32.gmra.mrb[0].mxu0 %v4966
      %v5061 = vpop.f32.mrb[0].mxu0
      %v5062 = vadd.f32 0.0, %v5061
      %v5063 = vpop.f32.mrb[0].mxu0
      %5064 = vmatprep.mubr.f32.mxu0 0.0
      %5065 = vmatmul.mubr.f32.gmra.mrb[0].mxu0 %v4969
      %v5066 = vpop.f32.mrb[0].mxu0
      %v5067 = vadd.f32 0.0, %v5066
      %v5068 = vpop.f32.mrb[0].mxu0
      %5069 = vmatprep.mubr.f32.mxu0 0.0
      %5070 = vmatmul.mubr.f32.gmra.mrb[0].mxu0 %v4972
      %v5071 = vpop.f32.mrb[0].mxu0
      %v5072 = vadd.f32 0.0, %v5071
      %v5073 = vpop.f32.mrb[0].mxu0
      %5074 = vmatprep.mubr.f32.mxu0 0.0
      %5075 = vmatmul.mubr.f32.gmra.mrb[0].mxu0 %v4975
      %v5076 = vpop.f32.mrb[0].mxu0
      %v5077 = vadd.f32 0.0, %v5076
      %v5078 = vpop.f32.mrb[0].mxu0
      %5079 = vmatprep.mubr.f32.mxu0 0.0
      %5080 = vmatmul.mubr.f32.gmra.mrb[0].mxu0 %v4978
      %v5081 = vpop.f32.mrb[0].mxu0
      %v5082 = vadd.f32 0.0, %v5081
      %v5083 = vpop.f32.mrb[0].mxu0
      %5084 = vdwg.mxu0
      %v5085 = vadd.f32 %v4873, %v5047
      %v5086 = vadd.f32 %v4874, %v5052
      %v5087 = vadd.f32 %v4875, %v5057
      %v5088 = vadd.f32 %v4876, %v5062
      %v5089 = vadd.f32 %v4877, %v5067
      %v5090 = vadd.f32 %v4878, %v5072
      %v5091 = vadd.f32 %v4879, %v5077
      %v5092 = vadd.f32 %v4880, %v5082
      %s5093 = sadd.s32 %s414, 37
      %s5094 = scalar_lea.vmem %s0, %s5093
      %v5095 = vld [vmem:[%s5094] sm:$0xff]
      %v5096 = vld [vmem:[%s5094 + $0x8] sm:$0xff]
      %v5097 = vld [vmem:[%s5094 + $0x10] sm:$0xff]
      %v5098 = vld [vmem:[%s5094 + $0x18] sm:$0xff]
      %v5099 = vld [vmem:[%s5094 + $0x20] sm:$0xff]
      %v5100 = vld [vmem:[%s5094 + $0x28] sm:$0xff]
      %v5101 = vld [vmem:[%s5094 + $0x30] sm:$0xff]
      %v5102 = vld [vmem:[%s5094 + $0x38] sm:$0xff]
      %v5103 = vmul.f32 %v5095, %v438
      %v5104 = vmul.f32 %v5096, %v438
      %v5105 = vmul.f32 %v5097, %v438
      %v5106 = vmul.f32 %v5098, %v438
      %v5107 = vmul.f32 %v5099, %v438
      %v5108 = vmul.f32 %v5100, %v438
      %v5109 = vmul.f32 %v5101, %v438
      %v5110 = vmul.f32 %v5102, %v438
      %v5111 = vadd.f32 %v5103, %v452
      %v5112 = vadd.f32 %v5104, %v452
      %v5113 = vadd.f32 %v5105, %v452
      %v5114 = vadd.f32 %v5106, %v452
      %v5115 = vadd.f32 %v5107, %v452
      %v5116 = vadd.f32 %v5108, %v452
      %v5117 = vadd.f32 %v5109, %v452
      %v5118 = vadd.f32 %v5110, %v452
      %v5119 = vmax.f32 %v5111, 0.0
      %v5120 = vmax.f32 %v5112, 0.0
      %v5121 = vmax.f32 %v5113, 0.0
      %v5122 = vmax.f32 %v5114, 0.0
      %v5123 = vmax.f32 %v5115, 0.0
      %v5124 = vmax.f32 %v5116, 0.0
      %v5125 = vmax.f32 %v5117, 0.0
      %v5126 = vmax.f32 %v5118, 0.0
      %5127 = vset.pattern.permute.xlu0 22
      %5128 = vperm.xlu0 %5127, %v417
      %v5129 = vpop.permute.xlu0 %5128
      %5131 = vset.pattern.permute.xlu0 22
      %5132 = vperm.xlu0 %5131, %v418
      %v5133 = vpop.permute.xlu0 %5132
      %5135 = vset.pattern.permute.xlu0 22
      %5136 = vperm.xlu0 %5135, %v419
      %v5137 = vpop.permute.xlu0 %5136
      %5139 = vset.pattern.permute.xlu0 22
      %5140 = vperm.xlu0 %5139, %v420
      %v5141 = vpop.permute.xlu0 %5140
      %5143 = vset.pattern.permute.xlu0 22
      %5144 = vperm.xlu0 %5143, %v421
      %v5145 = vpop.permute.xlu0 %5144
      %5147 = vset.pattern.permute.xlu0 22
      %5148 = vperm.xlu0 %5147, %v422
      %v5149 = vpop.permute.xlu0 %5148
      %5151 = vset.pattern.permute.xlu0 22
      %5152 = vperm.xlu0 %5151, %v423
      %v5153 = vpop.permute.xlu0 %5152
      %5155 = vset.pattern.permute.xlu0 22
      %5156 = vperm.xlu0 %5155, %v424
      %v5157 = vpop.permute.xlu0 %5156
      %v5159 = vmul.f32 %v5119, %v5129
      %v5160 = vmul.f32 %v5120, %v5133
      %v5161 = vmul.f32 %v5121, %v5137
      %v5162 = vmul.f32 %v5122, %v5141
      %v5163 = vmul.f32 %v5123, %v5145
      %v5164 = vmul.f32 %v5124, %v5149
      %v5165 = vmul.f32 %v5125, %v5153
      %v5166 = vmul.f32 %v5126, %v5157
      %v5167 = vld [vmem:[%s1 + $0xb0] sm:$0xff]
      %v5169 = vsel %vm594, %v5159, 0
      %v5172 = vsel %vm594, %v5160, 0
      %v5175 = vsel %vm594, %v5161, 0
      %v5178 = vsel %vm594, %v5162, 0
      %v5181 = vsel %vm594, %v5163, 0
      %v5184 = vsel %vm594, %v5164, 0
      %v5187 = vsel %vm594, %v5165, 0
      %v5190 = vsel %vm594, %v5166, 0
      %5192 = vmatprep.subr.mxu0 0.0
      %5193 = vmatpush1.msra.mxu0 %v5167
      %5194 = vmatprep.subr.mxu0 0.0
      %5195 = vmatpush1.msra.mxu0 0.0
      %5196 = vmatprep.subr.mxu0 0.0
      %5197 = vmatpush1.msra.mxu0 0.0
      %5198 = vmatprep.subr.mxu0 0.0
      %5199 = vmatpush1.msra.mxu0 0.0
      %5200 = vmatprep.subr.mxu0 0.0
      %5201 = vmatpush1.msra.mxu0 0.0
      %5202 = vmatprep.subr.mxu0 0.0
      %5203 = vmatpush1.msra.mxu0 0.0
      %5204 = vmatprep.subr.mxu0 0.0
      %5205 = vmatpush1.msra.mxu0 0.0
      %5206 = vmatprep.subr.mxu0 0.0
      %5207 = vmatpush1.msra.mxu0 0.0
      %5208 = vmatprep.subr.mxu0 0.0
      %5209 = vmatpush1.msra.mxu0 0.0
      %5210 = vmatprep.subr.mxu0 0.0
      %5211 = vmatpush1.msra.mxu0 0.0
      %5212 = vmatprep.subr.mxu0 0.0
      %5213 = vmatpush1.msra.mxu0 0.0
      %5214 = vmatprep.subr.mxu0 0.0
      %5215 = vmatpush1.msra.mxu0 0.0
      %5216 = vmatprep.subr.mxu0 0.0
      %5217 = vmatpush1.msra.mxu0 0.0
      %5218 = vmatprep.subr.mxu0 0.0
      %5219 = vmatpush1.msra.mxu0 0.0
      %5220 = vmatprep.subr.mxu0 0.0
      %5221 = vmatpush1.msra.mxu0 0.0
      %5222 = vmatprep.subr.mxu0 0.0
      %5223 = vmatpush1.msra.mxu0 0.0
      %5224 = vmatprep.subr.mxu0 0.0
      %5225 = vmatpush1.msra.mxu0 0.0
      %5226 = vmatprep.subr.mxu0 0.0
      %5227 = vmatpush1.msra.mxu0 0.0
      %5228 = vmatprep.subr.mxu0 0.0
      %5229 = vmatpush1.msra.mxu0 0.0
      %5230 = vmatprep.subr.mxu0 0.0
      %5231 = vmatpush1.msra.mxu0 0.0
      %5232 = vmatprep.subr.mxu0 0.0
      %5233 = vmatpush1.msra.mxu0 0.0
      %5234 = vmatprep.subr.mxu0 0.0
      %5235 = vmatpush1.msra.mxu0 0.0
      %5236 = vmatprep.subr.mxu0 0.0
      %5237 = vmatpush1.msra.mxu0 0.0
      %5238 = vmatprep.subr.mxu0 0.0
      %5239 = vmatpush1.msra.mxu0 0.0
      %5240 = vmatprep.subr.mxu0 0.0
      %5241 = vmatpush1.msra.mxu0 0.0
      %5242 = vmatprep.subr.mxu0 0.0
      %5243 = vmatpush1.msra.mxu0 0.0
      %5244 = vmatprep.subr.mxu0 0.0
      %5245 = vmatpush1.msra.mxu0 0.0
      %5246 = vmatprep.subr.mxu0 0.0
      %5247 = vmatpush1.msra.mxu0 0.0
      %5248 = vmatprep.subr.mxu0 0.0
      %5249 = vmatpush1.msra.mxu0 0.0
      %5250 = vmatprep.subr.mxu0 0.0
      %5251 = vmatpush1.msra.mxu0 0.0
      %5252 = vmatprep.subr.mxu0 0.0
      %5253 = vmatpush1.msra.mxu0 0.0
      %5254 = vmatprep.subr.mxu0 0.0
      %5255 = vmatpush1.msra.mxu0 0.0
      %5256 = vmatprep.mubr.f32.mxu0 0.0
      %5257 = vmatmul.mubr.f32.gmra.mrb[0].mxu0 %v5169
      %v5258 = vpop.f32.mrb[0].mxu0
      %v5259 = vadd.f32 0.0, %v5258
      %v5260 = vpop.f32.mrb[0].mxu0
      %5261 = vmatprep.mubr.f32.mxu0 0.0
      %5262 = vmatmul.mubr.f32.gmra.mrb[0].mxu0 %v5172
      %v5263 = vpop.f32.mrb[0].mxu0
      %v5264 = vadd.f32 0.0, %v5263
      %v5265 = vpop.f32.mrb[0].mxu0
      %5266 = vmatprep.mubr.f32.mxu0 0.0
      %5267 = vmatmul.mubr.f32.gmra.mrb[0].mxu0 %v5175
      %v5268 = vpop.f32.mrb[0].mxu0
      %v5269 = vadd.f32 0.0, %v5268
      %v5270 = vpop.f32.mrb[0].mxu0
      %5271 = vmatprep.mubr.f32.mxu0 0.0
      %5272 = vmatmul.mubr.f32.gmra.mrb[0].mxu0 %v5178
      %v5273 = vpop.f32.mrb[0].mxu0
      %v5274 = vadd.f32 0.0, %v5273
      %v5275 = vpop.f32.mrb[0].mxu0
      %5276 = vmatprep.mubr.f32.mxu0 0.0
      %5277 = vmatmul.mubr.f32.gmra.mrb[0].mxu0 %v5181
      %v5278 = vpop.f32.mrb[0].mxu0
      %v5279 = vadd.f32 0.0, %v5278
      %v5280 = vpop.f32.mrb[0].mxu0
      %5281 = vmatprep.mubr.f32.mxu0 0.0
      %5282 = vmatmul.mubr.f32.gmra.mrb[0].mxu0 %v5184
      %v5283 = vpop.f32.mrb[0].mxu0
      %v5284 = vadd.f32 0.0, %v5283
      %v5285 = vpop.f32.mrb[0].mxu0
      %5286 = vmatprep.mubr.f32.mxu0 0.0
      %5287 = vmatmul.mubr.f32.gmra.mrb[0].mxu0 %v5187
      %v5288 = vpop.f32.mrb[0].mxu0
      %v5289 = vadd.f32 0.0, %v5288
      %v5290 = vpop.f32.mrb[0].mxu0
      %5291 = vmatprep.mubr.f32.mxu0 0.0
      %5292 = vmatmul.mubr.f32.gmra.mrb[0].mxu0 %v5190
      %v5293 = vpop.f32.mrb[0].mxu0
      %v5294 = vadd.f32 0.0, %v5293
      %v5295 = vpop.f32.mrb[0].mxu0
      %5296 = vdwg.mxu0
      %v5297 = vadd.f32 %v5085, %v5259
      %v5298 = vadd.f32 %v5086, %v5264
      %v5299 = vadd.f32 %v5087, %v5269
      %v5300 = vadd.f32 %v5088, %v5274
      %v5301 = vadd.f32 %v5089, %v5279
      %v5302 = vadd.f32 %v5090, %v5284
      %v5303 = vadd.f32 %v5091, %v5289
      %v5304 = vadd.f32 %v5092, %v5294
      %s5305 = sadd.s32 %s414, 38
      %s5306 = scalar_lea.vmem %s0, %s5305
      %v5307 = vld [vmem:[%s5306] sm:$0xff]
      %v5308 = vld [vmem:[%s5306 + $0x8] sm:$0xff]
      %v5309 = vld [vmem:[%s5306 + $0x10] sm:$0xff]
      %v5310 = vld [vmem:[%s5306 + $0x18] sm:$0xff]
      %v5311 = vld [vmem:[%s5306 + $0x20] sm:$0xff]
      %v5312 = vld [vmem:[%s5306 + $0x28] sm:$0xff]
      %v5313 = vld [vmem:[%s5306 + $0x30] sm:$0xff]
      %v5314 = vld [vmem:[%s5306 + $0x38] sm:$0xff]
      %v5315 = vmul.f32 %v5307, %v438
      %v5316 = vmul.f32 %v5308, %v438
      %v5317 = vmul.f32 %v5309, %v438
      %v5318 = vmul.f32 %v5310, %v438
      %v5319 = vmul.f32 %v5311, %v438
      %v5320 = vmul.f32 %v5312, %v438
      %v5321 = vmul.f32 %v5313, %v438
      %v5322 = vmul.f32 %v5314, %v438
      %v5323 = vadd.f32 %v5315, %v452
      %v5324 = vadd.f32 %v5316, %v452
      %v5325 = vadd.f32 %v5317, %v452
      %v5326 = vadd.f32 %v5318, %v452
      %v5327 = vadd.f32 %v5319, %v452
      %v5328 = vadd.f32 %v5320, %v452
      %v5329 = vadd.f32 %v5321, %v452
      %v5330 = vadd.f32 %v5322, %v452
      %v5331 = vmax.f32 %v5323, 0.0
      %v5332 = vmax.f32 %v5324, 0.0
      %v5333 = vmax.f32 %v5325, 0.0
      %v5334 = vmax.f32 %v5326, 0.0
      %v5335 = vmax.f32 %v5327, 0.0
      %v5336 = vmax.f32 %v5328, 0.0
      %v5337 = vmax.f32 %v5329, 0.0
      %v5338 = vmax.f32 %v5330, 0.0
      %5339 = vset.pattern.permute.xlu0 23
      %5340 = vperm.xlu0 %5339, %v417
      %v5341 = vpop.permute.xlu0 %5340
      %5343 = vset.pattern.permute.xlu0 23
      %5344 = vperm.xlu0 %5343, %v418
      %v5345 = vpop.permute.xlu0 %5344
      %5347 = vset.pattern.permute.xlu0 23
      %5348 = vperm.xlu0 %5347, %v419
      %v5349 = vpop.permute.xlu0 %5348
      %5351 = vset.pattern.permute.xlu0 23
      %5352 = vperm.xlu0 %5351, %v420
      %v5353 = vpop.permute.xlu0 %5352
      %5355 = vset.pattern.permute.xlu0 23
      %5356 = vperm.xlu0 %5355, %v421
      %v5357 = vpop.permute.xlu0 %5356
      %5359 = vset.pattern.permute.xlu0 23
      %5360 = vperm.xlu0 %5359, %v422
      %v5361 = vpop.permute.xlu0 %5360
      %5363 = vset.pattern.permute.xlu0 23
      %5364 = vperm.xlu0 %5363, %v423
      %v5365 = vpop.permute.xlu0 %5364
      %5367 = vset.pattern.permute.xlu0 23
      %5368 = vperm.xlu0 %5367, %v424
      %v5369 = vpop.permute.xlu0 %5368
      %v5371 = vmul.f32 %v5331, %v5341
      %v5372 = vmul.f32 %v5332, %v5345
      %v5373 = vmul.f32 %v5333, %v5349
      %v5374 = vmul.f32 %v5334, %v5353
      %v5375 = vmul.f32 %v5335, %v5357
      %v5376 = vmul.f32 %v5336, %v5361
      %v5377 = vmul.f32 %v5337, %v5365
      %v5378 = vmul.f32 %v5338, %v5369
      %v5379 = vld [vmem:[%s1 + $0xb8] sm:$0xff]
      %v5381 = vsel %vm594, %v5371, 0
      %v5384 = vsel %vm594, %v5372, 0
      %v5387 = vsel %vm594, %v5373, 0
      %v5390 = vsel %vm594, %v5374, 0
      %v5393 = vsel %vm594, %v5375, 0
      %v5396 = vsel %vm594, %v5376, 0
      %v5399 = vsel %vm594, %v5377, 0
      %v5402 = vsel %vm594, %v5378, 0
      %5404 = vmatprep.subr.mxu0 0.0
      %5405 = vmatpush1.msra.mxu0 %v5379
      %5406 = vmatprep.subr.mxu0 0.0
      %5407 = vmatpush1.msra.mxu0 0.0
      %5408 = vmatprep.subr.mxu0 0.0
      %5409 = vmatpush1.msra.mxu0 0.0
      %5410 = vmatprep.subr.mxu0 0.0
      %5411 = vmatpush1.msra.mxu0 0.0
      %5412 = vmatprep.subr.mxu0 0.0
      %5413 = vmatpush1.msra.mxu0 0.0
      %5414 = vmatprep.subr.mxu0 0.0
      %5415 = vmatpush1.msra.mxu0 0.0
      %5416 = vmatprep.subr.mxu0 0.0
      %5417 = vmatpush1.msra.mxu0 0.0
      %5418 = vmatprep.subr.mxu0 0.0
      %5419 = vmatpush1.msra.mxu0 0.0
      %5420 = vmatprep.subr.mxu0 0.0
      %5421 = vmatpush1.msra.mxu0 0.0
      %5422 = vmatprep.subr.mxu0 0.0
      %5423 = vmatpush1.msra.mxu0 0.0
      %5424 = vmatprep.subr.mxu0 0.0
      %5425 = vmatpush1.msra.mxu0 0.0
      %5426 = vmatprep.subr.mxu0 0.0
      %5427 = vmatpush1.msra.mxu0 0.0
      %5428 = vmatprep.subr.mxu0 0.0
      %5429 = vmatpush1.msra.mxu0 0.0
      %5430 = vmatprep.subr.mxu0 0.0
      %5431 = vmatpush1.msra.mxu0 0.0
      %5432 = vmatprep.subr.mxu0 0.0
      %5433 = vmatpush1.msra.mxu0 0.0
      %5434 = vmatprep.subr.mxu0 0.0
      %5435 = vmatpush1.msra.mxu0 0.0
      %5436 = vmatprep.subr.mxu0 0.0
      %5437 = vmatpush1.msra.mxu0 0.0
      %5438 = vmatprep.subr.mxu0 0.0
      %5439 = vmatpush1.msra.mxu0 0.0
      %5440 = vmatprep.subr.mxu0 0.0
      %5441 = vmatpush1.msra.mxu0 0.0
      %5442 = vmatprep.subr.mxu0 0.0
      %5443 = vmatpush1.msra.mxu0 0.0
      %5444 = vmatprep.subr.mxu0 0.0
      %5445 = vmatpush1.msra.mxu0 0.0
      %5446 = vmatprep.subr.mxu0 0.0
      %5447 = vmatpush1.msra.mxu0 0.0
      %5448 = vmatprep.subr.mxu0 0.0
      %5449 = vmatpush1.msra.mxu0 0.0
      %5450 = vmatprep.subr.mxu0 0.0
      %5451 = vmatpush1.msra.mxu0 0.0
      %5452 = vmatprep.subr.mxu0 0.0
      %5453 = vmatpush1.msra.mxu0 0.0
      %5454 = vmatprep.subr.mxu0 0.0
      %5455 = vmatpush1.msra.mxu0 0.0
      %5456 = vmatprep.subr.mxu0 0.0
      %5457 = vmatpush1.msra.mxu0 0.0
      %5458 = vmatprep.subr.mxu0 0.0
      %5459 = vmatpush1.msra.mxu0 0.0
      %5460 = vmatprep.subr.mxu0 0.0
      %5461 = vmatpush1.msra.mxu0 0.0
      %5462 = vmatprep.subr.mxu0 0.0
      %5463 = vmatpush1.msra.mxu0 0.0
      %5464 = vmatprep.subr.mxu0 0.0
      %5465 = vmatpush1.msra.mxu0 0.0
      %5466 = vmatprep.subr.mxu0 0.0
      %5467 = vmatpush1.msra.mxu0 0.0
      %5468 = vmatprep.mubr.f32.mxu0 0.0
      %5469 = vmatmul.mubr.f32.gmra.mrb[0].mxu0 %v5381
      %v5470 = vpop.f32.mrb[0].mxu0
      %v5471 = vadd.f32 0.0, %v5470
      %v5472 = vpop.f32.mrb[0].mxu0
      %5473 = vmatprep.mubr.f32.mxu0 0.0
      %5474 = vmatmul.mubr.f32.gmra.mrb[0].mxu0 %v5384
      %v5475 = vpop.f32.mrb[0].mxu0
      %v5476 = vadd.f32 0.0, %v5475
      %v5477 = vpop.f32.mrb[0].mxu0
      %5478 = vmatprep.mubr.f32.mxu0 0.0
      %5479 = vmatmul.mubr.f32.gmra.mrb[0].mxu0 %v5387
      %v5480 = vpop.f32.mrb[0].mxu0
      %v5481 = vadd.f32 0.0, %v5480
      %v5482 = vpop.f32.mrb[0].mxu0
      %5483 = vmatprep.mubr.f32.mxu0 0.0
      %5484 = vmatmul.mubr.f32.gmra.mrb[0].mxu0 %v5390
      %v5485 = vpop.f32.mrb[0].mxu0
      %v5486 = vadd.f32 0.0, %v5485
      %v5487 = vpop.f32.mrb[0].mxu0
      %5488 = vmatprep.mubr.f32.mxu0 0.0
      %5489 = vmatmul.mubr.f32.gmra.mrb[0].mxu0 %v5393
      %v5490 = vpop.f32.mrb[0].mxu0
      %v5491 = vadd.f32 0.0, %v5490
      %v5492 = vpop.f32.mrb[0].mxu0
      %5493 = vmatprep.mubr.f32.mxu0 0.0
      %5494 = vmatmul.mubr.f32.gmra.mrb[0].mxu0 %v5396
      %v5495 = vpop.f32.mrb[0].mxu0
      %v5496 = vadd.f32 0.0, %v5495
      %v5497 = vpop.f32.mrb[0].mxu0
      %5498 = vmatprep.mubr.f32.mxu0 0.0
      %5499 = vmatmul.mubr.f32.gmra.mrb[0].mxu0 %v5399
      %v5500 = vpop.f32.mrb[0].mxu0
      %v5501 = vadd.f32 0.0, %v5500
      %v5502 = vpop.f32.mrb[0].mxu0
      %5503 = vmatprep.mubr.f32.mxu0 0.0
      %5504 = vmatmul.mubr.f32.gmra.mrb[0].mxu0 %v5402
      %v5505 = vpop.f32.mrb[0].mxu0
      %v5506 = vadd.f32 0.0, %v5505
      %v5507 = vpop.f32.mrb[0].mxu0
      %5508 = vdwg.mxu0
      %v5509 = vadd.f32 %v5297, %v5471
      %v5510 = vadd.f32 %v5298, %v5476
      %v5511 = vadd.f32 %v5299, %v5481
      %v5512 = vadd.f32 %v5300, %v5486
      %v5513 = vadd.f32 %v5301, %v5491
      %v5514 = vadd.f32 %v5302, %v5496
      %v5515 = vadd.f32 %v5303, %v5501
      %v5516 = vadd.f32 %v5304, %v5506
      %s5517 = sadd.s32 %s414, 40
      %s5518 = scalar_lea.vmem %s0, %s5517
      %v5519 = vld [vmem:[%s5518] sm:$0xff]
      %v5520 = vld [vmem:[%s5518 + $0x8] sm:$0xff]
      %v5521 = vld [vmem:[%s5518 + $0x10] sm:$0xff]
      %v5522 = vld [vmem:[%s5518 + $0x18] sm:$0xff]
      %v5523 = vld [vmem:[%s5518 + $0x20] sm:$0xff]
      %v5524 = vld [vmem:[%s5518 + $0x28] sm:$0xff]
      %v5525 = vld [vmem:[%s5518 + $0x30] sm:$0xff]
      %v5526 = vld [vmem:[%s5518 + $0x38] sm:$0xff]
      %v5527 = vmul.f32 %v5519, %v438
      %v5528 = vmul.f32 %v5520, %v438
      %v5529 = vmul.f32 %v5521, %v438
      %v5530 = vmul.f32 %v5522, %v438
      %v5531 = vmul.f32 %v5523, %v438
      %v5532 = vmul.f32 %v5524, %v438
      %v5533 = vmul.f32 %v5525, %v438
      %v5534 = vmul.f32 %v5526, %v438
      %v5535 = vadd.f32 %v5527, %v452
      %v5536 = vadd.f32 %v5528, %v452
      %v5537 = vadd.f32 %v5529, %v452
      %v5538 = vadd.f32 %v5530, %v452
      %v5539 = vadd.f32 %v5531, %v452
      %v5540 = vadd.f32 %v5532, %v452
      %v5541 = vadd.f32 %v5533, %v452
      %v5542 = vadd.f32 %v5534, %v452
      %v5543 = vmax.f32 %v5535, 0.0
      %v5544 = vmax.f32 %v5536, 0.0
      %v5545 = vmax.f32 %v5537, 0.0
      %v5546 = vmax.f32 %v5538, 0.0
      %v5547 = vmax.f32 %v5539, 0.0
      %v5548 = vmax.f32 %v5540, 0.0
      %v5549 = vmax.f32 %v5541, 0.0
      %v5550 = vmax.f32 %v5542, 0.0
      %5551 = vset.pattern.permute.xlu0 24
      %5552 = vperm.xlu0 %5551, %v417
      %v5553 = vpop.permute.xlu0 %5552
      %5555 = vset.pattern.permute.xlu0 24
      %5556 = vperm.xlu0 %5555, %v418
      %v5557 = vpop.permute.xlu0 %5556
      %5559 = vset.pattern.permute.xlu0 24
      %5560 = vperm.xlu0 %5559, %v419
      %v5561 = vpop.permute.xlu0 %5560
      %5563 = vset.pattern.permute.xlu0 24
      %5564 = vperm.xlu0 %5563, %v420
      %v5565 = vpop.permute.xlu0 %5564
      %5567 = vset.pattern.permute.xlu0 24
      %5568 = vperm.xlu0 %5567, %v421
      %v5569 = vpop.permute.xlu0 %5568
      %5571 = vset.pattern.permute.xlu0 24
      %5572 = vperm.xlu0 %5571, %v422
      %v5573 = vpop.permute.xlu0 %5572
      %5575 = vset.pattern.permute.xlu0 24
      %5576 = vperm.xlu0 %5575, %v423
      %v5577 = vpop.permute.xlu0 %5576
      %5579 = vset.pattern.permute.xlu0 24
      %5580 = vperm.xlu0 %5579, %v424
      %v5581 = vpop.permute.xlu0 %5580
      %v5583 = vmul.f32 %v5543, %v5553
      %v5584 = vmul.f32 %v5544, %v5557
      %v5585 = vmul.f32 %v5545, %v5561
      %v5586 = vmul.f32 %v5546, %v5565
      %v5587 = vmul.f32 %v5547, %v5569
      %v5588 = vmul.f32 %v5548, %v5573
      %v5589 = vmul.f32 %v5549, %v5577
      %v5590 = vmul.f32 %v5550, %v5581
      %v5591 = vld [vmem:[%s1 + $0xc0] sm:$0xff]
      %v5593 = vsel %vm594, %v5583, 0
      %v5596 = vsel %vm594, %v5584, 0
      %v5599 = vsel %vm594, %v5585, 0
      %v5602 = vsel %vm594, %v5586, 0
      %v5605 = vsel %vm594, %v5587, 0
      %v5608 = vsel %vm594, %v5588, 0
      %v5611 = vsel %vm594, %v5589, 0
      %v5614 = vsel %vm594, %v5590, 0
      %5616 = vmatprep.subr.mxu0 0.0
      %5617 = vmatpush1.msra.mxu0 %v5591
      %5618 = vmatprep.subr.mxu0 0.0
      %5619 = vmatpush1.msra.mxu0 0.0
      %5620 = vmatprep.subr.mxu0 0.0
      %5621 = vmatpush1.msra.mxu0 0.0
      %5622 = vmatprep.subr.mxu0 0.0
      %5623 = vmatpush1.msra.mxu0 0.0
      %5624 = vmatprep.subr.mxu0 0.0
      %5625 = vmatpush1.msra.mxu0 0.0
      %5626 = vmatprep.subr.mxu0 0.0
      %5627 = vmatpush1.msra.mxu0 0.0
      %5628 = vmatprep.subr.mxu0 0.0
      %5629 = vmatpush1.msra.mxu0 0.0
      %5630 = vmatprep.subr.mxu0 0.0
      %5631 = vmatpush1.msra.mxu0 0.0
      %5632 = vmatprep.subr.mxu0 0.0
      %5633 = vmatpush1.msra.mxu0 0.0
      %5634 = vmatprep.subr.mxu0 0.0
      %5635 = vmatpush1.msra.mxu0 0.0
      %5636 = vmatprep.subr.mxu0 0.0
      %5637 = vmatpush1.msra.mxu0 0.0
      %5638 = vmatprep.subr.mxu0 0.0
      %5639 = vmatpush1.msra.mxu0 0.0
      %5640 = vmatprep.subr.mxu0 0.0
      %5641 = vmatpush1.msra.mxu0 0.0
      %5642 = vmatprep.subr.mxu0 0.0
      %5643 = vmatpush1.msra.mxu0 0.0
      %5644 = vmatprep.subr.mxu0 0.0
      %5645 = vmatpush1.msra.mxu0 0.0
      %5646 = vmatprep.subr.mxu0 0.0
      %5647 = vmatpush1.msra.mxu0 0.0
      %5648 = vmatprep.subr.mxu0 0.0
      %5649 = vmatpush1.msra.mxu0 0.0
      %5650 = vmatprep.subr.mxu0 0.0
      %5651 = vmatpush1.msra.mxu0 0.0
      %5652 = vmatprep.subr.mxu0 0.0
      %5653 = vmatpush1.msra.mxu0 0.0
      %5654 = vmatprep.subr.mxu0 0.0
      %5655 = vmatpush1.msra.mxu0 0.0
      %5656 = vmatprep.subr.mxu0 0.0
      %5657 = vmatpush1.msra.mxu0 0.0
      %5658 = vmatprep.subr.mxu0 0.0
      %5659 = vmatpush1.msra.mxu0 0.0
      %5660 = vmatprep.subr.mxu0 0.0
      %5661 = vmatpush1.msra.mxu0 0.0
      %5662 = vmatprep.subr.mxu0 0.0
      %5663 = vmatpush1.msra.mxu0 0.0
      %5664 = vmatprep.subr.mxu0 0.0
      %5665 = vmatpush1.msra.mxu0 0.0
      %5666 = vmatprep.subr.mxu0 0.0
      %5667 = vmatpush1.msra.mxu0 0.0
      %5668 = vmatprep.subr.mxu0 0.0
      %5669 = vmatpush1.msra.mxu0 0.0
      %5670 = vmatprep.subr.mxu0 0.0
      %5671 = vmatpush1.msra.mxu0 0.0
      %5672 = vmatprep.subr.mxu0 0.0
      %5673 = vmatpush1.msra.mxu0 0.0
      %5674 = vmatprep.subr.mxu0 0.0
      %5675 = vmatpush1.msra.mxu0 0.0
      %5676 = vmatprep.subr.mxu0 0.0
      %5677 = vmatpush1.msra.mxu0 0.0
      %5678 = vmatprep.subr.mxu0 0.0
      %5679 = vmatpush1.msra.mxu0 0.0
      %5680 = vmatprep.mubr.f32.mxu0 0.0
      %5681 = vmatmul.mubr.f32.gmra.mrb[0].mxu0 %v5593
      %v5682 = vpop.f32.mrb[0].mxu0
      %v5683 = vadd.f32 0.0, %v5682
      %v5684 = vpop.f32.mrb[0].mxu0
      %5685 = vmatprep.mubr.f32.mxu0 0.0
      %5686 = vmatmul.mubr.f32.gmra.mrb[0].mxu0 %v5596
      %v5687 = vpop.f32.mrb[0].mxu0
      %v5688 = vadd.f32 0.0, %v5687
      %v5689 = vpop.f32.mrb[0].mxu0
      %5690 = vmatprep.mubr.f32.mxu0 0.0
      %5691 = vmatmul.mubr.f32.gmra.mrb[0].mxu0 %v5599
      %v5692 = vpop.f32.mrb[0].mxu0
      %v5693 = vadd.f32 0.0, %v5692
      %v5694 = vpop.f32.mrb[0].mxu0
      %5695 = vmatprep.mubr.f32.mxu0 0.0
      %5696 = vmatmul.mubr.f32.gmra.mrb[0].mxu0 %v5602
      %v5697 = vpop.f32.mrb[0].mxu0
      %v5698 = vadd.f32 0.0, %v5697
      %v5699 = vpop.f32.mrb[0].mxu0
      %5700 = vmatprep.mubr.f32.mxu0 0.0
      %5701 = vmatmul.mubr.f32.gmra.mrb[0].mxu0 %v5605
      %v5702 = vpop.f32.mrb[0].mxu0
      %v5703 = vadd.f32 0.0, %v5702
      %v5704 = vpop.f32.mrb[0].mxu0
      %5705 = vmatprep.mubr.f32.mxu0 0.0
      %5706 = vmatmul.mubr.f32.gmra.mrb[0].mxu0 %v5608
      %v5707 = vpop.f32.mrb[0].mxu0
      %v5708 = vadd.f32 0.0, %v5707
      %v5709 = vpop.f32.mrb[0].mxu0
      %5710 = vmatprep.mubr.f32.mxu0 0.0
      %5711 = vmatmul.mubr.f32.gmra.mrb[0].mxu0 %v5611
      %v5712 = vpop.f32.mrb[0].mxu0
      %v5713 = vadd.f32 0.0, %v5712
      %v5714 = vpop.f32.mrb[0].mxu0
      %5715 = vmatprep.mubr.f32.mxu0 0.0
      %5716 = vmatmul.mubr.f32.gmra.mrb[0].mxu0 %v5614
      %v5717 = vpop.f32.mrb[0].mxu0
      %v5718 = vadd.f32 0.0, %v5717
      %v5719 = vpop.f32.mrb[0].mxu0
      %5720 = vdwg.mxu0
      %v5721 = vadd.f32 %v5509, %v5683
      %v5722 = vadd.f32 %v5510, %v5688
      %v5723 = vadd.f32 %v5511, %v5693
      %v5724 = vadd.f32 %v5512, %v5698
      %v5725 = vadd.f32 %v5513, %v5703
      %v5726 = vadd.f32 %v5514, %v5708
      %v5727 = vadd.f32 %v5515, %v5713
      %v5728 = vadd.f32 %v5516, %v5718
      %s5729 = sadd.s32 %s414, 41
      %s5730 = scalar_lea.vmem %s0, %s5729
      %v5731 = vld [vmem:[%s5730] sm:$0xff]
      %v5732 = vld [vmem:[%s5730 + $0x8] sm:$0xff]
      %v5733 = vld [vmem:[%s5730 + $0x10] sm:$0xff]
      %v5734 = vld [vmem:[%s5730 + $0x18] sm:$0xff]
      %v5735 = vld [vmem:[%s5730 + $0x20] sm:$0xff]
      %v5736 = vld [vmem:[%s5730 + $0x28] sm:$0xff]
      %v5737 = vld [vmem:[%s5730 + $0x30] sm:$0xff]
      %v5738 = vld [vmem:[%s5730 + $0x38] sm:$0xff]
      %v5739 = vmul.f32 %v5731, %v438
      %v5740 = vmul.f32 %v5732, %v438
      %v5741 = vmul.f32 %v5733, %v438
      %v5742 = vmul.f32 %v5734, %v438
      %v5743 = vmul.f32 %v5735, %v438
      %v5744 = vmul.f32 %v5736, %v438
      %v5745 = vmul.f32 %v5737, %v438
      %v5746 = vmul.f32 %v5738, %v438
      %v5747 = vadd.f32 %v5739, %v452
      %v5748 = vadd.f32 %v5740, %v452
      %v5749 = vadd.f32 %v5741, %v452
      %v5750 = vadd.f32 %v5742, %v452
      %v5751 = vadd.f32 %v5743, %v452
      %v5752 = vadd.f32 %v5744, %v452
      %v5753 = vadd.f32 %v5745, %v452
      %v5754 = vadd.f32 %v5746, %v452
      %v5755 = vmax.f32 %v5747, 0.0
      %v5756 = vmax.f32 %v5748, 0.0
      %v5757 = vmax.f32 %v5749, 0.0
      %v5758 = vmax.f32 %v5750, 0.0
      %v5759 = vmax.f32 %v5751, 0.0
      %v5760 = vmax.f32 %v5752, 0.0
      %v5761 = vmax.f32 %v5753, 0.0
      %v5762 = vmax.f32 %v5754, 0.0
      %5763 = vset.pattern.permute.xlu0 25
      %5764 = vperm.xlu0 %5763, %v417
      %v5765 = vpop.permute.xlu0 %5764
      %5767 = vset.pattern.permute.xlu0 25
      %5768 = vperm.xlu0 %5767, %v418
      %v5769 = vpop.permute.xlu0 %5768
      %5771 = vset.pattern.permute.xlu0 25
      %5772 = vperm.xlu0 %5771, %v419
      %v5773 = vpop.permute.xlu0 %5772
      %5775 = vset.pattern.permute.xlu0 25
      %5776 = vperm.xlu0 %5775, %v420
      %v5777 = vpop.permute.xlu0 %5776
      %5779 = vset.pattern.permute.xlu0 25
      %5780 = vperm.xlu0 %5779, %v421
      %v5781 = vpop.permute.xlu0 %5780
      %5783 = vset.pattern.permute.xlu0 25
      %5784 = vperm.xlu0 %5783, %v422
      %v5785 = vpop.permute.xlu0 %5784
      %5787 = vset.pattern.permute.xlu0 25
      %5788 = vperm.xlu0 %5787, %v423
      %v5789 = vpop.permute.xlu0 %5788
      %5791 = vset.pattern.permute.xlu0 25
      %5792 = vperm.xlu0 %5791, %v424
      %v5793 = vpop.permute.xlu0 %5792
      %v5795 = vmul.f32 %v5755, %v5765
      %v5796 = vmul.f32 %v5756, %v5769
      %v5797 = vmul.f32 %v5757, %v5773
      %v5798 = vmul.f32 %v5758, %v5777
      %v5799 = vmul.f32 %v5759, %v5781
      %v5800 = vmul.f32 %v5760, %v5785
      %v5801 = vmul.f32 %v5761, %v5789
      %v5802 = vmul.f32 %v5762, %v5793
      %v5803 = vld [vmem:[%s1 + $0xc8] sm:$0xff]
      %v5805 = vsel %vm594, %v5795, 0
      %v5808 = vsel %vm594, %v5796, 0
      %v5811 = vsel %vm594, %v5797, 0
      %v5814 = vsel %vm594, %v5798, 0
      %v5817 = vsel %vm594, %v5799, 0
      %v5820 = vsel %vm594, %v5800, 0
      %v5823 = vsel %vm594, %v5801, 0
      %v5826 = vsel %vm594, %v5802, 0
      %5828 = vmatprep.subr.mxu0 0.0
      %5829 = vmatpush1.msra.mxu0 %v5803
      %5830 = vmatprep.subr.mxu0 0.0
      %5831 = vmatpush1.msra.mxu0 0.0
      %5832 = vmatprep.subr.mxu0 0.0
      %5833 = vmatpush1.msra.mxu0 0.0
      %5834 = vmatprep.subr.mxu0 0.0
      %5835 = vmatpush1.msra.mxu0 0.0
      %5836 = vmatprep.subr.mxu0 0.0
      %5837 = vmatpush1.msra.mxu0 0.0
      %5838 = vmatprep.subr.mxu0 0.0
      %5839 = vmatpush1.msra.mxu0 0.0
      %5840 = vmatprep.subr.mxu0 0.0
      %5841 = vmatpush1.msra.mxu0 0.0
      %5842 = vmatprep.subr.mxu0 0.0
      %5843 = vmatpush1.msra.mxu0 0.0
      %5844 = vmatprep.subr.mxu0 0.0
      %5845 = vmatpush1.msra.mxu0 0.0
      %5846 = vmatprep.subr.mxu0 0.0
      %5847 = vmatpush1.msra.mxu0 0.0
      %5848 = vmatprep.subr.mxu0 0.0
      %5849 = vmatpush1.msra.mxu0 0.0
      %5850 = vmatprep.subr.mxu0 0.0
      %5851 = vmatpush1.msra.mxu0 0.0
      %5852 = vmatprep.subr.mxu0 0.0
      %5853 = vmatpush1.msra.mxu0 0.0
      %5854 = vmatprep.subr.mxu0 0.0
      %5855 = vmatpush1.msra.mxu0 0.0
      %5856 = vmatprep.subr.mxu0 0.0
      %5857 = vmatpush1.msra.mxu0 0.0
      %5858 = vmatprep.subr.mxu0 0.0
      %5859 = vmatpush1.msra.mxu0 0.0
      %5860 = vmatprep.subr.mxu0 0.0
      %5861 = vmatpush1.msra.mxu0 0.0
      %5862 = vmatprep.subr.mxu0 0.0
      %5863 = vmatpush1.msra.mxu0 0.0
      %5864 = vmatprep.subr.mxu0 0.0
      %5865 = vmatpush1.msra.mxu0 0.0
      %5866 = vmatprep.subr.mxu0 0.0
      %5867 = vmatpush1.msra.mxu0 0.0
      %5868 = vmatprep.subr.mxu0 0.0
      %5869 = vmatpush1.msra.mxu0 0.0
      %5870 = vmatprep.subr.mxu0 0.0
      %5871 = vmatpush1.msra.mxu0 0.0
      %5872 = vmatprep.subr.mxu0 0.0
      %5873 = vmatpush1.msra.mxu0 0.0
      %5874 = vmatprep.subr.mxu0 0.0
      %5875 = vmatpush1.msra.mxu0 0.0
      %5876 = vmatprep.subr.mxu0 0.0
      %5877 = vmatpush1.msra.mxu0 0.0
      %5878 = vmatprep.subr.mxu0 0.0
      %5879 = vmatpush1.msra.mxu0 0.0
      %5880 = vmatprep.subr.mxu0 0.0
      %5881 = vmatpush1.msra.mxu0 0.0
      %5882 = vmatprep.subr.mxu0 0.0
      %5883 = vmatpush1.msra.mxu0 0.0
      %5884 = vmatprep.subr.mxu0 0.0
      %5885 = vmatpush1.msra.mxu0 0.0
      %5886 = vmatprep.subr.mxu0 0.0
      %5887 = vmatpush1.msra.mxu0 0.0
      %5888 = vmatprep.subr.mxu0 0.0
      %5889 = vmatpush1.msra.mxu0 0.0
      %5890 = vmatprep.subr.mxu0 0.0
      %5891 = vmatpush1.msra.mxu0 0.0
      %5892 = vmatprep.mubr.f32.mxu0 0.0
      %5893 = vmatmul.mubr.f32.gmra.mrb[0].mxu0 %v5805
      %v5894 = vpop.f32.mrb[0].mxu0
      %v5895 = vadd.f32 0.0, %v5894
      %v5896 = vpop.f32.mrb[0].mxu0
      %5897 = vmatprep.mubr.f32.mxu0 0.0
      %5898 = vmatmul.mubr.f32.gmra.mrb[0].mxu0 %v5808
      %v5899 = vpop.f32.mrb[0].mxu0
      %v5900 = vadd.f32 0.0, %v5899
      %v5901 = vpop.f32.mrb[0].mxu0
      %5902 = vmatprep.mubr.f32.mxu0 0.0
      %5903 = vmatmul.mubr.f32.gmra.mrb[0].mxu0 %v5811
      %v5904 = vpop.f32.mrb[0].mxu0
      %v5905 = vadd.f32 0.0, %v5904
      %v5906 = vpop.f32.mrb[0].mxu0
      %5907 = vmatprep.mubr.f32.mxu0 0.0
      %5908 = vmatmul.mubr.f32.gmra.mrb[0].mxu0 %v5814
      %v5909 = vpop.f32.mrb[0].mxu0
      %v5910 = vadd.f32 0.0, %v5909
      %v5911 = vpop.f32.mrb[0].mxu0
      %5912 = vmatprep.mubr.f32.mxu0 0.0
      %5913 = vmatmul.mubr.f32.gmra.mrb[0].mxu0 %v5817
      %v5914 = vpop.f32.mrb[0].mxu0
      %v5915 = vadd.f32 0.0, %v5914
      %v5916 = vpop.f32.mrb[0].mxu0
      %5917 = vmatprep.mubr.f32.mxu0 0.0
      %5918 = vmatmul.mubr.f32.gmra.mrb[0].mxu0 %v5820
      %v5919 = vpop.f32.mrb[0].mxu0
      %v5920 = vadd.f32 0.0, %v5919
      %v5921 = vpop.f32.mrb[0].mxu0
      %5922 = vmatprep.mubr.f32.mxu0 0.0
      %5923 = vmatmul.mubr.f32.gmra.mrb[0].mxu0 %v5823
      %v5924 = vpop.f32.mrb[0].mxu0
      %v5925 = vadd.f32 0.0, %v5924
      %v5926 = vpop.f32.mrb[0].mxu0
      %5927 = vmatprep.mubr.f32.mxu0 0.0
      %5928 = vmatmul.mubr.f32.gmra.mrb[0].mxu0 %v5826
      %v5929 = vpop.f32.mrb[0].mxu0
      %v5930 = vadd.f32 0.0, %v5929
      %v5931 = vpop.f32.mrb[0].mxu0
      %5932 = vdwg.mxu0
      %v5933 = vadd.f32 %v5721, %v5895
      %v5934 = vadd.f32 %v5722, %v5900
      %v5935 = vadd.f32 %v5723, %v5905
      %v5936 = vadd.f32 %v5724, %v5910
      %v5937 = vadd.f32 %v5725, %v5915
      %v5938 = vadd.f32 %v5726, %v5920
      %v5939 = vadd.f32 %v5727, %v5925
      %v5940 = vadd.f32 %v5728, %v5930
      %s5941 = sadd.s32 %s414, 42
      %s5942 = scalar_lea.vmem %s0, %s5941
      %v5943 = vld [vmem:[%s5942] sm:$0xff]
      %v5944 = vld [vmem:[%s5942 + $0x8] sm:$0xff]
      %v5945 = vld [vmem:[%s5942 + $0x10] sm:$0xff]
      %v5946 = vld [vmem:[%s5942 + $0x18] sm:$0xff]
      %v5947 = vld [vmem:[%s5942 + $0x20] sm:$0xff]
      %v5948 = vld [vmem:[%s5942 + $0x28] sm:$0xff]
      %v5949 = vld [vmem:[%s5942 + $0x30] sm:$0xff]
      %v5950 = vld [vmem:[%s5942 + $0x38] sm:$0xff]
      %v5951 = vmul.f32 %v5943, %v438
      %v5952 = vmul.f32 %v5944, %v438
      %v5953 = vmul.f32 %v5945, %v438
      %v5954 = vmul.f32 %v5946, %v438
      %v5955 = vmul.f32 %v5947, %v438
      %v5956 = vmul.f32 %v5948, %v438
      %v5957 = vmul.f32 %v5949, %v438
      %v5958 = vmul.f32 %v5950, %v438
      %v5959 = vadd.f32 %v5951, %v452
      %v5960 = vadd.f32 %v5952, %v452
      %v5961 = vadd.f32 %v5953, %v452
      %v5962 = vadd.f32 %v5954, %v452
      %v5963 = vadd.f32 %v5955, %v452
      %v5964 = vadd.f32 %v5956, %v452
      %v5965 = vadd.f32 %v5957, %v452
      %v5966 = vadd.f32 %v5958, %v452
      %v5967 = vmax.f32 %v5959, 0.0
      %v5968 = vmax.f32 %v5960, 0.0
      %v5969 = vmax.f32 %v5961, 0.0
      %v5970 = vmax.f32 %v5962, 0.0
      %v5971 = vmax.f32 %v5963, 0.0
      %v5972 = vmax.f32 %v5964, 0.0
      %v5973 = vmax.f32 %v5965, 0.0
      %v5974 = vmax.f32 %v5966, 0.0
      %5975 = vset.pattern.permute.xlu0 26
      %5976 = vperm.xlu0 %5975, %v417
      %v5977 = vpop.permute.xlu0 %5976
      %5979 = vset.pattern.permute.xlu0 26
      %5980 = vperm.xlu0 %5979, %v418
      %v5981 = vpop.permute.xlu0 %5980
      %5983 = vset.pattern.permute.xlu0 26
      %5984 = vperm.xlu0 %5983, %v419
      %v5985 = vpop.permute.xlu0 %5984
      %5987 = vset.pattern.permute.xlu0 26
      %5988 = vperm.xlu0 %5987, %v420
      %v5989 = vpop.permute.xlu0 %5988
      %5991 = vset.pattern.permute.xlu0 26
      %5992 = vperm.xlu0 %5991, %v421
      %v5993 = vpop.permute.xlu0 %5992
      %5995 = vset.pattern.permute.xlu0 26
      %5996 = vperm.xlu0 %5995, %v422
      %v5997 = vpop.permute.xlu0 %5996
      %5999 = vset.pattern.permute.xlu0 26
      %6000 = vperm.xlu0 %5999, %v423
      %v6001 = vpop.permute.xlu0 %6000
      %6003 = vset.pattern.permute.xlu0 26
      %6004 = vperm.xlu0 %6003, %v424
      %v6005 = vpop.permute.xlu0 %6004
      %v6007 = vmul.f32 %v5967, %v5977
      %v6008 = vmul.f32 %v5968, %v5981
      %v6009 = vmul.f32 %v5969, %v5985
      %v6010 = vmul.f32 %v5970, %v5989
      %v6011 = vmul.f32 %v5971, %v5993
      %v6012 = vmul.f32 %v5972, %v5997
      %v6013 = vmul.f32 %v5973, %v6001
      %v6014 = vmul.f32 %v5974, %v6005
      %v6015 = vld [vmem:[%s1 + $0xd0] sm:$0xff]
      %v6017 = vsel %vm594, %v6007, 0
      %v6020 = vsel %vm594, %v6008, 0
      %v6023 = vsel %vm594, %v6009, 0
      %v6026 = vsel %vm594, %v6010, 0
      %v6029 = vsel %vm594, %v6011, 0
      %v6032 = vsel %vm594, %v6012, 0
      %v6035 = vsel %vm594, %v6013, 0
      %v6038 = vsel %vm594, %v6014, 0
      %6040 = vmatprep.subr.mxu0 0.0
      %6041 = vmatpush1.msra.mxu0 %v6015
      %6042 = vmatprep.subr.mxu0 0.0
      %6043 = vmatpush1.msra.mxu0 0.0
      %6044 = vmatprep.subr.mxu0 0.0
      %6045 = vmatpush1.msra.mxu0 0.0
      %6046 = vmatprep.subr.mxu0 0.0
      %6047 = vmatpush1.msra.mxu0 0.0
      %6048 = vmatprep.subr.mxu0 0.0
      %6049 = vmatpush1.msra.mxu0 0.0
      %6050 = vmatprep.subr.mxu0 0.0
      %6051 = vmatpush1.msra.mxu0 0.0
      %6052 = vmatprep.subr.mxu0 0.0
      %6053 = vmatpush1.msra.mxu0 0.0
      %6054 = vmatprep.subr.mxu0 0.0
      %6055 = vmatpush1.msra.mxu0 0.0
      %6056 = vmatprep.subr.mxu0 0.0
      %6057 = vmatpush1.msra.mxu0 0.0
      %6058 = vmatprep.subr.mxu0 0.0
      %6059 = vmatpush1.msra.mxu0 0.0
      %6060 = vmatprep.subr.mxu0 0.0
      %6061 = vmatpush1.msra.mxu0 0.0
      %6062 = vmatprep.subr.mxu0 0.0
      %6063 = vmatpush1.msra.mxu0 0.0
      %6064 = vmatprep.subr.mxu0 0.0
      %6065 = vmatpush1.msra.mxu0 0.0
      %6066 = vmatprep.subr.mxu0 0.0
      %6067 = vmatpush1.msra.mxu0 0.0
      %6068 = vmatprep.subr.mxu0 0.0
      %6069 = vmatpush1.msra.mxu0 0.0
      %6070 = vmatprep.subr.mxu0 0.0
      %6071 = vmatpush1.msra.mxu0 0.0
      %6072 = vmatprep.subr.mxu0 0.0
      %6073 = vmatpush1.msra.mxu0 0.0
      %6074 = vmatprep.subr.mxu0 0.0
      %6075 = vmatpush1.msra.mxu0 0.0
      %6076 = vmatprep.subr.mxu0 0.0
      %6077 = vmatpush1.msra.mxu0 0.0
      %6078 = vmatprep.subr.mxu0 0.0
      %6079 = vmatpush1.msra.mxu0 0.0
      %6080 = vmatprep.subr.mxu0 0.0
      %6081 = vmatpush1.msra.mxu0 0.0
      %6082 = vmatprep.subr.mxu0 0.0
      %6083 = vmatpush1.msra.mxu0 0.0
      %6084 = vmatprep.subr.mxu0 0.0
      %6085 = vmatpush1.msra.mxu0 0.0
      %6086 = vmatprep.subr.mxu0 0.0
      %6087 = vmatpush1.msra.mxu0 0.0
      %6088 = vmatprep.subr.mxu0 0.0
      %6089 = vmatpush1.msra.mxu0 0.0
      %6090 = vmatprep.subr.mxu0 0.0
      %6091 = vmatpush1.msra.mxu0 0.0
      %6092 = vmatprep.subr.mxu0 0.0
      %6093 = vmatpush1.msra.mxu0 0.0
      %6094 = vmatprep.subr.mxu0 0.0
      %6095 = vmatpush1.msra.mxu0 0.0
      %6096 = vmatprep.subr.mxu0 0.0
      %6097 = vmatpush1.msra.mxu0 0.0
      %6098 = vmatprep.subr.mxu0 0.0
      %6099 = vmatpush1.msra.mxu0 0.0
      %6100 = vmatprep.subr.mxu0 0.0
      %6101 = vmatpush1.msra.mxu0 0.0
      %6102 = vmatprep.subr.mxu0 0.0
      %6103 = vmatpush1.msra.mxu0 0.0
      %6104 = vmatprep.mubr.f32.mxu0 0.0
      %6105 = vmatmul.mubr.f32.gmra.mrb[0].mxu0 %v6017
      %v6106 = vpop.f32.mrb[0].mxu0
      %v6107 = vadd.f32 0.0, %v6106
      %v6108 = vpop.f32.mrb[0].mxu0
      %6109 = vmatprep.mubr.f32.mxu0 0.0
      %6110 = vmatmul.mubr.f32.gmra.mrb[0].mxu0 %v6020
      %v6111 = vpop.f32.mrb[0].mxu0
      %v6112 = vadd.f32 0.0, %v6111
      %v6113 = vpop.f32.mrb[0].mxu0
      %6114 = vmatprep.mubr.f32.mxu0 0.0
      %6115 = vmatmul.mubr.f32.gmra.mrb[0].mxu0 %v6023
      %v6116 = vpop.f32.mrb[0].mxu0
      %v6117 = vadd.f32 0.0, %v6116
      %v6118 = vpop.f32.mrb[0].mxu0
      %6119 = vmatprep.mubr.f32.mxu0 0.0
      %6120 = vmatmul.mubr.f32.gmra.mrb[0].mxu0 %v6026
      %v6121 = vpop.f32.mrb[0].mxu0
      %v6122 = vadd.f32 0.0, %v6121
      %v6123 = vpop.f32.mrb[0].mxu0
      %6124 = vmatprep.mubr.f32.mxu0 0.0
      %6125 = vmatmul.mubr.f32.gmra.mrb[0].mxu0 %v6029
      %v6126 = vpop.f32.mrb[0].mxu0
      %v6127 = vadd.f32 0.0, %v6126
      %v6128 = vpop.f32.mrb[0].mxu0
      %6129 = vmatprep.mubr.f32.mxu0 0.0
      %6130 = vmatmul.mubr.f32.gmra.mrb[0].mxu0 %v6032
      %v6131 = vpop.f32.mrb[0].mxu0
      %v6132 = vadd.f32 0.0, %v6131
      %v6133 = vpop.f32.mrb[0].mxu0
      %6134 = vmatprep.mubr.f32.mxu0 0.0
      %6135 = vmatmul.mubr.f32.gmra.mrb[0].mxu0 %v6035
      %v6136 = vpop.f32.mrb[0].mxu0
      %v6137 = vadd.f32 0.0, %v6136
      %v6138 = vpop.f32.mrb[0].mxu0
      %6139 = vmatprep.mubr.f32.mxu0 0.0
      %6140 = vmatmul.mubr.f32.gmra.mrb[0].mxu0 %v6038
      %v6141 = vpop.f32.mrb[0].mxu0
      %v6142 = vadd.f32 0.0, %v6141
      %v6143 = vpop.f32.mrb[0].mxu0
      %6144 = vdwg.mxu0
      %v6145 = vadd.f32 %v5933, %v6107
      %v6146 = vadd.f32 %v5934, %v6112
      %v6147 = vadd.f32 %v5935, %v6117
      %v6148 = vadd.f32 %v5936, %v6122
      %v6149 = vadd.f32 %v5937, %v6127
      %v6150 = vadd.f32 %v5938, %v6132
      %v6151 = vadd.f32 %v5939, %v6137
      %v6152 = vadd.f32 %v5940, %v6142
      %v6153 = vld [vmem:[%s2] sm:$0x1]
      %v6155 = vlaneseq
      %v6156 = vshrl.u32 %v6155, 7
      %v6157 = vsub.s32 0, %v6156
      %v6158 = vrot.slane %v6153, %v6157
      %v6160 = vadd.f32 %v6145, %v6158
      %v6161 = vadd.f32 %v6146, %v6158
      %v6162 = vadd.f32 %v6147, %v6158
      %v6163 = vadd.f32 %v6148, %v6158
      %v6164 = vadd.f32 %v6149, %v6158
      %v6165 = vadd.f32 %v6150, %v6158
      %v6166 = vadd.f32 %v6151, %v6158
      %v6167 = vadd.f32 %v6152, %v6158
      %6168 = vst.msk [vmem:[%s397] sm:$0xff] %vm594, %v6160
      %6169 = vst.msk [vmem:[%s397 + $0x8] sm:$0xff] %vm594, %v6161
      %6170 = vst.msk [vmem:[%s397 + $0x10] sm:$0xff] %vm594, %v6162
      %6171 = vst.msk [vmem:[%s397 + $0x18] sm:$0xff] %vm594, %v6163
      %6172 = vst.msk [vmem:[%s397 + $0x20] sm:$0xff] %vm594, %v6164
      %6173 = vst.msk [vmem:[%s397 + $0x28] sm:$0xff] %vm594, %v6165
      %6174 = vst.msk [vmem:[%s397 + $0x30] sm:$0xff] %vm594, %v6166
      %6175 = vst.msk [vmem:[%s397 + $0x38] sm:$0xff] %vm594, %v6167
      %v6176 = vld [vmem:[%s389] sm:$0xff]
      %v6177 = vld [vmem:[%s389 + $0x8] sm:$0xff]
      %v6178 = vld [vmem:[%s389 + $0x10] sm:$0xff]
      %v6179 = vld [vmem:[%s389 + $0x18] sm:$0xff]
      %v6180 = vld [vmem:[%s389 + $0x20] sm:$0xff]
      %v6181 = vld [vmem:[%s389 + $0x28] sm:$0xff]
      %v6182 = vld [vmem:[%s389 + $0x30] sm:$0xff]
      %v6183 = vld [vmem:[%s389 + $0x38] sm:$0xff]
      %6185 = vset.pattern.permute.xlu0 0
      %6186 = vperm.xlu0 %6185, %v6176
      %v6187 = vpop.permute.xlu0 %6186
      %6190 = vset.pattern.permute.xlu0 0
      %6191 = vperm.xlu0 %6190, %v6177
      %v6192 = vpop.permute.xlu0 %6191
      %6195 = vset.pattern.permute.xlu0 0
      %6196 = vperm.xlu0 %6195, %v6178
      %v6197 = vpop.permute.xlu0 %6196
      %6200 = vset.pattern.permute.xlu0 0
      %6201 = vperm.xlu0 %6200, %v6179
      %v6202 = vpop.permute.xlu0 %6201
      %6205 = vset.pattern.permute.xlu0 0
      %6206 = vperm.xlu0 %6205, %v6180
      %v6207 = vpop.permute.xlu0 %6206
      %6210 = vset.pattern.permute.xlu0 0
      %6211 = vperm.xlu0 %6210, %v6181
      %v6212 = vpop.permute.xlu0 %6211
      %6215 = vset.pattern.permute.xlu0 0
      %6216 = vperm.xlu0 %6215, %v6182
      %v6217 = vpop.permute.xlu0 %6216
      %6220 = vset.pattern.permute.xlu0 0
      %6221 = vperm.xlu0 %6220, %v6183
      %v6222 = vpop.permute.xlu0 %6221
      %v6224 = vmul.f32 %v6160, %v6187
      %v6225 = vmul.f32 %v6161, %v6192
      %v6226 = vmul.f32 %v6162, %v6197
      %v6227 = vmul.f32 %v6163, %v6202
      %v6228 = vmul.f32 %v6164, %v6207
      %v6229 = vmul.f32 %v6165, %v6212
      %v6230 = vmul.f32 %v6166, %v6217
      %v6231 = vmul.f32 %v6167, %v6222
      %v6232 = vld [vmem:[%s402] sm:$0x1]
      %v6233 = vsel %vm594, %v6224, 0.0
      %v6234 = vsel %vm594, %v6225, 0.0
      %v6235 = vadd.f32 %v6233, %v6234
      %v6236 = vsel %vm594, %v6226, 0.0
      %v6237 = vadd.f32 %v6235, %v6236
      %v6238 = vsel %vm594, %v6227, 0.0
      %v6239 = vadd.f32 %v6237, %v6238
      %v6240 = vsel %vm594, %v6228, 0.0
      %v6241 = vadd.f32 %v6239, %v6240
      %v6242 = vsel %vm594, %v6229, 0.0
      %v6243 = vadd.f32 %v6241, %v6242
      %v6244 = vsel %vm594, %v6230, 0.0
      %v6245 = vadd.f32 %v6243, %v6244
      %v6246 = vsel %vm594, %v6231, 0.0
      %v6247 = vadd.f32 %v6245, %v6246
      %v6248 = vrot.slane %v6247, 4
      %v6249 = vadd.f32 %v6247, %v6248
      %v6250 = vrot.slane %v6249, 2
      %v6251 = vadd.f32 %v6249, %v6250
      %v6252 = vrot.slane %v6251, 1
      %v6253 = vadd.f32 %v6251, %v6252
      %v6254 = vadd.f32 %v6232, %v6253
      %vm6255 = vcmask 57344
      %6256 = vst.msk [vmem:[%s402] sm:$0x1] %vm6255, %v6254
      %v6257 = vld [vmem:[%s405] sm:$0x1]
      %v6258 = vmul.f32 %v6224, %v6224
      %v6259 = vmul.f32 %v6225, %v6225
      %v6260 = vmul.f32 %v6226, %v6226
      %v6261 = vmul.f32 %v6227, %v6227
      %v6262 = vmul.f32 %v6228, %v6228
      %v6263 = vmul.f32 %v6229, %v6229
      %v6264 = vmul.f32 %v6230, %v6230
      %v6265 = vmul.f32 %v6231, %v6231
      %v6266 = vsel %vm594, %v6258, 0.0
      %v6267 = vsel %vm594, %v6259, 0.0
      %v6268 = vadd.f32 %v6266, %v6267
      %v6269 = vsel %vm594, %v6260, 0.0
      %v6270 = vadd.f32 %v6268, %v6269
      %v6271 = vsel %vm594, %v6261, 0.0
      %v6272 = vadd.f32 %v6270, %v6271
      %v6273 = vsel %vm594, %v6262, 0.0
      %v6274 = vadd.f32 %v6272, %v6273
      %v6275 = vsel %vm594, %v6263, 0.0
      %v6276 = vadd.f32 %v6274, %v6275
      %v6277 = vsel %vm594, %v6264, 0.0
      %v6278 = vadd.f32 %v6276, %v6277
      %v6279 = vsel %vm594, %v6265, 0.0
      %v6280 = vadd.f32 %v6278, %v6279
      %v6281 = vrot.slane %v6280, 4
      %v6282 = vadd.f32 %v6280, %v6281
      %v6283 = vrot.slane %v6282, 2
      %v6284 = vadd.f32 %v6282, %v6283
      %v6285 = vrot.slane %v6284, 1
      %v6286 = vadd.f32 %v6284, %v6285
      %v6287 = vadd.f32 %v6257, %v6286
      %6288 = vst.msk [vmem:[%s405] sm:$0x1] %vm6255, %v6287
      %s6289 = sadd.s32 %s25, %s26
      %s6290 = smul.u32 8, %s6289
      %p6291 = scmp.lt.s32.totalorder %s6290, 15
      %s6292 = scalar_select %p6291, %s6290, 15
      %s6293 = smul.addr %s6292, 8
      %s6294 = scalar_lea.vmem %s7, %s6293
      %p6295 = scmp.lt.s32.totalorder %s25, 1
      %s6296 = scalar_select %p6295, %s25, 1
      %s6297 = scalar_lea.vmem %s8, %s6296
      %p6298 = scmp.lt.s32.totalorder %s25, 1
      %s6299 = scalar_select %p6298, %s25, 1
      %s6300 = scalar_lea.vmem %s9, %s6299
      // Predicated region
      $region53: #{conv_block_forward.5} parent=47 // pred_check
        %p6301 = pneg %p214
      $region54: #{conv_block_forward.5} parent=47 // pred_check_branch
        %6303 = sbr.rel (%p6301) target = $region56
      $region55: #{conv_block_forward.5} parent=47 // pred_region
        %s6304 = sadd.s32 %s25, %s26
        %s6305 = smul.u32 8, %s6304
      $region56: #{conv_block_forward.5} parent=47 // pred_fallthru
        _
      // Predicated region
      $region57: #{conv_block_forward.5} parent=47 // pred_check
        %p6306 = pneg %p240
      $region58: #{conv_block_forward.5} parent=47 // pred_check_branch
        %6308 = sbr.rel (%p6306) target = $region60
      $region59: #{conv_block_forward.5} parent=47 // pred_region
        _
      $region60: #{conv_block_forward.5} parent=47 // pred_fallthru
        _
      // Predicated region
      $region61: #{conv_block_forward.5} parent=47 // pred_check
        %p6309 = pneg %p266
      $region62: #{conv_block_forward.5} parent=47 // pred_check_branch
        %6311 = sbr.rel (%p6309) target = $region64
      $region63: #{conv_block_forward.5} parent=47 // pred_region
        _
      $region64: #{conv_block_forward.5} parent=47 // pred_fallthru
        _
    $region48: #{conv_block_forward.5} parent=5 // pred_fallthru
      _
    %p6312 = scmp.le.s32.totalorder 2, %s16
    // Predicated region
    $region65: #{conv_block_forward.5} parent=5 // pred_check
      %p6313 = pneg %p6312
    $region66: #{conv_block_forward.5} parent=5 // pred_check_branch
      %6315 = sbr.rel (%p6313) target = $region68
    $region67: #{conv_block_forward.5} parent=5 // pred_region
      %s6316 = ssub.s32 %s16, 2
      // Predicated region
      $region69: #{conv_block_forward.5} parent=67 // pred_check
        %p6317 = pneg %p220
      $region70: #{conv_block_forward.5} parent=67 // pred_check_branch
        %6319 = sbr.rel (%p6317) target = $region72
      $region71: #{conv_block_forward.5} parent=67 // pred_region
        %s6320 = sadd.s32 %s27, %s28
        %s6321 = smul.u32 8, %s6320
        %p6322 = scmp.lt.s32.totalorder %s6321, 15
        %s6323 = scalar_select %p6322, %s6321, 15
        %s6324 = smul.addr %s6323, 8
        %s6325 = scalar_lea.vmem %s7, %s6324
      $region72: #{conv_block_forward.5} parent=67 // pred_fallthru
        _
      // Predicated region
      $region73: #{conv_block_forward.5} parent=67 // pred_check
        %p6326 = pneg %p246
      $region74: #{conv_block_forward.5} parent=67 // pred_check_branch
        %6328 = sbr.rel (%p6326) target = $region76
      $region75: #{conv_block_forward.5} parent=67 // pred_region
        %p6329 = scmp.lt.s32.totalorder %s27, 1
        %s6330 = scalar_select %p6329, %s27, 1
        %s6331 = scalar_lea.vmem %s8, %s6330
      $region76: #{conv_block_forward.5} parent=67 // pred_fallthru
        _
      // Predicated region
      $region77: #{conv_block_forward.5} parent=67 // pred_check
        %p6332 = pneg %p272
      $region78: #{conv_block_forward.5} parent=67 // pred_check_branch
        %6334 = sbr.rel (%p6332) target = $region80
      $region79: #{conv_block_forward.5} parent=67 // pred_region
        %p6335 = scmp.lt.s32.totalorder %s27, 1
        %s6336 = scalar_select %p6335, %s27, 1
        %s6337 = scalar_lea.vmem %s9, %s6336
      $region80: #{conv_block_forward.5} parent=67 // pred_fallthru
        _
    $region68: #{conv_block_forward.5} parent=5 // pred_fallthru
      _
  $region6: #{conv_block_forward.5} parent=0 // loop_footer
    %s20 = sadd.s32 1, %s16
  $region7: #{conv_block_forward.5} parent=0 // loop_footer_branch
    %15 = sbr.rel target = $region3
  $region8: #{conv_block_forward.5} parent=0 // loop_exit
    _

</llo_original>
